<compile_context>
chip_gen: v6e
topology: v6e:2x2x1
jax: 0.10.0
libtpu: 0.0.40
codegen_flags: <defaults>
</compile_context>

<pallas_src>
import functools

import jax
import jax.numpy as jnp
from jax.experimental import pallas as pl
from jax.experimental.pallas import tpu as pltpu


# ---------------------------------------------------------------------------
# Math helpers (pure jnp; used inside the Pallas kernel).
# ---------------------------------------------------------------------------
def _layer_norm(x, gamma, beta, eps=1e-5):
    mean = jnp.mean(x, axis=-1, keepdims=True)
    var = jnp.mean((x - mean) ** 2, axis=-1, keepdims=True)
    return (x - mean) * jax.lax.rsqrt(var + eps) * gamma + beta


def _attn_heads(q, k, v, wo, nhead):
    """Multi-head attention core on un-batched operands.

    q: (Lq, D) with the 1/sqrt(Dh) scale already folded into the Q projection.
    k, v: (Lk, D).  wo: (D, D) pre-transposed output projection (bias added by
    the caller).

    Equivalent to  concat_h( softmax(q_h k_h^T) v_h ) @ wo, but the concat is
    removed by pushing each head's output through the matching row-block of
    wo and accumulating into a lane-dense (Lq, D) result.
    """
    Lq, D = q.shape
    Dh = D // nhead
    out = jnp.zeros((Lq, D), jnp.float32)
    for h in range(nhead):
        sl = slice(h * Dh, (h + 1) * Dh)
        # scores: contract head dim directly (no transpose)
        s = jax.lax.dot_general(q[:, sl], k[:, sl], (((1,), (1,)), ((), ())),
                                preferred_element_type=jnp.float32)  # (Lq, Lk)
        s = s - jnp.max(s, axis=-1, keepdims=True)
        p = jnp.exp(s)
        p = p / jnp.sum(p, axis=-1, keepdims=True)
        o_h = jnp.dot(p, v[:, sl], preferred_element_type=jnp.float32)       # (Lq, Dh)
        out = out + jnp.dot(o_h, wo[sl, :], preferred_element_type=jnp.float32)
    return out


# ---------------------------------------------------------------------------
# Fused Pallas kernel: ALL decoder layers for one batch element.
# ---------------------------------------------------------------------------
def fused_decoder_kernel(
    tgt_ref, src_ref,
    sa_wqkv_ref, sa_bqkv_ref, sa_wo_ref, sa_bo_ref,
    n2_g_ref, n2_b_ref,
    ca_wq_ref, ca_bq_ref, ca_wkv_ref, ca_bkv_ref, ca_wo_ref, ca_bo_ref,
    n1_g_ref, n1_b_ref,
    w1_ref, b1_ref, w2_ref, b2_ref,
    n3_g_ref, n3_b_ref,
    out_ref, *, nhead, num_layers):
    tgt = tgt_ref[0].astype(jnp.float32)    # (Lq, D)
    src = src_ref[0].astype(jnp.float32)    # (Lk, D)
    D = tgt.shape[-1]

    # Load weights into vregs once (shared by every layer iteration).
    sa_wqkv = sa_wqkv_ref[...]; sa_bqkv = sa_bqkv_ref[...]
    sa_wo = sa_wo_ref[...];     sa_bo = sa_bo_ref[...]
    ca_wq = ca_wq_ref[...];     ca_bq = ca_bq_ref[...]
    ca_wo = ca_wo_ref[...];     ca_bo = ca_bo_ref[...]
    w1 = w1_ref[...]; b1 = b1_ref[...]
    w2 = w2_ref[...]; b2 = b2_ref[...]
    n2_g = n2_g_ref[...]; n2_b = n2_b_ref[...]
    n1_g = n1_g_ref[...]; n1_b = n1_b_ref[...]
    n3_g = n3_g_ref[...]; n3_b = n3_b_ref[...]

    # Cross-attention K/V are layer-invariant (shared weights, constant src):
    # compute once, reuse every layer.
    kv_c = jnp.dot(src, ca_wkv_ref[...],
                   preferred_element_type=jnp.float32) + ca_bkv_ref[...]  # (Lk, 2D)
    k_c = kv_c[:, :D]
    v_c = kv_c[:, D:]

    for _ in range(num_layers):        # static unroll; all layers share params
        # --- self attention (fused QKV proj) + residual + norm2 ---
        qkv = jnp.dot(tgt, sa_wqkv,
                      preferred_element_type=jnp.float32) + sa_bqkv        # (Lq, 3D)
        q = qkv[:, :D]
        k = qkv[:, D:2 * D]
        v = qkv[:, 2 * D:]
        tgt2 = _attn_heads(q, k, v, sa_wo, nhead) + sa_bo
        tgt = _layer_norm(tgt + tgt2, n2_g, n2_b)

        # --- cross attention (hoisted K/V) + residual + norm1 ---
        q = jnp.dot(tgt, ca_wq, preferred_element_type=jnp.float32) + ca_bq
        tgt2 = _attn_heads(q, k_c, v_c, ca_wo, nhead) + ca_bo
        tgt = _layer_norm(tgt + tgt2, n1_g, n1_b)

        # --- FFN (linear1 -> relu -> linear2) + residual + norm3 ---
        h = jnp.maximum(
            jnp.dot(tgt, w1, preferred_element_type=jnp.float32) + b1, 0.0)
        tgt2 = jnp.dot(h, w2, preferred_element_type=jnp.float32) + b2
        tgt = _layer_norm(tgt + tgt2, n3_g, n3_b)

    out_ref[0] = tgt.astype(out_ref.dtype)


def iibmil_decoder_pallas(tgt, src, fused_params, nhead, num_layers):
    B, Lq, D = tgt.shape
    Lk = src.shape[1]

    def full_spec(shape):
        nd = len(shape)
        return pl.BlockSpec(shape, lambda b, _nd=nd: (0,) * _nd)

    in_specs = [pl.BlockSpec((1, Lq, D), lambda b: (b, 0, 0)),
                pl.BlockSpec((1, Lk, D), lambda b: (b, 0, 0))]
    in_specs += [full_spec(p.shape) for p in fused_params]

    return pl.pallas_call(
        functools.partial(fused_decoder_kernel, nhead=nhead,
                          num_layers=num_layers),
        out_shape=jax.ShapeDtypeStruct((B, Lq, D), tgt.dtype),
        grid=(B,),
        in_specs=in_specs,
        out_specs=pl.BlockSpec((1, Lq, D), lambda b: (b, 0, 0)),
        compiler_params=pltpu.CompilerParams(
            dimension_semantics=("parallel",)),
    )(tgt, src, *fused_params)


# ---------------------------------------------------------------------------
# Parameter prep: fuse QKV / KV projections and fold the attention scale.
# Done ONCE at parameter time (true constant fold).
# ---------------------------------------------------------------------------
def prepare_fused_params(base_params, d_model, nhead):
    (sa_wq, sa_bq, sa_wk, sa_bk, sa_wv, sa_bv, sa_wo, sa_bo,
     n2_g, n2_b,
     ca_wq, ca_bq, ca_wk, ca_bk, ca_wv, ca_bv, ca_wo, ca_bo,
     n1_g, n1_b,
     w1, b1, w2, b2,
     n3_g, n3_b) = base_params

    scale = 1.0 / ((d_model // nhead) ** 0.5)
    sa_wqkv = jnp.concatenate([sa_wq * scale, sa_wk, sa_wv], axis=1)  # (D, 3D)
    sa_bqkv = jnp.concatenate([sa_bq * scale, sa_bk, sa_bv], axis=1)  # (1, 3D)
    ca_wkv = jnp.concatenate([ca_wk, ca_wv], axis=1)                  # (D, 2D)
    ca_bkv = jnp.concatenate([ca_bk, ca_bv], axis=1)                  # (1, 2D)

    return [
        sa_wqkv, sa_bqkv, sa_wo, sa_bo,
        n2_g, n2_b,
        ca_wq * scale, ca_bq * scale, ca_wkv, ca_bkv, ca_wo, ca_bo,
        n1_g, n1_b,
        w1, b1, w2, b2,
        n3_g, n3_b,
    ]


# ---------------------------------------------------------------------------
# Pure-JAX reference with the canonical (un-fused, un-folded) formulation,
# matching the PyTorch module's math.  Validates the kernel's fusions.
# ---------------------------------------------------------------------------
def _ref_mha(xq, xk, xv, wq, bq, wk, bk, wv, bv, wo, bo, nhead):
    Lq, D = xq.shape
    Dh = D // nhead
    scale = 1.0 / (Dh ** 0.5)
    q = jnp.dot(xq, wq) + bq
    k = jnp.dot(xk, wk) + bk
    v = jnp.dot(xv, wv) + bv
    outs = []
    for h in range(nhead):
        sl = slice(h * Dh, (h + 1) * Dh)
        s = jnp.dot(q[:, sl] * scale, k[:, sl].T)
        p = jax.nn.softmax(s, axis=-1)
        outs.append(jnp.dot(p, v[:, sl]))
    o = jnp.concatenate(outs, axis=-1)
    return jnp.dot(o, wo) + bo


def ref_decoder(tgt, src, base_params, nhead, num_layers):
    (sa_wq, sa_bq, sa_wk, sa_bk, sa_wv, sa_bv, sa_wo, sa_bo,
     n2_g, n2_b,
     ca_wq, ca_bq, ca_wk, ca_bk, ca_wv, ca_bv, ca_wo, ca_bo,
     n1_g, n1_b,
     w1, b1, w2, b2,
     n3_g, n3_b) = base_params

    def one_layer(t, s):
        t2 = _ref_mha(t, t, t, sa_wq, sa_bq, sa_wk, sa_bk, sa_wv, sa_bv,
                      sa_wo, sa_bo, nhead)
        t = _layer_norm(t + t2, n2_g, n2_b)            # norm2 after self-attn
        t2 = _ref_mha(t, s, s, ca_wq, ca_bq, ca_wk, ca_bk, ca_wv, ca_bv,
                      ca_wo, ca_bo, nhead)
        t = _layer_norm(t + t2, n1_g, n1_b)            # norm1 after cross-attn
        h = jnp.maximum(jnp.dot(t, w1) + b1, 0.0)
        t2 = jnp.dot(h, w2) + b2
        return _layer_norm(t + t2, n3_g, n3_b)

    out = tgt
    for _ in range(num_layers):                        # shared params (deepcopy)
        out = jax.vmap(one_layer)(out, src)
    return out


# ---------------------------------------------------------------------------
# Deterministic synthetic parameter init (no checkpoint load).
# Weights are stored pre-transposed so projections are `x @ W + b`.
# ---------------------------------------------------------------------------
def init_base_params(key, d_model, d_ffn):
    D, F = d_model, d_ffn
    ks = jax.random.split(key, 10)
    sD, sF = 1.0 / (D ** 0.5), 1.0 / (F ** 0.5)

    def nrm(k, shape, s):
        return jax.random.normal(k, shape, jnp.float32) * s

    zeros = lambda shape: jnp.zeros(shape, jnp.float32)
    ones = lambda shape: jnp.ones(shape, jnp.float32)

    return [
        nrm(ks[0], (D, D), sD), zeros((1, D)),   # self-attn Wq, bq
        nrm(ks[1], (D, D), sD), zeros((1, D)),   # self-attn Wk, bk
        nrm(ks[2], (D, D), sD), zeros((1, D)),   # self-attn Wv, bv
        nrm(ks[3], (D, D), sD), zeros((1, D)),   # self-attn Wo, bo
        ones((1, D)), zeros((1, D)),             # norm2 gamma, beta
        nrm(ks[4], (D, D), sD), zeros((1, D)),   # cross-attn Wq, bq
        nrm(ks[5], (D, D), sD), zeros((1, D)),   # cross-attn Wk, bk
        nrm(ks[6], (D, D), sD), zeros((1, D)),   # cross-attn Wv, bv
        nrm(ks[7], (D, D), sD), zeros((1, D)),   # cross-attn Wo, bo
        ones((1, D)), zeros((1, D)),             # norm1 gamma, beta
        nrm(ks[8], (D, F), sD), zeros((1, F)),   # linear1 W, b
        nrm(ks[9], (F, D), sF), zeros((1, D)),   # linear2 W, b
        ones((1, D)), zeros((1, D)),             # norm3 gamma, beta
    ]


if __name__ == "__main__":
    d_model, nhead, num_layers, d_ffn = 32, 4, 2, 64
    B, Lq, Lk = 2, 8, 16

    key = jax.random.PRNGKey(0)
    k_tgt, k_src, k_p = jax.random.split(key, 3)
    tgt = jax.random.normal(k_tgt, (B, Lq, d_model), jnp.float32)
    src = jax.random.normal(k_src, (B, Lk, d_model), jnp.float32)

    base_params = init_base_params(k_p, d_model, d_ffn)
    fused_params = prepare_fused_params(base_params, d_model, nhead)

    out = iibmil_decoder_pallas(tgt, src, fused_params, nhead, num_layers)
    out = jax.block_until_ready(out)

    ref = ref_decoder(tgt, src, base_params, nhead, num_layers)
    assert out.shape == (B, Lq, d_model)
    assert jnp.allclose(out, ref, atol=1e-3, rtol=1e-3), "mismatch vs reference"

    # TODO(synk): dropout layers are identity (inference); no RNG path implemented.
    print("KERNEL_OK")
</pallas_src>

<mosaic_0001>
module attributes {stable_mosaic.version = 11 : i64} {
  func.func @fused_decoder_kernel(%arg0: i32, %arg1: memref<1x8x32xf32, #tpu.memory_space<vmem>>, %arg2: memref<1x16x32xf32, #tpu.memory_space<vmem>>, %arg3: memref<32x96xf32, #tpu.memory_space<vmem>>, %arg4: memref<1x96xf32, #tpu.memory_space<vmem>>, %arg5: memref<32x32xf32, #tpu.memory_space<vmem>>, %arg6: memref<1x32xf32, #tpu.memory_space<vmem>>, %arg7: memref<1x32xf32, #tpu.memory_space<vmem>>, %arg8: memref<1x32xf32, #tpu.memory_space<vmem>>, %arg9: memref<32x32xf32, #tpu.memory_space<vmem>>, %arg10: memref<1x32xf32, #tpu.memory_space<vmem>>, %arg11: memref<32x64xf32, #tpu.memory_space<vmem>>, %arg12: memref<1x64xf32, #tpu.memory_space<vmem>>, %arg13: memref<32x32xf32, #tpu.memory_space<vmem>>, %arg14: memref<1x32xf32, #tpu.memory_space<vmem>>, %arg15: memref<1x32xf32, #tpu.memory_space<vmem>>, %arg16: memref<1x32xf32, #tpu.memory_space<vmem>>, %arg17: memref<32x64xf32, #tpu.memory_space<vmem>>, %arg18: memref<1x64xf32, #tpu.memory_space<vmem>>, %arg19: memref<64x32xf32, #tpu.memory_space<vmem>>, %arg20: memref<1x32xf32, #tpu.memory_space<vmem>>, %arg21: memref<1x32xf32, #tpu.memory_space<vmem>>, %arg22: memref<1x32xf32, #tpu.memory_space<vmem>>, %arg23: memref<1x8x32xf32, #tpu.memory_space<vmem>>) attributes {dimension_semantics = [#tpu.dimension_semantics<parallel>], iteration_bounds = array<i64: 2>, scalar_prefetch = 0 : i64, scratch_operands = 0 : i64, tpu.core_type = #tpu.core_type<tc>, window_params = [{transform_indices = @transform_0, window_bounds = array<i64: 1, 8, 32>}, {transform_indices = @transform_1, window_bounds = array<i64: 1, 16, 32>}, {pipeline_mode = #tpu.pipeline_mode<synchronous>, transform_indices = @transform_2, window_bounds = array<i64: 32, 96>}, {pipeline_mode = #tpu.pipeline_mode<synchronous>, transform_indices = @transform_3, window_bounds = array<i64: 1, 96>}, {pipeline_mode = #tpu.pipeline_mode<synchronous>, transform_indices = @transform_4, window_bounds = array<i64: 32, 32>}, {pipeline_mode = #tpu.pipeline_mode<synchronous>, transform_indices = @transform_5, window_bounds = array<i64: 1, 32>}, {pipeline_mode = #tpu.pipeline_mode<synchronous>, transform_indices = @transform_6, window_bounds = array<i64: 1, 32>}, {pipeline_mode = #tpu.pipeline_mode<synchronous>, transform_indices = @transform_7, window_bounds = array<i64: 1, 32>}, {pipeline_mode = #tpu.pipeline_mode<synchronous>, transform_indices = @transform_8, window_bounds = array<i64: 32, 32>}, {pipeline_mode = #tpu.pipeline_mode<synchronous>, transform_indices = @transform_9, window_bounds = array<i64: 1, 32>}, {pipeline_mode = #tpu.pipeline_mode<synchronous>, transform_indices = @transform_10, window_bounds = array<i64: 32, 64>}, {pipeline_mode = #tpu.pipeline_mode<synchronous>, transform_indices = @transform_11, window_bounds = array<i64: 1, 64>}, {pipeline_mode = #tpu.pipeline_mode<synchronous>, transform_indices = @transform_12, window_bounds = array<i64: 32, 32>}, {pipeline_mode = #tpu.pipeline_mode<synchronous>, transform_indices = @transform_13, window_bounds = array<i64: 1, 32>}, {pipeline_mode = #tpu.pipeline_mode<synchronous>, transform_indices = @transform_14, window_bounds = array<i64: 1, 32>}, {pipeline_mode = #tpu.pipeline_mode<synchronous>, transform_indices = @transform_15, window_bounds = array<i64: 1, 32>}, {pipeline_mode = #tpu.pipeline_mode<synchronous>, transform_indices = @transform_16, window_bounds = array<i64: 32, 64>}, {pipeline_mode = #tpu.pipeline_mode<synchronous>, transform_indices = @transform_17, window_bounds = array<i64: 1, 64>}, {pipeline_mode = #tpu.pipeline_mode<synchronous>, transform_indices = @transform_18, window_bounds = array<i64: 64, 32>}, {pipeline_mode = #tpu.pipeline_mode<synchronous>, transform_indices = @transform_19, window_bounds = array<i64: 1, 32>}, {pipeline_mode = #tpu.pipeline_mode<synchronous>, transform_indices = @transform_20, window_bounds = array<i64: 1, 32>}, {pipeline_mode = #tpu.pipeline_mode<synchronous>, transform_indices = @transform_21, window_bounds = array<i64: 1, 32>}, {transform_indices = @transform_22, window_bounds = array<i64: 1, 8, 32>}]} {
    %c0 = arith.constant 0 : index
    %c0_0 = arith.constant 0 : index
    %c0_1 = arith.constant 0 : index
    %0 = vector.load %arg1[%c0, %c0_0, %c0_1] : memref<1x8x32xf32, #tpu.memory_space<vmem>>, vector<1x8x32xf32>
    %1 = vector.shape_cast %0 : vector<1x8x32xf32> to vector<8x32xf32>
    %c0_2 = arith.constant 0 : index
    %c0_3 = arith.constant 0 : index
    %c0_4 = arith.constant 0 : index
    %2 = vector.load %arg2[%c0_2, %c0_3, %c0_4] : memref<1x16x32xf32, #tpu.memory_space<vmem>>, vector<1x16x32xf32>
    %3 = vector.shape_cast %2 : vector<1x16x32xf32> to vector<16x32xf32>
    %c0_5 = arith.constant 0 : index
    %c0_6 = arith.constant 0 : index
    %4 = vector.load %arg3[%c0_5, %c0_6] : memref<32x96xf32, #tpu.memory_space<vmem>>, vector<32x96xf32>
    %c0_7 = arith.constant 0 : index
    %c0_8 = arith.constant 0 : index
    %5 = vector.load %arg4[%c0_7, %c0_8] : memref<1x96xf32, #tpu.memory_space<vmem>>, vector<1x96xf32>
    %c0_9 = arith.constant 0 : index
    %c0_10 = arith.constant 0 : index
    %6 = vector.load %arg5[%c0_9, %c0_10] : memref<32x32xf32, #tpu.memory_space<vmem>>, vector<32x32xf32>
    %c0_11 = arith.constant 0 : index
    %c0_12 = arith.constant 0 : index
    %7 = vector.load %arg6[%c0_11, %c0_12] : memref<1x32xf32, #tpu.memory_space<vmem>>, vector<1x32xf32>
    %c0_13 = arith.constant 0 : index
    %c0_14 = arith.constant 0 : index
    %8 = vector.load %arg9[%c0_13, %c0_14] : memref<32x32xf32, #tpu.memory_space<vmem>>, vector<32x32xf32>
    %c0_15 = arith.constant 0 : index
    %c0_16 = arith.constant 0 : index
    %9 = vector.load %arg10[%c0_15, %c0_16] : memref<1x32xf32, #tpu.memory_space<vmem>>, vector<1x32xf32>
    %c0_17 = arith.constant 0 : index
    %c0_18 = arith.constant 0 : index
    %10 = vector.load %arg13[%c0_17, %c0_18] : memref<32x32xf32, #tpu.memory_space<vmem>>, vector<32x32xf32>
    %c0_19 = arith.constant 0 : index
    %c0_20 = arith.constant 0 : index
    %11 = vector.load %arg14[%c0_19, %c0_20] : memref<1x32xf32, #tpu.memory_space<vmem>>, vector<1x32xf32>
    %c0_21 = arith.constant 0 : index
    %c0_22 = arith.constant 0 : index
    %12 = vector.load %arg17[%c0_21, %c0_22] : memref<32x64xf32, #tpu.memory_space<vmem>>, vector<32x64xf32>
    %c0_23 = arith.constant 0 : index
    %c0_24 = arith.constant 0 : index
    %13 = vector.load %arg18[%c0_23, %c0_24] : memref<1x64xf32, #tpu.memory_space<vmem>>, vector<1x64xf32>
    %c0_25 = arith.constant 0 : index
    %c0_26 = arith.constant 0 : index
    %14 = vector.load %arg19[%c0_25, %c0_26] : memref<64x32xf32, #tpu.memory_space<vmem>>, vector<64x32xf32>
    %c0_27 = arith.constant 0 : index
    %c0_28 = arith.constant 0 : index
    %15 = vector.load %arg20[%c0_27, %c0_28] : memref<1x32xf32, #tpu.memory_space<vmem>>, vector<1x32xf32>
    %c0_29 = arith.constant 0 : index
    %c0_30 = arith.constant 0 : index
    %16 = vector.load %arg7[%c0_29, %c0_30] : memref<1x32xf32, #tpu.memory_space<vmem>>, vector<1x32xf32>
    %c0_31 = arith.constant 0 : index
    %c0_32 = arith.constant 0 : index
    %17 = vector.load %arg8[%c0_31, %c0_32] : memref<1x32xf32, #tpu.memory_space<vmem>>, vector<1x32xf32>
    %c0_33 = arith.constant 0 : index
    %c0_34 = arith.constant 0 : index
    %18 = vector.load %arg15[%c0_33, %c0_34] : memref<1x32xf32, #tpu.memory_space<vmem>>, vector<1x32xf32>
    %c0_35 = arith.constant 0 : index
    %c0_36 = arith.constant 0 : index
    %19 = vector.load %arg16[%c0_35, %c0_36] : memref<1x32xf32, #tpu.memory_space<vmem>>, vector<1x32xf32>
    %c0_37 = arith.constant 0 : index
    %c0_38 = arith.constant 0 : index
    %20 = vector.load %arg21[%c0_37, %c0_38] : memref<1x32xf32, #tpu.memory_space<vmem>>, vector<1x32xf32>
    %c0_39 = arith.constant 0 : index
    %c0_40 = arith.constant 0 : index
    %21 = vector.load %arg22[%c0_39, %c0_40] : memref<1x32xf32, #tpu.memory_space<vmem>>, vector<1x32xf32>
    %c0_41 = arith.constant 0 : index
    %c0_42 = arith.constant 0 : index
    %22 = vector.load %arg11[%c0_41, %c0_42] : memref<32x64xf32, #tpu.memory_space<vmem>>, vector<32x64xf32>
    %cst = arith.constant dense<0.000000e+00> : vector<16x64xf32>
    %23 = tpu.matmul %3, %22, %cst {dimension_numbers = #tpu.dot_dimension_numbers<[1], [0], [0], [1], [0, 0, 1, 1], [], []>} : vector<16x32xf32>, vector<32x64xf32>, vector<16x64xf32> -> vector<16x64xf32>
    %c0_43 = arith.constant 0 : index
    %c0_44 = arith.constant 0 : index
    %24 = vector.load %arg12[%c0_43, %c0_44] : memref<1x64xf32, #tpu.memory_space<vmem>>, vector<1x64xf32>
    %25 = vector.broadcast %24 : vector<1x64xf32> to vector<16x64xf32>
    %26 = arith.addf %23, %25 : vector<16x64xf32>
    %27 = vector.extract_strided_slice %26 {offsets = [0, 0], sizes = [16, 32], strides = [1, 1]} : vector<16x64xf32> to vector<16x32xf32>
    %28 = vector.extract_strided_slice %26 {offsets = [0, 32], sizes = [16, 32], strides = [1, 1]} : vector<16x64xf32> to vector<16x32xf32>
    %cst_45 = arith.constant dense<0.000000e+00> : vector<8x96xf32>
    %29 = tpu.matmul %1, %4, %cst_45 {dimension_numbers = #tpu.dot_dimension_numbers<[1], [0], [0], [1], [0, 0, 1, 1], [], []>} : vector<8x32xf32>, vector<32x96xf32>, vector<8x96xf32> -> vector<8x96xf32>
    %30 = vector.broadcast %5 : vector<1x96xf32> to vector<8x96xf32>
    %31 = arith.addf %29, %30 : vector<8x96xf32>
    %32 = vector.extract_strided_slice %31 {offsets = [0, 0], sizes = [8, 32], strides = [1, 1]} : vector<8x96xf32> to vector<8x32xf32>
    %33 = vector.extract_strided_slice %31 {offsets = [0, 32], sizes = [8, 32], strides = [1, 1]} : vector<8x96xf32> to vector<8x32xf32>
    %34 = vector.extract_strided_slice %31 {offsets = [0, 64], sizes = [8, 32], strides = [1, 1]} : vector<8x96xf32> to vector<8x32xf32>
    %cst_46 = arith.constant 0.000000e+00 : f32
    %35 = vector.broadcast %cst_46 : f32 to vector<8x32xf32>
    %36 = vector.extract_strided_slice %32 {offsets = [0, 0], sizes = [8, 8], strides = [1, 1]} : vector<8x32xf32> to vector<8x8xf32>
    %37 = vector.extract_strided_slice %33 {offsets = [0, 0], sizes = [8, 8], strides = [1, 1]} : vector<8x32xf32> to vector<8x8xf32>
    %cst_47 = arith.constant dense<0.000000e+00> : vector<8x8xf32>
    %38 = tpu.matmul %36, %37, %cst_47 {dimension_numbers = #tpu.dot_dimension_numbers<[1], [1], [0], [0], [0, 0, 1, 0], [], []>} : vector<8x8xf32>, vector<8x8xf32>, vector<8x8xf32> -> vector<8x8xf32>
    %cst_48 = arith.constant dense<0xFF800000> : vector<8xf32>
    %39 = vector.multi_reduction <maximumf>, %38, %cst_48 [1] : vector<8x8xf32> to vector<8xf32>
    %40 = vector.shape_cast %39 : vector<8xf32> to vector<8x1xf32>
    %41 = vector.broadcast %40 : vector<8x1xf32> to vector<8x8xf32>
    %42 = arith.subf %38, %41 : vector<8x8xf32>
    %43 = math.exp %42 : vector<8x8xf32>
    %cst_49 = arith.constant dense<0.000000e+00> : vector<8xf32>
    %44 = vector.multi_reduction <add>, %43, %cst_49 [1] : vector<8x8xf32> to vector<8xf32>
    %45 = vector.shape_cast %44 : vector<8xf32> to vector<8x1xf32>
    %46 = vector.broadcast %45 : vector<8x1xf32> to vector<8x8xf32>
    %47 = arith.divf %43, %46 : vector<8x8xf32>
    %48 = vector.extract_strided_slice %34 {offsets = [0, 0], sizes = [8, 8], strides = [1, 1]} : vector<8x32xf32> to vector<8x8xf32>
    %cst_50 = arith.constant dense<0.000000e+00> : vector<8x8xf32>
    %49 = tpu.matmul %47, %48, %cst_50 {dimension_numbers = #tpu.dot_dimension_numbers<[1], [0], [0], [1], [0, 0, 1, 1], [], []>} : vector<8x8xf32>, vector<8x8xf32>, vector<8x8xf32> -> vector<8x8xf32>
    %50 = vector.extract_strided_slice %6 {offsets = [0, 0], sizes = [8, 32], strides = [1, 1]} : vector<32x32xf32> to vector<8x32xf32>
    %cst_51 = arith.constant dense<0.000000e+00> : vector<8x32xf32>
    %51 = tpu.matmul %49, %50, %cst_51 {dimension_numbers = #tpu.dot_dimension_numbers<[1], [0], [0], [1], [0, 0, 1, 1], [], []>} : vector<8x8xf32>, vector<8x32xf32>, vector<8x32xf32> -> vector<8x32xf32>
    %52 = arith.addf %35, %51 : vector<8x32xf32>
    %53 = vector.extract_strided_slice %32 {offsets = [0, 8], sizes = [8, 8], strides = [1, 1]} : vector<8x32xf32> to vector<8x8xf32>
    %54 = vector.extract_strided_slice %33 {offsets = [0, 8], sizes = [8, 8], strides = [1, 1]} : vector<8x32xf32> to vector<8x8xf32>
    %cst_52 = arith.constant dense<0.000000e+00> : vector<8x8xf32>
    %55 = tpu.matmul %53, %54, %cst_52 {dimension_numbers = #tpu.dot_dimension_numbers<[1], [1], [0], [0], [0, 0, 1, 0], [], []>} : vector<8x8xf32>, vector<8x8xf32>, vector<8x8xf32> -> vector<8x8xf32>
    %cst_53 = arith.constant dense<0xFF800000> : vector<8xf32>
    %56 = vector.multi_reduction <maximumf>, %55, %cst_53 [1] : vector<8x8xf32> to vector<8xf32>
    %57 = vector.shape_cast %56 : vector<8xf32> to vector<8x1xf32>
    %58 = vector.broadcast %57 : vector<8x1xf32> to vector<8x8xf32>
    %59 = arith.subf %55, %58 : vector<8x8xf32>
    %60 = math.exp %59 : vector<8x8xf32>
    %cst_54 = arith.constant dense<0.000000e+00> : vector<8xf32>
    %61 = vector.multi_reduction <add>, %60, %cst_54 [1] : vector<8x8xf32> to vector<8xf32>
    %62 = vector.shape_cast %61 : vector<8xf32> to vector<8x1xf32>
    %63 = vector.broadcast %62 : vector<8x1xf32> to vector<8x8xf32>
    %64 = arith.divf %60, %63 : vector<8x8xf32>
    %65 = vector.extract_strided_slice %34 {offsets = [0, 8], sizes = [8, 8], strides = [1, 1]} : vector<8x32xf32> to vector<8x8xf32>
    %cst_55 = arith.constant dense<0.000000e+00> : vector<8x8xf32>
    %66 = tpu.matmul %64, %65, %cst_55 {dimension_numbers = #tpu.dot_dimension_numbers<[1], [0], [0], [1], [0, 0, 1, 1], [], []>} : vector<8x8xf32>, vector<8x8xf32>, vector<8x8xf32> -> vector<8x8xf32>
    %67 = vector.extract_strided_slice %6 {offsets = [8, 0], sizes = [8, 32], strides = [1, 1]} : vector<32x32xf32> to vector<8x32xf32>
    %cst_56 = arith.constant dense<0.000000e+00> : vector<8x32xf32>
    %68 = tpu.matmul %66, %67, %cst_56 {dimension_numbers = #tpu.dot_dimension_numbers<[1], [0], [0], [1], [0, 0, 1, 1], [], []>} : vector<8x8xf32>, vector<8x32xf32>, vector<8x32xf32> -> vector<8x32xf32>
    %69 = arith.addf %52, %68 : vector<8x32xf32>
    %70 = vector.extract_strided_slice %32 {offsets = [0, 16], sizes = [8, 8], strides = [1, 1]} : vector<8x32xf32> to vector<8x8xf32>
    %71 = vector.extract_strided_slice %33 {offsets = [0, 16], sizes = [8, 8], strides = [1, 1]} : vector<8x32xf32> to vector<8x8xf32>
    %cst_57 = arith.constant dense<0.000000e+00> : vector<8x8xf32>
    %72 = tpu.matmul %70, %71, %cst_57 {dimension_numbers = #tpu.dot_dimension_numbers<[1], [1], [0], [0], [0, 0, 1, 0], [], []>} : vector<8x8xf32>, vector<8x8xf32>, vector<8x8xf32> -> vector<8x8xf32>
    %cst_58 = arith.constant dense<0xFF800000> : vector<8xf32>
    %73 = vector.multi_reduction <maximumf>, %72, %cst_58 [1] : vector<8x8xf32> to vector<8xf32>
    %74 = vector.shape_cast %73 : vector<8xf32> to vector<8x1xf32>
    %75 = vector.broadcast %74 : vector<8x1xf32> to vector<8x8xf32>
    %76 = arith.subf %72, %75 : vector<8x8xf32>
    %77 = math.exp %76 : vector<8x8xf32>
    %cst_59 = arith.constant dense<0.000000e+00> : vector<8xf32>
    %78 = vector.multi_reduction <add>, %77, %cst_59 [1] : vector<8x8xf32> to vector<8xf32>
    %79 = vector.shape_cast %78 : vector<8xf32> to vector<8x1xf32>
    %80 = vector.broadcast %79 : vector<8x1xf32> to vector<8x8xf32>
    %81 = arith.divf %77, %80 : vector<8x8xf32>
    %82 = vector.extract_strided_slice %34 {offsets = [0, 16], sizes = [8, 8], strides = [1, 1]} : vector<8x32xf32> to vector<8x8xf32>
    %cst_60 = arith.constant dense<0.000000e+00> : vector<8x8xf32>
    %83 = tpu.matmul %81, %82, %cst_60 {dimension_numbers = #tpu.dot_dimension_numbers<[1], [0], [0], [1], [0, 0, 1, 1], [], []>} : vector<8x8xf32>, vector<8x8xf32>, vector<8x8xf32> -> vector<8x8xf32>
    %84 = vector.extract_strided_slice %6 {offsets = [16, 0], sizes = [8, 32], strides = [1, 1]} : vector<32x32xf32> to vector<8x32xf32>
    %cst_61 = arith.constant dense<0.000000e+00> : vector<8x32xf32>
    %85 = tpu.matmul %83, %84, %cst_61 {dimension_numbers = #tpu.dot_dimension_numbers<[1], [0], [0], [1], [0, 0, 1, 1], [], []>} : vector<8x8xf32>, vector<8x32xf32>, vector<8x32xf32> -> vector<8x32xf32>
    %86 = arith.addf %69, %85 : vector<8x32xf32>
    %87 = vector.extract_strided_slice %32 {offsets = [0, 24], sizes = [8, 8], strides = [1, 1]} : vector<8x32xf32> to vector<8x8xf32>
    %88 = vector.extract_strided_slice %33 {offsets = [0, 24], sizes = [8, 8], strides = [1, 1]} : vector<8x32xf32> to vector<8x8xf32>
    %cst_62 = arith.constant dense<0.000000e+00> : vector<8x8xf32>
    %89 = tpu.matmul %87, %88, %cst_62 {dimension_numbers = #tpu.dot_dimension_numbers<[1], [1], [0], [0], [0, 0, 1, 0], [], []>} : vector<8x8xf32>, vector<8x8xf32>, vector<8x8xf32> -> vector<8x8xf32>
    %cst_63 = arith.constant dense<0xFF800000> : vector<8xf32>
    %90 = vector.multi_reduction <maximumf>, %89, %cst_63 [1] : vector<8x8xf32> to vector<8xf32>
    %91 = vector.shape_cast %90 : vector<8xf32> to vector<8x1xf32>
    %92 = vector.broadcast %91 : vector<8x1xf32> to vector<8x8xf32>
    %93 = arith.subf %89, %92 : vector<8x8xf32>
    %94 = math.exp %93 : vector<8x8xf32>
    %cst_64 = arith.constant dense<0.000000e+00> : vector<8xf32>
    %95 = vector.multi_reduction <add>, %94, %cst_64 [1] : vector<8x8xf32> to vector<8xf32>
    %96 = vector.shape_cast %95 : vector<8xf32> to vector<8x1xf32>
    %97 = vector.broadcast %96 : vector<8x1xf32> to vector<8x8xf32>
    %98 = arith.divf %94, %97 : vector<8x8xf32>
    %99 = vector.extract_strided_slice %34 {offsets = [0, 24], sizes = [8, 8], strides = [1, 1]} : vector<8x32xf32> to vector<8x8xf32>
    %cst_65 = arith.constant dense<0.000000e+00> : vector<8x8xf32>
    %100 = tpu.matmul %98, %99, %cst_65 {dimension_numbers = #tpu.dot_dimension_numbers<[1], [0], [0], [1], [0, 0, 1, 1], [], []>} : vector<8x8xf32>, vector<8x8xf32>, vector<8x8xf32> -> vector<8x8xf32>
    %101 = vector.extract_strided_slice %6 {offsets = [24, 0], sizes = [8, 32], strides = [1, 1]} : vector<32x32xf32> to vector<8x32xf32>
    %cst_66 = arith.constant dense<0.000000e+00> : vector<8x32xf32>
    %102 = tpu.matmul %100, %101, %cst_66 {dimension_numbers = #tpu.dot_dimension_numbers<[1], [0], [0], [1], [0, 0, 1, 1], [], []>} : vector<8x8xf32>, vector<8x32xf32>, vector<8x32xf32> -> vector<8x32xf32>
    %103 = arith.addf %86, %102 : vector<8x32xf32>
    %104 = vector.broadcast %7 : vector<1x32xf32> to vector<8x32xf32>
    %105 = arith.addf %103, %104 : vector<8x32xf32>
    %106 = arith.addf %1, %105 : vector<8x32xf32>
    %cst_67 = arith.constant dense<0.000000e+00> : vector<8xf32>
    %107 = vector.multi_reduction <add>, %106, %cst_67 [1] : vector<8x32xf32> to vector<8xf32>
    %108 = vector.shape_cast %107 : vector<8xf32> to vector<8x1xf32>
    %cst_68 = arith.constant 3.200000e+01 : f32
    %109 = vector.broadcast %cst_68 : f32 to vector<8x1xf32>
    %110 = arith.divf %108, %109 : vector<8x1xf32>
    %111 = vector.broadcast %110 : vector<8x1xf32> to vector<8x32xf32>
    %112 = arith.subf %106, %111 : vector<8x32xf32>
    %113 = arith.mulf %112, %112 : vector<8x32xf32>
    %cst_69 = arith.constant dense<0.000000e+00> : vector<8xf32>
    %114 = vector.multi_reduction <add>, %113, %cst_69 [1] : vector<8x32xf32> to vector<8xf32>
    %115 = vector.shape_cast %114 : vector<8xf32> to vector<8x1xf32>
    %cst_70 = arith.constant 3.200000e+01 : f32
    %116 = vector.broadcast %cst_70 : f32 to vector<8x1xf32>
    %117 = arith.divf %115, %116 : vector<8x1xf32>
    %118 = vector.broadcast %110 : vector<8x1xf32> to vector<8x32xf32>
    %119 = arith.subf %106, %118 : vector<8x32xf32>
    %cst_71 = arith.constant 9.99999974E-6 : f32
    %120 = vector.broadcast %cst_71 : f32 to vector<8x1xf32>
    %121 = arith.addf %117, %120 : vector<8x1xf32>
    %122 = math.rsqrt %121 : vector<8x1xf32>
    %123 = vector.broadcast %122 : vector<8x1xf32> to vector<8x32xf32>
    %124 = arith.mulf %119, %123 : vector<8x32xf32>
    %125 = vector.broadcast %16 : vector<1x32xf32> to vector<8x32xf32>
    %126 = arith.mulf %124, %125 : vector<8x32xf32>
    %127 = vector.broadcast %17 : vector<1x32xf32> to vector<8x32xf32>
    %128 = arith.addf %126, %127 : vector<8x32xf32>
    %cst_72 = arith.constant dense<0.000000e+00> : vector<8x32xf32>
    %129 = tpu.matmul %128, %8, %cst_72 {dimension_numbers = #tpu.dot_dimension_numbers<[1], [0], [0], [1], [0, 0, 1, 1], [], []>} : vector<8x32xf32>, vector<32x32xf32>, vector<8x32xf32> -> vector<8x32xf32>
    %130 = vector.broadcast %9 : vector<1x32xf32> to vector<8x32xf32>
    %131 = arith.addf %129, %130 : vector<8x32xf32>
    %cst_73 = arith.constant 0.000000e+00 : f32
    %132 = vector.broadcast %cst_73 : f32 to vector<8x32xf32>
    %133 = vector.extract_strided_slice %131 {offsets = [0, 0], sizes = [8, 8], strides = [1, 1]} : vector<8x32xf32> to vector<8x8xf32>
    %134 = vector.extract_strided_slice %27 {offsets = [0, 0], sizes = [16, 8], strides = [1, 1]} : vector<16x32xf32> to vector<16x8xf32>
    %cst_74 = arith.constant dense<0.000000e+00> : vector<8x16xf32>
    %135 = tpu.matmul %133, %134, %cst_74 {dimension_numbers = #tpu.dot_dimension_numbers<[1], [1], [0], [0], [0, 0, 1, 0], [], []>} : vector<8x8xf32>, vector<16x8xf32>, vector<8x16xf32> -> vector<8x16xf32>
    %cst_75 = arith.constant dense<0xFF800000> : vector<8xf32>
    %136 = vector.multi_reduction <maximumf>, %135, %cst_75 [1] : vector<8x16xf32> to vector<8xf32>
    %137 = vector.shape_cast %136 : vector<8xf32> to vector<8x1xf32>
    %138 = vector.broadcast %137 : vector<8x1xf32> to vector<8x16xf32>
    %139 = arith.subf %135, %138 : vector<8x16xf32>
    %140 = math.exp %139 : vector<8x16xf32>
    %cst_76 = arith.constant dense<0.000000e+00> : vector<8xf32>
    %141 = vector.multi_reduction <add>, %140, %cst_76 [1] : vector<8x16xf32> to vector<8xf32>
    %142 = vector.shape_cast %141 : vector<8xf32> to vector<8x1xf32>
    %143 = vector.broadcast %142 : vector<8x1xf32> to vector<8x16xf32>
    %144 = arith.divf %140, %143 : vector<8x16xf32>
    %145 = vector.extract_strided_slice %28 {offsets = [0, 0], sizes = [16, 8], strides = [1, 1]} : vector<16x32xf32> to vector<16x8xf32>
    %cst_77 = arith.constant dense<0.000000e+00> : vector<8x8xf32>
    %146 = tpu.matmul %144, %145, %cst_77 {dimension_numbers = #tpu.dot_dimension_numbers<[1], [0], [0], [1], [0, 0, 1, 1], [], []>} : vector<8x16xf32>, vector<16x8xf32>, vector<8x8xf32> -> vector<8x8xf32>
    %147 = vector.extract_strided_slice %10 {offsets = [0, 0], sizes = [8, 32], strides = [1, 1]} : vector<32x32xf32> to vector<8x32xf32>
    %cst_78 = arith.constant dense<0.000000e+00> : vector<8x32xf32>
    %148 = tpu.matmul %146, %147, %cst_78 {dimension_numbers = #tpu.dot_dimension_numbers<[1], [0], [0], [1], [0, 0, 1, 1], [], []>} : vector<8x8xf32>, vector<8x32xf32>, vector<8x32xf32> -> vector<8x32xf32>
    %149 = arith.addf %132, %148 : vector<8x32xf32>
    %150 = vector.extract_strided_slice %131 {offsets = [0, 8], sizes = [8, 8], strides = [1, 1]} : vector<8x32xf32> to vector<8x8xf32>
    %151 = vector.extract_strided_slice %27 {offsets = [0, 8], sizes = [16, 8], strides = [1, 1]} : vector<16x32xf32> to vector<16x8xf32>
    %cst_79 = arith.constant dense<0.000000e+00> : vector<8x16xf32>
    %152 = tpu.matmul %150, %151, %cst_79 {dimension_numbers = #tpu.dot_dimension_numbers<[1], [1], [0], [0], [0, 0, 1, 0], [], []>} : vector<8x8xf32>, vector<16x8xf32>, vector<8x16xf32> -> vector<8x16xf32>
    %cst_80 = arith.constant dense<0xFF800000> : vector<8xf32>
    %153 = vector.multi_reduction <maximumf>, %152, %cst_80 [1] : vector<8x16xf32> to vector<8xf32>
    %154 = vector.shape_cast %153 : vector<8xf32> to vector<8x1xf32>
    %155 = vector.broadcast %154 : vector<8x1xf32> to vector<8x16xf32>
    %156 = arith.subf %152, %155 : vector<8x16xf32>
    %157 = math.exp %156 : vector<8x16xf32>
    %cst_81 = arith.constant dense<0.000000e+00> : vector<8xf32>
    %158 = vector.multi_reduction <add>, %157, %cst_81 [1] : vector<8x16xf32> to vector<8xf32>
    %159 = vector.shape_cast %158 : vector<8xf32> to vector<8x1xf32>
    %160 = vector.broadcast %159 : vector<8x1xf32> to vector<8x16xf32>
    %161 = arith.divf %157, %160 : vector<8x16xf32>
    %162 = vector.extract_strided_slice %28 {offsets = [0, 8], sizes = [16, 8], strides = [1, 1]} : vector<16x32xf32> to vector<16x8xf32>
    %cst_82 = arith.constant dense<0.000000e+00> : vector<8x8xf32>
    %163 = tpu.matmul %161, %162, %cst_82 {dimension_numbers = #tpu.dot_dimension_numbers<[1], [0], [0], [1], [0, 0, 1, 1], [], []>} : vector<8x16xf32>, vector<16x8xf32>, vector<8x8xf32> -> vector<8x8xf32>
    %164 = vector.extract_strided_slice %10 {offsets = [8, 0], sizes = [8, 32], strides = [1, 1]} : vector<32x32xf32> to vector<8x32xf32>
    %cst_83 = arith.constant dense<0.000000e+00> : vector<8x32xf32>
    %165 = tpu.matmul %163, %164, %cst_83 {dimension_numbers = #tpu.dot_dimension_numbers<[1], [0], [0], [1], [0, 0, 1, 1], [], []>} : vector<8x8xf32>, vector<8x32xf32>, vector<8x32xf32> -> vector<8x32xf32>
    %166 = arith.addf %149, %165 : vector<8x32xf32>
    %167 = vector.extract_strided_slice %131 {offsets = [0, 16], sizes = [8, 8], strides = [1, 1]} : vector<8x32xf32> to vector<8x8xf32>
    %168 = vector.extract_strided_slice %27 {offsets = [0, 16], sizes = [16, 8], strides = [1, 1]} : vector<16x32xf32> to vector<16x8xf32>
    %cst_84 = arith.constant dense<0.000000e+00> : vector<8x16xf32>
    %169 = tpu.matmul %167, %168, %cst_84 {dimension_numbers = #tpu.dot_dimension_numbers<[1], [1], [0], [0], [0, 0, 1, 0], [], []>} : vector<8x8xf32>, vector<16x8xf32>, vector<8x16xf32> -> vector<8x16xf32>
    %cst_85 = arith.constant dense<0xFF800000> : vector<8xf32>
    %170 = vector.multi_reduction <maximumf>, %169, %cst_85 [1] : vector<8x16xf32> to vector<8xf32>
    %171 = vector.shape_cast %170 : vector<8xf32> to vector<8x1xf32>
    %172 = vector.broadcast %171 : vector<8x1xf32> to vector<8x16xf32>
    %173 = arith.subf %169, %172 : vector<8x16xf32>
    %174 = math.exp %173 : vector<8x16xf32>
    %cst_86 = arith.constant dense<0.000000e+00> : vector<8xf32>
    %175 = vector.multi_reduction <add>, %174, %cst_86 [1] : vector<8x16xf32> to vector<8xf32>
    %176 = vector.shape_cast %175 : vector<8xf32> to vector<8x1xf32>
    %177 = vector.broadcast %176 : vector<8x1xf32> to vector<8x16xf32>
    %178 = arith.divf %174, %177 : vector<8x16xf32>
    %179 = vector.extract_strided_slice %28 {offsets = [0, 16], sizes = [16, 8], strides = [1, 1]} : vector<16x32xf32> to vector<16x8xf32>
    %cst_87 = arith.constant dense<0.000000e+00> : vector<8x8xf32>
    %180 = tpu.matmul %178, %179, %cst_87 {dimension_numbers = #tpu.dot_dimension_numbers<[1], [0], [0], [1], [0, 0, 1, 1], [], []>} : vector<8x16xf32>, vector<16x8xf32>, vector<8x8xf32> -> vector<8x8xf32>
    %181 = vector.extract_strided_slice %10 {offsets = [16, 0], sizes = [8, 32], strides = [1, 1]} : vector<32x32xf32> to vector<8x32xf32>
    %cst_88 = arith.constant dense<0.000000e+00> : vector<8x32xf32>
    %182 = tpu.matmul %180, %181, %cst_88 {dimension_numbers = #tpu.dot_dimension_numbers<[1], [0], [0], [1], [0, 0, 1, 1], [], []>} : vector<8x8xf32>, vector<8x32xf32>, vector<8x32xf32> -> vector<8x32xf32>
    %183 = arith.addf %166, %182 : vector<8x32xf32>
    %184 = vector.extract_strided_slice %131 {offsets = [0, 24], sizes = [8, 8], strides = [1, 1]} : vector<8x32xf32> to vector<8x8xf32>
    %185 = vector.extract_strided_slice %27 {offsets = [0, 24], sizes = [16, 8], strides = [1, 1]} : vector<16x32xf32> to vector<16x8xf32>
    %cst_89 = arith.constant dense<0.000000e+00> : vector<8x16xf32>
    %186 = tpu.matmul %184, %185, %cst_89 {dimension_numbers = #tpu.dot_dimension_numbers<[1], [1], [0], [0], [0, 0, 1, 0], [], []>} : vector<8x8xf32>, vector<16x8xf32>, vector<8x16xf32> -> vector<8x16xf32>
    %cst_90 = arith.constant dense<0xFF800000> : vector<8xf32>
    %187 = vector.multi_reduction <maximumf>, %186, %cst_90 [1] : vector<8x16xf32> to vector<8xf32>
    %188 = vector.shape_cast %187 : vector<8xf32> to vector<8x1xf32>
    %189 = vector.broadcast %188 : vector<8x1xf32> to vector<8x16xf32>
    %190 = arith.subf %186, %189 : vector<8x16xf32>
    %191 = math.exp %190 : vector<8x16xf32>
    %cst_91 = arith.constant dense<0.000000e+00> : vector<8xf32>
    %192 = vector.multi_reduction <add>, %191, %cst_91 [1] : vector<8x16xf32> to vector<8xf32>
    %193 = vector.shape_cast %192 : vector<8xf32> to vector<8x1xf32>
    %194 = vector.broadcast %193 : vector<8x1xf32> to vector<8x16xf32>
    %195 = arith.divf %191, %194 : vector<8x16xf32>
    %196 = vector.extract_strided_slice %28 {offsets = [0, 24], sizes = [16, 8], strides = [1, 1]} : vector<16x32xf32> to vector<16x8xf32>
    %cst_92 = arith.constant dense<0.000000e+00> : vector<8x8xf32>
    %197 = tpu.matmul %195, %196, %cst_92 {dimension_numbers = #tpu.dot_dimension_numbers<[1], [0], [0], [1], [0, 0, 1, 1], [], []>} : vector<8x16xf32>, vector<16x8xf32>, vector<8x8xf32> -> vector<8x8xf32>
    %198 = vector.extract_strided_slice %10 {offsets = [24, 0], sizes = [8, 32], strides = [1, 1]} : vector<32x32xf32> to vector<8x32xf32>
    %cst_93 = arith.constant dense<0.000000e+00> : vector<8x32xf32>
    %199 = tpu.matmul %197, %198, %cst_93 {dimension_numbers = #tpu.dot_dimension_numbers<[1], [0], [0], [1], [0, 0, 1, 1], [], []>} : vector<8x8xf32>, vector<8x32xf32>, vector<8x32xf32> -> vector<8x32xf32>
    %200 = arith.addf %183, %199 : vector<8x32xf32>
    %201 = vector.broadcast %11 : vector<1x32xf32> to vector<8x32xf32>
    %202 = arith.addf %200, %201 : vector<8x32xf32>
    %203 = arith.addf %128, %202 : vector<8x32xf32>
    %cst_94 = arith.constant dense<0.000000e+00> : vector<8xf32>
    %204 = vector.multi_reduction <add>, %203, %cst_94 [1] : vector<8x32xf32> to vector<8xf32>
    %205 = vector.shape_cast %204 : vector<8xf32> to vector<8x1xf32>
    %cst_95 = arith.constant 3.200000e+01 : f32
    %206 = vector.broadcast %cst_95 : f32 to vector<8x1xf32>
    %207 = arith.divf %205, %206 : vector<8x1xf32>
    %208 = vector.broadcast %207 : vector<8x1xf32> to vector<8x32xf32>
    %209 = arith.subf %203, %208 : vector<8x32xf32>
    %210 = arith.mulf %209, %209 : vector<8x32xf32>
    %cst_96 = arith.constant dense<0.000000e+00> : vector<8xf32>
    %211 = vector.multi_reduction <add>, %210, %cst_96 [1] : vector<8x32xf32> to vector<8xf32>
    %212 = vector.shape_cast %211 : vector<8xf32> to vector<8x1xf32>
    %cst_97 = arith.constant 3.200000e+01 : f32
    %213 = vector.broadcast %cst_97 : f32 to vector<8x1xf32>
    %214 = arith.divf %212, %213 : vector<8x1xf32>
    %215 = vector.broadcast %207 : vector<8x1xf32> to vector<8x32xf32>
    %216 = arith.subf %203, %215 : vector<8x32xf32>
    %cst_98 = arith.constant 9.99999974E-6 : f32
    %217 = vector.broadcast %cst_98 : f32 to vector<8x1xf32>
    %218 = arith.addf %214, %217 : vector<8x1xf32>
    %219 = math.rsqrt %218 : vector<8x1xf32>
    %220 = vector.broadcast %219 : vector<8x1xf32> to vector<8x32xf32>
    %221 = arith.mulf %216, %220 : vector<8x32xf32>
    %222 = vector.broadcast %18 : vector<1x32xf32> to vector<8x32xf32>
    %223 = arith.mulf %221, %222 : vector<8x32xf32>
    %224 = vector.broadcast %19 : vector<1x32xf32> to vector<8x32xf32>
    %225 = arith.addf %223, %224 : vector<8x32xf32>
    %cst_99 = arith.constant dense<0.000000e+00> : vector<8x64xf32>
    %226 = tpu.matmul %225, %12, %cst_99 {dimension_numbers = #tpu.dot_dimension_numbers<[1], [0], [0], [1], [0, 0, 1, 1], [], []>} : vector<8x32xf32>, vector<32x64xf32>, vector<8x64xf32> -> vector<8x64xf32>
    %227 = vector.broadcast %13 : vector<1x64xf32> to vector<8x64xf32>
    %228 = arith.addf %226, %227 : vector<8x64xf32>
    %cst_100 = arith.constant 0.000000e+00 : f32
    %229 = vector.broadcast %cst_100 : f32 to vector<8x64xf32>
    %230 = arith.maximumf %228, %229 : vector<8x64xf32>
    %cst_101 = arith.constant dense<0.000000e+00> : vector<8x32xf32>
    %231 = tpu.matmul %230, %14, %cst_101 {dimension_numbers = #tpu.dot_dimension_numbers<[1], [0], [0], [1], [0, 0, 1, 1], [], []>} : vector<8x64xf32>, vector<64x32xf32>, vector<8x32xf32> -> vector<8x32xf32>
    %232 = vector.broadcast %15 : vector<1x32xf32> to vector<8x32xf32>
    %233 = arith.addf %231, %232 : vector<8x32xf32>
    %234 = arith.addf %225, %233 : vector<8x32xf32>
    %cst_102 = arith.constant dense<0.000000e+00> : vector<8xf32>
    %235 = vector.multi_reduction <add>, %234, %cst_102 [1] : vector<8x32xf32> to vector<8xf32>
    %236 = vector.shape_cast %235 : vector<8xf32> to vector<8x1xf32>
    %cst_103 = arith.constant 3.200000e+01 : f32
    %237 = vector.broadcast %cst_103 : f32 to vector<8x1xf32>
    %238 = arith.divf %236, %237 : vector<8x1xf32>
    %239 = vector.broadcast %238 : vector<8x1xf32> to vector<8x32xf32>
    %240 = arith.subf %234, %239 : vector<8x32xf32>
    %241 = arith.mulf %240, %240 : vector<8x32xf32>
    %cst_104 = arith.constant dense<0.000000e+00> : vector<8xf32>
    %242 = vector.multi_reduction <add>, %241, %cst_104 [1] : vector<8x32xf32> to vector<8xf32>
    %243 = vector.shape_cast %242 : vector<8xf32> to vector<8x1xf32>
    %cst_105 = arith.constant 3.200000e+01 : f32
    %244 = vector.broadcast %cst_105 : f32 to vector<8x1xf32>
    %245 = arith.divf %243, %244 : vector<8x1xf32>
    %246 = vector.broadcast %238 : vector<8x1xf32> to vector<8x32xf32>
    %247 = arith.subf %234, %246 : vector<8x32xf32>
    %cst_106 = arith.constant 9.99999974E-6 : f32
    %248 = vector.broadcast %cst_106 : f32 to vector<8x1xf32>
    %249 = arith.addf %245, %248 : vector<8x1xf32>
    %250 = math.rsqrt %249 : vector<8x1xf32>
    %251 = vector.broadcast %250 : vector<8x1xf32> to vector<8x32xf32>
    %252 = arith.mulf %247, %251 : vector<8x32xf32>
    %253 = vector.broadcast %20 : vector<1x32xf32> to vector<8x32xf32>
    %254 = arith.mulf %252, %253 : vector<8x32xf32>
    %255 = vector.broadcast %21 : vector<1x32xf32> to vector<8x32xf32>
    %256 = arith.addf %254, %255 : vector<8x32xf32>
    %cst_107 = arith.constant dense<0.000000e+00> : vector<8x96xf32>
    %257 = tpu.matmul %256, %4, %cst_107 {dimension_numbers = #tpu.dot_dimension_numbers<[1], [0], [0], [1], [0, 0, 1, 1], [], []>} : vector<8x32xf32>, vector<32x96xf32>, vector<8x96xf32> -> vector<8x96xf32>
    %258 = vector.broadcast %5 : vector<1x96xf32> to vector<8x96xf32>
    %259 = arith.addf %257, %258 : vector<8x96xf32>
    %260 = vector.extract_strided_slice %259 {offsets = [0, 0], sizes = [8, 32], strides = [1, 1]} : vector<8x96xf32> to vector<8x32xf32>
    %261 = vector.extract_strided_slice %259 {offsets = [0, 32], sizes = [8, 32], strides = [1, 1]} : vector<8x96xf32> to vector<8x32xf32>
    %262 = vector.extract_strided_slice %259 {offsets = [0, 64], sizes = [8, 32], strides = [1, 1]} : vector<8x96xf32> to vector<8x32xf32>
    %cst_108 = arith.constant 0.000000e+00 : f32
    %263 = vector.broadcast %cst_108 : f32 to vector<8x32xf32>
    %264 = vector.extract_strided_slice %260 {offsets = [0, 0], sizes = [8, 8], strides = [1, 1]} : vector<8x32xf32> to vector<8x8xf32>
    %265 = vector.extract_strided_slice %261 {offsets = [0, 0], sizes = [8, 8], strides = [1, 1]} : vector<8x32xf32> to vector<8x8xf32>
    %cst_109 = arith.constant dense<0.000000e+00> : vector<8x8xf32>
    %266 = tpu.matmul %264, %265, %cst_109 {dimension_numbers = #tpu.dot_dimension_numbers<[1], [1], [0], [0], [0, 0, 1, 0], [], []>} : vector<8x8xf32>, vector<8x8xf32>, vector<8x8xf32> -> vector<8x8xf32>
    %cst_110 = arith.constant dense<0xFF800000> : vector<8xf32>
    %267 = vector.multi_reduction <maximumf>, %266, %cst_110 [1] : vector<8x8xf32> to vector<8xf32>
    %268 = vector.shape_cast %267 : vector<8xf32> to vector<8x1xf32>
    %269 = vector.broadcast %268 : vector<8x1xf32> to vector<8x8xf32>
    %270 = arith.subf %266, %269 : vector<8x8xf32>
    %271 = math.exp %270 : vector<8x8xf32>
    %cst_111 = arith.constant dense<0.000000e+00> : vector<8xf32>
    %272 = vector.multi_reduction <add>, %271, %cst_111 [1] : vector<8x8xf32> to vector<8xf32>
    %273 = vector.shape_cast %272 : vector<8xf32> to vector<8x1xf32>
    %274 = vector.broadcast %273 : vector<8x1xf32> to vector<8x8xf32>
    %275 = arith.divf %271, %274 : vector<8x8xf32>
    %276 = vector.extract_strided_slice %262 {offsets = [0, 0], sizes = [8, 8], strides = [1, 1]} : vector<8x32xf32> to vector<8x8xf32>
    %cst_112 = arith.constant dense<0.000000e+00> : vector<8x8xf32>
    %277 = tpu.matmul %275, %276, %cst_112 {dimension_numbers = #tpu.dot_dimension_numbers<[1], [0], [0], [1], [0, 0, 1, 1], [], []>} : vector<8x8xf32>, vector<8x8xf32>, vector<8x8xf32> -> vector<8x8xf32>
    %278 = vector.extract_strided_slice %6 {offsets = [0, 0], sizes = [8, 32], strides = [1, 1]} : vector<32x32xf32> to vector<8x32xf32>
    %cst_113 = arith.constant dense<0.000000e+00> : vector<8x32xf32>
    %279 = tpu.matmul %277, %278, %cst_113 {dimension_numbers = #tpu.dot_dimension_numbers<[1], [0], [0], [1], [0, 0, 1, 1], [], []>} : vector<8x8xf32>, vector<8x32xf32>, vector<8x32xf32> -> vector<8x32xf32>
    %280 = arith.addf %263, %279 : vector<8x32xf32>
    %281 = vector.extract_strided_slice %260 {offsets = [0, 8], sizes = [8, 8], strides = [1, 1]} : vector<8x32xf32> to vector<8x8xf32>
    %282 = vector.extract_strided_slice %261 {offsets = [0, 8], sizes = [8, 8], strides = [1, 1]} : vector<8x32xf32> to vector<8x8xf32>
    %cst_114 = arith.constant dense<0.000000e+00> : vector<8x8xf32>
    %283 = tpu.matmul %281, %282, %cst_114 {dimension_numbers = #tpu.dot_dimension_numbers<[1], [1], [0], [0], [0, 0, 1, 0], [], []>} : vector<8x8xf32>, vector<8x8xf32>, vector<8x8xf32> -> vector<8x8xf32>
    %cst_115 = arith.constant dense<0xFF800000> : vector<8xf32>
    %284 = vector.multi_reduction <maximumf>, %283, %cst_115 [1] : vector<8x8xf32> to vector<8xf32>
    %285 = vector.shape_cast %284 : vector<8xf32> to vector<8x1xf32>
    %286 = vector.broadcast %285 : vector<8x1xf32> to vector<8x8xf32>
    %287 = arith.subf %283, %286 : vector<8x8xf32>
    %288 = math.exp %287 : vector<8x8xf32>
    %cst_116 = arith.constant dense<0.000000e+00> : vector<8xf32>
    %289 = vector.multi_reduction <add>, %288, %cst_116 [1] : vector<8x8xf32> to vector<8xf32>
    %290 = vector.shape_cast %289 : vector<8xf32> to vector<8x1xf32>
    %291 = vector.broadcast %290 : vector<8x1xf32> to vector<8x8xf32>
    %292 = arith.divf %288, %291 : vector<8x8xf32>
    %293 = vector.extract_strided_slice %262 {offsets = [0, 8], sizes = [8, 8], strides = [1, 1]} : vector<8x32xf32> to vector<8x8xf32>
    %cst_117 = arith.constant dense<0.000000e+00> : vector<8x8xf32>
    %294 = tpu.matmul %292, %293, %cst_117 {dimension_numbers = #tpu.dot_dimension_numbers<[1], [0], [0], [1], [0, 0, 1, 1], [], []>} : vector<8x8xf32>, vector<8x8xf32>, vector<8x8xf32> -> vector<8x8xf32>
    %295 = vector.extract_strided_slice %6 {offsets = [8, 0], sizes = [8, 32], strides = [1, 1]} : vector<32x32xf32> to vector<8x32xf32>
    %cst_118 = arith.constant dense<0.000000e+00> : vector<8x32xf32>
    %296 = tpu.matmul %294, %295, %cst_118 {dimension_numbers = #tpu.dot_dimension_numbers<[1], [0], [0], [1], [0, 0, 1, 1], [], []>} : vector<8x8xf32>, vector<8x32xf32>, vector<8x32xf32> -> vector<8x32xf32>
    %297 = arith.addf %280, %296 : vector<8x32xf32>
    %298 = vector.extract_strided_slice %260 {offsets = [0, 16], sizes = [8, 8], strides = [1, 1]} : vector<8x32xf32> to vector<8x8xf32>
    %299 = vector.extract_strided_slice %261 {offsets = [0, 16], sizes = [8, 8], strides = [1, 1]} : vector<8x32xf32> to vector<8x8xf32>
    %cst_119 = arith.constant dense<0.000000e+00> : vector<8x8xf32>
    %300 = tpu.matmul %298, %299, %cst_119 {dimension_numbers = #tpu.dot_dimension_numbers<[1], [1], [0], [0], [0, 0, 1, 0], [], []>} : vector<8x8xf32>, vector<8x8xf32>, vector<8x8xf32> -> vector<8x8xf32>
    %cst_120 = arith.constant dense<0xFF800000> : vector<8xf32>
    %301 = vector.multi_reduction <maximumf>, %300, %cst_120 [1] : vector<8x8xf32> to vector<8xf32>
    %302 = vector.shape_cast %301 : vector<8xf32> to vector<8x1xf32>
    %303 = vector.broadcast %302 : vector<8x1xf32> to vector<8x8xf32>
    %304 = arith.subf %300, %303 : vector<8x8xf32>
    %305 = math.exp %304 : vector<8x8xf32>
    %cst_121 = arith.constant dense<0.000000e+00> : vector<8xf32>
    %306 = vector.multi_reduction <add>, %305, %cst_121 [1] : vector<8x8xf32> to vector<8xf32>
    %307 = vector.shape_cast %306 : vector<8xf32> to vector<8x1xf32>
    %308 = vector.broadcast %307 : vector<8x1xf32> to vector<8x8xf32>
    %309 = arith.divf %305, %308 : vector<8x8xf32>
    %310 = vector.extract_strided_slice %262 {offsets = [0, 16], sizes = [8, 8], strides = [1, 1]} : vector<8x32xf32> to vector<8x8xf32>
    %cst_122 = arith.constant dense<0.000000e+00> : vector<8x8xf32>
    %311 = tpu.matmul %309, %310, %cst_122 {dimension_numbers = #tpu.dot_dimension_numbers<[1], [0], [0], [1], [0, 0, 1, 1], [], []>} : vector<8x8xf32>, vector<8x8xf32>, vector<8x8xf32> -> vector<8x8xf32>
    %312 = vector.extract_strided_slice %6 {offsets = [16, 0], sizes = [8, 32], strides = [1, 1]} : vector<32x32xf32> to vector<8x32xf32>
    %cst_123 = arith.constant dense<0.000000e+00> : vector<8x32xf32>
    %313 = tpu.matmul %311, %312, %cst_123 {dimension_numbers = #tpu.dot_dimension_numbers<[1], [0], [0], [1], [0, 0, 1, 1], [], []>} : vector<8x8xf32>, vector<8x32xf32>, vector<8x32xf32> -> vector<8x32xf32>
    %314 = arith.addf %297, %313 : vector<8x32xf32>
    %315 = vector.extract_strided_slice %260 {offsets = [0, 24], sizes = [8, 8], strides = [1, 1]} : vector<8x32xf32> to vector<8x8xf32>
    %316 = vector.extract_strided_slice %261 {offsets = [0, 24], sizes = [8, 8], strides = [1, 1]} : vector<8x32xf32> to vector<8x8xf32>
    %cst_124 = arith.constant dense<0.000000e+00> : vector<8x8xf32>
    %317 = tpu.matmul %315, %316, %cst_124 {dimension_numbers = #tpu.dot_dimension_numbers<[1], [1], [0], [0], [0, 0, 1, 0], [], []>} : vector<8x8xf32>, vector<8x8xf32>, vector<8x8xf32> -> vector<8x8xf32>
    %cst_125 = arith.constant dense<0xFF800000> : vector<8xf32>
    %318 = vector.multi_reduction <maximumf>, %317, %cst_125 [1] : vector<8x8xf32> to vector<8xf32>
    %319 = vector.shape_cast %318 : vector<8xf32> to vector<8x1xf32>
    %320 = vector.broadcast %319 : vector<8x1xf32> to vector<8x8xf32>
    %321 = arith.subf %317, %320 : vector<8x8xf32>
    %322 = math.exp %321 : vector<8x8xf32>
    %cst_126 = arith.constant dense<0.000000e+00> : vector<8xf32>
    %323 = vector.multi_reduction <add>, %322, %cst_126 [1] : vector<8x8xf32> to vector<8xf32>
    %324 = vector.shape_cast %323 : vector<8xf32> to vector<8x1xf32>
    %325 = vector.broadcast %324 : vector<8x1xf32> to vector<8x8xf32>
    %326 = arith.divf %322, %325 : vector<8x8xf32>
    %327 = vector.extract_strided_slice %262 {offsets = [0, 24], sizes = [8, 8], strides = [1, 1]} : vector<8x32xf32> to vector<8x8xf32>
    %cst_127 = arith.constant dense<0.000000e+00> : vector<8x8xf32>
    %328 = tpu.matmul %326, %327, %cst_127 {dimension_numbers = #tpu.dot_dimension_numbers<[1], [0], [0], [1], [0, 0, 1, 1], [], []>} : vector<8x8xf32>, vector<8x8xf32>, vector<8x8xf32> -> vector<8x8xf32>
    %329 = vector.extract_strided_slice %6 {offsets = [24, 0], sizes = [8, 32], strides = [1, 1]} : vector<32x32xf32> to vector<8x32xf32>
    %cst_128 = arith.constant dense<0.000000e+00> : vector<8x32xf32>
    %330 = tpu.matmul %328, %329, %cst_128 {dimension_numbers = #tpu.dot_dimension_numbers<[1], [0], [0], [1], [0, 0, 1, 1], [], []>} : vector<8x8xf32>, vector<8x32xf32>, vector<8x32xf32> -> vector<8x32xf32>
    %331 = arith.addf %314, %330 : vector<8x32xf32>
    %332 = vector.broadcast %7 : vector<1x32xf32> to vector<8x32xf32>
    %333 = arith.addf %331, %332 : vector<8x32xf32>
    %334 = arith.addf %256, %333 : vector<8x32xf32>
    %cst_129 = arith.constant dense<0.000000e+00> : vector<8xf32>
    %335 = vector.multi_reduction <add>, %334, %cst_129 [1] : vector<8x32xf32> to vector<8xf32>
    %336 = vector.shape_cast %335 : vector<8xf32> to vector<8x1xf32>
    %cst_130 = arith.constant 3.200000e+01 : f32
    %337 = vector.broadcast %cst_130 : f32 to vector<8x1xf32>
    %338 = arith.divf %336, %337 : vector<8x1xf32>
    %339 = vector.broadcast %338 : vector<8x1xf32> to vector<8x32xf32>
    %340 = arith.subf %334, %339 : vector<8x32xf32>
    %341 = arith.mulf %340, %340 : vector<8x32xf32>
    %cst_131 = arith.constant dense<0.000000e+00> : vector<8xf32>
    %342 = vector.multi_reduction <add>, %341, %cst_131 [1] : vector<8x32xf32> to vector<8xf32>
    %343 = vector.shape_cast %342 : vector<8xf32> to vector<8x1xf32>
    %cst_132 = arith.constant 3.200000e+01 : f32
    %344 = vector.broadcast %cst_132 : f32 to vector<8x1xf32>
    %345 = arith.divf %343, %344 : vector<8x1xf32>
    %346 = vector.broadcast %338 : vector<8x1xf32> to vector<8x32xf32>
    %347 = arith.subf %334, %346 : vector<8x32xf32>
    %cst_133 = arith.constant 9.99999974E-6 : f32
    %348 = vector.broadcast %cst_133 : f32 to vector<8x1xf32>
    %349 = arith.addf %345, %348 : vector<8x1xf32>
    %350 = math.rsqrt %349 : vector<8x1xf32>
    %351 = vector.broadcast %350 : vector<8x1xf32> to vector<8x32xf32>
    %352 = arith.mulf %347, %351 : vector<8x32xf32>
    %353 = vector.broadcast %16 : vector<1x32xf32> to vector<8x32xf32>
    %354 = arith.mulf %352, %353 : vector<8x32xf32>
    %355 = vector.broadcast %17 : vector<1x32xf32> to vector<8x32xf32>
    %356 = arith.addf %354, %355 : vector<8x32xf32>
    %cst_134 = arith.constant dense<0.000000e+00> : vector<8x32xf32>
    %357 = tpu.matmul %356, %8, %cst_134 {dimension_numbers = #tpu.dot_dimension_numbers<[1], [0], [0], [1], [0, 0, 1, 1], [], []>} : vector<8x32xf32>, vector<32x32xf32>, vector<8x32xf32> -> vector<8x32xf32>
    %358 = vector.broadcast %9 : vector<1x32xf32> to vector<8x32xf32>
    %359 = arith.addf %357, %358 : vector<8x32xf32>
    %cst_135 = arith.constant 0.000000e+00 : f32
    %360 = vector.broadcast %cst_135 : f32 to vector<8x32xf32>
    %361 = vector.extract_strided_slice %359 {offsets = [0, 0], sizes = [8, 8], strides = [1, 1]} : vector<8x32xf32> to vector<8x8xf32>
    %362 = vector.extract_strided_slice %27 {offsets = [0, 0], sizes = [16, 8], strides = [1, 1]} : vector<16x32xf32> to vector<16x8xf32>
    %cst_136 = arith.constant dense<0.000000e+00> : vector<8x16xf32>
    %363 = tpu.matmul %361, %362, %cst_136 {dimension_numbers = #tpu.dot_dimension_numbers<[1], [1], [0], [0], [0, 0, 1, 0], [], []>} : vector<8x8xf32>, vector<16x8xf32>, vector<8x16xf32> -> vector<8x16xf32>
    %cst_137 = arith.constant dense<0xFF800000> : vector<8xf32>
    %364 = vector.multi_reduction <maximumf>, %363, %cst_137 [1] : vector<8x16xf32> to vector<8xf32>
    %365 = vector.shape_cast %364 : vector<8xf32> to vector<8x1xf32>
    %366 = vector.broadcast %365 : vector<8x1xf32> to vector<8x16xf32>
    %367 = arith.subf %363, %366 : vector<8x16xf32>
    %368 = math.exp %367 : vector<8x16xf32>
    %cst_138 = arith.constant dense<0.000000e+00> : vector<8xf32>
    %369 = vector.multi_reduction <add>, %368, %cst_138 [1] : vector<8x16xf32> to vector<8xf32>
    %370 = vector.shape_cast %369 : vector<8xf32> to vector<8x1xf32>
    %371 = vector.broadcast %370 : vector<8x1xf32> to vector<8x16xf32>
    %372 = arith.divf %368, %371 : vector<8x16xf32>
    %373 = vector.extract_strided_slice %28 {offsets = [0, 0], sizes = [16, 8], strides = [1, 1]} : vector<16x32xf32> to vector<16x8xf32>
    %cst_139 = arith.constant dense<0.000000e+00> : vector<8x8xf32>
    %374 = tpu.matmul %372, %373, %cst_139 {dimension_numbers = #tpu.dot_dimension_numbers<[1], [0], [0], [1], [0, 0, 1, 1], [], []>} : vector<8x16xf32>, vector<16x8xf32>, vector<8x8xf32> -> vector<8x8xf32>
    %375 = vector.extract_strided_slice %10 {offsets = [0, 0], sizes = [8, 32], strides = [1, 1]} : vector<32x32xf32> to vector<8x32xf32>
    %cst_140 = arith.constant dense<0.000000e+00> : vector<8x32xf32>
    %376 = tpu.matmul %374, %375, %cst_140 {dimension_numbers = #tpu.dot_dimension_numbers<[1], [0], [0], [1], [0, 0, 1, 1], [], []>} : vector<8x8xf32>, vector<8x32xf32>, vector<8x32xf32> -> vector<8x32xf32>
    %377 = arith.addf %360, %376 : vector<8x32xf32>
    %378 = vector.extract_strided_slice %359 {offsets = [0, 8], sizes = [8, 8], strides = [1, 1]} : vector<8x32xf32> to vector<8x8xf32>
    %379 = vector.extract_strided_slice %27 {offsets = [0, 8], sizes = [16, 8], strides = [1, 1]} : vector<16x32xf32> to vector<16x8xf32>
    %cst_141 = arith.constant dense<0.000000e+00> : vector<8x16xf32>
    %380 = tpu.matmul %378, %379, %cst_141 {dimension_numbers = #tpu.dot_dimension_numbers<[1], [1], [0], [0], [0, 0, 1, 0], [], []>} : vector<8x8xf32>, vector<16x8xf32>, vector<8x16xf32> -> vector<8x16xf32>
    %cst_142 = arith.constant dense<0xFF800000> : vector<8xf32>
    %381 = vector.multi_reduction <maximumf>, %380, %cst_142 [1] : vector<8x16xf32> to vector<8xf32>
    %382 = vector.shape_cast %381 : vector<8xf32> to vector<8x1xf32>
    %383 = vector.broadcast %382 : vector<8x1xf32> to vector<8x16xf32>
    %384 = arith.subf %380, %383 : vector<8x16xf32>
    %385 = math.exp %384 : vector<8x16xf32>
    %cst_143 = arith.constant dense<0.000000e+00> : vector<8xf32>
    %386 = vector.multi_reduction <add>, %385, %cst_143 [1] : vector<8x16xf32> to vector<8xf32>
    %387 = vector.shape_cast %386 : vector<8xf32> to vector<8x1xf32>
    %388 = vector.broadcast %387 : vector<8x1xf32> to vector<8x16xf32>
    %389 = arith.divf %385, %388 : vector<8x16xf32>
    %390 = vector.extract_strided_slice %28 {offsets = [0, 8], sizes = [16, 8], strides = [1, 1]} : vector<16x32xf32> to vector<16x8xf32>
    %cst_144 = arith.constant dense<0.000000e+00> : vector<8x8xf32>
    %391 = tpu.matmul %389, %390, %cst_144 {dimension_numbers = #tpu.dot_dimension_numbers<[1], [0], [0], [1], [0, 0, 1, 1], [], []>} : vector<8x16xf32>, vector<16x8xf32>, vector<8x8xf32> -> vector<8x8xf32>
    %392 = vector.extract_strided_slice %10 {offsets = [8, 0], sizes = [8, 32], strides = [1, 1]} : vector<32x32xf32> to vector<8x32xf32>
    %cst_145 = arith.constant dense<0.000000e+00> : vector<8x32xf32>
    %393 = tpu.matmul %391, %392, %cst_145 {dimension_numbers = #tpu.dot_dimension_numbers<[1], [0], [0], [1], [0, 0, 1, 1], [], []>} : vector<8x8xf32>, vector<8x32xf32>, vector<8x32xf32> -> vector<8x32xf32>
    %394 = arith.addf %377, %393 : vector<8x32xf32>
    %395 = vector.extract_strided_slice %359 {offsets = [0, 16], sizes = [8, 8], strides = [1, 1]} : vector<8x32xf32> to vector<8x8xf32>
    %396 = vector.extract_strided_slice %27 {offsets = [0, 16], sizes = [16, 8], strides = [1, 1]} : vector<16x32xf32> to vector<16x8xf32>
    %cst_146 = arith.constant dense<0.000000e+00> : vector<8x16xf32>
    %397 = tpu.matmul %395, %396, %cst_146 {dimension_numbers = #tpu.dot_dimension_numbers<[1], [1], [0], [0], [0, 0, 1, 0], [], []>} : vector<8x8xf32>, vector<16x8xf32>, vector<8x16xf32> -> vector<8x16xf32>
    %cst_147 = arith.constant dense<0xFF800000> : vector<8xf32>
    %398 = vector.multi_reduction <maximumf>, %397, %cst_147 [1] : vector<8x16xf32> to vector<8xf32>
    %399 = vector.shape_cast %398 : vector<8xf32> to vector<8x1xf32>
    %400 = vector.broadcast %399 : vector<8x1xf32> to vector<8x16xf32>
    %401 = arith.subf %397, %400 : vector<8x16xf32>
    %402 = math.exp %401 : vector<8x16xf32>
    %cst_148 = arith.constant dense<0.000000e+00> : vector<8xf32>
    %403 = vector.multi_reduction <add>, %402, %cst_148 [1] : vector<8x16xf32> to vector<8xf32>
    %404 = vector.shape_cast %403 : vector<8xf32> to vector<8x1xf32>
    %405 = vector.broadcast %404 : vector<8x1xf32> to vector<8x16xf32>
    %406 = arith.divf %402, %405 : vector<8x16xf32>
    %407 = vector.extract_strided_slice %28 {offsets = [0, 16], sizes = [16, 8], strides = [1, 1]} : vector<16x32xf32> to vector<16x8xf32>
    %cst_149 = arith.constant dense<0.000000e+00> : vector<8x8xf32>
    %408 = tpu.matmul %406, %407, %cst_149 {dimension_numbers = #tpu.dot_dimension_numbers<[1], [0], [0], [1], [0, 0, 1, 1], [], []>} : vector<8x16xf32>, vector<16x8xf32>, vector<8x8xf32> -> vector<8x8xf32>
    %409 = vector.extract_strided_slice %10 {offsets = [16, 0], sizes = [8, 32], strides = [1, 1]} : vector<32x32xf32> to vector<8x32xf32>
    %cst_150 = arith.constant dense<0.000000e+00> : vector<8x32xf32>
    %410 = tpu.matmul %408, %409, %cst_150 {dimension_numbers = #tpu.dot_dimension_numbers<[1], [0], [0], [1], [0, 0, 1, 1], [], []>} : vector<8x8xf32>, vector<8x32xf32>, vector<8x32xf32> -> vector<8x32xf32>
    %411 = arith.addf %394, %410 : vector<8x32xf32>
    %412 = vector.extract_strided_slice %359 {offsets = [0, 24], sizes = [8, 8], strides = [1, 1]} : vector<8x32xf32> to vector<8x8xf32>
    %413 = vector.extract_strided_slice %27 {offsets = [0, 24], sizes = [16, 8], strides = [1, 1]} : vector<16x32xf32> to vector<16x8xf32>
    %cst_151 = arith.constant dense<0.000000e+00> : vector<8x16xf32>
    %414 = tpu.matmul %412, %413, %cst_151 {dimension_numbers = #tpu.dot_dimension_numbers<[1], [1], [0], [0], [0, 0, 1, 0], [], []>} : vector<8x8xf32>, vector<16x8xf32>, vector<8x16xf32> -> vector<8x16xf32>
    %cst_152 = arith.constant dense<0xFF800000> : vector<8xf32>
    %415 = vector.multi_reduction <maximumf>, %414, %cst_152 [1] : vector<8x16xf32> to vector<8xf32>
    %416 = vector.shape_cast %415 : vector<8xf32> to vector<8x1xf32>
    %417 = vector.broadcast %416 : vector<8x1xf32> to vector<8x16xf32>
    %418 = arith.subf %414, %417 : vector<8x16xf32>
    %419 = math.exp %418 : vector<8x16xf32>
    %cst_153 = arith.constant dense<0.000000e+00> : vector<8xf32>
    %420 = vector.multi_reduction <add>, %419, %cst_153 [1] : vector<8x16xf32> to vector<8xf32>
    %421 = vector.shape_cast %420 : vector<8xf32> to vector<8x1xf32>
    %422 = vector.broadcast %421 : vector<8x1xf32> to vector<8x16xf32>
    %423 = arith.divf %419, %422 : vector<8x16xf32>
    %424 = vector.extract_strided_slice %28 {offsets = [0, 24], sizes = [16, 8], strides = [1, 1]} : vector<16x32xf32> to vector<16x8xf32>
    %cst_154 = arith.constant dense<0.000000e+00> : vector<8x8xf32>
    %425 = tpu.matmul %423, %424, %cst_154 {dimension_numbers = #tpu.dot_dimension_numbers<[1], [0], [0], [1], [0, 0, 1, 1], [], []>} : vector<8x16xf32>, vector<16x8xf32>, vector<8x8xf32> -> vector<8x8xf32>
    %426 = vector.extract_strided_slice %10 {offsets = [24, 0], sizes = [8, 32], strides = [1, 1]} : vector<32x32xf32> to vector<8x32xf32>
    %cst_155 = arith.constant dense<0.000000e+00> : vector<8x32xf32>
    %427 = tpu.matmul %425, %426, %cst_155 {dimension_numbers = #tpu.dot_dimension_numbers<[1], [0], [0], [1], [0, 0, 1, 1], [], []>} : vector<8x8xf32>, vector<8x32xf32>, vector<8x32xf32> -> vector<8x32xf32>
    %428 = arith.addf %411, %427 : vector<8x32xf32>
    %429 = vector.broadcast %11 : vector<1x32xf32> to vector<8x32xf32>
    %430 = arith.addf %428, %429 : vector<8x32xf32>
    %431 = arith.addf %356, %430 : vector<8x32xf32>
    %cst_156 = arith.constant dense<0.000000e+00> : vector<8xf32>
    %432 = vector.multi_reduction <add>, %431, %cst_156 [1] : vector<8x32xf32> to vector<8xf32>
    %433 = vector.shape_cast %432 : vector<8xf32> to vector<8x1xf32>
    %cst_157 = arith.constant 3.200000e+01 : f32
    %434 = vector.broadcast %cst_157 : f32 to vector<8x1xf32>
    %435 = arith.divf %433, %434 : vector<8x1xf32>
    %436 = vector.broadcast %435 : vector<8x1xf32> to vector<8x32xf32>
    %437 = arith.subf %431, %436 : vector<8x32xf32>
    %438 = arith.mulf %437, %437 : vector<8x32xf32>
    %cst_158 = arith.constant dense<0.000000e+00> : vector<8xf32>
    %439 = vector.multi_reduction <add>, %438, %cst_158 [1] : vector<8x32xf32> to vector<8xf32>
    %440 = vector.shape_cast %439 : vector<8xf32> to vector<8x1xf32>
    %cst_159 = arith.constant 3.200000e+01 : f32
    %441 = vector.broadcast %cst_159 : f32 to vector<8x1xf32>
    %442 = arith.divf %440, %441 : vector<8x1xf32>
    %443 = vector.broadcast %435 : vector<8x1xf32> to vector<8x32xf32>
    %444 = arith.subf %431, %443 : vector<8x32xf32>
    %cst_160 = arith.constant 9.99999974E-6 : f32
    %445 = vector.broadcast %cst_160 : f32 to vector<8x1xf32>
    %446 = arith.addf %442, %445 : vector<8x1xf32>
    %447 = math.rsqrt %446 : vector<8x1xf32>
    %448 = vector.broadcast %447 : vector<8x1xf32> to vector<8x32xf32>
    %449 = arith.mulf %444, %448 : vector<8x32xf32>
    %450 = vector.broadcast %18 : vector<1x32xf32> to vector<8x32xf32>
    %451 = arith.mulf %449, %450 : vector<8x32xf32>
    %452 = vector.broadcast %19 : vector<1x32xf32> to vector<8x32xf32>
    %453 = arith.addf %451, %452 : vector<8x32xf32>
    %cst_161 = arith.constant dense<0.000000e+00> : vector<8x64xf32>
    %454 = tpu.matmul %453, %12, %cst_161 {dimension_numbers = #tpu.dot_dimension_numbers<[1], [0], [0], [1], [0, 0, 1, 1], [], []>} : vector<8x32xf32>, vector<32x64xf32>, vector<8x64xf32> -> vector<8x64xf32>
    %455 = vector.broadcast %13 : vector<1x64xf32> to vector<8x64xf32>
    %456 = arith.addf %454, %455 : vector<8x64xf32>
    %cst_162 = arith.constant 0.000000e+00 : f32
    %457 = vector.broadcast %cst_162 : f32 to vector<8x64xf32>
    %458 = arith.maximumf %456, %457 : vector<8x64xf32>
    %cst_163 = arith.constant dense<0.000000e+00> : vector<8x32xf32>
    %459 = tpu.matmul %458, %14, %cst_163 {dimension_numbers = #tpu.dot_dimension_numbers<[1], [0], [0], [1], [0, 0, 1, 1], [], []>} : vector<8x64xf32>, vector<64x32xf32>, vector<8x32xf32> -> vector<8x32xf32>
    %460 = vector.broadcast %15 : vector<1x32xf32> to vector<8x32xf32>
    %461 = arith.addf %459, %460 : vector<8x32xf32>
    %462 = arith.addf %453, %461 : vector<8x32xf32>
    %cst_164 = arith.constant dense<0.000000e+00> : vector<8xf32>
    %463 = vector.multi_reduction <add>, %462, %cst_164 [1] : vector<8x32xf32> to vector<8xf32>
    %464 = vector.shape_cast %463 : vector<8xf32> to vector<8x1xf32>
    %cst_165 = arith.constant 3.200000e+01 : f32
    %465 = vector.broadcast %cst_165 : f32 to vector<8x1xf32>
    %466 = arith.divf %464, %465 : vector<8x1xf32>
    %467 = vector.broadcast %466 : vector<8x1xf32> to vector<8x32xf32>
    %468 = arith.subf %462, %467 : vector<8x32xf32>
    %469 = arith.mulf %468, %468 : vector<8x32xf32>
    %cst_166 = arith.constant dense<0.000000e+00> : vector<8xf32>
    %470 = vector.multi_reduction <add>, %469, %cst_166 [1] : vector<8x32xf32> to vector<8xf32>
    %471 = vector.shape_cast %470 : vector<8xf32> to vector<8x1xf32>
    %cst_167 = arith.constant 3.200000e+01 : f32
    %472 = vector.broadcast %cst_167 : f32 to vector<8x1xf32>
    %473 = arith.divf %471, %472 : vector<8x1xf32>
    %474 = vector.broadcast %466 : vector<8x1xf32> to vector<8x32xf32>
    %475 = arith.subf %462, %474 : vector<8x32xf32>
    %cst_168 = arith.constant 9.99999974E-6 : f32
    %476 = vector.broadcast %cst_168 : f32 to vector<8x1xf32>
    %477 = arith.addf %473, %476 : vector<8x1xf32>
    %478 = math.rsqrt %477 : vector<8x1xf32>
    %479 = vector.broadcast %478 : vector<8x1xf32> to vector<8x32xf32>
    %480 = arith.mulf %475, %479 : vector<8x32xf32>
    %481 = vector.broadcast %20 : vector<1x32xf32> to vector<8x32xf32>
    %482 = arith.mulf %480, %481 : vector<8x32xf32>
    %483 = vector.broadcast %21 : vector<1x32xf32> to vector<8x32xf32>
    %484 = arith.addf %482, %483 : vector<8x32xf32>
    %c0_169 = arith.constant 0 : index
    %c0_170 = arith.constant 0 : index
    %c0_171 = arith.constant 0 : index
    %485 = vector.load %arg23[%c0_169, %c0_170, %c0_171] : memref<1x8x32xf32, #tpu.memory_space<vmem>>, vector<1x8x32xf32>
    %486 = vector.shape_cast %485 : vector<1x8x32xf32> to vector<8x32xf32>
    %487 = vector.shape_cast %484 : vector<8x32xf32> to vector<1x8x32xf32>
    tpu.vector_store %arg23[%c0_169, %c0_170, %c0_171], %487 {strides = array<i32>} : memref<1x8x32xf32, #tpu.memory_space<vmem>>, vector<1x8x32xf32>,
    return
  }
  func.func @transform_0(%arg0: i32) -> (i32, i32, i32) {
    %c0_i32 = arith.constant 0 : i32
    %c0_i32_0 = arith.constant 0 : i32
    %c0_i32_1 = arith.constant 0 : i32
    return %arg0, %c0_i32, %c0_i32_0 : i32, i32, i32
  }
  func.func @transform_1(%arg0: i32) -> (i32, i32, i32) {
    %c0_i32 = arith.constant 0 : i32
    %c0_i32_0 = arith.constant 0 : i32
    %c0_i32_1 = arith.constant 0 : i32
    return %arg0, %c0_i32, %c0_i32_0 : i32, i32, i32
  }
  func.func @transform_2(%arg0: i32) -> (i32, i32) {
    %c0_i32 = arith.constant 0 : i32
    %c0_i32_0 = arith.constant 0 : i32
    %c0_i32_1 = arith.constant 0 : i32
    return %c0_i32, %c0_i32_0 : i32, i32
  }
  func.func @transform_3(%arg0: i32) -> (i32, i32) {
    %c0_i32 = arith.constant 0 : i32
    %c0_i32_0 = arith.constant 0 : i32
    %c0_i32_1 = arith.constant 0 : i32
    return %c0_i32, %c0_i32_0 : i32, i32
  }
  func.func @transform_4(%arg0: i32) -> (i32, i32) {
    %c0_i32 = arith.constant 0 : i32
    %c0_i32_0 = arith.constant 0 : i32
    %c0_i32_1 = arith.constant 0 : i32
    return %c0_i32, %c0_i32_0 : i32, i32
  }
  func.func @transform_5(%arg0: i32) -> (i32, i32) {
    %c0_i32 = arith.constant 0 : i32
    %c0_i32_0 = arith.constant 0 : i32
    %c0_i32_1 = arith.constant 0 : i32
    return %c0_i32, %c0_i32_0 : i32, i32
  }
  func.func @transform_6(%arg0: i32) -> (i32, i32) {
    %c0_i32 = arith.constant 0 : i32
    %c0_i32_0 = arith.constant 0 : i32
    %c0_i32_1 = arith.constant 0 : i32
    return %c0_i32, %c0_i32_0 : i32, i32
  }
  func.func @transform_7(%arg0: i32) -> (i32, i32) {
    %c0_i32 = arith.constant 0 : i32
    %c0_i32_0 = arith.constant 0 : i32
    %c0_i32_1 = arith.constant 0 : i32
    return %c0_i32, %c0_i32_0 : i32, i32
  }
  func.func @transform_8(%arg0: i32) -> (i32, i32) {
    %c0_i32 = arith.constant 0 : i32
    %c0_i32_0 = arith.constant 0 : i32
    %c0_i32_1 = arith.constant 0 : i32
    return %c0_i32, %c0_i32_0 : i32, i32
  }
  func.func @transform_9(%arg0: i32) -> (i32, i32) {
    %c0_i32 = arith.constant 0 : i32
    %c0_i32_0 = arith.constant 0 : i32
    %c0_i32_1 = arith.constant 0 : i32
    return %c0_i32, %c0_i32_0 : i32, i32
  }
  func.func @transform_10(%arg0: i32) -> (i32, i32) {
    %c0_i32 = arith.constant 0 : i32
    %c0_i32_0 = arith.constant 0 : i32
    %c0_i32_1 = arith.constant 0 : i32
    return %c0_i32, %c0_i32_0 : i32, i32
  }
  func.func @transform_11(%arg0: i32) -> (i32, i32) {
    %c0_i32 = arith.constant 0 : i32
    %c0_i32_0 = arith.constant 0 : i32
    %c0_i32_1 = arith.constant 0 : i32
    return %c0_i32, %c0_i32_0 : i32, i32
  }
  func.func @transform_12(%arg0: i32) -> (i32, i32) {
    %c0_i32 = arith.constant 0 : i32
    %c0_i32_0 = arith.constant 0 : i32
    %c0_i32_1 = arith.constant 0 : i32
    return %c0_i32, %c0_i32_0 : i32, i32
  }
  func.func @transform_13(%arg0: i32) -> (i32, i32) {
    %c0_i32 = arith.constant 0 : i32
    %c0_i32_0 = arith.constant 0 : i32
    %c0_i32_1 = arith.constant 0 : i32
    return %c0_i32, %c0_i32_0 : i32, i32
  }
  func.func @transform_14(%arg0: i32) -> (i32, i32) {
    %c0_i32 = arith.constant 0 : i32
    %c0_i32_0 = arith.constant 0 : i32
    %c0_i32_1 = arith.constant 0 : i32
    return %c0_i32, %c0_i32_0 : i32, i32
  }
  func.func @transform_15(%arg0: i32) -> (i32, i32) {
    %c0_i32 = arith.constant 0 : i32
    %c0_i32_0 = arith.constant 0 : i32
    %c0_i32_1 = arith.constant 0 : i32
    return %c0_i32, %c0_i32_0 : i32, i32
  }
  func.func @transform_16(%arg0: i32) -> (i32, i32) {
    %c0_i32 = arith.constant 0 : i32
    %c0_i32_0 = arith.constant 0 : i32
    %c0_i32_1 = arith.constant 0 : i32
    return %c0_i32, %c0_i32_0 : i32, i32
  }
  func.func @transform_17(%arg0: i32) -> (i32, i32) {
    %c0_i32 = arith.constant 0 : i32
    %c0_i32_0 = arith.constant 0 : i32
    %c0_i32_1 = arith.constant 0 : i32
    return %c0_i32, %c0_i32_0 : i32, i32
  }
  func.func @transform_18(%arg0: i32) -> (i32, i32) {
    %c0_i32 = arith.constant 0 : i32
    %c0_i32_0 = arith.constant 0 : i32
    %c0_i32_1 = arith.constant 0 : i32
    return %c0_i32, %c0_i32_0 : i32, i32
  }
  func.func @transform_19(%arg0: i32) -> (i32, i32) {
    %c0_i32 = arith.constant 0 : i32
    %c0_i32_0 = arith.constant 0 : i32
    %c0_i32_1 = arith.constant 0 : i32
    return %c0_i32, %c0_i32_0 : i32, i32
  }
  func.func @transform_20(%arg0: i32) -> (i32, i32) {
    %c0_i32 = arith.constant 0 : i32
    %c0_i32_0 = arith.constant 0 : i32
    %c0_i32_1 = arith.constant 0 : i32
    return %c0_i32, %c0_i32_0 : i32, i32
  }
  func.func @transform_21(%arg0: i32) -> (i32, i32) {
    %c0_i32 = arith.constant 0 : i32
    %c0_i32_0 = arith.constant 0 : i32
    %c0_i32_1 = arith.constant 0 : i32
    return %c0_i32, %c0_i32_0 : i32, i32
  }
  func.func @transform_22(%arg0: i32) -> (i32, i32, i32) {
    %c0_i32 = arith.constant 0 : i32
    %c0_i32_0 = arith.constant 0 : i32
    %c0_i32_1 = arith.constant 0 : i32
    return %arg0, %c0_i32, %c0_i32_0 : i32, i32, i32
  }
}

</mosaic_0001>

<llo_original>
// kernel: tpu_custom_call.1
$region0: #{tpu_custom_call.1}
  #allocation0 [shape = 'u32[]', space=smem, size = 0x4, offset = 0x4, fixed_abs, tag = 'smem constant byte address 0x4 - core index']
  #allocation1 [shape = 'u32[144,128]{1,0:T(1,128)}', space=vmem, size = 0x12000, scoped, tag = 'internal scratch']
  %s0 = inlined_call_operand.hbm [shape: f32[2,8,32], index: 0, kind: input, shape index: {}]
  %s1 = inlined_call_operand.vmem [shape: f32[2,16,32], index: 1, kind: input, shape index: {}]
  %s2 = inlined_call_operand.vmem [shape: f32[32,96], index: 2, kind: input, shape index: {}]
  %s3 = inlined_call_operand.hbm [shape: f32[1,96], index: 3, kind: input, shape index: {}]
  %s4 = inlined_call_operand.vmem [shape: f32[32,32], index: 4, kind: input, shape index: {}]
  %s5 = inlined_call_operand.hbm [shape: f32[1,32], index: 5, kind: input, shape index: {}]
  %s6 = inlined_call_operand.hbm [shape: f32[1,32], index: 6, kind: input, shape index: {}]
  %s7 = inlined_call_operand.hbm [shape: f32[1,32], index: 7, kind: input, shape index: {}]
  %s8 = inlined_call_operand.hbm [shape: f32[32,32], index: 8, kind: input, shape index: {}]
  %s9 = inlined_call_operand.hbm [shape: f32[1,32], index: 9, kind: input, shape index: {}]
  %s10 = inlined_call_operand.hbm [shape: f32[32,64], index: 10, kind: input, shape index: {}]
  %s11 = inlined_call_operand.hbm [shape: f32[1,64], index: 11, kind: input, shape index: {}]
  %s12 = inlined_call_operand.hbm [shape: f32[32,32], index: 12, kind: input, shape index: {}]
  %s13 = inlined_call_operand.hbm [shape: f32[1,32], index: 13, kind: input, shape index: {}]
  %s14 = inlined_call_operand.hbm [shape: f32[1,32], index: 14, kind: input, shape index: {}]
  %s15 = inlined_call_operand.hbm [shape: f32[1,32], index: 15, kind: input, shape index: {}]
  %s16 = inlined_call_operand.hbm [shape: f32[32,64], index: 16, kind: input, shape index: {}]
  %s17 = inlined_call_operand.hbm [shape: f32[1,64], index: 17, kind: input, shape index: {}]
  %s18 = inlined_call_operand.vmem [shape: f32[64,32], index: 18, kind: input, shape index: {}]
  %s19 = inlined_call_operand.vmem [shape: f32[1,32], index: 19, kind: input, shape index: {}]
  %s20 = inlined_call_operand.vmem [shape: f32[1,32], index: 20, kind: input, shape index: {}]
  %s21 = inlined_call_operand.vmem [shape: f32[1,32], index: 21, kind: input, shape index: {}]
  %s22 = inlined_call_operand.hbm [shape: f32[2,8,32], index: 22, kind: output, shape index: {}]
  %s23 = sld [smem:[#allocation0]]
  $region181: #{tpu_custom_call.1} parent=0
    _
  %s25 = ssub.s32 1, %s23
  %s26 = scalar_select 0, %s25, %s23
  $region1: #{tpu_custom_call.1} parent=0
    #allocation2 [shape = 'u8[8192]{0}', space=vmem, size = 0x2000, scoped, tag = 'input window, operand 0']
    #allocation3 [shape = 's32[2]{0}', space=sflag, size = 0x8, scoped, tag = 'scoped memory for tpu_custom_call.1']
    #allocation4 [shape = 's32[2]{0}', space=sflag, size = 0x8, scoped, tag = 'scoped memory for tpu_custom_call.1']
    #allocation5 [shape = 'u8[512]{0}', space=vmem, size = 0x400, scoped, tag = 'input window, operand 3, single buffered']
    #allocation6 [shape = 's32[1]{0}', space=sflag, size = 0x4, scoped, tag = 'scoped memory for tpu_custom_call.1']
    #allocation7 [shape = 'u8[512]{0}', space=vmem, size = 0x400, scoped, tag = 'input window, operand 5, single buffered']
    #allocation8 [shape = 'u8[512]{0}', space=vmem, size = 0x400, scoped, tag = 'input window, operand 6, single buffered']
    #allocation9 [shape = 's32[1]{0}', space=sflag, size = 0x4, scoped, tag = 'scoped memory for tpu_custom_call.1']
    #allocation10 [shape = 'u8[512]{0}', space=vmem, size = 0x400, scoped, tag = 'input window, operand 7, single buffered']
    #allocation11 [shape = 'u8[16384]{0}', space=vmem, size = 0x4000, scoped, tag = 'input window, operand 8, single buffered']
    #allocation12 [shape = 's32[1]{0}', space=sflag, size = 0x4, scoped, tag = 'scoped memory for tpu_custom_call.1']
    #allocation13 [shape = 'u8[512]{0}', space=vmem, size = 0x400, scoped, tag = 'input window, operand 9, single buffered']
    #allocation14 [shape = 'u8[16384]{0}', space=vmem, size = 0x4000, scoped, tag = 'input window, operand 10, single buffered']
    #allocation15 [shape = 's32[1]{0}', space=sflag, size = 0x4, scoped, tag = 'scoped memory for tpu_custom_call.1']
    #allocation16 [shape = 'u8[512]{0}', space=vmem, size = 0x400, scoped, tag = 'input window, operand 11, single buffered']
    #allocation17 [shape = 'u8[16384]{0}', space=vmem, size = 0x4000, scoped, tag = 'input window, operand 12, single buffered']
    #allocation18 [shape = 's32[1]{0}', space=sflag, size = 0x4, scoped, tag = 'scoped memory for tpu_custom_call.1']
    #allocation19 [shape = 'u8[512]{0}', space=vmem, size = 0x400, scoped, tag = 'input window, operand 13, single buffered']
    #allocation20 [shape = 'u8[512]{0}', space=vmem, size = 0x400, scoped, tag = 'input window, operand 14, single buffered']
    #allocation21 [shape = 's32[1]{0}', space=sflag, size = 0x4, scoped, tag = 'scoped memory for tpu_custom_call.1']
    #allocation22 [shape = 'u8[512]{0}', space=vmem, size = 0x400, scoped, tag = 'input window, operand 15, single buffered']
    #allocation23 [shape = 'u8[16384]{0}', space=vmem, size = 0x4000, scoped, tag = 'input window, operand 16, single buffered']
    #allocation24 [shape = 's32[1]{0}', space=sflag, size = 0x4, scoped, tag = 'scoped memory for tpu_custom_call.1']
    #allocation25 [shape = 'u8[512]{0}', space=vmem, size = 0x400, scoped, tag = 'input window, operand 17, single buffered']
    #allocation26 [shape = 'u8[8192]{0}', space=vmem, size = 0x2000, scoped, tag = 'output window, operand 0']
    %27 = vsyncpa [#allocation3], 0
    %s28 = scalar_lea.sflag [#allocation3], 1
    %29 = vsyncpa %s28, 0
    %30 = vsyncpa [#allocation6], 0
    %31 = vsyncpa [#allocation9], 0
    %32 = vsyncpa [#allocation12], 0
    %33 = vsyncpa [#allocation15], 0
    %34 = vsyncpa [#allocation18], 0
    %35 = vsyncpa [#allocation21], 0
    %36 = vsyncpa [#allocation24], 0
    %37 = vsyncpa [#allocation4], 0
    %s38 = scalar_lea.sflag [#allocation4], 1
    %39 = vsyncpa %s38, 0
    loop: start=0, step=1, limit=4
    $region2: #{tpu_custom_call.1} parent=1 // loop_pre_header
      _
    $region3: #{tpu_custom_call.1} parent=1 // loop_header
      %s41 = sphi 0, %s45
      %p42 = scmp.ge.s32.totalorder %s41, 4
      %s51 = sphi 0, %s53
      %s54 = sphi 0, %s51
      %s55 = sphi 0, %s54
      %s71 = sphi 0, %s55
      %s77 = sphi 0, %s79
      %s80 = sphi 0, %s77
      %s81 = sphi 0, %s80
      %s97 = sphi 0, %s81
      %s101 = sphi 0, %s101
      %s103 = sphi 0, %s101
      %s104 = sphi 0, %s103
      %s118 = sphi 0, %s104
      %s122 = sphi 0, %s122
      %s124 = sphi 0, %s122
      %s125 = sphi 0, %s124
      %s139 = sphi 0, %s125
      %s143 = sphi 0, %s143
      %s145 = sphi 0, %s143
      %s146 = sphi 0, %s145
      %s160 = sphi 0, %s146
      %s164 = sphi 0, %s164
      %s166 = sphi 0, %s164
      %s167 = sphi 0, %s166
      %s181 = sphi 0, %s167
      %s185 = sphi 0, %s185
      %s187 = sphi 0, %s185
      %s188 = sphi 0, %s187
      %s202 = sphi 0, %s188
      %s206 = sphi 0, %s206
      %s208 = sphi 0, %s206
      %s209 = sphi 0, %s208
      %s223 = sphi 0, %s209
      %s227 = sphi 0, %s227
      %s229 = sphi 0, %s227
      %s230 = sphi 0, %s229
      %s244 = sphi 0, %s230
      %s248 = sphi 0, %s248
      %s250 = sphi 0, %s248
      %s251 = sphi 0, %s250
      %s265 = sphi 0, %s251
      %s269 = sphi 0, %s269
      %s271 = sphi 0, %s269
      %s272 = sphi 0, %s271
      %s286 = sphi 0, %s272
      %s290 = sphi 0, %s290
      %s292 = sphi 0, %s290
      %s293 = sphi 0, %s292
      %s307 = sphi 0, %s293
      %s311 = sphi 0, %s311
      %s313 = sphi 0, %s311
      %s314 = sphi 0, %s313
      %s328 = sphi 0, %s314
      %s332 = sphi 0, %s332
      %s334 = sphi 0, %s332
      %s335 = sphi 0, %s334
      %s349 = sphi 0, %s335
      %s353 = sphi 0, %s353
      %s355 = sphi 0, %s353
      %s356 = sphi 0, %s355
      %s370 = sphi 0, %s356
      %s374 = sphi 0, %s374
      %s376 = sphi 0, %s374
      %s377 = sphi 0, %s376
      %s391 = sphi 0, %s377
      %s395 = sphi 0, %s395
      %s397 = sphi 0, %s395
      %s398 = sphi 0, %s397
      %s412 = sphi 0, %s398
      %s416 = sphi 0, %s416
      %s418 = sphi 0, %s416
      %s419 = sphi 0, %s418
      %s433 = sphi 0, %s419
      %s437 = sphi 0, %s437
      %s439 = sphi 0, %s437
      %s440 = sphi 0, %s439
      %s454 = sphi 0, %s440
      %s458 = sphi 0, %s458
      %s460 = sphi 0, %s458
      %s461 = sphi 0, %s460
      %s475 = sphi 0, %s461
      %s479 = sphi 0, %s479
      %s481 = sphi 0, %s479
      %s482 = sphi 0, %s481
      %s496 = sphi 0, %s482
      %s500 = sphi 0, %s500
      %s502 = sphi 0, %s500
      %s503 = sphi 0, %s502
      %s517 = sphi 0, %s503
      %s523 = sphi 0, %s525
      %s526 = sphi 0, %s523
      %s527 = sphi 0, %s526
      %s543 = sphi 0, %s527
    $region4: #{tpu_custom_call.1} parent=1 // loop_header_branch
      %44 = sbr.rel (%p42) target = $region8
    $region5: #{tpu_custom_call.1} parent=1 // loop_body
      %s46 = ssub.s32 %s41, 1
      %s47 = ssub.s32 %s41, 2
      %s48 = sadd.s32 %s41, 1
      %s49 = ssub.s32 %s41, %s48
      %p50 = scmp.eq.s32.totalorder %s49, 0
      %s52 = sadd.s32 %s51, 1
      %s53 = scalar_select %p50, %s51, %s52
      %p56 = pneg %p50
      %p57 = scmp.eq.s32.totalorder %s41, 1
      %p58 = por %p56, %p57
      %p59 = scmp.ne.s32.totalorder %s51, %s54
      %p60 = scmp.eq.s32.totalorder %s41, 0
      %p61 = por %p59, %p60
      %p62 = scmp.ne.s32.totalorder %s51, %s54
      %p63 = scmp.eq.s32.totalorder %s46, 1
      %p64 = por %p62, %p63
      %p65 = scmp.ne.s32.totalorder %s54, %s55
      %p66 = scmp.eq.s32.totalorder %s46, 0
      %p67 = por %p65, %p66
      %p68 = scmp.ne.s32.totalorder %s54, %s55
      %p69 = scmp.eq.s32.totalorder %s47, 1
      %p70 = por %p68, %p69
      %p72 = scmp.ne.s32.totalorder %s55, %s71
      %p73 = scmp.eq.s32.totalorder %s47, 0
      %p74 = por %p72, %p73
      %s75 = ssub.s32 %s41, %s48
      %p76 = scmp.eq.s32.totalorder %s75, 0
      %s78 = sadd.s32 %s77, 1
      %s79 = scalar_select %p76, %s77, %s78
      %p82 = pneg %p76
      %p83 = scmp.eq.s32.totalorder %s41, 1
      %p84 = por %p82, %p83
      %p85 = scmp.ne.s32.totalorder %s77, %s80
      %p86 = scmp.eq.s32.totalorder %s41, 0
      %p87 = por %p85, %p86
      %p88 = scmp.ne.s32.totalorder %s77, %s80
      %p89 = scmp.eq.s32.totalorder %s46, 1
      %p90 = por %p88, %p89
      %p91 = scmp.ne.s32.totalorder %s80, %s81
      %p92 = scmp.eq.s32.totalorder %s46, 0
      %p93 = por %p91, %p92
      %p94 = scmp.ne.s32.totalorder %s80, %s81
      %p95 = scmp.eq.s32.totalorder %s47, 1
      %p96 = por %p94, %p95
      %p98 = scmp.ne.s32.totalorder %s81, %s97
      %p99 = scmp.eq.s32.totalorder %s47, 0
      %p100 = por %p98, %p99
      %s102 = sadd.s32 %s101, 1
      %p105 = scmp.eq.s32.totalorder %s41, 1
      %p106 = scmp.ne.s32.totalorder %s101, %s103
      %p107 = scmp.eq.s32.totalorder %s41, 0
      %p108 = por %p106, %p107
      %p109 = scmp.ne.s32.totalorder %s101, %s103
      %p110 = scmp.eq.s32.totalorder %s46, 1
      %p111 = por %p109, %p110
      %p112 = scmp.ne.s32.totalorder %s103, %s104
      %p113 = scmp.eq.s32.totalorder %s46, 0
      %p114 = por %p112, %p113
      %p115 = scmp.ne.s32.totalorder %s103, %s104
      %p116 = scmp.eq.s32.totalorder %s47, 1
      %p117 = por %p115, %p116
      %p119 = scmp.ne.s32.totalorder %s104, %s118
      %p120 = scmp.eq.s32.totalorder %s47, 0
      %p121 = por %p119, %p120
      %s123 = sadd.s32 %s122, 1
      %p126 = scmp.eq.s32.totalorder %s41, 1
      %p127 = scmp.ne.s32.totalorder %s122, %s124
      %p128 = scmp.eq.s32.totalorder %s41, 0
      %p129 = por %p127, %p128
      %p130 = scmp.ne.s32.totalorder %s122, %s124
      %p131 = scmp.eq.s32.totalorder %s46, 1
      %p132 = por %p130, %p131
      %p133 = scmp.ne.s32.totalorder %s124, %s125
      %p134 = scmp.eq.s32.totalorder %s46, 0
      %p135 = por %p133, %p134
      %p136 = scmp.ne.s32.totalorder %s124, %s125
      %p137 = scmp.eq.s32.totalorder %s47, 1
      %p138 = por %p136, %p137
      %p140 = scmp.ne.s32.totalorder %s125, %s139
      %p141 = scmp.eq.s32.totalorder %s47, 0
      %p142 = por %p140, %p141
      %s144 = sadd.s32 %s143, 1
      %p147 = scmp.eq.s32.totalorder %s41, 1
      %p148 = scmp.ne.s32.totalorder %s143, %s145
      %p149 = scmp.eq.s32.totalorder %s41, 0
      %p150 = por %p148, %p149
      %p151 = scmp.ne.s32.totalorder %s143, %s145
      %p152 = scmp.eq.s32.totalorder %s46, 1
      %p153 = por %p151, %p152
      %p154 = scmp.ne.s32.totalorder %s145, %s146
      %p155 = scmp.eq.s32.totalorder %s46, 0
      %p156 = por %p154, %p155
      %p157 = scmp.ne.s32.totalorder %s145, %s146
      %p158 = scmp.eq.s32.totalorder %s47, 1
      %p159 = por %p157, %p158
      %p161 = scmp.ne.s32.totalorder %s146, %s160
      %p162 = scmp.eq.s32.totalorder %s47, 0
      %p163 = por %p161, %p162
      %s165 = sadd.s32 %s164, 1
      %p168 = scmp.eq.s32.totalorder %s41, 1
      %p169 = scmp.ne.s32.totalorder %s164, %s166
      %p170 = scmp.eq.s32.totalorder %s41, 0
      %p171 = por %p169, %p170
      %p172 = scmp.ne.s32.totalorder %s164, %s166
      %p173 = scmp.eq.s32.totalorder %s46, 1
      %p174 = por %p172, %p173
      %p175 = scmp.ne.s32.totalorder %s166, %s167
      %p176 = scmp.eq.s32.totalorder %s46, 0
      %p177 = por %p175, %p176
      %p178 = scmp.ne.s32.totalorder %s166, %s167
      %p179 = scmp.eq.s32.totalorder %s47, 1
      %p180 = por %p178, %p179
      %p182 = scmp.ne.s32.totalorder %s167, %s181
      %p183 = scmp.eq.s32.totalorder %s47, 0
      %p184 = por %p182, %p183
      %s186 = sadd.s32 %s185, 1
      %p189 = scmp.eq.s32.totalorder %s41, 1
      %p190 = scmp.ne.s32.totalorder %s185, %s187
      %p191 = scmp.eq.s32.totalorder %s41, 0
      %p192 = por %p190, %p191
      %p193 = scmp.ne.s32.totalorder %s185, %s187
      %p194 = scmp.eq.s32.totalorder %s46, 1
      %p195 = por %p193, %p194
      %p196 = scmp.ne.s32.totalorder %s187, %s188
      %p197 = scmp.eq.s32.totalorder %s46, 0
      %p198 = por %p196, %p197
      %p199 = scmp.ne.s32.totalorder %s187, %s188
      %p200 = scmp.eq.s32.totalorder %s47, 1
      %p201 = por %p199, %p200
      %p203 = scmp.ne.s32.totalorder %s188, %s202
      %p204 = scmp.eq.s32.totalorder %s47, 0
      %p205 = por %p203, %p204
      %s207 = sadd.s32 %s206, 1
      %p210 = scmp.eq.s32.totalorder %s41, 1
      %p211 = scmp.ne.s32.totalorder %s206, %s208
      %p212 = scmp.eq.s32.totalorder %s41, 0
      %p213 = por %p211, %p212
      %p214 = scmp.ne.s32.totalorder %s206, %s208
      %p215 = scmp.eq.s32.totalorder %s46, 1
      %p216 = por %p214, %p215
      %p217 = scmp.ne.s32.totalorder %s208, %s209
      %p218 = scmp.eq.s32.totalorder %s46, 0
      %p219 = por %p217, %p218
      %p220 = scmp.ne.s32.totalorder %s208, %s209
      %p221 = scmp.eq.s32.totalorder %s47, 1
      %p222 = por %p220, %p221
      %p224 = scmp.ne.s32.totalorder %s209, %s223
      %p225 = scmp.eq.s32.totalorder %s47, 0
      %p226 = por %p224, %p225
      %s228 = sadd.s32 %s227, 1
      %p231 = scmp.eq.s32.totalorder %s41, 1
      %p232 = scmp.ne.s32.totalorder %s227, %s229
      %p233 = scmp.eq.s32.totalorder %s41, 0
      %p234 = por %p232, %p233
      %p235 = scmp.ne.s32.totalorder %s227, %s229
      %p236 = scmp.eq.s32.totalorder %s46, 1
      %p237 = por %p235, %p236
      %p238 = scmp.ne.s32.totalorder %s229, %s230
      %p239 = scmp.eq.s32.totalorder %s46, 0
      %p240 = por %p238, %p239
      %p241 = scmp.ne.s32.totalorder %s229, %s230
      %p242 = scmp.eq.s32.totalorder %s47, 1
      %p243 = por %p241, %p242
      %p245 = scmp.ne.s32.totalorder %s230, %s244
      %p246 = scmp.eq.s32.totalorder %s47, 0
      %p247 = por %p245, %p246
      %s249 = sadd.s32 %s248, 1
      %p252 = scmp.eq.s32.totalorder %s41, 1
      %p253 = scmp.ne.s32.totalorder %s248, %s250
      %p254 = scmp.eq.s32.totalorder %s41, 0
      %p255 = por %p253, %p254
      %p256 = scmp.ne.s32.totalorder %s248, %s250
      %p257 = scmp.eq.s32.totalorder %s46, 1
      %p258 = por %p256, %p257
      %p259 = scmp.ne.s32.totalorder %s250, %s251
      %p260 = scmp.eq.s32.totalorder %s46, 0
      %p261 = por %p259, %p260
      %p262 = scmp.ne.s32.totalorder %s250, %s251
      %p263 = scmp.eq.s32.totalorder %s47, 1
      %p264 = por %p262, %p263
      %p266 = scmp.ne.s32.totalorder %s251, %s265
      %p267 = scmp.eq.s32.totalorder %s47, 0
      %p268 = por %p266, %p267
      %s270 = sadd.s32 %s269, 1
      %p273 = scmp.eq.s32.totalorder %s41, 1
      %p274 = scmp.ne.s32.totalorder %s269, %s271
      %p275 = scmp.eq.s32.totalorder %s41, 0
      %p276 = por %p274, %p275
      %p277 = scmp.ne.s32.totalorder %s269, %s271
      %p278 = scmp.eq.s32.totalorder %s46, 1
      %p279 = por %p277, %p278
      %p280 = scmp.ne.s32.totalorder %s271, %s272
      %p281 = scmp.eq.s32.totalorder %s46, 0
      %p282 = por %p280, %p281
      %p283 = scmp.ne.s32.totalorder %s271, %s272
      %p284 = scmp.eq.s32.totalorder %s47, 1
      %p285 = por %p283, %p284
      %p287 = scmp.ne.s32.totalorder %s272, %s286
      %p288 = scmp.eq.s32.totalorder %s47, 0
      %p289 = por %p287, %p288
      %s291 = sadd.s32 %s290, 1
      %p294 = scmp.eq.s32.totalorder %s41, 1
      %p295 = scmp.ne.s32.totalorder %s290, %s292
      %p296 = scmp.eq.s32.totalorder %s41, 0
      %p297 = por %p295, %p296
      %p298 = scmp.ne.s32.totalorder %s290, %s292
      %p299 = scmp.eq.s32.totalorder %s46, 1
      %p300 = por %p298, %p299
      %p301 = scmp.ne.s32.totalorder %s292, %s293
      %p302 = scmp.eq.s32.totalorder %s46, 0
      %p303 = por %p301, %p302
      %p304 = scmp.ne.s32.totalorder %s292, %s293
      %p305 = scmp.eq.s32.totalorder %s47, 1
      %p306 = por %p304, %p305
      %p308 = scmp.ne.s32.totalorder %s293, %s307
      %p309 = scmp.eq.s32.totalorder %s47, 0
      %p310 = por %p308, %p309
      %s312 = sadd.s32 %s311, 1
      %p315 = scmp.eq.s32.totalorder %s41, 1
      %p316 = scmp.ne.s32.totalorder %s311, %s313
      %p317 = scmp.eq.s32.totalorder %s41, 0
      %p318 = por %p316, %p317
      %p319 = scmp.ne.s32.totalorder %s311, %s313
      %p320 = scmp.eq.s32.totalorder %s46, 1
      %p321 = por %p319, %p320
      %p322 = scmp.ne.s32.totalorder %s313, %s314
      %p323 = scmp.eq.s32.totalorder %s46, 0
      %p324 = por %p322, %p323
      %p325 = scmp.ne.s32.totalorder %s313, %s314
      %p326 = scmp.eq.s32.totalorder %s47, 1
      %p327 = por %p325, %p326
      %p329 = scmp.ne.s32.totalorder %s314, %s328
      %p330 = scmp.eq.s32.totalorder %s47, 0
      %p331 = por %p329, %p330
      %s333 = sadd.s32 %s332, 1
      %p336 = scmp.eq.s32.totalorder %s41, 1
      %p337 = scmp.ne.s32.totalorder %s332, %s334
      %p338 = scmp.eq.s32.totalorder %s41, 0
      %p339 = por %p337, %p338
      %p340 = scmp.ne.s32.totalorder %s332, %s334
      %p341 = scmp.eq.s32.totalorder %s46, 1
      %p342 = por %p340, %p341
      %p343 = scmp.ne.s32.totalorder %s334, %s335
      %p344 = scmp.eq.s32.totalorder %s46, 0
      %p345 = por %p343, %p344
      %p346 = scmp.ne.s32.totalorder %s334, %s335
      %p347 = scmp.eq.s32.totalorder %s47, 1
      %p348 = por %p346, %p347
      %p350 = scmp.ne.s32.totalorder %s335, %s349
      %p351 = scmp.eq.s32.totalorder %s47, 0
      %p352 = por %p350, %p351
      %s354 = sadd.s32 %s353, 1
      %p357 = scmp.eq.s32.totalorder %s41, 1
      %p358 = scmp.ne.s32.totalorder %s353, %s355
      %p359 = scmp.eq.s32.totalorder %s41, 0
      %p360 = por %p358, %p359
      %p361 = scmp.ne.s32.totalorder %s353, %s355
      %p362 = scmp.eq.s32.totalorder %s46, 1
      %p363 = por %p361, %p362
      %p364 = scmp.ne.s32.totalorder %s355, %s356
      %p365 = scmp.eq.s32.totalorder %s46, 0
      %p366 = por %p364, %p365
      %p367 = scmp.ne.s32.totalorder %s355, %s356
      %p368 = scmp.eq.s32.totalorder %s47, 1
      %p369 = por %p367, %p368
      %p371 = scmp.ne.s32.totalorder %s356, %s370
      %p372 = scmp.eq.s32.totalorder %s47, 0
      %p373 = por %p371, %p372
      %s375 = sadd.s32 %s374, 1
      %p378 = scmp.eq.s32.totalorder %s41, 1
      %p379 = scmp.ne.s32.totalorder %s374, %s376
      %p380 = scmp.eq.s32.totalorder %s41, 0
      %p381 = por %p379, %p380
      %p382 = scmp.ne.s32.totalorder %s374, %s376
      %p383 = scmp.eq.s32.totalorder %s46, 1
      %p384 = por %p382, %p383
      %p385 = scmp.ne.s32.totalorder %s376, %s377
      %p386 = scmp.eq.s32.totalorder %s46, 0
      %p387 = por %p385, %p386
      %p388 = scmp.ne.s32.totalorder %s376, %s377
      %p389 = scmp.eq.s32.totalorder %s47, 1
      %p390 = por %p388, %p389
      %p392 = scmp.ne.s32.totalorder %s377, %s391
      %p393 = scmp.eq.s32.totalorder %s47, 0
      %p394 = por %p392, %p393
      %s396 = sadd.s32 %s395, 1
      %p399 = scmp.eq.s32.totalorder %s41, 1
      %p400 = scmp.ne.s32.totalorder %s395, %s397
      %p401 = scmp.eq.s32.totalorder %s41, 0
      %p402 = por %p400, %p401
      %p403 = scmp.ne.s32.totalorder %s395, %s397
      %p404 = scmp.eq.s32.totalorder %s46, 1
      %p405 = por %p403, %p404
      %p406 = scmp.ne.s32.totalorder %s397, %s398
      %p407 = scmp.eq.s32.totalorder %s46, 0
      %p408 = por %p406, %p407
      %p409 = scmp.ne.s32.totalorder %s397, %s398
      %p410 = scmp.eq.s32.totalorder %s47, 1
      %p411 = por %p409, %p410
      %p413 = scmp.ne.s32.totalorder %s398, %s412
      %p414 = scmp.eq.s32.totalorder %s47, 0
      %p415 = por %p413, %p414
      %s417 = sadd.s32 %s416, 1
      %p420 = scmp.eq.s32.totalorder %s41, 1
      %p421 = scmp.ne.s32.totalorder %s416, %s418
      %p422 = scmp.eq.s32.totalorder %s41, 0
      %p423 = por %p421, %p422
      %p424 = scmp.ne.s32.totalorder %s416, %s418
      %p425 = scmp.eq.s32.totalorder %s46, 1
      %p426 = por %p424, %p425
      %p427 = scmp.ne.s32.totalorder %s418, %s419
      %p428 = scmp.eq.s32.totalorder %s46, 0
      %p429 = por %p427, %p428
      %p430 = scmp.ne.s32.totalorder %s418, %s419
      %p431 = scmp.eq.s32.totalorder %s47, 1
      %p432 = por %p430, %p431
      %p434 = scmp.ne.s32.totalorder %s419, %s433
      %p435 = scmp.eq.s32.totalorder %s47, 0
      %p436 = por %p434, %p435
      %s438 = sadd.s32 %s437, 1
      %p441 = scmp.eq.s32.totalorder %s41, 1
      %p442 = scmp.ne.s32.totalorder %s437, %s439
      %p443 = scmp.eq.s32.totalorder %s41, 0
      %p444 = por %p442, %p443
      %p445 = scmp.ne.s32.totalorder %s437, %s439
      %p446 = scmp.eq.s32.totalorder %s46, 1
      %p447 = por %p445, %p446
      %p448 = scmp.ne.s32.totalorder %s439, %s440
      %p449 = scmp.eq.s32.totalorder %s46, 0
      %p450 = por %p448, %p449
      %p451 = scmp.ne.s32.totalorder %s439, %s440
      %p452 = scmp.eq.s32.totalorder %s47, 1
      %p453 = por %p451, %p452
      %p455 = scmp.ne.s32.totalorder %s440, %s454
      %p456 = scmp.eq.s32.totalorder %s47, 0
      %p457 = por %p455, %p456
      %s459 = sadd.s32 %s458, 1
      %p462 = scmp.eq.s32.totalorder %s41, 1
      %p463 = scmp.ne.s32.totalorder %s458, %s460
      %p464 = scmp.eq.s32.totalorder %s41, 0
      %p465 = por %p463, %p464
      %p466 = scmp.ne.s32.totalorder %s458, %s460
      %p467 = scmp.eq.s32.totalorder %s46, 1
      %p468 = por %p466, %p467
      %p469 = scmp.ne.s32.totalorder %s460, %s461
      %p470 = scmp.eq.s32.totalorder %s46, 0
      %p471 = por %p469, %p470
      %p472 = scmp.ne.s32.totalorder %s460, %s461
      %p473 = scmp.eq.s32.totalorder %s47, 1
      %p474 = por %p472, %p473
      %p476 = scmp.ne.s32.totalorder %s461, %s475
      %p477 = scmp.eq.s32.totalorder %s47, 0
      %p478 = por %p476, %p477
      %s480 = sadd.s32 %s479, 1
      %p483 = scmp.eq.s32.totalorder %s41, 1
      %p484 = scmp.ne.s32.totalorder %s479, %s481
      %p485 = scmp.eq.s32.totalorder %s41, 0
      %p486 = por %p484, %p485
      %p487 = scmp.ne.s32.totalorder %s479, %s481
      %p488 = scmp.eq.s32.totalorder %s46, 1
      %p489 = por %p487, %p488
      %p490 = scmp.ne.s32.totalorder %s481, %s482
      %p491 = scmp.eq.s32.totalorder %s46, 0
      %p492 = por %p490, %p491
      %p493 = scmp.ne.s32.totalorder %s481, %s482
      %p494 = scmp.eq.s32.totalorder %s47, 1
      %p495 = por %p493, %p494
      %p497 = scmp.ne.s32.totalorder %s482, %s496
      %p498 = scmp.eq.s32.totalorder %s47, 0
      %p499 = por %p497, %p498
      %s501 = sadd.s32 %s500, 1
      %p504 = scmp.eq.s32.totalorder %s41, 1
      %p505 = scmp.ne.s32.totalorder %s500, %s502
      %p506 = scmp.eq.s32.totalorder %s41, 0
      %p507 = por %p505, %p506
      %p508 = scmp.ne.s32.totalorder %s500, %s502
      %p509 = scmp.eq.s32.totalorder %s46, 1
      %p510 = por %p508, %p509
      %p511 = scmp.ne.s32.totalorder %s502, %s503
      %p512 = scmp.eq.s32.totalorder %s46, 0
      %p513 = por %p511, %p512
      %p514 = scmp.ne.s32.totalorder %s502, %s503
      %p515 = scmp.eq.s32.totalorder %s47, 1
      %p516 = por %p514, %p515
      %p518 = scmp.ne.s32.totalorder %s503, %s517
      %p519 = scmp.eq.s32.totalorder %s47, 0
      %p520 = por %p518, %p519
      %s521 = ssub.s32 %s41, %s48
      %p522 = scmp.eq.s32.totalorder %s521, 0
      %s524 = sadd.s32 %s523, 1
      %s525 = scalar_select %p522, %s523, %s524
      %p528 = pneg %p522
      %p529 = scmp.eq.s32.totalorder %s41, 1
      %p530 = por %p528, %p529
      %p531 = scmp.ne.s32.totalorder %s523, %s526
      %p532 = scmp.eq.s32.totalorder %s41, 0
      %p533 = por %p531, %p532
      %p534 = scmp.ne.s32.totalorder %s523, %s526
      %p535 = scmp.eq.s32.totalorder %s46, 1
      %p536 = por %p534, %p535
      %p537 = scmp.ne.s32.totalorder %s526, %s527
      %p538 = scmp.eq.s32.totalorder %s46, 0
      %p539 = por %p537, %p538
      %p540 = scmp.ne.s32.totalorder %s526, %s527
      %p541 = scmp.eq.s32.totalorder %s47, 1
      %p542 = por %p540, %p541
      %p544 = scmp.ne.s32.totalorder %s527, %s543
      %p545 = scmp.eq.s32.totalorder %s47, 0
      %p546 = por %p544, %p545
      %p547 = scmp.le.s32.totalorder 1, %s41
      %p548 = scmp.lt.s32.totalorder %s41, 3
      %p549 = pnand %p547, %p548
      %p550 = pneg %p549
      // Predicated region
      $region9: #{tpu_custom_call.1} parent=5 // pred_check
        _
      $region10: #{tpu_custom_call.1} parent=5 // pred_check_branch
        %552 = sbr.rel (%p549) target = $region12
      $region11: #{tpu_custom_call.1} parent=5 // pred_region
        %s553 = ssub.s32 %s41, 1
        // Predicated region
        $region13: #{tpu_custom_call.1} parent=11 // pred_check
          %p554 = pneg %p114
        $region14: #{tpu_custom_call.1} parent=11 // pred_check_branch
          %556 = sbr.rel (%p554) target = $region16
        $region15: #{tpu_custom_call.1} parent=11 // pred_region
          _
        $region16: #{tpu_custom_call.1} parent=11 // pred_fallthru
          _
        // Predicated region
        $region17: #{tpu_custom_call.1} parent=11 // pred_check
          %p557 = pneg %p135
        $region18: #{tpu_custom_call.1} parent=11 // pred_check_branch
          %559 = sbr.rel (%p557) target = $region20
        $region19: #{tpu_custom_call.1} parent=11 // pred_region
          %s561 = ssub.s32 16, 16
          %562 = vsyncadd [#allocation6], %s561
          %s564 = sshll.u32 [#allocation5], 4
          %s565 = int_to_ptr.vmem [resolvable:$true] %s564
          %567 = dma.hbm_to_vmem [thread:$0]  %s3, 16, %s565, [#allocation6]
        $region20: #{tpu_custom_call.1} parent=11 // pred_fallthru
          _
        // Predicated region
        $region21: #{tpu_custom_call.1} parent=11 // pred_check
          %p568 = pneg %p156
        $region22: #{tpu_custom_call.1} parent=11 // pred_check_branch
          %570 = sbr.rel (%p568) target = $region24
        $region23: #{tpu_custom_call.1} parent=11 // pred_region
          _
        $region24: #{tpu_custom_call.1} parent=11 // pred_fallthru
          _
        // Predicated region
        $region25: #{tpu_custom_call.1} parent=11 // pred_check
          %p571 = pneg %p177
        $region26: #{tpu_custom_call.1} parent=11 // pred_check_branch
          %573 = sbr.rel (%p571) target = $region28
        $region27: #{tpu_custom_call.1} parent=11 // pred_region
          %s575 = ssub.s32 16, 16
          %576 = vsyncadd [#allocation6], %s575
          %s578 = sshll.u32 [#allocation7], 4
          %s579 = int_to_ptr.vmem [resolvable:$true] %s578
          %581 = dma.hbm_to_vmem [thread:$0]  %s5, 16, %s579, [#allocation6]
        $region28: #{tpu_custom_call.1} parent=11 // pred_fallthru
          _
        // Predicated region
        $region29: #{tpu_custom_call.1} parent=11 // pred_check
          %p582 = pneg %p198
        $region30: #{tpu_custom_call.1} parent=11 // pred_check_branch
          %584 = sbr.rel (%p582) target = $region32
        $region31: #{tpu_custom_call.1} parent=11 // pred_region
          %s586 = ssub.s32 16, 16
          %587 = vsyncadd [#allocation9], %s586
          %s589 = sshll.u32 [#allocation8], 4
          %s590 = int_to_ptr.vmem [resolvable:$true] %s589
          %592 = dma.hbm_to_vmem [thread:$0]  %s6, 16, %s590, [#allocation9]
        $region32: #{tpu_custom_call.1} parent=11 // pred_fallthru
          _
        // Predicated region
        $region33: #{tpu_custom_call.1} parent=11 // pred_check
          %p593 = pneg %p219
        $region34: #{tpu_custom_call.1} parent=11 // pred_check_branch
          %595 = sbr.rel (%p593) target = $region36
        $region35: #{tpu_custom_call.1} parent=11 // pred_region
          %s597 = ssub.s32 16, 16
          %598 = vsyncadd [#allocation9], %s597
          %s600 = sshll.u32 [#allocation10], 4
          %s601 = int_to_ptr.vmem [resolvable:$true] %s600
          %603 = dma.hbm_to_vmem [thread:$0]  %s7, 16, %s601, [#allocation9]
        $region36: #{tpu_custom_call.1} parent=11 // pred_fallthru
          _
        // Predicated region
        $region37: #{tpu_custom_call.1} parent=11 // pred_check
          %p604 = pneg %p240
        $region38: #{tpu_custom_call.1} parent=11 // pred_check_branch
          %606 = sbr.rel (%p604) target = $region40
        $region39: #{tpu_custom_call.1} parent=11 // pred_region
          %s608 = ssub.s32 512, 512
          %609 = vsyncadd [#allocation12], %s608
          %s610 = sshll.u32 [#allocation11], 4
          %s611 = int_to_ptr.vmem [resolvable:$true] %s610
          %616 = dma.hbm_to_vmem [thread:$0]  %s8, 512, %s611, [#allocation12], 128, 128, 8
        $region40: #{tpu_custom_call.1} parent=11 // pred_fallthru
          _
        // Predicated region
        $region41: #{tpu_custom_call.1} parent=11 // pred_check
          %p617 = pneg %p261
        $region42: #{tpu_custom_call.1} parent=11 // pred_check_branch
          %619 = sbr.rel (%p617) target = $region44
        $region43: #{tpu_custom_call.1} parent=11 // pred_region
          %s621 = ssub.s32 16, 16
          %622 = vsyncadd [#allocation12], %s621
          %s624 = sshll.u32 [#allocation13], 4
          %s625 = int_to_ptr.vmem [resolvable:$true] %s624
          %627 = dma.hbm_to_vmem [thread:$0]  %s9, 16, %s625, [#allocation12]
        $region44: #{tpu_custom_call.1} parent=11 // pred_fallthru
          _
        // Predicated region
        $region45: #{tpu_custom_call.1} parent=11 // pred_check
          %p628 = pneg %p282
        $region46: #{tpu_custom_call.1} parent=11 // pred_check_branch
          %630 = sbr.rel (%p628) target = $region48
        $region47: #{tpu_custom_call.1} parent=11 // pred_region
          %s632 = ssub.s32 512, 512
          %633 = vsyncadd [#allocation15], %s632
          %s634 = sshll.u32 [#allocation14], 4
          %s635 = int_to_ptr.vmem [resolvable:$true] %s634
          %640 = dma.hbm_to_vmem [thread:$0]  %s10, 512, %s635, [#allocation15], 128, 128, 8
        $region48: #{tpu_custom_call.1} parent=11 // pred_fallthru
          _
        // Predicated region
        $region49: #{tpu_custom_call.1} parent=11 // pred_check
          %p641 = pneg %p303
        $region50: #{tpu_custom_call.1} parent=11 // pred_check_branch
          %643 = sbr.rel (%p641) target = $region52
        $region51: #{tpu_custom_call.1} parent=11 // pred_region
          %s645 = ssub.s32 16, 16
          %646 = vsyncadd [#allocation15], %s645
          %s648 = sshll.u32 [#allocation16], 4
          %s649 = int_to_ptr.vmem [resolvable:$true] %s648
          %651 = dma.hbm_to_vmem [thread:$0]  %s11, 16, %s649, [#allocation15]
        $region52: #{tpu_custom_call.1} parent=11 // pred_fallthru
          _
        // Predicated region
        $region53: #{tpu_custom_call.1} parent=11 // pred_check
          %p652 = pneg %p324
        $region54: #{tpu_custom_call.1} parent=11 // pred_check_branch
          %654 = sbr.rel (%p652) target = $region56
        $region55: #{tpu_custom_call.1} parent=11 // pred_region
          %s656 = ssub.s32 512, 512
          %657 = vsyncadd [#allocation18], %s656
          %s658 = sshll.u32 [#allocation17], 4
          %s659 = int_to_ptr.vmem [resolvable:$true] %s658
          %664 = dma.hbm_to_vmem [thread:$0]  %s12, 512, %s659, [#allocation18], 128, 128, 8
        $region56: #{tpu_custom_call.1} parent=11 // pred_fallthru
          _
        // Predicated region
        $region57: #{tpu_custom_call.1} parent=11 // pred_check
          %p665 = pneg %p345
        $region58: #{tpu_custom_call.1} parent=11 // pred_check_branch
          %667 = sbr.rel (%p665) target = $region60
        $region59: #{tpu_custom_call.1} parent=11 // pred_region
          %s669 = ssub.s32 16, 16
          %670 = vsyncadd [#allocation18], %s669
          %s672 = sshll.u32 [#allocation19], 4
          %s673 = int_to_ptr.vmem [resolvable:$true] %s672
          %675 = dma.hbm_to_vmem [thread:$0]  %s13, 16, %s673, [#allocation18]
        $region60: #{tpu_custom_call.1} parent=11 // pred_fallthru
          _
        // Predicated region
        $region61: #{tpu_custom_call.1} parent=11 // pred_check
          %p676 = pneg %p366
        $region62: #{tpu_custom_call.1} parent=11 // pred_check_branch
          %678 = sbr.rel (%p676) target = $region64
        $region63: #{tpu_custom_call.1} parent=11 // pred_region
          %s680 = ssub.s32 16, 16
          %681 = vsyncadd [#allocation21], %s680
          %s683 = sshll.u32 [#allocation20], 4
          %s684 = int_to_ptr.vmem [resolvable:$true] %s683
          %686 = dma.hbm_to_vmem [thread:$0]  %s14, 16, %s684, [#allocation21]
        $region64: #{tpu_custom_call.1} parent=11 // pred_fallthru
          _
        // Predicated region
        $region65: #{tpu_custom_call.1} parent=11 // pred_check
          %p687 = pneg %p387
        $region66: #{tpu_custom_call.1} parent=11 // pred_check_branch
          %689 = sbr.rel (%p687) target = $region68
        $region67: #{tpu_custom_call.1} parent=11 // pred_region
          %s691 = ssub.s32 16, 16
          %692 = vsyncadd [#allocation21], %s691
          %s694 = sshll.u32 [#allocation22], 4
          %s695 = int_to_ptr.vmem [resolvable:$true] %s694
          %697 = dma.hbm_to_vmem [thread:$0]  %s15, 16, %s695, [#allocation21]
        $region68: #{tpu_custom_call.1} parent=11 // pred_fallthru
          _
        // Predicated region
        $region69: #{tpu_custom_call.1} parent=11 // pred_check
          %p698 = pneg %p408
        $region70: #{tpu_custom_call.1} parent=11 // pred_check_branch
          %700 = sbr.rel (%p698) target = $region72
        $region71: #{tpu_custom_call.1} parent=11 // pred_region
          %s702 = ssub.s32 512, 512
          %703 = vsyncadd [#allocation24], %s702
          %s704 = sshll.u32 [#allocation23], 4
          %s705 = int_to_ptr.vmem [resolvable:$true] %s704
          %710 = dma.hbm_to_vmem [thread:$0]  %s16, 512, %s705, [#allocation24], 128, 128, 8
        $region72: #{tpu_custom_call.1} parent=11 // pred_fallthru
          _
        // Predicated region
        $region73: #{tpu_custom_call.1} parent=11 // pred_check
          %p711 = pneg %p429
        $region74: #{tpu_custom_call.1} parent=11 // pred_check_branch
          %713 = sbr.rel (%p711) target = $region76
        $region75: #{tpu_custom_call.1} parent=11 // pred_region
          %s715 = ssub.s32 16, 16
          %716 = vsyncadd [#allocation24], %s715
          %s718 = sshll.u32 [#allocation25], 4
          %s719 = int_to_ptr.vmem [resolvable:$true] %s718
          %721 = dma.hbm_to_vmem [thread:$0]  %s17, 16, %s719, [#allocation24]
        $region76: #{tpu_custom_call.1} parent=11 // pred_fallthru
          _
        // Predicated region
        $region77: #{tpu_custom_call.1} parent=11 // pred_check
          %p722 = pneg %p450
        $region78: #{tpu_custom_call.1} parent=11 // pred_check_branch
          %724 = sbr.rel (%p722) target = $region80
        $region79: #{tpu_custom_call.1} parent=11 // pred_region
          _
        $region80: #{tpu_custom_call.1} parent=11 // pred_fallthru
          _
        // Predicated region
        $region81: #{tpu_custom_call.1} parent=11 // pred_check
          %p725 = pneg %p471
        $region82: #{tpu_custom_call.1} parent=11 // pred_check_branch
          %727 = sbr.rel (%p725) target = $region84
        $region83: #{tpu_custom_call.1} parent=11 // pred_region
          _
        $region84: #{tpu_custom_call.1} parent=11 // pred_fallthru
          _
        // Predicated region
        $region85: #{tpu_custom_call.1} parent=11 // pred_check
          %p728 = pneg %p492
        $region86: #{tpu_custom_call.1} parent=11 // pred_check_branch
          %730 = sbr.rel (%p728) target = $region88
        $region87: #{tpu_custom_call.1} parent=11 // pred_region
          _
        $region88: #{tpu_custom_call.1} parent=11 // pred_fallthru
          _
        // Predicated region
        $region89: #{tpu_custom_call.1} parent=11 // pred_check
          %p731 = pneg %p513
        $region90: #{tpu_custom_call.1} parent=11 // pred_check_branch
          %733 = sbr.rel (%p731) target = $region92
        $region91: #{tpu_custom_call.1} parent=11 // pred_region
          _
        $region92: #{tpu_custom_call.1} parent=11 // pred_fallthru
          _
      $region12: #{tpu_custom_call.1} parent=5 // pred_fallthru
        _
      %p734 = scmp.lt.s32.totalorder %s41, 2
      // Predicated region
      $region93: #{tpu_custom_call.1} parent=5 // pred_check
        %p735 = pneg %p734
      $region94: #{tpu_custom_call.1} parent=5 // pred_check_branch
        %737 = sbr.rel (%p735) target = $region96
      $region95: #{tpu_custom_call.1} parent=5 // pred_region
        // Predicated region
        $region97: #{tpu_custom_call.1} parent=95 // pred_check
          %p738 = pneg %p61
        $region98: #{tpu_custom_call.1} parent=95 // pred_check_branch
          %740 = sbr.rel (%p738) target = $region100
        $region99: #{tpu_custom_call.1} parent=95 // pred_region
          %s741 = sand.u32 %s51, 1
          %s742 = scalar_lea.sflag [#allocation3], %s741
          %s743 = sand.u32 %s51, 1
          %s744 = smul.addr %s743, 8
          %s745 = scalar_lea.vmem [#allocation2], %s744
          %s747 = ssub.s32 128, 128
          %748 = vsyncadd %s742, %s747
          %s749 = smul.addr %s41, 128
          %s750 = scalar_lea.hbm %s0, %s749
          %s752 = sshll.u32 %s745, 4
          %s753 = int_to_ptr.vmem [resolvable:$true] %s752
          %755 = dma.hbm_to_vmem [thread:$0]  %s750, 128, %s753, %s742
        $region100: #{tpu_custom_call.1} parent=95 // pred_fallthru
          _
        // Predicated region
        $region101: #{tpu_custom_call.1} parent=95 // pred_check
          %p756 = pneg %p87
        $region102: #{tpu_custom_call.1} parent=95 // pred_check_branch
          %758 = sbr.rel (%p756) target = $region104
        $region103: #{tpu_custom_call.1} parent=95 // pred_region
          %p759 = scmp.lt.s32.totalorder %s41, 1
          %s760 = scalar_select %p759, %s41, 1
          %s761 = smul.addr %s760, 2
          %s762 = smul.addr %s761, 8
          %s763 = scalar_lea.vmem %s1, %s762
        $region104: #{tpu_custom_call.1} parent=95 // pred_fallthru
          _
      $region96: #{tpu_custom_call.1} parent=5 // pred_fallthru
        _
      %p764 = scmp.le.s32.totalorder 1, %s41
      %p765 = scmp.lt.s32.totalorder %s41, 3
      %p766 = pnand %p764, %p765
      %p767 = pneg %p766
      // Predicated region
      $region105: #{tpu_custom_call.1} parent=5 // pred_check
        _
      $region106: #{tpu_custom_call.1} parent=5 // pred_check_branch
        %769 = sbr.rel (%p766) target = $region108
      $region107: #{tpu_custom_call.1} parent=5 // pred_region
        %s770 = ssub.s32 %s41, 1
        %s771 = sand.u32 %s54, 1
        %s772 = scalar_lea.sflag [#allocation3], %s771
        %s773 = sand.u32 %s54, 1
        %s774 = smul.addr %s773, 8
        %s775 = scalar_lea.vmem [#allocation2], %s774
        // Predicated region
        $region109: #{tpu_custom_call.1} parent=107 // pred_check
          %p776 = pneg %p67
        $region110: #{tpu_custom_call.1} parent=107 // pred_check_branch
          %778 = sbr.rel (%p776) target = $region112
        $region111: #{tpu_custom_call.1} parent=107 // pred_region
          %779 = dma.done %s772, 128
        $region112: #{tpu_custom_call.1} parent=107 // pred_fallthru
          _
        // Predicated region
        $region113: #{tpu_custom_call.1} parent=107 // pred_check
          %p780 = pneg %p135
        $region114: #{tpu_custom_call.1} parent=107 // pred_check_branch
          %782 = sbr.rel (%p780) target = $region116
        $region115: #{tpu_custom_call.1} parent=107 // pred_region
          %783 = dma.done [#allocation6], 16
        $region116: #{tpu_custom_call.1} parent=107 // pred_fallthru
          _
        // Predicated region
        $region117: #{tpu_custom_call.1} parent=107 // pred_check
          %p784 = pneg %p177
        $region118: #{tpu_custom_call.1} parent=107 // pred_check_branch
          %786 = sbr.rel (%p784) target = $region120
        $region119: #{tpu_custom_call.1} parent=107 // pred_region
          %787 = dma.done [#allocation6], 16
        $region120: #{tpu_custom_call.1} parent=107 // pred_fallthru
          _
        // Predicated region
        $region121: #{tpu_custom_call.1} parent=107 // pred_check
          %p788 = pneg %p198
        $region122: #{tpu_custom_call.1} parent=107 // pred_check_branch
          %790 = sbr.rel (%p788) target = $region124
        $region123: #{tpu_custom_call.1} parent=107 // pred_region
          %791 = dma.done [#allocation9], 16
        $region124: #{tpu_custom_call.1} parent=107 // pred_fallthru
          _
        // Predicated region
        $region125: #{tpu_custom_call.1} parent=107 // pred_check
          %p792 = pneg %p219
        $region126: #{tpu_custom_call.1} parent=107 // pred_check_branch
          %794 = sbr.rel (%p792) target = $region128
        $region127: #{tpu_custom_call.1} parent=107 // pred_region
          %795 = dma.done [#allocation9], 16
        $region128: #{tpu_custom_call.1} parent=107 // pred_fallthru
          _
        // Predicated region
        $region129: #{tpu_custom_call.1} parent=107 // pred_check
          %p796 = pneg %p240
        $region130: #{tpu_custom_call.1} parent=107 // pred_check_branch
          %798 = sbr.rel (%p796) target = $region132
        $region131: #{tpu_custom_call.1} parent=107 // pred_region
          %799 = dma.done [#allocation12], 512
        $region132: #{tpu_custom_call.1} parent=107 // pred_fallthru
          _
        // Predicated region
        $region133: #{tpu_custom_call.1} parent=107 // pred_check
          %p800 = pneg %p261
        $region134: #{tpu_custom_call.1} parent=107 // pred_check_branch
          %802 = sbr.rel (%p800) target = $region136
        $region135: #{tpu_custom_call.1} parent=107 // pred_region
          %803 = dma.done [#allocation12], 16
        $region136: #{tpu_custom_call.1} parent=107 // pred_fallthru
          _
        // Predicated region
        $region137: #{tpu_custom_call.1} parent=107 // pred_check
          %p804 = pneg %p282
        $region138: #{tpu_custom_call.1} parent=107 // pred_check_branch
          %806 = sbr.rel (%p804) target = $region140
        $region139: #{tpu_custom_call.1} parent=107 // pred_region
          %807 = dma.done [#allocation15], 512
        $region140: #{tpu_custom_call.1} parent=107 // pred_fallthru
          _
        // Predicated region
        $region141: #{tpu_custom_call.1} parent=107 // pred_check
          %p808 = pneg %p303
        $region142: #{tpu_custom_call.1} parent=107 // pred_check_branch
          %810 = sbr.rel (%p808) target = $region144
        $region143: #{tpu_custom_call.1} parent=107 // pred_region
          %811 = dma.done [#allocation15], 16
        $region144: #{tpu_custom_call.1} parent=107 // pred_fallthru
          _
        // Predicated region
        $region145: #{tpu_custom_call.1} parent=107 // pred_check
          %p812 = pneg %p324
        $region146: #{tpu_custom_call.1} parent=107 // pred_check_branch
          %814 = sbr.rel (%p812) target = $region148
        $region147: #{tpu_custom_call.1} parent=107 // pred_region
          %815 = dma.done [#allocation18], 512
        $region148: #{tpu_custom_call.1} parent=107 // pred_fallthru
          _
        // Predicated region
        $region149: #{tpu_custom_call.1} parent=107 // pred_check
          %p816 = pneg %p345
        $region150: #{tpu_custom_call.1} parent=107 // pred_check_branch
          %818 = sbr.rel (%p816) target = $region152
        $region151: #{tpu_custom_call.1} parent=107 // pred_region
          %819 = dma.done [#allocation18], 16
        $region152: #{tpu_custom_call.1} parent=107 // pred_fallthru
          _
        // Predicated region
        $region153: #{tpu_custom_call.1} parent=107 // pred_check
          %p820 = pneg %p366
        $region154: #{tpu_custom_call.1} parent=107 // pred_check_branch
          %822 = sbr.rel (%p820) target = $region156
        $region155: #{tpu_custom_call.1} parent=107 // pred_region
          %823 = dma.done [#allocation21], 16
        $region156: #{tpu_custom_call.1} parent=107 // pred_fallthru
          _
        // Predicated region
        $region157: #{tpu_custom_call.1} parent=107 // pred_check
          %p824 = pneg %p387
        $region158: #{tpu_custom_call.1} parent=107 // pred_check_branch
          %826 = sbr.rel (%p824) target = $region160
        $region159: #{tpu_custom_call.1} parent=107 // pred_region
          %827 = dma.done [#allocation21], 16
        $region160: #{tpu_custom_call.1} parent=107 // pred_fallthru
          _
        // Predicated region
        $region161: #{tpu_custom_call.1} parent=107 // pred_check
          %p828 = pneg %p408
        $region162: #{tpu_custom_call.1} parent=107 // pred_check_branch
          %830 = sbr.rel (%p828) target = $region164
        $region163: #{tpu_custom_call.1} parent=107 // pred_region
          %831 = dma.done [#allocation24], 512
        $region164: #{tpu_custom_call.1} parent=107 // pred_fallthru
          _
        // Predicated region
        $region165: #{tpu_custom_call.1} parent=107 // pred_check
          %p832 = pneg %p429
        $region166: #{tpu_custom_call.1} parent=107 // pred_check_branch
          %834 = sbr.rel (%p832) target = $region168
        $region167: #{tpu_custom_call.1} parent=107 // pred_region
          %835 = dma.done [#allocation24], 16
        $region168: #{tpu_custom_call.1} parent=107 // pred_fallthru
          _
        %s836 = sand.u32 %s54, 1
        %s837 = scalar_lea.sflag [#allocation3], %s836
        %s838 = sand.u32 %s54, 1
        %s839 = smul.addr %s838, 8
        %s840 = scalar_lea.vmem [#allocation2], %s839
        %p841 = pneg %p67
        %p842 = pneg %p64
        %p843 = scmp.lt.s32.totalorder %s46, 1
        %s844 = scalar_select %p843, %s46, 1
        %s845 = smul.addr %s844, 2
        %s846 = smul.addr %s845, 8
        %s847 = scalar_lea.vmem %s1, %s846
        %p848 = pneg %p93
        %p849 = pneg %p90
        %p850 = pneg %p114
        %p851 = pneg %p111
        %p852 = pneg %p135
        %p853 = pneg %p132
        %p854 = pneg %p156
        %p855 = pneg %p153
        %p856 = pneg %p177
        %p857 = pneg %p174
        %p858 = pneg %p198
        %p859 = pneg %p195
        %p860 = pneg %p219
        %p861 = pneg %p216
        %p862 = pneg %p240
        %p863 = pneg %p237
        %p864 = pneg %p261
        %p865 = pneg %p258
        %p866 = pneg %p282
        %p867 = pneg %p279
        %p868 = pneg %p303
        %p869 = pneg %p300
        %p870 = pneg %p324
        %p871 = pneg %p321
        %p872 = pneg %p345
        %p873 = pneg %p342
        %p874 = pneg %p366
        %p875 = pneg %p363
        %p876 = pneg %p387
        %p877 = pneg %p384
        %p878 = pneg %p408
        %p879 = pneg %p405
        %p880 = pneg %p429
        %p881 = pneg %p426
        %p882 = pneg %p450
        %p883 = pneg %p447
        %p884 = pneg %p471
        %p885 = pneg %p468
        %p886 = pneg %p492
        %p887 = pneg %p489
        %p888 = pneg %p513
        %p889 = pneg %p510
        %p890 = pneg %p539
        %p891 = pneg %p536
        %s892 = sand.u32 %s526, 1
        %s893 = scalar_lea.sflag [#allocation4], %s892
        %s894 = sand.u32 %s526, 1
        %s895 = smul.addr %s894, 8
        %s896 = scalar_lea.vmem [#allocation26], %s895
        %p897 = scmp.lt.s32.totalorder %s46, 1
        %s898 = scalar_select %p897, %s46, 1
        %s899 = smul.addr %s898, 2
        %s900 = smul.addr %s899, 8
        %s901 = scalar_lea.vmem %s1, %s900
        %v902 = vld [vmem:[%s775] sm:$0xff]
        %v903 = vld [vmem:[%s901] sm:$0xff]
        %v904 = vld [vmem:[%s901 + $0x8] sm:$0xff]
        %v905 = vld [vmem:[%s2] sm:$0xff]
        %v906 = vld [vmem:[%s2 + $0x8] sm:$0xff]
        %v907 = vld [vmem:[%s2 + $0x10] sm:$0xff]
        %v908 = vld [vmem:[%s2 + $0x18] sm:$0xff]
        %v909 = vld [vmem:[#allocation5] sm:$0x1]
        %v910 = vld [vmem:[%s4] sm:$0xff]
        %v911 = vld [vmem:[%s4 + $0x8] sm:$0xff]
        %v912 = vld [vmem:[%s4 + $0x10] sm:$0xff]
        %v913 = vld [vmem:[%s4 + $0x18] sm:$0xff]
        %v914 = vld [vmem:[#allocation7] sm:$0x1]
        %v915 = vld [vmem:[#allocation11] sm:$0xff]
        %v916 = vld [vmem:[#allocation11 + $0x8] sm:$0xff]
        %v917 = vld [vmem:[#allocation11 + $0x10] sm:$0xff]
        %v918 = vld [vmem:[#allocation11 + $0x18] sm:$0xff]
        %v919 = vld [vmem:[#allocation13] sm:$0x1]
        %v920 = vld [vmem:[#allocation17] sm:$0xff]
        %v921 = vld [vmem:[#allocation17 + $0x8] sm:$0xff]
        %v922 = vld [vmem:[#allocation17 + $0x10] sm:$0xff]
        %v923 = vld [vmem:[#allocation17 + $0x18] sm:$0xff]
        %v924 = vld [vmem:[#allocation19] sm:$0x1]
        %v925 = vld [vmem:[#allocation23] sm:$0xff]
        %v926 = vld [vmem:[#allocation23 + $0x8] sm:$0xff]
        %v927 = vld [vmem:[#allocation23 + $0x10] sm:$0xff]
        %v928 = vld [vmem:[#allocation23 + $0x18] sm:$0xff]
        %v929 = vld [vmem:[#allocation25] sm:$0x1]
        %v930 = vld [vmem:[%s18] sm:$0xff]
        %v931 = vld [vmem:[%s18 + $0x8] sm:$0xff]
        %v932 = vld [vmem:[%s18 + $0x10] sm:$0xff]
        %v933 = vld [vmem:[%s18 + $0x18] sm:$0xff]
        %v934 = vld [vmem:[%s18 + $0x20] sm:$0xff]
        %v935 = vld [vmem:[%s18 + $0x28] sm:$0xff]
        %v936 = vld [vmem:[%s18 + $0x30] sm:$0xff]
        %v937 = vld [vmem:[%s18 + $0x38] sm:$0xff]
        %v938 = vld [vmem:[%s19] sm:$0x1]
        %v939 = vld [vmem:[#allocation8] sm:$0x1]
        %v940 = vld [vmem:[#allocation10] sm:$0x1]
        %v941 = vld [vmem:[#allocation20] sm:$0x1]
        %v942 = vld [vmem:[#allocation22] sm:$0x1]
        %v943 = vld [vmem:[%s20] sm:$0x1]
        %v944 = vld [vmem:[%s21] sm:$0x1]
        %v945 = vld [vmem:[#allocation14] sm:$0xff]
        %v946 = vld [vmem:[#allocation14 + $0x8] sm:$0xff]
        %v947 = vld [vmem:[#allocation14 + $0x10] sm:$0xff]
        %v948 = vld [vmem:[#allocation14 + $0x18] sm:$0xff]
        %v949 = vld [vmem:[#allocation16] sm:$0x1]
        %v951 = vlaneseq
        %v952 = vshrl.u32 %v951, 7
        %v953 = vsub.s32 0, %v952
        %v954 = vrot.slane %v949, %v953
        %vm956 = vcmask 261120
        %v958 = vsel %vm956, %v903, 0
        %v961 = vsel %vm956, %v904, 0
        %963 = vmatprep.subr.mxu0 0.0
        %964 = vmatpush1.msra.mxu0 0.0
        %965 = vmatprep.subr.mxu0 0.0
        %966 = vmatpush1.msra.mxu0 0.0
        %967 = vmatprep.subr.mxu0 0.0
        %968 = vmatpush1.msra.mxu0 0.0
        %969 = vmatprep.subr.mxu0 0.0
        %970 = vmatpush1.msra.mxu0 0.0
        %971 = vmatprep.subr.mxu0 0.0
        %972 = vmatpush1.msra.mxu0 0.0
        %973 = vmatprep.subr.mxu0 0.0
        %974 = vmatpush1.msra.mxu0 0.0
        %975 = vmatprep.subr.mxu0 0.0
        %976 = vmatpush1.msra.mxu0 0.0
        %977 = vmatprep.subr.mxu0 0.0
        %978 = vmatpush1.msra.mxu0 0.0
        %979 = vmatprep.subr.mxu0 0.0
        %980 = vmatpush1.msra.mxu0 0.0
        %981 = vmatprep.subr.mxu0 0.0
        %982 = vmatpush1.msra.mxu0 0.0
        %983 = vmatprep.subr.mxu0 0.0
        %984 = vmatpush1.msra.mxu0 0.0
        %985 = vmatprep.subr.mxu0 0.0
        %986 = vmatpush1.msra.mxu0 0.0
        %987 = vmatprep.subr.mxu0 0.0
        %988 = vmatpush1.msra.mxu0 %v948
        %989 = vmatprep.subr.mxu0 0.0
        %990 = vmatpush1.msra.mxu0 %v947
        %991 = vmatprep.subr.mxu0 0.0
        %992 = vmatpush1.msra.mxu0 %v946
        %993 = vmatprep.subr.mxu0 0.0
        %994 = vmatpush1.msra.mxu0 %v945
        %995 = vmatprep.subr.mxu0 0.0
        %996 = vmatpush2.msra.mxu0 0.0
        %997 = vmatprep.subr.mxu0 0.0
        %998 = vmatpush2.msra.mxu0 0.0
        %999 = vmatprep.subr.mxu0 0.0
        %1000 = vmatpush2.msra.mxu0 0.0
        %1001 = vmatprep.subr.mxu0 0.0
        %1002 = vmatpush2.msra.mxu0 0.0
        %1003 = vmatprep.subr.mxu0 0.0
        %1004 = vmatpush2.msra.mxu0 0.0
        %1005 = vmatprep.subr.mxu0 0.0
        %1006 = vmatpush2.msra.mxu0 0.0
        %1007 = vmatprep.subr.mxu0 0.0
        %1008 = vmatpush2.msra.mxu0 0.0
        %1009 = vmatprep.subr.mxu0 0.0
        %1010 = vmatpush2.msra.mxu0 0.0
        %1011 = vmatprep.subr.mxu0 0.0
        %1012 = vmatpush2.msra.mxu0 0.0
        %1013 = vmatprep.subr.mxu0 0.0
        %1014 = vmatpush2.msra.mxu0 0.0
        %1015 = vmatprep.subr.mxu0 0.0
        %1016 = vmatpush2.msra.mxu0 0.0
        %1017 = vmatprep.subr.mxu0 0.0
        %1018 = vmatpush2.msra.mxu0 0.0
        %1019 = vmatprep.subr.mxu0 0.0
        %1020 = vmatpush2.msra.mxu0 0.0
        %1021 = vmatprep.subr.mxu0 0.0
        %1022 = vmatpush2.msra.mxu0 0.0
        %1023 = vmatprep.subr.mxu0 0.0
        %1024 = vmatpush2.msra.mxu0 0.0
        %1025 = vmatprep.subr.mxu0 0.0
        %1026 = vmatpush2.msra.mxu0 0.0
        %1027 = vmatprep.mubr.f32.mxu0 0.0
        %1028 = vmatmul.mubr.f32.gmra.mxu0 %v958
        %v1029 = vpop.f32.mrf.mxu0
        %v1030 = vadd.f32 %v954, %v1029
        %v1031 = vpop.f32.mrf.mxu0
        %1032 = vmatprep.mubr.f32.mxu0 0.0
        %1033 = vmatmul.mubr.f32.gmra.mxu0 %v961
        %v1034 = vpop.f32.mrf.mxu0
        %v1035 = vadd.f32 %v954, %v1034
        %v1036 = vpop.f32.mrf.mxu0
        %1037 = vdwg.mxu0
        %v1039 = vlaneseq
        %v1040 = vshrl.u32 %v1039, 7
        %v1041 = vsub.s32 0, %v1040
        %v1042 = vrot.slane %v909, %v1041
        %v1045 = vsel %vm956, %v902, 0
        %1047 = vmatprep.subr.mxu0 0.0
        %1048 = vmatpush1.msra.mxu0 0.0
        %1049 = vmatprep.subr.mxu0 0.0
        %1050 = vmatpush1.msra.mxu0 0.0
        %1051 = vmatprep.subr.mxu0 0.0
        %1052 = vmatpush1.msra.mxu0 0.0
        %1053 = vmatprep.subr.mxu0 0.0
        %1054 = vmatpush1.msra.mxu0 0.0
        %1055 = vmatprep.subr.mxu0 0.0
        %1056 = vmatpush1.msra.mxu0 0.0
        %1057 = vmatprep.subr.mxu0 0.0
        %1058 = vmatpush1.msra.mxu0 0.0
        %1059 = vmatprep.subr.mxu0 0.0
        %1060 = vmatpush1.msra.mxu0 0.0
        %1061 = vmatprep.subr.mxu0 0.0
        %1062 = vmatpush1.msra.mxu0 0.0
        %1063 = vmatprep.subr.mxu0 0.0
        %1064 = vmatpush1.msra.mxu0 0.0
        %1065 = vmatprep.subr.mxu0 0.0
        %1066 = vmatpush1.msra.mxu0 0.0
        %1067 = vmatprep.subr.mxu0 0.0
        %1068 = vmatpush1.msra.mxu0 0.0
        %1069 = vmatprep.subr.mxu0 0.0
        %1070 = vmatpush1.msra.mxu0 0.0
        %1071 = vmatprep.subr.mxu0 0.0
        %1072 = vmatpush1.msra.mxu0 %v908
        %1073 = vmatprep.subr.mxu0 0.0
        %1074 = vmatpush1.msra.mxu0 %v907
        %1075 = vmatprep.subr.mxu0 0.0
        %1076 = vmatpush1.msra.mxu0 %v906
        %1077 = vmatprep.subr.mxu0 0.0
        %1078 = vmatpush1.msra.mxu0 %v905
        %1079 = vmatprep.subr.mxu0 0.0
        %1080 = vmatpush2.msra.mxu0 0.0
        %1081 = vmatprep.subr.mxu0 0.0
        %1082 = vmatpush2.msra.mxu0 0.0
        %1083 = vmatprep.subr.mxu0 0.0
        %1084 = vmatpush2.msra.mxu0 0.0
        %1085 = vmatprep.subr.mxu0 0.0
        %1086 = vmatpush2.msra.mxu0 0.0
        %1087 = vmatprep.subr.mxu0 0.0
        %1088 = vmatpush2.msra.mxu0 0.0
        %1089 = vmatprep.subr.mxu0 0.0
        %1090 = vmatpush2.msra.mxu0 0.0
        %1091 = vmatprep.subr.mxu0 0.0
        %1092 = vmatpush2.msra.mxu0 0.0
        %1093 = vmatprep.subr.mxu0 0.0
        %1094 = vmatpush2.msra.mxu0 0.0
        %1095 = vmatprep.subr.mxu0 0.0
        %1096 = vmatpush2.msra.mxu0 0.0
        %1097 = vmatprep.subr.mxu0 0.0
        %1098 = vmatpush2.msra.mxu0 0.0
        %1099 = vmatprep.subr.mxu0 0.0
        %1100 = vmatpush2.msra.mxu0 0.0
        %1101 = vmatprep.subr.mxu0 0.0
        %1102 = vmatpush2.msra.mxu0 0.0
        %1103 = vmatprep.subr.mxu0 0.0
        %1104 = vmatpush2.msra.mxu0 0.0
        %1105 = vmatprep.subr.mxu0 0.0
        %1106 = vmatpush2.msra.mxu0 0.0
        %1107 = vmatprep.subr.mxu0 0.0
        %1108 = vmatpush2.msra.mxu0 0.0
        %1109 = vmatprep.subr.mxu0 0.0
        %1110 = vmatpush2.msra.mxu0 0.0
        %1111 = vmatprep.mubr.f32.mxu0 0.0
        %1112 = vmatmul.mubr.f32.gmra.mxu0 %v1045
        %v1113 = vpop.f32.mrf.mxu0
        %v1114 = vadd.f32 %v1042, %v1113
        %v1115 = vpop.f32.mrf.mxu0
        %1116 = vdwg.mxu0
        %1118 = vrot.lane.b32.xlu0 %v1114, 96
        %v1119 = vpop.permute.xlu0 %1118
        %vm1120 = vcmask 64512
        %v1121 = vsel %vm1120, %v1114, 0
        %v1123 = vsel %vm1120, %v1119, 0
        %1125 = vmatprep.subr.mxu0 0.0
        %1126 = vmatpush1.xpose.msra.mxu0 0.0
        %1127 = vmatprep.subr.mxu0 0.0
        %1128 = vmatpush1.xpose.msra.mxu0 0.0
        %1129 = vmatprep.subr.mxu0 0.0
        %1130 = vmatpush1.xpose.msra.mxu0 0.0
        %1131 = vmatprep.subr.mxu0 0.0
        %1132 = vmatpush1.xpose.msra.mxu0 0.0
        %1133 = vmatprep.subr.mxu0 0.0
        %1134 = vmatpush1.xpose.msra.mxu0 0.0
        %1135 = vmatprep.subr.mxu0 0.0
        %1136 = vmatpush1.xpose.msra.mxu0 0.0
        %1137 = vmatprep.subr.mxu0 0.0
        %1138 = vmatpush1.xpose.msra.mxu0 0.0
        %1139 = vmatprep.subr.mxu0 0.0
        %1140 = vmatpush1.xpose.msra.mxu0 0.0
        %1141 = vmatprep.subr.mxu0 0.0
        %1142 = vmatpush1.xpose.msra.mxu0 0.0
        %1143 = vmatprep.subr.mxu0 0.0
        %1144 = vmatpush1.xpose.msra.mxu0 0.0
        %1145 = vmatprep.subr.mxu0 0.0
        %1146 = vmatpush1.xpose.msra.mxu0 0.0
        %1147 = vmatprep.subr.mxu0 0.0
        %1148 = vmatpush1.xpose.msra.mxu0 0.0
        %1149 = vmatprep.subr.mxu0 0.0
        %1150 = vmatpush1.xpose.msra.mxu0 0.0
        %1151 = vmatprep.subr.mxu0 0.0
        %1152 = vmatpush1.xpose.msra.mxu0 0.0
        %1153 = vmatprep.subr.mxu0 0.0
        %1154 = vmatpush1.xpose.msra.mxu0 0.0
        %1155 = vmatprep.subr.mxu0 0.0
        %1156 = vmatpush1.xpose.msra.mxu0 %v1123
        %1157 = vmatprep.subr.mxu0 0.0
        %1158 = vmatpush2.xpose.msra.mxu0 0.0
        %1159 = vmatprep.subr.mxu0 0.0
        %1160 = vmatpush2.xpose.msra.mxu0 0.0
        %1161 = vmatprep.subr.mxu0 0.0
        %1162 = vmatpush2.xpose.msra.mxu0 0.0
        %1163 = vmatprep.subr.mxu0 0.0
        %1164 = vmatpush2.xpose.msra.mxu0 0.0
        %1165 = vmatprep.subr.mxu0 0.0
        %1166 = vmatpush2.xpose.msra.mxu0 0.0
        %1167 = vmatprep.subr.mxu0 0.0
        %1168 = vmatpush2.xpose.msra.mxu0 0.0
        %1169 = vmatprep.subr.mxu0 0.0
        %1170 = vmatpush2.xpose.msra.mxu0 0.0
        %1171 = vmatprep.subr.mxu0 0.0
        %1172 = vmatpush2.xpose.msra.mxu0 0.0
        %1173 = vmatprep.subr.mxu0 0.0
        %1174 = vmatpush2.xpose.msra.mxu0 0.0
        %1175 = vmatprep.subr.mxu0 0.0
        %1176 = vmatpush2.xpose.msra.mxu0 0.0
        %1177 = vmatprep.subr.mxu0 0.0
        %1178 = vmatpush2.xpose.msra.mxu0 0.0
        %1179 = vmatprep.subr.mxu0 0.0
        %1180 = vmatpush2.xpose.msra.mxu0 0.0
        %1181 = vmatprep.subr.mxu0 0.0
        %1182 = vmatpush2.xpose.msra.mxu0 0.0
        %1183 = vmatprep.subr.mxu0 0.0
        %1184 = vmatpush2.xpose.msra.mxu0 0.0
        %1185 = vmatprep.subr.mxu0 0.0
        %1186 = vmatpush2.xpose.msra.mxu0 0.0
        %1187 = vmatprep.subr.mxu0 0.0
        %1188 = vmatpush2.xpose.msra.mxu0 0.0
        %1189 = vmatprep.mubr.f32.mxu0 0.0
        %1190 = vmatmul.mubr.f32.gmra.mxu0 %v1121
        %v1191 = vpop.f32.mrf.mxu0
        %v1192 = vadd.f32 0.0, %v1191
        %v1193 = vpop.f32.mrf.mxu0
        %1194 = vdwg.mxu0
        %v1195 = vsel %vm1120, %v1192, -inf
        %1196 = vmax.xlane.f32.xlu0 %v1195
        %v1197 = vpop.xlane.xlu0 %1196
        %v1198 = vsub.f32 %v1192, %v1197
        %v1199 = vmul.f32 %v1198, 1.442695
        %v1200 = vpow.pop %v1199
        %v1201 = vsel %vm1120, %v1200, 0.0
        %1202 = vadd.xlane.f32.xlu0 %v1201
        %v1203 = vpop.xlane.xlu0 %1202
        %v1204 = vrcp.pop %v1203
        %v1205 = vmul.f32 %v1200, %v1204
        %1206 = vrot.lane.b32.xlu0 %v1114, 64
        %v1207 = vpop.permute.xlu0 %1206
        %v1210 = vsel %vm1120, %v1205, 0
        %1212 = vmatprep.subr.mxu0 0.0
        %1213 = vmatpush1.msra.mxu0 0.0
        %1214 = vmatprep.subr.mxu0 0.0
        %1215 = vmatpush1.msra.mxu0 0.0
        %1216 = vmatprep.subr.mxu0 0.0
        %1217 = vmatpush1.msra.mxu0 0.0
        %1218 = vmatprep.subr.mxu0 0.0
        %1219 = vmatpush1.msra.mxu0 0.0
        %1220 = vmatprep.subr.mxu0 0.0
        %1221 = vmatpush1.msra.mxu0 0.0
        %1222 = vmatprep.subr.mxu0 0.0
        %1223 = vmatpush1.msra.mxu0 0.0
        %1224 = vmatprep.subr.mxu0 0.0
        %1225 = vmatpush1.msra.mxu0 0.0
        %1226 = vmatprep.subr.mxu0 0.0
        %1227 = vmatpush1.msra.mxu0 0.0
        %1228 = vmatprep.subr.mxu0 0.0
        %1229 = vmatpush1.msra.mxu0 0.0
        %1230 = vmatprep.subr.mxu0 0.0
        %1231 = vmatpush1.msra.mxu0 0.0
        %1232 = vmatprep.subr.mxu0 0.0
        %1233 = vmatpush1.msra.mxu0 0.0
        %1234 = vmatprep.subr.mxu0 0.0
        %1235 = vmatpush1.msra.mxu0 0.0
        %1236 = vmatprep.subr.mxu0 0.0
        %1237 = vmatpush1.msra.mxu0 0.0
        %1238 = vmatprep.subr.mxu0 0.0
        %1239 = vmatpush1.msra.mxu0 0.0
        %1240 = vmatprep.subr.mxu0 0.0
        %1241 = vmatpush1.msra.mxu0 0.0
        %1242 = vmatprep.subr.mxu0 0.0
        %1243 = vmatpush1.msra.mxu0 %v1207
        %1244 = vmatprep.subr.mxu0 0.0
        %1245 = vmatpush2.msra.mxu0 0.0
        %1246 = vmatprep.subr.mxu0 0.0
        %1247 = vmatpush2.msra.mxu0 0.0
        %1248 = vmatprep.subr.mxu0 0.0
        %1249 = vmatpush2.msra.mxu0 0.0
        %1250 = vmatprep.subr.mxu0 0.0
        %1251 = vmatpush2.msra.mxu0 0.0
        %1252 = vmatprep.subr.mxu0 0.0
        %1253 = vmatpush2.msra.mxu0 0.0
        %1254 = vmatprep.subr.mxu0 0.0
        %1255 = vmatpush2.msra.mxu0 0.0
        %1256 = vmatprep.subr.mxu0 0.0
        %1257 = vmatpush2.msra.mxu0 0.0
        %1258 = vmatprep.subr.mxu0 0.0
        %1259 = vmatpush2.msra.mxu0 0.0
        %1260 = vmatprep.subr.mxu0 0.0
        %1261 = vmatpush2.msra.mxu0 0.0
        %1262 = vmatprep.subr.mxu0 0.0
        %1263 = vmatpush2.msra.mxu0 0.0
        %1264 = vmatprep.subr.mxu0 0.0
        %1265 = vmatpush2.msra.mxu0 0.0
        %1266 = vmatprep.subr.mxu0 0.0
        %1267 = vmatpush2.msra.mxu0 0.0
        %1268 = vmatprep.subr.mxu0 0.0
        %1269 = vmatpush2.msra.mxu0 0.0
        %1270 = vmatprep.subr.mxu0 0.0
        %1271 = vmatpush2.msra.mxu0 0.0
        %1272 = vmatprep.subr.mxu0 0.0
        %1273 = vmatpush2.msra.mxu0 0.0
        %1274 = vmatprep.subr.mxu0 0.0
        %1275 = vmatpush2.msra.mxu0 0.0
        %1276 = vmatprep.mubr.f32.mxu0 0.0
        %1277 = vmatmul.mubr.f32.gmra.mxu0 %v1210
        %v1278 = vpop.f32.mrf.mxu0
        %v1279 = vadd.f32 0.0, %v1278
        %v1280 = vpop.f32.mrf.mxu0
        %1281 = vdwg.mxu0
        %1282 = vrot.lane.b32.xlu0 %v1114, 120
        %v1283 = vpop.permute.xlu0 %1282
        %1284 = vrot.lane.b32.xlu0 %v1114, 88
        %v1285 = vpop.permute.xlu0 %1284
        %v1286 = vsel %vm1120, %v1283, 0
        %v1288 = vsel %vm1120, %v1285, 0
        %1290 = vmatprep.subr.mxu0 0.0
        %1291 = vmatpush1.xpose.msra.mxu0 0.0
        %1292 = vmatprep.subr.mxu0 0.0
        %1293 = vmatpush1.xpose.msra.mxu0 0.0
        %1294 = vmatprep.subr.mxu0 0.0
        %1295 = vmatpush1.xpose.msra.mxu0 0.0
        %1296 = vmatprep.subr.mxu0 0.0
        %1297 = vmatpush1.xpose.msra.mxu0 0.0
        %1298 = vmatprep.subr.mxu0 0.0
        %1299 = vmatpush1.xpose.msra.mxu0 0.0
        %1300 = vmatprep.subr.mxu0 0.0
        %1301 = vmatpush1.xpose.msra.mxu0 0.0
        %1302 = vmatprep.subr.mxu0 0.0
        %1303 = vmatpush1.xpose.msra.mxu0 0.0
        %1304 = vmatprep.subr.mxu0 0.0
        %1305 = vmatpush1.xpose.msra.mxu0 0.0
        %1306 = vmatprep.subr.mxu0 0.0
        %1307 = vmatpush1.xpose.msra.mxu0 0.0
        %1308 = vmatprep.subr.mxu0 0.0
        %1309 = vmatpush1.xpose.msra.mxu0 0.0
        %1310 = vmatprep.subr.mxu0 0.0
        %1311 = vmatpush1.xpose.msra.mxu0 0.0
        %1312 = vmatprep.subr.mxu0 0.0
        %1313 = vmatpush1.xpose.msra.mxu0 0.0
        %1314 = vmatprep.subr.mxu0 0.0
        %1315 = vmatpush1.xpose.msra.mxu0 0.0
        %1316 = vmatprep.subr.mxu0 0.0
        %1317 = vmatpush1.xpose.msra.mxu0 0.0
        %1318 = vmatprep.subr.mxu0 0.0
        %1319 = vmatpush1.xpose.msra.mxu0 0.0
        %1320 = vmatprep.subr.mxu0 0.0
        %1321 = vmatpush1.xpose.msra.mxu0 %v1288
        %1322 = vmatprep.subr.mxu0 0.0
        %1323 = vmatpush2.xpose.msra.mxu0 0.0
        %1324 = vmatprep.subr.mxu0 0.0
        %1325 = vmatpush2.xpose.msra.mxu0 0.0
        %1326 = vmatprep.subr.mxu0 0.0
        %1327 = vmatpush2.xpose.msra.mxu0 0.0
        %1328 = vmatprep.subr.mxu0 0.0
        %1329 = vmatpush2.xpose.msra.mxu0 0.0
        %1330 = vmatprep.subr.mxu0 0.0
        %1331 = vmatpush2.xpose.msra.mxu0 0.0
        %1332 = vmatprep.subr.mxu0 0.0
        %1333 = vmatpush2.xpose.msra.mxu0 0.0
        %1334 = vmatprep.subr.mxu0 0.0
        %1335 = vmatpush2.xpose.msra.mxu0 0.0
        %1336 = vmatprep.subr.mxu0 0.0
        %1337 = vmatpush2.xpose.msra.mxu0 0.0
        %1338 = vmatprep.subr.mxu0 0.0
        %1339 = vmatpush2.xpose.msra.mxu0 0.0
        %1340 = vmatprep.subr.mxu0 0.0
        %1341 = vmatpush2.xpose.msra.mxu0 0.0
        %1342 = vmatprep.subr.mxu0 0.0
        %1343 = vmatpush2.xpose.msra.mxu0 0.0
        %1344 = vmatprep.subr.mxu0 0.0
        %1345 = vmatpush2.xpose.msra.mxu0 0.0
        %1346 = vmatprep.subr.mxu0 0.0
        %1347 = vmatpush2.xpose.msra.mxu0 0.0
        %1348 = vmatprep.subr.mxu0 0.0
        %1349 = vmatpush2.xpose.msra.mxu0 0.0
        %1350 = vmatprep.subr.mxu0 0.0
        %1351 = vmatpush2.xpose.msra.mxu0 0.0
        %1352 = vmatprep.subr.mxu0 0.0
        %1353 = vmatpush2.xpose.msra.mxu0 0.0
        %1354 = vmatprep.mubr.f32.mxu0 0.0
        %1355 = vmatmul.mubr.f32.gmra.mxu0 %v1286
        %v1356 = vpop.f32.mrf.mxu0
        %v1357 = vadd.f32 0.0, %v1356
        %v1358 = vpop.f32.mrf.mxu0
        %1359 = vdwg.mxu0
        %v1360 = vsel %vm1120, %v1357, -inf
        %1361 = vmax.xlane.f32.xlu0 %v1360
        %v1362 = vpop.xlane.xlu0 %1361
        %v1363 = vsub.f32 %v1357, %v1362
        %v1364 = vmul.f32 %v1363, 1.442695
        %v1365 = vpow.pop %v1364
        %v1366 = vsel %vm1120, %v1365, 0.0
        %1367 = vadd.xlane.f32.xlu0 %v1366
        %v1368 = vpop.xlane.xlu0 %1367
        %v1369 = vrcp.pop %v1368
        %v1370 = vmul.f32 %v1365, %v1369
        %1371 = vrot.lane.b32.xlu0 %v1114, 56
        %v1372 = vpop.permute.xlu0 %1371
        %v1375 = vsel %vm1120, %v1370, 0
        %1377 = vmatprep.subr.mxu0 0.0
        %1378 = vmatpush1.msra.mxu0 0.0
        %1379 = vmatprep.subr.mxu0 0.0
        %1380 = vmatpush1.msra.mxu0 0.0
        %1381 = vmatprep.subr.mxu0 0.0
        %1382 = vmatpush1.msra.mxu0 0.0
        %1383 = vmatprep.subr.mxu0 0.0
        %1384 = vmatpush1.msra.mxu0 0.0
        %1385 = vmatprep.subr.mxu0 0.0
        %1386 = vmatpush1.msra.mxu0 0.0
        %1387 = vmatprep.subr.mxu0 0.0
        %1388 = vmatpush1.msra.mxu0 0.0
        %1389 = vmatprep.subr.mxu0 0.0
        %1390 = vmatpush1.msra.mxu0 0.0
        %1391 = vmatprep.subr.mxu0 0.0
        %1392 = vmatpush1.msra.mxu0 0.0
        %1393 = vmatprep.subr.mxu0 0.0
        %1394 = vmatpush1.msra.mxu0 0.0
        %1395 = vmatprep.subr.mxu0 0.0
        %1396 = vmatpush1.msra.mxu0 0.0
        %1397 = vmatprep.subr.mxu0 0.0
        %1398 = vmatpush1.msra.mxu0 0.0
        %1399 = vmatprep.subr.mxu0 0.0
        %1400 = vmatpush1.msra.mxu0 0.0
        %1401 = vmatprep.subr.mxu0 0.0
        %1402 = vmatpush1.msra.mxu0 0.0
        %1403 = vmatprep.subr.mxu0 0.0
        %1404 = vmatpush1.msra.mxu0 0.0
        %1405 = vmatprep.subr.mxu0 0.0
        %1406 = vmatpush1.msra.mxu0 0.0
        %1407 = vmatprep.subr.mxu0 0.0
        %1408 = vmatpush1.msra.mxu0 %v1372
        %1409 = vmatprep.subr.mxu0 0.0
        %1410 = vmatpush2.msra.mxu0 0.0
        %1411 = vmatprep.subr.mxu0 0.0
        %1412 = vmatpush2.msra.mxu0 0.0
        %1413 = vmatprep.subr.mxu0 0.0
        %1414 = vmatpush2.msra.mxu0 0.0
        %1415 = vmatprep.subr.mxu0 0.0
        %1416 = vmatpush2.msra.mxu0 0.0
        %1417 = vmatprep.subr.mxu0 0.0
        %1418 = vmatpush2.msra.mxu0 0.0
        %1419 = vmatprep.subr.mxu0 0.0
        %1420 = vmatpush2.msra.mxu0 0.0
        %1421 = vmatprep.subr.mxu0 0.0
        %1422 = vmatpush2.msra.mxu0 0.0
        %1423 = vmatprep.subr.mxu0 0.0
        %1424 = vmatpush2.msra.mxu0 0.0
        %1425 = vmatprep.subr.mxu0 0.0
        %1426 = vmatpush2.msra.mxu0 0.0
        %1427 = vmatprep.subr.mxu0 0.0
        %1428 = vmatpush2.msra.mxu0 0.0
        %1429 = vmatprep.subr.mxu0 0.0
        %1430 = vmatpush2.msra.mxu0 0.0
        %1431 = vmatprep.subr.mxu0 0.0
        %1432 = vmatpush2.msra.mxu0 0.0
        %1433 = vmatprep.subr.mxu0 0.0
        %1434 = vmatpush2.msra.mxu0 0.0
        %1435 = vmatprep.subr.mxu0 0.0
        %1436 = vmatpush2.msra.mxu0 0.0
        %1437 = vmatprep.subr.mxu0 0.0
        %1438 = vmatpush2.msra.mxu0 0.0
        %1439 = vmatprep.subr.mxu0 0.0
        %1440 = vmatpush2.msra.mxu0 0.0
        %1441 = vmatprep.mubr.f32.mxu0 0.0
        %1442 = vmatmul.mubr.f32.gmra.mxu0 %v1375
        %v1443 = vpop.f32.mrf.mxu0
        %v1444 = vadd.f32 0.0, %v1443
        %v1445 = vpop.f32.mrf.mxu0
        %1446 = vdwg.mxu0
        %v1448 = vsel %vm1120, %v1444, 0
        %1450 = vmatprep.subr.mxu0 0.0
        %1451 = vmatpush1.msra.mxu0 0.0
        %1452 = vmatprep.subr.mxu0 0.0
        %1453 = vmatpush1.msra.mxu0 0.0
        %1454 = vmatprep.subr.mxu0 0.0
        %1455 = vmatpush1.msra.mxu0 0.0
        %1456 = vmatprep.subr.mxu0 0.0
        %1457 = vmatpush1.msra.mxu0 0.0
        %1458 = vmatprep.subr.mxu0 0.0
        %1459 = vmatpush1.msra.mxu0 0.0
        %1460 = vmatprep.subr.mxu0 0.0
        %1461 = vmatpush1.msra.mxu0 0.0
        %1462 = vmatprep.subr.mxu0 0.0
        %1463 = vmatpush1.msra.mxu0 0.0
        %1464 = vmatprep.subr.mxu0 0.0
        %1465 = vmatpush1.msra.mxu0 0.0
        %1466 = vmatprep.subr.mxu0 0.0
        %1467 = vmatpush1.msra.mxu0 0.0
        %1468 = vmatprep.subr.mxu0 0.0
        %1469 = vmatpush1.msra.mxu0 0.0
        %1470 = vmatprep.subr.mxu0 0.0
        %1471 = vmatpush1.msra.mxu0 0.0
        %1472 = vmatprep.subr.mxu0 0.0
        %1473 = vmatpush1.msra.mxu0 0.0
        %1474 = vmatprep.subr.mxu0 0.0
        %1475 = vmatpush1.msra.mxu0 0.0
        %1476 = vmatprep.subr.mxu0 0.0
        %1477 = vmatpush1.msra.mxu0 0.0
        %1478 = vmatprep.subr.mxu0 0.0
        %1479 = vmatpush1.msra.mxu0 0.0
        %1480 = vmatprep.subr.mxu0 0.0
        %1481 = vmatpush1.msra.mxu0 %v911
        %1482 = vmatprep.subr.mxu0 0.0
        %1483 = vmatpush2.msra.mxu0 0.0
        %1484 = vmatprep.subr.mxu0 0.0
        %1485 = vmatpush2.msra.mxu0 0.0
        %1486 = vmatprep.subr.mxu0 0.0
        %1487 = vmatpush2.msra.mxu0 0.0
        %1488 = vmatprep.subr.mxu0 0.0
        %1489 = vmatpush2.msra.mxu0 0.0
        %1490 = vmatprep.subr.mxu0 0.0
        %1491 = vmatpush2.msra.mxu0 0.0
        %1492 = vmatprep.subr.mxu0 0.0
        %1493 = vmatpush2.msra.mxu0 0.0
        %1494 = vmatprep.subr.mxu0 0.0
        %1495 = vmatpush2.msra.mxu0 0.0
        %1496 = vmatprep.subr.mxu0 0.0
        %1497 = vmatpush2.msra.mxu0 0.0
        %1498 = vmatprep.subr.mxu0 0.0
        %1499 = vmatpush2.msra.mxu0 0.0
        %1500 = vmatprep.subr.mxu0 0.0
        %1501 = vmatpush2.msra.mxu0 0.0
        %1502 = vmatprep.subr.mxu0 0.0
        %1503 = vmatpush2.msra.mxu0 0.0
        %1504 = vmatprep.subr.mxu0 0.0
        %1505 = vmatpush2.msra.mxu0 0.0
        %1506 = vmatprep.subr.mxu0 0.0
        %1507 = vmatpush2.msra.mxu0 0.0
        %1508 = vmatprep.subr.mxu0 0.0
        %1509 = vmatpush2.msra.mxu0 0.0
        %1510 = vmatprep.subr.mxu0 0.0
        %1511 = vmatpush2.msra.mxu0 0.0
        %1512 = vmatprep.subr.mxu0 0.0
        %1513 = vmatpush2.msra.mxu0 0.0
        %1514 = vmatprep.mubr.f32.mxu0 0.0
        %1515 = vmatmul.mubr.f32.gmra.mxu0 %v1448
        %v1516 = vpop.f32.mrf.mxu0
        %v1517 = vadd.f32 0.0, %v1516
        %v1518 = vpop.f32.mrf.mxu0
        %1519 = vdwg.mxu0
        %v1521 = vsel %vm1120, %v1279, 0
        %1523 = vmatprep.subr.mxu0 0.0
        %1524 = vmatpush1.msra.mxu0 0.0
        %1525 = vmatprep.subr.mxu0 0.0
        %1526 = vmatpush1.msra.mxu0 0.0
        %1527 = vmatprep.subr.mxu0 0.0
        %1528 = vmatpush1.msra.mxu0 0.0
        %1529 = vmatprep.subr.mxu0 0.0
        %1530 = vmatpush1.msra.mxu0 0.0
        %1531 = vmatprep.subr.mxu0 0.0
        %1532 = vmatpush1.msra.mxu0 0.0
        %1533 = vmatprep.subr.mxu0 0.0
        %1534 = vmatpush1.msra.mxu0 0.0
        %1535 = vmatprep.subr.mxu0 0.0
        %1536 = vmatpush1.msra.mxu0 0.0
        %1537 = vmatprep.subr.mxu0 0.0
        %1538 = vmatpush1.msra.mxu0 0.0
        %1539 = vmatprep.subr.mxu0 0.0
        %1540 = vmatpush1.msra.mxu0 0.0
        %1541 = vmatprep.subr.mxu0 0.0
        %1542 = vmatpush1.msra.mxu0 0.0
        %1543 = vmatprep.subr.mxu0 0.0
        %1544 = vmatpush1.msra.mxu0 0.0
        %1545 = vmatprep.subr.mxu0 0.0
        %1546 = vmatpush1.msra.mxu0 0.0
        %1547 = vmatprep.subr.mxu0 0.0
        %1548 = vmatpush1.msra.mxu0 0.0
        %1549 = vmatprep.subr.mxu0 0.0
        %1550 = vmatpush1.msra.mxu0 0.0
        %1551 = vmatprep.subr.mxu0 0.0
        %1552 = vmatpush1.msra.mxu0 0.0
        %1553 = vmatprep.subr.mxu0 0.0
        %1554 = vmatpush1.msra.mxu0 %v910
        %1555 = vmatprep.subr.mxu0 0.0
        %1556 = vmatpush2.msra.mxu0 0.0
        %1557 = vmatprep.subr.mxu0 0.0
        %1558 = vmatpush2.msra.mxu0 0.0
        %1559 = vmatprep.subr.mxu0 0.0
        %1560 = vmatpush2.msra.mxu0 0.0
        %1561 = vmatprep.subr.mxu0 0.0
        %1562 = vmatpush2.msra.mxu0 0.0
        %1563 = vmatprep.subr.mxu0 0.0
        %1564 = vmatpush2.msra.mxu0 0.0
        %1565 = vmatprep.subr.mxu0 0.0
        %1566 = vmatpush2.msra.mxu0 0.0
        %1567 = vmatprep.subr.mxu0 0.0
        %1568 = vmatpush2.msra.mxu0 0.0
        %1569 = vmatprep.subr.mxu0 0.0
        %1570 = vmatpush2.msra.mxu0 0.0
        %1571 = vmatprep.subr.mxu0 0.0
        %1572 = vmatpush2.msra.mxu0 0.0
        %1573 = vmatprep.subr.mxu0 0.0
        %1574 = vmatpush2.msra.mxu0 0.0
        %1575 = vmatprep.subr.mxu0 0.0
        %1576 = vmatpush2.msra.mxu0 0.0
        %1577 = vmatprep.subr.mxu0 0.0
        %1578 = vmatpush2.msra.mxu0 0.0
        %1579 = vmatprep.subr.mxu0 0.0
        %1580 = vmatpush2.msra.mxu0 0.0
        %1581 = vmatprep.subr.mxu0 0.0
        %1582 = vmatpush2.msra.mxu0 0.0
        %1583 = vmatprep.subr.mxu0 0.0
        %1584 = vmatpush2.msra.mxu0 0.0
        %1585 = vmatprep.subr.mxu0 0.0
        %1586 = vmatpush2.msra.mxu0 0.0
        %1587 = vmatprep.mubr.f32.mxu0 0.0
        %1588 = vmatmul.mubr.f32.gmra.mxu0 %v1521
        %v1589 = vpop.f32.mrf.mxu0
        %v1590 = vadd.f32 %v1517, %v1589
        %v1591 = vpop.f32.mrf.mxu0
        %1592 = vdwg.mxu0
        %1593 = vrot.lane.b32.xlu0 %v1114, 112
        %v1594 = vpop.permute.xlu0 %1593
        %1595 = vrot.lane.b32.xlu0 %v1114, 80
        %v1596 = vpop.permute.xlu0 %1595
        %v1597 = vsel %vm1120, %v1594, 0
        %v1599 = vsel %vm1120, %v1596, 0
        %1601 = vmatprep.subr.mxu0 0.0
        %1602 = vmatpush1.xpose.msra.mxu0 0.0
        %1603 = vmatprep.subr.mxu0 0.0
        %1604 = vmatpush1.xpose.msra.mxu0 0.0
        %1605 = vmatprep.subr.mxu0 0.0
        %1606 = vmatpush1.xpose.msra.mxu0 0.0
        %1607 = vmatprep.subr.mxu0 0.0
        %1608 = vmatpush1.xpose.msra.mxu0 0.0
        %1609 = vmatprep.subr.mxu0 0.0
        %1610 = vmatpush1.xpose.msra.mxu0 0.0
        %1611 = vmatprep.subr.mxu0 0.0
        %1612 = vmatpush1.xpose.msra.mxu0 0.0
        %1613 = vmatprep.subr.mxu0 0.0
        %1614 = vmatpush1.xpose.msra.mxu0 0.0
        %1615 = vmatprep.subr.mxu0 0.0
        %1616 = vmatpush1.xpose.msra.mxu0 0.0
        %1617 = vmatprep.subr.mxu0 0.0
        %1618 = vmatpush1.xpose.msra.mxu0 0.0
        %1619 = vmatprep.subr.mxu0 0.0
        %1620 = vmatpush1.xpose.msra.mxu0 0.0
        %1621 = vmatprep.subr.mxu0 0.0
        %1622 = vmatpush1.xpose.msra.mxu0 0.0
        %1623 = vmatprep.subr.mxu0 0.0
        %1624 = vmatpush1.xpose.msra.mxu0 0.0
        %1625 = vmatprep.subr.mxu0 0.0
        %1626 = vmatpush1.xpose.msra.mxu0 0.0
        %1627 = vmatprep.subr.mxu0 0.0
        %1628 = vmatpush1.xpose.msra.mxu0 0.0
        %1629 = vmatprep.subr.mxu0 0.0
        %1630 = vmatpush1.xpose.msra.mxu0 0.0
        %1631 = vmatprep.subr.mxu0 0.0
        %1632 = vmatpush1.xpose.msra.mxu0 %v1599
        %1633 = vmatprep.subr.mxu0 0.0
        %1634 = vmatpush2.xpose.msra.mxu0 0.0
        %1635 = vmatprep.subr.mxu0 0.0
        %1636 = vmatpush2.xpose.msra.mxu0 0.0
        %1637 = vmatprep.subr.mxu0 0.0
        %1638 = vmatpush2.xpose.msra.mxu0 0.0
        %1639 = vmatprep.subr.mxu0 0.0
        %1640 = vmatpush2.xpose.msra.mxu0 0.0
        %1641 = vmatprep.subr.mxu0 0.0
        %1642 = vmatpush2.xpose.msra.mxu0 0.0
        %1643 = vmatprep.subr.mxu0 0.0
        %1644 = vmatpush2.xpose.msra.mxu0 0.0
        %1645 = vmatprep.subr.mxu0 0.0
        %1646 = vmatpush2.xpose.msra.mxu0 0.0
        %1647 = vmatprep.subr.mxu0 0.0
        %1648 = vmatpush2.xpose.msra.mxu0 0.0
        %1649 = vmatprep.subr.mxu0 0.0
        %1650 = vmatpush2.xpose.msra.mxu0 0.0
        %1651 = vmatprep.subr.mxu0 0.0
        %1652 = vmatpush2.xpose.msra.mxu0 0.0
        %1653 = vmatprep.subr.mxu0 0.0
        %1654 = vmatpush2.xpose.msra.mxu0 0.0
        %1655 = vmatprep.subr.mxu0 0.0
        %1656 = vmatpush2.xpose.msra.mxu0 0.0
        %1657 = vmatprep.subr.mxu0 0.0
        %1658 = vmatpush2.xpose.msra.mxu0 0.0
        %1659 = vmatprep.subr.mxu0 0.0
        %1660 = vmatpush2.xpose.msra.mxu0 0.0
        %1661 = vmatprep.subr.mxu0 0.0
        %1662 = vmatpush2.xpose.msra.mxu0 0.0
        %1663 = vmatprep.subr.mxu0 0.0
        %1664 = vmatpush2.xpose.msra.mxu0 0.0
        %1665 = vmatprep.mubr.f32.mxu0 0.0
        %1666 = vmatmul.mubr.f32.gmra.mxu0 %v1597
        %v1667 = vpop.f32.mrf.mxu0
        %v1668 = vadd.f32 0.0, %v1667
        %v1669 = vpop.f32.mrf.mxu0
        %1670 = vdwg.mxu0
        %v1671 = vsel %vm1120, %v1668, -inf
        %1672 = vmax.xlane.f32.xlu0 %v1671
        %v1673 = vpop.xlane.xlu0 %1672
        %v1674 = vsub.f32 %v1668, %v1673
        %v1675 = vmul.f32 %v1674, 1.442695
        %v1676 = vpow.pop %v1675
        %v1677 = vsel %vm1120, %v1676, 0.0
        %1678 = vadd.xlane.f32.xlu0 %v1677
        %v1679 = vpop.xlane.xlu0 %1678
        %v1680 = vrcp.pop %v1679
        %v1681 = vmul.f32 %v1676, %v1680
        %1682 = vrot.lane.b32.xlu0 %v1114, 48
        %v1683 = vpop.permute.xlu0 %1682
        %v1686 = vsel %vm1120, %v1681, 0
        %1688 = vmatprep.subr.mxu0 0.0
        %1689 = vmatpush1.msra.mxu0 0.0
        %1690 = vmatprep.subr.mxu0 0.0
        %1691 = vmatpush1.msra.mxu0 0.0
        %1692 = vmatprep.subr.mxu0 0.0
        %1693 = vmatpush1.msra.mxu0 0.0
        %1694 = vmatprep.subr.mxu0 0.0
        %1695 = vmatpush1.msra.mxu0 0.0
        %1696 = vmatprep.subr.mxu0 0.0
        %1697 = vmatpush1.msra.mxu0 0.0
        %1698 = vmatprep.subr.mxu0 0.0
        %1699 = vmatpush1.msra.mxu0 0.0
        %1700 = vmatprep.subr.mxu0 0.0
        %1701 = vmatpush1.msra.mxu0 0.0
        %1702 = vmatprep.subr.mxu0 0.0
        %1703 = vmatpush1.msra.mxu0 0.0
        %1704 = vmatprep.subr.mxu0 0.0
        %1705 = vmatpush1.msra.mxu0 0.0
        %1706 = vmatprep.subr.mxu0 0.0
        %1707 = vmatpush1.msra.mxu0 0.0
        %1708 = vmatprep.subr.mxu0 0.0
        %1709 = vmatpush1.msra.mxu0 0.0
        %1710 = vmatprep.subr.mxu0 0.0
        %1711 = vmatpush1.msra.mxu0 0.0
        %1712 = vmatprep.subr.mxu0 0.0
        %1713 = vmatpush1.msra.mxu0 0.0
        %1714 = vmatprep.subr.mxu0 0.0
        %1715 = vmatpush1.msra.mxu0 0.0
        %1716 = vmatprep.subr.mxu0 0.0
        %1717 = vmatpush1.msra.mxu0 0.0
        %1718 = vmatprep.subr.mxu0 0.0
        %1719 = vmatpush1.msra.mxu0 %v1683
        %1720 = vmatprep.subr.mxu0 0.0
        %1721 = vmatpush2.msra.mxu0 0.0
        %1722 = vmatprep.subr.mxu0 0.0
        %1723 = vmatpush2.msra.mxu0 0.0
        %1724 = vmatprep.subr.mxu0 0.0
        %1725 = vmatpush2.msra.mxu0 0.0
        %1726 = vmatprep.subr.mxu0 0.0
        %1727 = vmatpush2.msra.mxu0 0.0
        %1728 = vmatprep.subr.mxu0 0.0
        %1729 = vmatpush2.msra.mxu0 0.0
        %1730 = vmatprep.subr.mxu0 0.0
        %1731 = vmatpush2.msra.mxu0 0.0
        %1732 = vmatprep.subr.mxu0 0.0
        %1733 = vmatpush2.msra.mxu0 0.0
        %1734 = vmatprep.subr.mxu0 0.0
        %1735 = vmatpush2.msra.mxu0 0.0
        %1736 = vmatprep.subr.mxu0 0.0
        %1737 = vmatpush2.msra.mxu0 0.0
        %1738 = vmatprep.subr.mxu0 0.0
        %1739 = vmatpush2.msra.mxu0 0.0
        %1740 = vmatprep.subr.mxu0 0.0
        %1741 = vmatpush2.msra.mxu0 0.0
        %1742 = vmatprep.subr.mxu0 0.0
        %1743 = vmatpush2.msra.mxu0 0.0
        %1744 = vmatprep.subr.mxu0 0.0
        %1745 = vmatpush2.msra.mxu0 0.0
        %1746 = vmatprep.subr.mxu0 0.0
        %1747 = vmatpush2.msra.mxu0 0.0
        %1748 = vmatprep.subr.mxu0 0.0
        %1749 = vmatpush2.msra.mxu0 0.0
        %1750 = vmatprep.subr.mxu0 0.0
        %1751 = vmatpush2.msra.mxu0 0.0
        %1752 = vmatprep.mubr.f32.mxu0 0.0
        %1753 = vmatmul.mubr.f32.gmra.mxu0 %v1686
        %v1754 = vpop.f32.mrf.mxu0
        %v1755 = vadd.f32 0.0, %v1754
        %v1756 = vpop.f32.mrf.mxu0
        %1757 = vdwg.mxu0
        %v1759 = vsel %vm1120, %v1755, 0
        %1761 = vmatprep.subr.mxu0 0.0
        %1762 = vmatpush1.msra.mxu0 0.0
        %1763 = vmatprep.subr.mxu0 0.0
        %1764 = vmatpush1.msra.mxu0 0.0
        %1765 = vmatprep.subr.mxu0 0.0
        %1766 = vmatpush1.msra.mxu0 0.0
        %1767 = vmatprep.subr.mxu0 0.0
        %1768 = vmatpush1.msra.mxu0 0.0
        %1769 = vmatprep.subr.mxu0 0.0
        %1770 = vmatpush1.msra.mxu0 0.0
        %1771 = vmatprep.subr.mxu0 0.0
        %1772 = vmatpush1.msra.mxu0 0.0
        %1773 = vmatprep.subr.mxu0 0.0
        %1774 = vmatpush1.msra.mxu0 0.0
        %1775 = vmatprep.subr.mxu0 0.0
        %1776 = vmatpush1.msra.mxu0 0.0
        %1777 = vmatprep.subr.mxu0 0.0
        %1778 = vmatpush1.msra.mxu0 0.0
        %1779 = vmatprep.subr.mxu0 0.0
        %1780 = vmatpush1.msra.mxu0 0.0
        %1781 = vmatprep.subr.mxu0 0.0
        %1782 = vmatpush1.msra.mxu0 0.0
        %1783 = vmatprep.subr.mxu0 0.0
        %1784 = vmatpush1.msra.mxu0 0.0
        %1785 = vmatprep.subr.mxu0 0.0
        %1786 = vmatpush1.msra.mxu0 0.0
        %1787 = vmatprep.subr.mxu0 0.0
        %1788 = vmatpush1.msra.mxu0 0.0
        %1789 = vmatprep.subr.mxu0 0.0
        %1790 = vmatpush1.msra.mxu0 0.0
        %1791 = vmatprep.subr.mxu0 0.0
        %1792 = vmatpush1.msra.mxu0 %v912
        %1793 = vmatprep.subr.mxu0 0.0
        %1794 = vmatpush2.msra.mxu0 0.0
        %1795 = vmatprep.subr.mxu0 0.0
        %1796 = vmatpush2.msra.mxu0 0.0
        %1797 = vmatprep.subr.mxu0 0.0
        %1798 = vmatpush2.msra.mxu0 0.0
        %1799 = vmatprep.subr.mxu0 0.0
        %1800 = vmatpush2.msra.mxu0 0.0
        %1801 = vmatprep.subr.mxu0 0.0
        %1802 = vmatpush2.msra.mxu0 0.0
        %1803 = vmatprep.subr.mxu0 0.0
        %1804 = vmatpush2.msra.mxu0 0.0
        %1805 = vmatprep.subr.mxu0 0.0
        %1806 = vmatpush2.msra.mxu0 0.0
        %1807 = vmatprep.subr.mxu0 0.0
        %1808 = vmatpush2.msra.mxu0 0.0
        %1809 = vmatprep.subr.mxu0 0.0
        %1810 = vmatpush2.msra.mxu0 0.0
        %1811 = vmatprep.subr.mxu0 0.0
        %1812 = vmatpush2.msra.mxu0 0.0
        %1813 = vmatprep.subr.mxu0 0.0
        %1814 = vmatpush2.msra.mxu0 0.0
        %1815 = vmatprep.subr.mxu0 0.0
        %1816 = vmatpush2.msra.mxu0 0.0
        %1817 = vmatprep.subr.mxu0 0.0
        %1818 = vmatpush2.msra.mxu0 0.0
        %1819 = vmatprep.subr.mxu0 0.0
        %1820 = vmatpush2.msra.mxu0 0.0
        %1821 = vmatprep.subr.mxu0 0.0
        %1822 = vmatpush2.msra.mxu0 0.0
        %1823 = vmatprep.subr.mxu0 0.0
        %1824 = vmatpush2.msra.mxu0 0.0
        %1825 = vmatprep.mubr.f32.mxu0 0.0
        %1826 = vmatmul.mubr.f32.gmra.mxu0 %v1759
        %v1827 = vpop.f32.mrf.mxu0
        %v1828 = vadd.f32 0.0, %v1827
        %v1829 = vpop.f32.mrf.mxu0
        %1830 = vdwg.mxu0
        %v1831 = vadd.f32 %v1590, %v1828
        %1832 = vrot.lane.b32.xlu0 %v1114, 104
        %v1833 = vpop.permute.xlu0 %1832
        %1834 = vrot.lane.b32.xlu0 %v1114, 72
        %v1835 = vpop.permute.xlu0 %1834
        %v1836 = vsel %vm1120, %v1833, 0
        %v1838 = vsel %vm1120, %v1835, 0
        %1840 = vmatprep.subr.mxu0 0.0
        %1841 = vmatpush1.xpose.msra.mxu0 0.0
        %1842 = vmatprep.subr.mxu0 0.0
        %1843 = vmatpush1.xpose.msra.mxu0 0.0
        %1844 = vmatprep.subr.mxu0 0.0
        %1845 = vmatpush1.xpose.msra.mxu0 0.0
        %1846 = vmatprep.subr.mxu0 0.0
        %1847 = vmatpush1.xpose.msra.mxu0 0.0
        %1848 = vmatprep.subr.mxu0 0.0
        %1849 = vmatpush1.xpose.msra.mxu0 0.0
        %1850 = vmatprep.subr.mxu0 0.0
        %1851 = vmatpush1.xpose.msra.mxu0 0.0
        %1852 = vmatprep.subr.mxu0 0.0
        %1853 = vmatpush1.xpose.msra.mxu0 0.0
        %1854 = vmatprep.subr.mxu0 0.0
        %1855 = vmatpush1.xpose.msra.mxu0 0.0
        %1856 = vmatprep.subr.mxu0 0.0
        %1857 = vmatpush1.xpose.msra.mxu0 0.0
        %1858 = vmatprep.subr.mxu0 0.0
        %1859 = vmatpush1.xpose.msra.mxu0 0.0
        %1860 = vmatprep.subr.mxu0 0.0
        %1861 = vmatpush1.xpose.msra.mxu0 0.0
        %1862 = vmatprep.subr.mxu0 0.0
        %1863 = vmatpush1.xpose.msra.mxu0 0.0
        %1864 = vmatprep.subr.mxu0 0.0
        %1865 = vmatpush1.xpose.msra.mxu0 0.0
        %1866 = vmatprep.subr.mxu0 0.0
        %1867 = vmatpush1.xpose.msra.mxu0 0.0
        %1868 = vmatprep.subr.mxu0 0.0
        %1869 = vmatpush1.xpose.msra.mxu0 0.0
        %1870 = vmatprep.subr.mxu0 0.0
        %1871 = vmatpush1.xpose.msra.mxu0 %v1838
        %1872 = vmatprep.subr.mxu0 0.0
        %1873 = vmatpush2.xpose.msra.mxu0 0.0
        %1874 = vmatprep.subr.mxu0 0.0
        %1875 = vmatpush2.xpose.msra.mxu0 0.0
        %1876 = vmatprep.subr.mxu0 0.0
        %1877 = vmatpush2.xpose.msra.mxu0 0.0
        %1878 = vmatprep.subr.mxu0 0.0
        %1879 = vmatpush2.xpose.msra.mxu0 0.0
        %1880 = vmatprep.subr.mxu0 0.0
        %1881 = vmatpush2.xpose.msra.mxu0 0.0
        %1882 = vmatprep.subr.mxu0 0.0
        %1883 = vmatpush2.xpose.msra.mxu0 0.0
        %1884 = vmatprep.subr.mxu0 0.0
        %1885 = vmatpush2.xpose.msra.mxu0 0.0
        %1886 = vmatprep.subr.mxu0 0.0
        %1887 = vmatpush2.xpose.msra.mxu0 0.0
        %1888 = vmatprep.subr.mxu0 0.0
        %1889 = vmatpush2.xpose.msra.mxu0 0.0
        %1890 = vmatprep.subr.mxu0 0.0
        %1891 = vmatpush2.xpose.msra.mxu0 0.0
        %1892 = vmatprep.subr.mxu0 0.0
        %1893 = vmatpush2.xpose.msra.mxu0 0.0
        %1894 = vmatprep.subr.mxu0 0.0
        %1895 = vmatpush2.xpose.msra.mxu0 0.0
        %1896 = vmatprep.subr.mxu0 0.0
        %1897 = vmatpush2.xpose.msra.mxu0 0.0
        %1898 = vmatprep.subr.mxu0 0.0
        %1899 = vmatpush2.xpose.msra.mxu0 0.0
        %1900 = vmatprep.subr.mxu0 0.0
        %1901 = vmatpush2.xpose.msra.mxu0 0.0
        %1902 = vmatprep.subr.mxu0 0.0
        %1903 = vmatpush2.xpose.msra.mxu0 0.0
        %1904 = vmatprep.mubr.f32.mxu0 0.0
        %1905 = vmatmul.mubr.f32.gmra.mxu0 %v1836
        %v1906 = vpop.f32.mrf.mxu0
        %v1907 = vadd.f32 0.0, %v1906
        %v1908 = vpop.f32.mrf.mxu0
        %1909 = vdwg.mxu0
        %v1910 = vsel %vm1120, %v1907, -inf
        %1911 = vmax.xlane.f32.xlu0 %v1910
        %v1912 = vpop.xlane.xlu0 %1911
        %v1913 = vsub.f32 %v1907, %v1912
        %v1914 = vmul.f32 %v1913, 1.442695
        %v1915 = vpow.pop %v1914
        %v1916 = vsel %vm1120, %v1915, 0.0
        %1917 = vadd.xlane.f32.xlu0 %v1916
        %v1918 = vpop.xlane.xlu0 %1917
        %v1919 = vrcp.pop %v1918
        %v1920 = vmul.f32 %v1915, %v1919
        %1921 = vrot.lane.b32.xlu0 %v1114, 40
        %v1922 = vpop.permute.xlu0 %1921
        %v1925 = vsel %vm1120, %v1920, 0
        %1927 = vmatprep.subr.mxu0 0.0
        %1928 = vmatpush1.msra.mxu0 0.0
        %1929 = vmatprep.subr.mxu0 0.0
        %1930 = vmatpush1.msra.mxu0 0.0
        %1931 = vmatprep.subr.mxu0 0.0
        %1932 = vmatpush1.msra.mxu0 0.0
        %1933 = vmatprep.subr.mxu0 0.0
        %1934 = vmatpush1.msra.mxu0 0.0
        %1935 = vmatprep.subr.mxu0 0.0
        %1936 = vmatpush1.msra.mxu0 0.0
        %1937 = vmatprep.subr.mxu0 0.0
        %1938 = vmatpush1.msra.mxu0 0.0
        %1939 = vmatprep.subr.mxu0 0.0
        %1940 = vmatpush1.msra.mxu0 0.0
        %1941 = vmatprep.subr.mxu0 0.0
        %1942 = vmatpush1.msra.mxu0 0.0
        %1943 = vmatprep.subr.mxu0 0.0
        %1944 = vmatpush1.msra.mxu0 0.0
        %1945 = vmatprep.subr.mxu0 0.0
        %1946 = vmatpush1.msra.mxu0 0.0
        %1947 = vmatprep.subr.mxu0 0.0
        %1948 = vmatpush1.msra.mxu0 0.0
        %1949 = vmatprep.subr.mxu0 0.0
        %1950 = vmatpush1.msra.mxu0 0.0
        %1951 = vmatprep.subr.mxu0 0.0
        %1952 = vmatpush1.msra.mxu0 0.0
        %1953 = vmatprep.subr.mxu0 0.0
        %1954 = vmatpush1.msra.mxu0 0.0
        %1955 = vmatprep.subr.mxu0 0.0
        %1956 = vmatpush1.msra.mxu0 0.0
        %1957 = vmatprep.subr.mxu0 0.0
        %1958 = vmatpush1.msra.mxu0 %v1922
        %1959 = vmatprep.subr.mxu0 0.0
        %1960 = vmatpush2.msra.mxu0 0.0
        %1961 = vmatprep.subr.mxu0 0.0
        %1962 = vmatpush2.msra.mxu0 0.0
        %1963 = vmatprep.subr.mxu0 0.0
        %1964 = vmatpush2.msra.mxu0 0.0
        %1965 = vmatprep.subr.mxu0 0.0
        %1966 = vmatpush2.msra.mxu0 0.0
        %1967 = vmatprep.subr.mxu0 0.0
        %1968 = vmatpush2.msra.mxu0 0.0
        %1969 = vmatprep.subr.mxu0 0.0
        %1970 = vmatpush2.msra.mxu0 0.0
        %1971 = vmatprep.subr.mxu0 0.0
        %1972 = vmatpush2.msra.mxu0 0.0
        %1973 = vmatprep.subr.mxu0 0.0
        %1974 = vmatpush2.msra.mxu0 0.0
        %1975 = vmatprep.subr.mxu0 0.0
        %1976 = vmatpush2.msra.mxu0 0.0
        %1977 = vmatprep.subr.mxu0 0.0
        %1978 = vmatpush2.msra.mxu0 0.0
        %1979 = vmatprep.subr.mxu0 0.0
        %1980 = vmatpush2.msra.mxu0 0.0
        %1981 = vmatprep.subr.mxu0 0.0
        %1982 = vmatpush2.msra.mxu0 0.0
        %1983 = vmatprep.subr.mxu0 0.0
        %1984 = vmatpush2.msra.mxu0 0.0
        %1985 = vmatprep.subr.mxu0 0.0
        %1986 = vmatpush2.msra.mxu0 0.0
        %1987 = vmatprep.subr.mxu0 0.0
        %1988 = vmatpush2.msra.mxu0 0.0
        %1989 = vmatprep.subr.mxu0 0.0
        %1990 = vmatpush2.msra.mxu0 0.0
        %1991 = vmatprep.mubr.f32.mxu0 0.0
        %1992 = vmatmul.mubr.f32.gmra.mxu0 %v1925
        %v1993 = vpop.f32.mrf.mxu0
        %v1994 = vadd.f32 0.0, %v1993
        %v1995 = vpop.f32.mrf.mxu0
        %1996 = vdwg.mxu0
        %v1998 = vsel %vm1120, %v1994, 0
        %2000 = vmatprep.subr.mxu0 0.0
        %2001 = vmatpush1.msra.mxu0 0.0
        %2002 = vmatprep.subr.mxu0 0.0
        %2003 = vmatpush1.msra.mxu0 0.0
        %2004 = vmatprep.subr.mxu0 0.0
        %2005 = vmatpush1.msra.mxu0 0.0
        %2006 = vmatprep.subr.mxu0 0.0
        %2007 = vmatpush1.msra.mxu0 0.0
        %2008 = vmatprep.subr.mxu0 0.0
        %2009 = vmatpush1.msra.mxu0 0.0
        %2010 = vmatprep.subr.mxu0 0.0
        %2011 = vmatpush1.msra.mxu0 0.0
        %2012 = vmatprep.subr.mxu0 0.0
        %2013 = vmatpush1.msra.mxu0 0.0
        %2014 = vmatprep.subr.mxu0 0.0
        %2015 = vmatpush1.msra.mxu0 0.0
        %2016 = vmatprep.subr.mxu0 0.0
        %2017 = vmatpush1.msra.mxu0 0.0
        %2018 = vmatprep.subr.mxu0 0.0
        %2019 = vmatpush1.msra.mxu0 0.0
        %2020 = vmatprep.subr.mxu0 0.0
        %2021 = vmatpush1.msra.mxu0 0.0
        %2022 = vmatprep.subr.mxu0 0.0
        %2023 = vmatpush1.msra.mxu0 0.0
        %2024 = vmatprep.subr.mxu0 0.0
        %2025 = vmatpush1.msra.mxu0 0.0
        %2026 = vmatprep.subr.mxu0 0.0
        %2027 = vmatpush1.msra.mxu0 0.0
        %2028 = vmatprep.subr.mxu0 0.0
        %2029 = vmatpush1.msra.mxu0 0.0
        %2030 = vmatprep.subr.mxu0 0.0
        %2031 = vmatpush1.msra.mxu0 %v913
        %2032 = vmatprep.subr.mxu0 0.0
        %2033 = vmatpush2.msra.mxu0 0.0
        %2034 = vmatprep.subr.mxu0 0.0
        %2035 = vmatpush2.msra.mxu0 0.0
        %2036 = vmatprep.subr.mxu0 0.0
        %2037 = vmatpush2.msra.mxu0 0.0
        %2038 = vmatprep.subr.mxu0 0.0
        %2039 = vmatpush2.msra.mxu0 0.0
        %2040 = vmatprep.subr.mxu0 0.0
        %2041 = vmatpush2.msra.mxu0 0.0
        %2042 = vmatprep.subr.mxu0 0.0
        %2043 = vmatpush2.msra.mxu0 0.0
        %2044 = vmatprep.subr.mxu0 0.0
        %2045 = vmatpush2.msra.mxu0 0.0
        %2046 = vmatprep.subr.mxu0 0.0
        %2047 = vmatpush2.msra.mxu0 0.0
        %2048 = vmatprep.subr.mxu0 0.0
        %2049 = vmatpush2.msra.mxu0 0.0
        %2050 = vmatprep.subr.mxu0 0.0
        %2051 = vmatpush2.msra.mxu0 0.0
        %2052 = vmatprep.subr.mxu0 0.0
        %2053 = vmatpush2.msra.mxu0 0.0
        %2054 = vmatprep.subr.mxu0 0.0
        %2055 = vmatpush2.msra.mxu0 0.0
        %2056 = vmatprep.subr.mxu0 0.0
        %2057 = vmatpush2.msra.mxu0 0.0
        %2058 = vmatprep.subr.mxu0 0.0
        %2059 = vmatpush2.msra.mxu0 0.0
        %2060 = vmatprep.subr.mxu0 0.0
        %2061 = vmatpush2.msra.mxu0 0.0
        %2062 = vmatprep.subr.mxu0 0.0
        %2063 = vmatpush2.msra.mxu0 0.0
        %2064 = vmatprep.mubr.f32.mxu0 0.0
        %2065 = vmatmul.mubr.f32.gmra.mxu0 %v1998
        %v2066 = vpop.f32.mrf.mxu0
        %v2067 = vadd.f32 0.0, %v2066
        %v2068 = vpop.f32.mrf.mxu0
        %2069 = vdwg.mxu0
        %v2070 = vadd.f32 %v1831, %v2067
        %v2072 = vlaneseq
        %v2073 = vshrl.u32 %v2072, 7
        %v2074 = vsub.s32 0, %v2073
        %v2075 = vrot.slane %v914, %v2074
        %v2077 = vadd.f32 %v2070, %v2075
        %v2078 = vadd.f32 %v902, %v2077
        %v2079 = vsel %vm956, %v2078, 0.0
        %2080 = vadd.xlane.f32.xlu0 %v2079
        %v2081 = vpop.xlane.xlu0 %2080
        %v2082 = vrcp.pop 32.0
        %v2083 = vmul.f32 %v2081, %v2082
        %v2084 = vsub.f32 %v2078, %v2083
        %v2085 = vmul.f32 %v2084, %v2084
        %v2086 = vsel %vm956, %v2085, 0.0
        %2087 = vadd.xlane.f32.xlu0 %v2086
        %v2088 = vpop.xlane.xlu0 %2087
        %v2089 = vmul.f32 %v2088, %v2082
        %v2090 = vadd.f32 %v2089, 1e-05
        %v2091 = vrsqrt.pop %v2090
        %v2092 = vmul.f32 %v2084, %v2091
        %v2094 = vlaneseq
        %v2095 = vshrl.u32 %v2094, 7
        %v2096 = vsub.s32 0, %v2095
        %v2097 = vrot.slane %v939, %v2096
        %v2099 = vmul.f32 %v2092, %v2097
        %v2101 = vlaneseq
        %v2102 = vshrl.u32 %v2101, 7
        %v2103 = vsub.s32 0, %v2102
        %v2104 = vrot.slane %v940, %v2103
        %v2106 = vadd.f32 %v2099, %v2104
        %v2108 = vlaneseq
        %v2109 = vshrl.u32 %v2108, 7
        %v2110 = vsub.s32 0, %v2109
        %v2111 = vrot.slane %v919, %v2110
        %v2114 = vsel %vm956, %v2106, 0
        %2116 = vmatprep.subr.mxu0 0.0
        %2117 = vmatpush1.msra.mxu0 0.0
        %2118 = vmatprep.subr.mxu0 0.0
        %2119 = vmatpush1.msra.mxu0 0.0
        %2120 = vmatprep.subr.mxu0 0.0
        %2121 = vmatpush1.msra.mxu0 0.0
        %2122 = vmatprep.subr.mxu0 0.0
        %2123 = vmatpush1.msra.mxu0 0.0
        %2124 = vmatprep.subr.mxu0 0.0
        %2125 = vmatpush1.msra.mxu0 0.0
        %2126 = vmatprep.subr.mxu0 0.0
        %2127 = vmatpush1.msra.mxu0 0.0
        %2128 = vmatprep.subr.mxu0 0.0
        %2129 = vmatpush1.msra.mxu0 0.0
        %2130 = vmatprep.subr.mxu0 0.0
        %2131 = vmatpush1.msra.mxu0 0.0
        %2132 = vmatprep.subr.mxu0 0.0
        %2133 = vmatpush1.msra.mxu0 0.0
        %2134 = vmatprep.subr.mxu0 0.0
        %2135 = vmatpush1.msra.mxu0 0.0
        %2136 = vmatprep.subr.mxu0 0.0
        %2137 = vmatpush1.msra.mxu0 0.0
        %2138 = vmatprep.subr.mxu0 0.0
        %2139 = vmatpush1.msra.mxu0 0.0
        %2140 = vmatprep.subr.mxu0 0.0
        %2141 = vmatpush1.msra.mxu0 %v918
        %2142 = vmatprep.subr.mxu0 0.0
        %2143 = vmatpush1.msra.mxu0 %v917
        %2144 = vmatprep.subr.mxu0 0.0
        %2145 = vmatpush1.msra.mxu0 %v916
        %2146 = vmatprep.subr.mxu0 0.0
        %2147 = vmatpush1.msra.mxu0 %v915
        %2148 = vmatprep.subr.mxu0 0.0
        %2149 = vmatpush2.msra.mxu0 0.0
        %2150 = vmatprep.subr.mxu0 0.0
        %2151 = vmatpush2.msra.mxu0 0.0
        %2152 = vmatprep.subr.mxu0 0.0
        %2153 = vmatpush2.msra.mxu0 0.0
        %2154 = vmatprep.subr.mxu0 0.0
        %2155 = vmatpush2.msra.mxu0 0.0
        %2156 = vmatprep.subr.mxu0 0.0
        %2157 = vmatpush2.msra.mxu0 0.0
        %2158 = vmatprep.subr.mxu0 0.0
        %2159 = vmatpush2.msra.mxu0 0.0
        %2160 = vmatprep.subr.mxu0 0.0
        %2161 = vmatpush2.msra.mxu0 0.0
        %2162 = vmatprep.subr.mxu0 0.0
        %2163 = vmatpush2.msra.mxu0 0.0
        %2164 = vmatprep.subr.mxu0 0.0
        %2165 = vmatpush2.msra.mxu0 0.0
        %2166 = vmatprep.subr.mxu0 0.0
        %2167 = vmatpush2.msra.mxu0 0.0
        %2168 = vmatprep.subr.mxu0 0.0
        %2169 = vmatpush2.msra.mxu0 0.0
        %2170 = vmatprep.subr.mxu0 0.0
        %2171 = vmatpush2.msra.mxu0 0.0
        %2172 = vmatprep.subr.mxu0 0.0
        %2173 = vmatpush2.msra.mxu0 0.0
        %2174 = vmatprep.subr.mxu0 0.0
        %2175 = vmatpush2.msra.mxu0 0.0
        %2176 = vmatprep.subr.mxu0 0.0
        %2177 = vmatpush2.msra.mxu0 0.0
        %2178 = vmatprep.subr.mxu0 0.0
        %2179 = vmatpush2.msra.mxu0 0.0
        %2180 = vmatprep.mubr.f32.mxu0 0.0
        %2181 = vmatmul.mubr.f32.gmra.mxu0 %v2114
        %v2182 = vpop.f32.mrf.mxu0
        %v2183 = vadd.f32 %v2111, %v2182
        %v2184 = vpop.f32.mrf.mxu0
        %2185 = vdwg.mxu0
        %v2187 = vsel %vm1120, %v2183, 0
        %v2190 = vsel %vm1120, %v1030, 0
        %v2193 = vsel %vm1120, %v1035, 0
        %2195 = vmatprep.subr.mxu0 0.0
        %2196 = vmatpush1.xpose.msra.mxu0 0.0
        %2197 = vmatprep.subr.mxu0 0.0
        %2198 = vmatpush1.xpose.msra.mxu0 0.0
        %2199 = vmatprep.subr.mxu0 0.0
        %2200 = vmatpush1.xpose.msra.mxu0 0.0
        %2201 = vmatprep.subr.mxu0 0.0
        %2202 = vmatpush1.xpose.msra.mxu0 0.0
        %2203 = vmatprep.subr.mxu0 0.0
        %2204 = vmatpush1.xpose.msra.mxu0 0.0
        %2205 = vmatprep.subr.mxu0 0.0
        %2206 = vmatpush1.xpose.msra.mxu0 0.0
        %2207 = vmatprep.subr.mxu0 0.0
        %2208 = vmatpush1.xpose.msra.mxu0 0.0
        %2209 = vmatprep.subr.mxu0 0.0
        %2210 = vmatpush1.xpose.msra.mxu0 0.0
        %2211 = vmatprep.subr.mxu0 0.0
        %2212 = vmatpush1.xpose.msra.mxu0 0.0
        %2213 = vmatprep.subr.mxu0 0.0
        %2214 = vmatpush1.xpose.msra.mxu0 0.0
        %2215 = vmatprep.subr.mxu0 0.0
        %2216 = vmatpush1.xpose.msra.mxu0 0.0
        %2217 = vmatprep.subr.mxu0 0.0
        %2218 = vmatpush1.xpose.msra.mxu0 0.0
        %2219 = vmatprep.subr.mxu0 0.0
        %2220 = vmatpush1.xpose.msra.mxu0 0.0
        %2221 = vmatprep.subr.mxu0 0.0
        %2222 = vmatpush1.xpose.msra.mxu0 0.0
        %2223 = vmatprep.subr.mxu0 0.0
        %2224 = vmatpush1.xpose.msra.mxu0 %v2193
        %2225 = vmatprep.subr.mxu0 0.0
        %2226 = vmatpush1.xpose.msra.mxu0 %v2190
        %2227 = vmatprep.subr.mxu0 0.0
        %2228 = vmatpush2.xpose.msra.mxu0 0.0
        %2229 = vmatprep.subr.mxu0 0.0
        %2230 = vmatpush2.xpose.msra.mxu0 0.0
        %2231 = vmatprep.subr.mxu0 0.0
        %2232 = vmatpush2.xpose.msra.mxu0 0.0
        %2233 = vmatprep.subr.mxu0 0.0
        %2234 = vmatpush2.xpose.msra.mxu0 0.0
        %2235 = vmatprep.subr.mxu0 0.0
        %2236 = vmatpush2.xpose.msra.mxu0 0.0
        %2237 = vmatprep.subr.mxu0 0.0
        %2238 = vmatpush2.xpose.msra.mxu0 0.0
        %2239 = vmatprep.subr.mxu0 0.0
        %2240 = vmatpush2.xpose.msra.mxu0 0.0
        %2241 = vmatprep.subr.mxu0 0.0
        %2242 = vmatpush2.xpose.msra.mxu0 0.0
        %2243 = vmatprep.subr.mxu0 0.0
        %2244 = vmatpush2.xpose.msra.mxu0 0.0
        %2245 = vmatprep.subr.mxu0 0.0
        %2246 = vmatpush2.xpose.msra.mxu0 0.0
        %2247 = vmatprep.subr.mxu0 0.0
        %2248 = vmatpush2.xpose.msra.mxu0 0.0
        %2249 = vmatprep.subr.mxu0 0.0
        %2250 = vmatpush2.xpose.msra.mxu0 0.0
        %2251 = vmatprep.subr.mxu0 0.0
        %2252 = vmatpush2.xpose.msra.mxu0 0.0
        %2253 = vmatprep.subr.mxu0 0.0
        %2254 = vmatpush2.xpose.msra.mxu0 0.0
        %2255 = vmatprep.subr.mxu0 0.0
        %2256 = vmatpush2.xpose.msra.mxu0 0.0
        %2257 = vmatprep.subr.mxu0 0.0
        %2258 = vmatpush2.xpose.msra.mxu0 0.0
        %2259 = vmatprep.mubr.f32.mxu0 0.0
        %2260 = vmatmul.mubr.f32.gmra.mxu0 %v2187
        %v2261 = vpop.f32.mrf.mxu0
        %v2262 = vadd.f32 0.0, %v2261
        %v2263 = vpop.f32.mrf.mxu0
        %2264 = vdwg.mxu0
        %vm2265 = vcmask 130048
        %v2266 = vsel %vm2265, %v2262, -inf
        %2267 = vmax.xlane.f32.xlu0 %v2266
        %v2268 = vpop.xlane.xlu0 %2267
        %v2269 = vsub.f32 %v2262, %v2268
        %v2270 = vmul.f32 %v2269, 1.442695
        %v2271 = vpow.pop %v2270
        %v2272 = vsel %vm2265, %v2271, 0.0
        %2273 = vadd.xlane.f32.xlu0 %v2272
        %v2274 = vpop.xlane.xlu0 %2273
        %v2275 = vrcp.pop %v2274
        %v2276 = vmul.f32 %v2271, %v2275
        %2277 = vrot.lane.b32.xlu0 %v1030, 96
        %v2278 = vpop.permute.xlu0 %2277
        %2279 = vrot.lane.b32.xlu0 %v1035, 96
        %v2280 = vpop.permute.xlu0 %2279
        %v2284 = vsel %vm2265, %v2276, 0
        %2286 = vmatprep.subr.mxu0 0.0
        %2287 = vmatpush1.msra.mxu0 0.0
        %2288 = vmatprep.subr.mxu0 0.0
        %2289 = vmatpush1.msra.mxu0 0.0
        %2290 = vmatprep.subr.mxu0 0.0
        %2291 = vmatpush1.msra.mxu0 0.0
        %2292 = vmatprep.subr.mxu0 0.0
        %2293 = vmatpush1.msra.mxu0 0.0
        %2294 = vmatprep.subr.mxu0 0.0
        %2295 = vmatpush1.msra.mxu0 0.0
        %2296 = vmatprep.subr.mxu0 0.0
        %2297 = vmatpush1.msra.mxu0 0.0
        %2298 = vmatprep.subr.mxu0 0.0
        %2299 = vmatpush1.msra.mxu0 0.0
        %2300 = vmatprep.subr.mxu0 0.0
        %2301 = vmatpush1.msra.mxu0 0.0
        %2302 = vmatprep.subr.mxu0 0.0
        %2303 = vmatpush1.msra.mxu0 0.0
        %2304 = vmatprep.subr.mxu0 0.0
        %2305 = vmatpush1.msra.mxu0 0.0
        %2306 = vmatprep.subr.mxu0 0.0
        %2307 = vmatpush1.msra.mxu0 0.0
        %2308 = vmatprep.subr.mxu0 0.0
        %2309 = vmatpush1.msra.mxu0 0.0
        %2310 = vmatprep.subr.mxu0 0.0
        %2311 = vmatpush1.msra.mxu0 0.0
        %2312 = vmatprep.subr.mxu0 0.0
        %2313 = vmatpush1.msra.mxu0 0.0
        %2314 = vmatprep.subr.mxu0 0.0
        %2315 = vmatpush1.msra.mxu0 %v2280
        %2316 = vmatprep.subr.mxu0 0.0
        %2317 = vmatpush1.msra.mxu0 %v2278
        %2318 = vmatprep.subr.mxu0 0.0
        %2319 = vmatpush2.msra.mxu0 0.0
        %2320 = vmatprep.subr.mxu0 0.0
        %2321 = vmatpush2.msra.mxu0 0.0
        %2322 = vmatprep.subr.mxu0 0.0
        %2323 = vmatpush2.msra.mxu0 0.0
        %2324 = vmatprep.subr.mxu0 0.0
        %2325 = vmatpush2.msra.mxu0 0.0
        %2326 = vmatprep.subr.mxu0 0.0
        %2327 = vmatpush2.msra.mxu0 0.0
        %2328 = vmatprep.subr.mxu0 0.0
        %2329 = vmatpush2.msra.mxu0 0.0
        %2330 = vmatprep.subr.mxu0 0.0
        %2331 = vmatpush2.msra.mxu0 0.0
        %2332 = vmatprep.subr.mxu0 0.0
        %2333 = vmatpush2.msra.mxu0 0.0
        %2334 = vmatprep.subr.mxu0 0.0
        %2335 = vmatpush2.msra.mxu0 0.0
        %2336 = vmatprep.subr.mxu0 0.0
        %2337 = vmatpush2.msra.mxu0 0.0
        %2338 = vmatprep.subr.mxu0 0.0
        %2339 = vmatpush2.msra.mxu0 0.0
        %2340 = vmatprep.subr.mxu0 0.0
        %2341 = vmatpush2.msra.mxu0 0.0
        %2342 = vmatprep.subr.mxu0 0.0
        %2343 = vmatpush2.msra.mxu0 0.0
        %2344 = vmatprep.subr.mxu0 0.0
        %2345 = vmatpush2.msra.mxu0 0.0
        %2346 = vmatprep.subr.mxu0 0.0
        %2347 = vmatpush2.msra.mxu0 0.0
        %2348 = vmatprep.subr.mxu0 0.0
        %2349 = vmatpush2.msra.mxu0 0.0
        %2350 = vmatprep.mubr.f32.mxu0 0.0
        %2351 = vmatmul.mubr.f32.gmra.mxu0 %v2284
        %v2352 = vpop.f32.mrf.mxu0
        %v2353 = vadd.f32 0.0, %v2352
        %v2354 = vpop.f32.mrf.mxu0
        %2355 = vdwg.mxu0
        %2356 = vrot.lane.b32.xlu0 %v2183, 120
        %v2357 = vpop.permute.xlu0 %2356
        %2358 = vrot.lane.b32.xlu0 %v1030, 120
        %v2359 = vpop.permute.xlu0 %2358
        %2360 = vrot.lane.b32.xlu0 %v1035, 120
        %v2361 = vpop.permute.xlu0 %2360
        %v2362 = vsel %vm1120, %v2357, 0
        %v2364 = vsel %vm1120, %v2359, 0
        %v2366 = vsel %vm1120, %v2361, 0
        %2368 = vmatprep.subr.mxu0 0.0
        %2369 = vmatpush1.xpose.msra.mxu0 0.0
        %2370 = vmatprep.subr.mxu0 0.0
        %2371 = vmatpush1.xpose.msra.mxu0 0.0
        %2372 = vmatprep.subr.mxu0 0.0
        %2373 = vmatpush1.xpose.msra.mxu0 0.0
        %2374 = vmatprep.subr.mxu0 0.0
        %2375 = vmatpush1.xpose.msra.mxu0 0.0
        %2376 = vmatprep.subr.mxu0 0.0
        %2377 = vmatpush1.xpose.msra.mxu0 0.0
        %2378 = vmatprep.subr.mxu0 0.0
        %2379 = vmatpush1.xpose.msra.mxu0 0.0
        %2380 = vmatprep.subr.mxu0 0.0
        %2381 = vmatpush1.xpose.msra.mxu0 0.0
        %2382 = vmatprep.subr.mxu0 0.0
        %2383 = vmatpush1.xpose.msra.mxu0 0.0
        %2384 = vmatprep.subr.mxu0 0.0
        %2385 = vmatpush1.xpose.msra.mxu0 0.0
        %2386 = vmatprep.subr.mxu0 0.0
        %2387 = vmatpush1.xpose.msra.mxu0 0.0
        %2388 = vmatprep.subr.mxu0 0.0
        %2389 = vmatpush1.xpose.msra.mxu0 0.0
        %2390 = vmatprep.subr.mxu0 0.0
        %2391 = vmatpush1.xpose.msra.mxu0 0.0
        %2392 = vmatprep.subr.mxu0 0.0
        %2393 = vmatpush1.xpose.msra.mxu0 0.0
        %2394 = vmatprep.subr.mxu0 0.0
        %2395 = vmatpush1.xpose.msra.mxu0 0.0
        %2396 = vmatprep.subr.mxu0 0.0
        %2397 = vmatpush1.xpose.msra.mxu0 %v2366
        %2398 = vmatprep.subr.mxu0 0.0
        %2399 = vmatpush1.xpose.msra.mxu0 %v2364
        %2400 = vmatprep.subr.mxu0 0.0
        %2401 = vmatpush2.xpose.msra.mxu0 0.0
        %2402 = vmatprep.subr.mxu0 0.0
        %2403 = vmatpush2.xpose.msra.mxu0 0.0
        %2404 = vmatprep.subr.mxu0 0.0
        %2405 = vmatpush2.xpose.msra.mxu0 0.0
        %2406 = vmatprep.subr.mxu0 0.0
        %2407 = vmatpush2.xpose.msra.mxu0 0.0
        %2408 = vmatprep.subr.mxu0 0.0
        %2409 = vmatpush2.xpose.msra.mxu0 0.0
        %2410 = vmatprep.subr.mxu0 0.0
        %2411 = vmatpush2.xpose.msra.mxu0 0.0
        %2412 = vmatprep.subr.mxu0 0.0
        %2413 = vmatpush2.xpose.msra.mxu0 0.0
        %2414 = vmatprep.subr.mxu0 0.0
        %2415 = vmatpush2.xpose.msra.mxu0 0.0
        %2416 = vmatprep.subr.mxu0 0.0
        %2417 = vmatpush2.xpose.msra.mxu0 0.0
        %2418 = vmatprep.subr.mxu0 0.0
        %2419 = vmatpush2.xpose.msra.mxu0 0.0
        %2420 = vmatprep.subr.mxu0 0.0
        %2421 = vmatpush2.xpose.msra.mxu0 0.0
        %2422 = vmatprep.subr.mxu0 0.0
        %2423 = vmatpush2.xpose.msra.mxu0 0.0
        %2424 = vmatprep.subr.mxu0 0.0
        %2425 = vmatpush2.xpose.msra.mxu0 0.0
        %2426 = vmatprep.subr.mxu0 0.0
        %2427 = vmatpush2.xpose.msra.mxu0 0.0
        %2428 = vmatprep.subr.mxu0 0.0
        %2429 = vmatpush2.xpose.msra.mxu0 0.0
        %2430 = vmatprep.subr.mxu0 0.0
        %2431 = vmatpush2.xpose.msra.mxu0 0.0
        %2432 = vmatprep.mubr.f32.mxu0 0.0
        %2433 = vmatmul.mubr.f32.gmra.mxu0 %v2362
        %v2434 = vpop.f32.mrf.mxu0
        %v2435 = vadd.f32 0.0, %v2434
        %v2436 = vpop.f32.mrf.mxu0
        %2437 = vdwg.mxu0
        %v2438 = vsel %vm2265, %v2435, -inf
        %2439 = vmax.xlane.f32.xlu0 %v2438
        %v2440 = vpop.xlane.xlu0 %2439
        %v2441 = vsub.f32 %v2435, %v2440
        %v2442 = vmul.f32 %v2441, 1.442695
        %v2443 = vpow.pop %v2442
        %v2444 = vsel %vm2265, %v2443, 0.0
        %2445 = vadd.xlane.f32.xlu0 %v2444
        %v2446 = vpop.xlane.xlu0 %2445
        %v2447 = vrcp.pop %v2446
        %v2448 = vmul.f32 %v2443, %v2447
        %2449 = vrot.lane.b32.xlu0 %v1030, 88
        %v2450 = vpop.permute.xlu0 %2449
        %2451 = vrot.lane.b32.xlu0 %v1035, 88
        %v2452 = vpop.permute.xlu0 %2451
        %v2456 = vsel %vm2265, %v2448, 0
        %2458 = vmatprep.subr.mxu0 0.0
        %2459 = vmatpush1.msra.mxu0 0.0
        %2460 = vmatprep.subr.mxu0 0.0
        %2461 = vmatpush1.msra.mxu0 0.0
        %2462 = vmatprep.subr.mxu0 0.0
        %2463 = vmatpush1.msra.mxu0 0.0
        %2464 = vmatprep.subr.mxu0 0.0
        %2465 = vmatpush1.msra.mxu0 0.0
        %2466 = vmatprep.subr.mxu0 0.0
        %2467 = vmatpush1.msra.mxu0 0.0
        %2468 = vmatprep.subr.mxu0 0.0
        %2469 = vmatpush1.msra.mxu0 0.0
        %2470 = vmatprep.subr.mxu0 0.0
        %2471 = vmatpush1.msra.mxu0 0.0
        %2472 = vmatprep.subr.mxu0 0.0
        %2473 = vmatpush1.msra.mxu0 0.0
        %2474 = vmatprep.subr.mxu0 0.0
        %2475 = vmatpush1.msra.mxu0 0.0
        %2476 = vmatprep.subr.mxu0 0.0
        %2477 = vmatpush1.msra.mxu0 0.0
        %2478 = vmatprep.subr.mxu0 0.0
        %2479 = vmatpush1.msra.mxu0 0.0
        %2480 = vmatprep.subr.mxu0 0.0
        %2481 = vmatpush1.msra.mxu0 0.0
        %2482 = vmatprep.subr.mxu0 0.0
        %2483 = vmatpush1.msra.mxu0 0.0
        %2484 = vmatprep.subr.mxu0 0.0
        %2485 = vmatpush1.msra.mxu0 0.0
        %2486 = vmatprep.subr.mxu0 0.0
        %2487 = vmatpush1.msra.mxu0 %v2452
        %2488 = vmatprep.subr.mxu0 0.0
        %2489 = vmatpush1.msra.mxu0 %v2450
        %2490 = vmatprep.subr.mxu0 0.0
        %2491 = vmatpush2.msra.mxu0 0.0
        %2492 = vmatprep.subr.mxu0 0.0
        %2493 = vmatpush2.msra.mxu0 0.0
        %2494 = vmatprep.subr.mxu0 0.0
        %2495 = vmatpush2.msra.mxu0 0.0
        %2496 = vmatprep.subr.mxu0 0.0
        %2497 = vmatpush2.msra.mxu0 0.0
        %2498 = vmatprep.subr.mxu0 0.0
        %2499 = vmatpush2.msra.mxu0 0.0
        %2500 = vmatprep.subr.mxu0 0.0
        %2501 = vmatpush2.msra.mxu0 0.0
        %2502 = vmatprep.subr.mxu0 0.0
        %2503 = vmatpush2.msra.mxu0 0.0
        %2504 = vmatprep.subr.mxu0 0.0
        %2505 = vmatpush2.msra.mxu0 0.0
        %2506 = vmatprep.subr.mxu0 0.0
        %2507 = vmatpush2.msra.mxu0 0.0
        %2508 = vmatprep.subr.mxu0 0.0
        %2509 = vmatpush2.msra.mxu0 0.0
        %2510 = vmatprep.subr.mxu0 0.0
        %2511 = vmatpush2.msra.mxu0 0.0
        %2512 = vmatprep.subr.mxu0 0.0
        %2513 = vmatpush2.msra.mxu0 0.0
        %2514 = vmatprep.subr.mxu0 0.0
        %2515 = vmatpush2.msra.mxu0 0.0
        %2516 = vmatprep.subr.mxu0 0.0
        %2517 = vmatpush2.msra.mxu0 0.0
        %2518 = vmatprep.subr.mxu0 0.0
        %2519 = vmatpush2.msra.mxu0 0.0
        %2520 = vmatprep.subr.mxu0 0.0
        %2521 = vmatpush2.msra.mxu0 0.0
        %2522 = vmatprep.mubr.f32.mxu0 0.0
        %2523 = vmatmul.mubr.f32.gmra.mxu0 %v2456
        %v2524 = vpop.f32.mrf.mxu0
        %v2525 = vadd.f32 0.0, %v2524
        %v2526 = vpop.f32.mrf.mxu0
        %2527 = vdwg.mxu0
        %v2529 = vsel %vm1120, %v2525, 0
        %2531 = vmatprep.subr.mxu0 0.0
        %2532 = vmatpush1.msra.mxu0 0.0
        %2533 = vmatprep.subr.mxu0 0.0
        %2534 = vmatpush1.msra.mxu0 0.0
        %2535 = vmatprep.subr.mxu0 0.0
        %2536 = vmatpush1.msra.mxu0 0.0
        %2537 = vmatprep.subr.mxu0 0.0
        %2538 = vmatpush1.msra.mxu0 0.0
        %2539 = vmatprep.subr.mxu0 0.0
        %2540 = vmatpush1.msra.mxu0 0.0
        %2541 = vmatprep.subr.mxu0 0.0
        %2542 = vmatpush1.msra.mxu0 0.0
        %2543 = vmatprep.subr.mxu0 0.0
        %2544 = vmatpush1.msra.mxu0 0.0
        %2545 = vmatprep.subr.mxu0 0.0
        %2546 = vmatpush1.msra.mxu0 0.0
        %2547 = vmatprep.subr.mxu0 0.0
        %2548 = vmatpush1.msra.mxu0 0.0
        %2549 = vmatprep.subr.mxu0 0.0
        %2550 = vmatpush1.msra.mxu0 0.0
        %2551 = vmatprep.subr.mxu0 0.0
        %2552 = vmatpush1.msra.mxu0 0.0
        %2553 = vmatprep.subr.mxu0 0.0
        %2554 = vmatpush1.msra.mxu0 0.0
        %2555 = vmatprep.subr.mxu0 0.0
        %2556 = vmatpush1.msra.mxu0 0.0
        %2557 = vmatprep.subr.mxu0 0.0
        %2558 = vmatpush1.msra.mxu0 0.0
        %2559 = vmatprep.subr.mxu0 0.0
        %2560 = vmatpush1.msra.mxu0 0.0
        %2561 = vmatprep.subr.mxu0 0.0
        %2562 = vmatpush1.msra.mxu0 %v921
        %2563 = vmatprep.subr.mxu0 0.0
        %2564 = vmatpush2.msra.mxu0 0.0
        %2565 = vmatprep.subr.mxu0 0.0
        %2566 = vmatpush2.msra.mxu0 0.0
        %2567 = vmatprep.subr.mxu0 0.0
        %2568 = vmatpush2.msra.mxu0 0.0
        %2569 = vmatprep.subr.mxu0 0.0
        %2570 = vmatpush2.msra.mxu0 0.0
        %2571 = vmatprep.subr.mxu0 0.0
        %2572 = vmatpush2.msra.mxu0 0.0
        %2573 = vmatprep.subr.mxu0 0.0
        %2574 = vmatpush2.msra.mxu0 0.0
        %2575 = vmatprep.subr.mxu0 0.0
        %2576 = vmatpush2.msra.mxu0 0.0
        %2577 = vmatprep.subr.mxu0 0.0
        %2578 = vmatpush2.msra.mxu0 0.0
        %2579 = vmatprep.subr.mxu0 0.0
        %2580 = vmatpush2.msra.mxu0 0.0
        %2581 = vmatprep.subr.mxu0 0.0
        %2582 = vmatpush2.msra.mxu0 0.0
        %2583 = vmatprep.subr.mxu0 0.0
        %2584 = vmatpush2.msra.mxu0 0.0
        %2585 = vmatprep.subr.mxu0 0.0
        %2586 = vmatpush2.msra.mxu0 0.0
        %2587 = vmatprep.subr.mxu0 0.0
        %2588 = vmatpush2.msra.mxu0 0.0
        %2589 = vmatprep.subr.mxu0 0.0
        %2590 = vmatpush2.msra.mxu0 0.0
        %2591 = vmatprep.subr.mxu0 0.0
        %2592 = vmatpush2.msra.mxu0 0.0
        %2593 = vmatprep.subr.mxu0 0.0
        %2594 = vmatpush2.msra.mxu0 0.0
        %2595 = vmatprep.mubr.f32.mxu0 0.0
        %2596 = vmatmul.mubr.f32.gmra.mxu0 %v2529
        %v2597 = vpop.f32.mrf.mxu0
        %v2598 = vadd.f32 0.0, %v2597
        %v2599 = vpop.f32.mrf.mxu0
        %2600 = vdwg.mxu0
        %v2602 = vsel %vm1120, %v2353, 0
        %2604 = vmatprep.subr.mxu0 0.0
        %2605 = vmatpush1.msra.mxu0 0.0
        %2606 = vmatprep.subr.mxu0 0.0
        %2607 = vmatpush1.msra.mxu0 0.0
        %2608 = vmatprep.subr.mxu0 0.0
        %2609 = vmatpush1.msra.mxu0 0.0
        %2610 = vmatprep.subr.mxu0 0.0
        %2611 = vmatpush1.msra.mxu0 0.0
        %2612 = vmatprep.subr.mxu0 0.0
        %2613 = vmatpush1.msra.mxu0 0.0
        %2614 = vmatprep.subr.mxu0 0.0
        %2615 = vmatpush1.msra.mxu0 0.0
        %2616 = vmatprep.subr.mxu0 0.0
        %2617 = vmatpush1.msra.mxu0 0.0
        %2618 = vmatprep.subr.mxu0 0.0
        %2619 = vmatpush1.msra.mxu0 0.0
        %2620 = vmatprep.subr.mxu0 0.0
        %2621 = vmatpush1.msra.mxu0 0.0
        %2622 = vmatprep.subr.mxu0 0.0
        %2623 = vmatpush1.msra.mxu0 0.0
        %2624 = vmatprep.subr.mxu0 0.0
        %2625 = vmatpush1.msra.mxu0 0.0
        %2626 = vmatprep.subr.mxu0 0.0
        %2627 = vmatpush1.msra.mxu0 0.0
        %2628 = vmatprep.subr.mxu0 0.0
        %2629 = vmatpush1.msra.mxu0 0.0
        %2630 = vmatprep.subr.mxu0 0.0
        %2631 = vmatpush1.msra.mxu0 0.0
        %2632 = vmatprep.subr.mxu0 0.0
        %2633 = vmatpush1.msra.mxu0 0.0
        %2634 = vmatprep.subr.mxu0 0.0
        %2635 = vmatpush1.msra.mxu0 %v920
        %2636 = vmatprep.subr.mxu0 0.0
        %2637 = vmatpush2.msra.mxu0 0.0
        %2638 = vmatprep.subr.mxu0 0.0
        %2639 = vmatpush2.msra.mxu0 0.0
        %2640 = vmatprep.subr.mxu0 0.0
        %2641 = vmatpush2.msra.mxu0 0.0
        %2642 = vmatprep.subr.mxu0 0.0
        %2643 = vmatpush2.msra.mxu0 0.0
        %2644 = vmatprep.subr.mxu0 0.0
        %2645 = vmatpush2.msra.mxu0 0.0
        %2646 = vmatprep.subr.mxu0 0.0
        %2647 = vmatpush2.msra.mxu0 0.0
        %2648 = vmatprep.subr.mxu0 0.0
        %2649 = vmatpush2.msra.mxu0 0.0
        %2650 = vmatprep.subr.mxu0 0.0
        %2651 = vmatpush2.msra.mxu0 0.0
        %2652 = vmatprep.subr.mxu0 0.0
        %2653 = vmatpush2.msra.mxu0 0.0
        %2654 = vmatprep.subr.mxu0 0.0
        %2655 = vmatpush2.msra.mxu0 0.0
        %2656 = vmatprep.subr.mxu0 0.0
        %2657 = vmatpush2.msra.mxu0 0.0
        %2658 = vmatprep.subr.mxu0 0.0
        %2659 = vmatpush2.msra.mxu0 0.0
        %2660 = vmatprep.subr.mxu0 0.0
        %2661 = vmatpush2.msra.mxu0 0.0
        %2662 = vmatprep.subr.mxu0 0.0
        %2663 = vmatpush2.msra.mxu0 0.0
        %2664 = vmatprep.subr.mxu0 0.0
        %2665 = vmatpush2.msra.mxu0 0.0
        %2666 = vmatprep.subr.mxu0 0.0
        %2667 = vmatpush2.msra.mxu0 0.0
        %2668 = vmatprep.mubr.f32.mxu0 0.0
        %2669 = vmatmul.mubr.f32.gmra.mxu0 %v2602
        %v2670 = vpop.f32.mrf.mxu0
        %v2671 = vadd.f32 %v2598, %v2670
        %v2672 = vpop.f32.mrf.mxu0
        %2673 = vdwg.mxu0
        %2674 = vrot.lane.b32.xlu0 %v2183, 112
        %v2675 = vpop.permute.xlu0 %2674
        %2676 = vrot.lane.b32.xlu0 %v1030, 112
        %v2677 = vpop.permute.xlu0 %2676
        %2678 = vrot.lane.b32.xlu0 %v1035, 112
        %v2679 = vpop.permute.xlu0 %2678
        %v2680 = vsel %vm1120, %v2675, 0
        %v2682 = vsel %vm1120, %v2677, 0
        %v2684 = vsel %vm1120, %v2679, 0
        %2686 = vmatprep.subr.mxu0 0.0
        %2687 = vmatpush1.xpose.msra.mxu0 0.0
        %2688 = vmatprep.subr.mxu0 0.0
        %2689 = vmatpush1.xpose.msra.mxu0 0.0
        %2690 = vmatprep.subr.mxu0 0.0
        %2691 = vmatpush1.xpose.msra.mxu0 0.0
        %2692 = vmatprep.subr.mxu0 0.0
        %2693 = vmatpush1.xpose.msra.mxu0 0.0
        %2694 = vmatprep.subr.mxu0 0.0
        %2695 = vmatpush1.xpose.msra.mxu0 0.0
        %2696 = vmatprep.subr.mxu0 0.0
        %2697 = vmatpush1.xpose.msra.mxu0 0.0
        %2698 = vmatprep.subr.mxu0 0.0
        %2699 = vmatpush1.xpose.msra.mxu0 0.0
        %2700 = vmatprep.subr.mxu0 0.0
        %2701 = vmatpush1.xpose.msra.mxu0 0.0
        %2702 = vmatprep.subr.mxu0 0.0
        %2703 = vmatpush1.xpose.msra.mxu0 0.0
        %2704 = vmatprep.subr.mxu0 0.0
        %2705 = vmatpush1.xpose.msra.mxu0 0.0
        %2706 = vmatprep.subr.mxu0 0.0
        %2707 = vmatpush1.xpose.msra.mxu0 0.0
        %2708 = vmatprep.subr.mxu0 0.0
        %2709 = vmatpush1.xpose.msra.mxu0 0.0
        %2710 = vmatprep.subr.mxu0 0.0
        %2711 = vmatpush1.xpose.msra.mxu0 0.0
        %2712 = vmatprep.subr.mxu0 0.0
        %2713 = vmatpush1.xpose.msra.mxu0 0.0
        %2714 = vmatprep.subr.mxu0 0.0
        %2715 = vmatpush1.xpose.msra.mxu0 %v2684
        %2716 = vmatprep.subr.mxu0 0.0
        %2717 = vmatpush1.xpose.msra.mxu0 %v2682
        %2718 = vmatprep.subr.mxu0 0.0
        %2719 = vmatpush2.xpose.msra.mxu0 0.0
        %2720 = vmatprep.subr.mxu0 0.0
        %2721 = vmatpush2.xpose.msra.mxu0 0.0
        %2722 = vmatprep.subr.mxu0 0.0
        %2723 = vmatpush2.xpose.msra.mxu0 0.0
        %2724 = vmatprep.subr.mxu0 0.0
        %2725 = vmatpush2.xpose.msra.mxu0 0.0
        %2726 = vmatprep.subr.mxu0 0.0
        %2727 = vmatpush2.xpose.msra.mxu0 0.0
        %2728 = vmatprep.subr.mxu0 0.0
        %2729 = vmatpush2.xpose.msra.mxu0 0.0
        %2730 = vmatprep.subr.mxu0 0.0
        %2731 = vmatpush2.xpose.msra.mxu0 0.0
        %2732 = vmatprep.subr.mxu0 0.0
        %2733 = vmatpush2.xpose.msra.mxu0 0.0
        %2734 = vmatprep.subr.mxu0 0.0
        %2735 = vmatpush2.xpose.msra.mxu0 0.0
        %2736 = vmatprep.subr.mxu0 0.0
        %2737 = vmatpush2.xpose.msra.mxu0 0.0
        %2738 = vmatprep.subr.mxu0 0.0
        %2739 = vmatpush2.xpose.msra.mxu0 0.0
        %2740 = vmatprep.subr.mxu0 0.0
        %2741 = vmatpush2.xpose.msra.mxu0 0.0
        %2742 = vmatprep.subr.mxu0 0.0
        %2743 = vmatpush2.xpose.msra.mxu0 0.0
        %2744 = vmatprep.subr.mxu0 0.0
        %2745 = vmatpush2.xpose.msra.mxu0 0.0
        %2746 = vmatprep.subr.mxu0 0.0
        %2747 = vmatpush2.xpose.msra.mxu0 0.0
        %2748 = vmatprep.subr.mxu0 0.0
        %2749 = vmatpush2.xpose.msra.mxu0 0.0
        %2750 = vmatprep.mubr.f32.mxu0 0.0
        %2751 = vmatmul.mubr.f32.gmra.mxu0 %v2680
        %v2752 = vpop.f32.mrf.mxu0
        %v2753 = vadd.f32 0.0, %v2752
        %v2754 = vpop.f32.mrf.mxu0
        %2755 = vdwg.mxu0
        %v2756 = vsel %vm2265, %v2753, -inf
        %2757 = vmax.xlane.f32.xlu0 %v2756
        %v2758 = vpop.xlane.xlu0 %2757
        %v2759 = vsub.f32 %v2753, %v2758
        %v2760 = vmul.f32 %v2759, 1.442695
        %v2761 = vpow.pop %v2760
        %v2762 = vsel %vm2265, %v2761, 0.0
        %2763 = vadd.xlane.f32.xlu0 %v2762
        %v2764 = vpop.xlane.xlu0 %2763
        %v2765 = vrcp.pop %v2764
        %v2766 = vmul.f32 %v2761, %v2765
        %2767 = vrot.lane.b32.xlu0 %v1030, 80
        %v2768 = vpop.permute.xlu0 %2767
        %2769 = vrot.lane.b32.xlu0 %v1035, 80
        %v2770 = vpop.permute.xlu0 %2769
        %v2774 = vsel %vm2265, %v2766, 0
        %2776 = vmatprep.subr.mxu0 0.0
        %2777 = vmatpush1.msra.mxu0 0.0
        %2778 = vmatprep.subr.mxu0 0.0
        %2779 = vmatpush1.msra.mxu0 0.0
        %2780 = vmatprep.subr.mxu0 0.0
        %2781 = vmatpush1.msra.mxu0 0.0
        %2782 = vmatprep.subr.mxu0 0.0
        %2783 = vmatpush1.msra.mxu0 0.0
        %2784 = vmatprep.subr.mxu0 0.0
        %2785 = vmatpush1.msra.mxu0 0.0
        %2786 = vmatprep.subr.mxu0 0.0
        %2787 = vmatpush1.msra.mxu0 0.0
        %2788 = vmatprep.subr.mxu0 0.0
        %2789 = vmatpush1.msra.mxu0 0.0
        %2790 = vmatprep.subr.mxu0 0.0
        %2791 = vmatpush1.msra.mxu0 0.0
        %2792 = vmatprep.subr.mxu0 0.0
        %2793 = vmatpush1.msra.mxu0 0.0
        %2794 = vmatprep.subr.mxu0 0.0
        %2795 = vmatpush1.msra.mxu0 0.0
        %2796 = vmatprep.subr.mxu0 0.0
        %2797 = vmatpush1.msra.mxu0 0.0
        %2798 = vmatprep.subr.mxu0 0.0
        %2799 = vmatpush1.msra.mxu0 0.0
        %2800 = vmatprep.subr.mxu0 0.0
        %2801 = vmatpush1.msra.mxu0 0.0
        %2802 = vmatprep.subr.mxu0 0.0
        %2803 = vmatpush1.msra.mxu0 0.0
        %2804 = vmatprep.subr.mxu0 0.0
        %2805 = vmatpush1.msra.mxu0 %v2770
        %2806 = vmatprep.subr.mxu0 0.0
        %2807 = vmatpush1.msra.mxu0 %v2768
        %2808 = vmatprep.subr.mxu0 0.0
        %2809 = vmatpush2.msra.mxu0 0.0
        %2810 = vmatprep.subr.mxu0 0.0
        %2811 = vmatpush2.msra.mxu0 0.0
        %2812 = vmatprep.subr.mxu0 0.0
        %2813 = vmatpush2.msra.mxu0 0.0
        %2814 = vmatprep.subr.mxu0 0.0
        %2815 = vmatpush2.msra.mxu0 0.0
        %2816 = vmatprep.subr.mxu0 0.0
        %2817 = vmatpush2.msra.mxu0 0.0
        %2818 = vmatprep.subr.mxu0 0.0
        %2819 = vmatpush2.msra.mxu0 0.0
        %2820 = vmatprep.subr.mxu0 0.0
        %2821 = vmatpush2.msra.mxu0 0.0
        %2822 = vmatprep.subr.mxu0 0.0
        %2823 = vmatpush2.msra.mxu0 0.0
        %2824 = vmatprep.subr.mxu0 0.0
        %2825 = vmatpush2.msra.mxu0 0.0
        %2826 = vmatprep.subr.mxu0 0.0
        %2827 = vmatpush2.msra.mxu0 0.0
        %2828 = vmatprep.subr.mxu0 0.0
        %2829 = vmatpush2.msra.mxu0 0.0
        %2830 = vmatprep.subr.mxu0 0.0
        %2831 = vmatpush2.msra.mxu0 0.0
        %2832 = vmatprep.subr.mxu0 0.0
        %2833 = vmatpush2.msra.mxu0 0.0
        %2834 = vmatprep.subr.mxu0 0.0
        %2835 = vmatpush2.msra.mxu0 0.0
        %2836 = vmatprep.subr.mxu0 0.0
        %2837 = vmatpush2.msra.mxu0 0.0
        %2838 = vmatprep.subr.mxu0 0.0
        %2839 = vmatpush2.msra.mxu0 0.0
        %2840 = vmatprep.mubr.f32.mxu0 0.0
        %2841 = vmatmul.mubr.f32.gmra.mxu0 %v2774
        %v2842 = vpop.f32.mrf.mxu0
        %v2843 = vadd.f32 0.0, %v2842
        %v2844 = vpop.f32.mrf.mxu0
        %2845 = vdwg.mxu0
        %v2847 = vsel %vm1120, %v2843, 0
        %2849 = vmatprep.subr.mxu0 0.0
        %2850 = vmatpush1.msra.mxu0 0.0
        %2851 = vmatprep.subr.mxu0 0.0
        %2852 = vmatpush1.msra.mxu0 0.0
        %2853 = vmatprep.subr.mxu0 0.0
        %2854 = vmatpush1.msra.mxu0 0.0
        %2855 = vmatprep.subr.mxu0 0.0
        %2856 = vmatpush1.msra.mxu0 0.0
        %2857 = vmatprep.subr.mxu0 0.0
        %2858 = vmatpush1.msra.mxu0 0.0
        %2859 = vmatprep.subr.mxu0 0.0
        %2860 = vmatpush1.msra.mxu0 0.0
        %2861 = vmatprep.subr.mxu0 0.0
        %2862 = vmatpush1.msra.mxu0 0.0
        %2863 = vmatprep.subr.mxu0 0.0
        %2864 = vmatpush1.msra.mxu0 0.0
        %2865 = vmatprep.subr.mxu0 0.0
        %2866 = vmatpush1.msra.mxu0 0.0
        %2867 = vmatprep.subr.mxu0 0.0
        %2868 = vmatpush1.msra.mxu0 0.0
        %2869 = vmatprep.subr.mxu0 0.0
        %2870 = vmatpush1.msra.mxu0 0.0
        %2871 = vmatprep.subr.mxu0 0.0
        %2872 = vmatpush1.msra.mxu0 0.0
        %2873 = vmatprep.subr.mxu0 0.0
        %2874 = vmatpush1.msra.mxu0 0.0
        %2875 = vmatprep.subr.mxu0 0.0
        %2876 = vmatpush1.msra.mxu0 0.0
        %2877 = vmatprep.subr.mxu0 0.0
        %2878 = vmatpush1.msra.mxu0 0.0
        %2879 = vmatprep.subr.mxu0 0.0
        %2880 = vmatpush1.msra.mxu0 %v922
        %2881 = vmatprep.subr.mxu0 0.0
        %2882 = vmatpush2.msra.mxu0 0.0
        %2883 = vmatprep.subr.mxu0 0.0
        %2884 = vmatpush2.msra.mxu0 0.0
        %2885 = vmatprep.subr.mxu0 0.0
        %2886 = vmatpush2.msra.mxu0 0.0
        %2887 = vmatprep.subr.mxu0 0.0
        %2888 = vmatpush2.msra.mxu0 0.0
        %2889 = vmatprep.subr.mxu0 0.0
        %2890 = vmatpush2.msra.mxu0 0.0
        %2891 = vmatprep.subr.mxu0 0.0
        %2892 = vmatpush2.msra.mxu0 0.0
        %2893 = vmatprep.subr.mxu0 0.0
        %2894 = vmatpush2.msra.mxu0 0.0
        %2895 = vmatprep.subr.mxu0 0.0
        %2896 = vmatpush2.msra.mxu0 0.0
        %2897 = vmatprep.subr.mxu0 0.0
        %2898 = vmatpush2.msra.mxu0 0.0
        %2899 = vmatprep.subr.mxu0 0.0
        %2900 = vmatpush2.msra.mxu0 0.0
        %2901 = vmatprep.subr.mxu0 0.0
        %2902 = vmatpush2.msra.mxu0 0.0
        %2903 = vmatprep.subr.mxu0 0.0
        %2904 = vmatpush2.msra.mxu0 0.0
        %2905 = vmatprep.subr.mxu0 0.0
        %2906 = vmatpush2.msra.mxu0 0.0
        %2907 = vmatprep.subr.mxu0 0.0
        %2908 = vmatpush2.msra.mxu0 0.0
        %2909 = vmatprep.subr.mxu0 0.0
        %2910 = vmatpush2.msra.mxu0 0.0
        %2911 = vmatprep.subr.mxu0 0.0
        %2912 = vmatpush2.msra.mxu0 0.0
        %2913 = vmatprep.mubr.f32.mxu0 0.0
        %2914 = vmatmul.mubr.f32.gmra.mxu0 %v2847
        %v2915 = vpop.f32.mrf.mxu0
        %v2916 = vadd.f32 0.0, %v2915
        %v2917 = vpop.f32.mrf.mxu0
        %2918 = vdwg.mxu0
        %v2919 = vadd.f32 %v2671, %v2916
        %2920 = vrot.lane.b32.xlu0 %v2183, 104
        %v2921 = vpop.permute.xlu0 %2920
        %2922 = vrot.lane.b32.xlu0 %v1030, 104
        %v2923 = vpop.permute.xlu0 %2922
        %2924 = vrot.lane.b32.xlu0 %v1035, 104
        %v2925 = vpop.permute.xlu0 %2924
        %v2926 = vsel %vm1120, %v2921, 0
        %v2928 = vsel %vm1120, %v2923, 0
        %v2930 = vsel %vm1120, %v2925, 0
        %2932 = vmatprep.subr.mxu0 0.0
        %2933 = vmatpush1.xpose.msra.mxu0 0.0
        %2934 = vmatprep.subr.mxu0 0.0
        %2935 = vmatpush1.xpose.msra.mxu0 0.0
        %2936 = vmatprep.subr.mxu0 0.0
        %2937 = vmatpush1.xpose.msra.mxu0 0.0
        %2938 = vmatprep.subr.mxu0 0.0
        %2939 = vmatpush1.xpose.msra.mxu0 0.0
        %2940 = vmatprep.subr.mxu0 0.0
        %2941 = vmatpush1.xpose.msra.mxu0 0.0
        %2942 = vmatprep.subr.mxu0 0.0
        %2943 = vmatpush1.xpose.msra.mxu0 0.0
        %2944 = vmatprep.subr.mxu0 0.0
        %2945 = vmatpush1.xpose.msra.mxu0 0.0
        %2946 = vmatprep.subr.mxu0 0.0
        %2947 = vmatpush1.xpose.msra.mxu0 0.0
        %2948 = vmatprep.subr.mxu0 0.0
        %2949 = vmatpush1.xpose.msra.mxu0 0.0
        %2950 = vmatprep.subr.mxu0 0.0
        %2951 = vmatpush1.xpose.msra.mxu0 0.0
        %2952 = vmatprep.subr.mxu0 0.0
        %2953 = vmatpush1.xpose.msra.mxu0 0.0
        %2954 = vmatprep.subr.mxu0 0.0
        %2955 = vmatpush1.xpose.msra.mxu0 0.0
        %2956 = vmatprep.subr.mxu0 0.0
        %2957 = vmatpush1.xpose.msra.mxu0 0.0
        %2958 = vmatprep.subr.mxu0 0.0
        %2959 = vmatpush1.xpose.msra.mxu0 0.0
        %2960 = vmatprep.subr.mxu0 0.0
        %2961 = vmatpush1.xpose.msra.mxu0 %v2930
        %2962 = vmatprep.subr.mxu0 0.0
        %2963 = vmatpush1.xpose.msra.mxu0 %v2928
        %2964 = vmatprep.subr.mxu0 0.0
        %2965 = vmatpush2.xpose.msra.mxu0 0.0
        %2966 = vmatprep.subr.mxu0 0.0
        %2967 = vmatpush2.xpose.msra.mxu0 0.0
        %2968 = vmatprep.subr.mxu0 0.0
        %2969 = vmatpush2.xpose.msra.mxu0 0.0
        %2970 = vmatprep.subr.mxu0 0.0
        %2971 = vmatpush2.xpose.msra.mxu0 0.0
        %2972 = vmatprep.subr.mxu0 0.0
        %2973 = vmatpush2.xpose.msra.mxu0 0.0
        %2974 = vmatprep.subr.mxu0 0.0
        %2975 = vmatpush2.xpose.msra.mxu0 0.0
        %2976 = vmatprep.subr.mxu0 0.0
        %2977 = vmatpush2.xpose.msra.mxu0 0.0
        %2978 = vmatprep.subr.mxu0 0.0
        %2979 = vmatpush2.xpose.msra.mxu0 0.0
        %2980 = vmatprep.subr.mxu0 0.0
        %2981 = vmatpush2.xpose.msra.mxu0 0.0
        %2982 = vmatprep.subr.mxu0 0.0
        %2983 = vmatpush2.xpose.msra.mxu0 0.0
        %2984 = vmatprep.subr.mxu0 0.0
        %2985 = vmatpush2.xpose.msra.mxu0 0.0
        %2986 = vmatprep.subr.mxu0 0.0
        %2987 = vmatpush2.xpose.msra.mxu0 0.0
        %2988 = vmatprep.subr.mxu0 0.0
        %2989 = vmatpush2.xpose.msra.mxu0 0.0
        %2990 = vmatprep.subr.mxu0 0.0
        %2991 = vmatpush2.xpose.msra.mxu0 0.0
        %2992 = vmatprep.subr.mxu0 0.0
        %2993 = vmatpush2.xpose.msra.mxu0 0.0
        %2994 = vmatprep.subr.mxu0 0.0
        %2995 = vmatpush2.xpose.msra.mxu0 0.0
        %2996 = vmatprep.mubr.f32.mxu0 0.0
        %2997 = vmatmul.mubr.f32.gmra.mxu0 %v2926
        %v2998 = vpop.f32.mrf.mxu0
        %v2999 = vadd.f32 0.0, %v2998
        %v3000 = vpop.f32.mrf.mxu0
        %3001 = vdwg.mxu0
        %v3002 = vsel %vm2265, %v2999, -inf
        %3003 = vmax.xlane.f32.xlu0 %v3002
        %v3004 = vpop.xlane.xlu0 %3003
        %v3005 = vsub.f32 %v2999, %v3004
        %v3006 = vmul.f32 %v3005, 1.442695
        %v3007 = vpow.pop %v3006
        %v3008 = vsel %vm2265, %v3007, 0.0
        %3009 = vadd.xlane.f32.xlu0 %v3008
        %v3010 = vpop.xlane.xlu0 %3009
        %v3011 = vrcp.pop %v3010
        %v3012 = vmul.f32 %v3007, %v3011
        %3013 = vrot.lane.b32.xlu0 %v1030, 72
        %v3014 = vpop.permute.xlu0 %3013
        %3015 = vrot.lane.b32.xlu0 %v1035, 72
        %v3016 = vpop.permute.xlu0 %3015
        %v3020 = vsel %vm2265, %v3012, 0
        %3022 = vmatprep.subr.mxu0 0.0
        %3023 = vmatpush1.msra.mxu0 0.0
        %3024 = vmatprep.subr.mxu0 0.0
        %3025 = vmatpush1.msra.mxu0 0.0
        %3026 = vmatprep.subr.mxu0 0.0
        %3027 = vmatpush1.msra.mxu0 0.0
        %3028 = vmatprep.subr.mxu0 0.0
        %3029 = vmatpush1.msra.mxu0 0.0
        %3030 = vmatprep.subr.mxu0 0.0
        %3031 = vmatpush1.msra.mxu0 0.0
        %3032 = vmatprep.subr.mxu0 0.0
        %3033 = vmatpush1.msra.mxu0 0.0
        %3034 = vmatprep.subr.mxu0 0.0
        %3035 = vmatpush1.msra.mxu0 0.0
        %3036 = vmatprep.subr.mxu0 0.0
        %3037 = vmatpush1.msra.mxu0 0.0
        %3038 = vmatprep.subr.mxu0 0.0
        %3039 = vmatpush1.msra.mxu0 0.0
        %3040 = vmatprep.subr.mxu0 0.0
        %3041 = vmatpush1.msra.mxu0 0.0
        %3042 = vmatprep.subr.mxu0 0.0
        %3043 = vmatpush1.msra.mxu0 0.0
        %3044 = vmatprep.subr.mxu0 0.0
        %3045 = vmatpush1.msra.mxu0 0.0
        %3046 = vmatprep.subr.mxu0 0.0
        %3047 = vmatpush1.msra.mxu0 0.0
        %3048 = vmatprep.subr.mxu0 0.0
        %3049 = vmatpush1.msra.mxu0 0.0
        %3050 = vmatprep.subr.mxu0 0.0
        %3051 = vmatpush1.msra.mxu0 %v3016
        %3052 = vmatprep.subr.mxu0 0.0
        %3053 = vmatpush1.msra.mxu0 %v3014
        %3054 = vmatprep.subr.mxu0 0.0
        %3055 = vmatpush2.msra.mxu0 0.0
        %3056 = vmatprep.subr.mxu0 0.0
        %3057 = vmatpush2.msra.mxu0 0.0
        %3058 = vmatprep.subr.mxu0 0.0
        %3059 = vmatpush2.msra.mxu0 0.0
        %3060 = vmatprep.subr.mxu0 0.0
        %3061 = vmatpush2.msra.mxu0 0.0
        %3062 = vmatprep.subr.mxu0 0.0
        %3063 = vmatpush2.msra.mxu0 0.0
        %3064 = vmatprep.subr.mxu0 0.0
        %3065 = vmatpush2.msra.mxu0 0.0
        %3066 = vmatprep.subr.mxu0 0.0
        %3067 = vmatpush2.msra.mxu0 0.0
        %3068 = vmatprep.subr.mxu0 0.0
        %3069 = vmatpush2.msra.mxu0 0.0
        %3070 = vmatprep.subr.mxu0 0.0
        %3071 = vmatpush2.msra.mxu0 0.0
        %3072 = vmatprep.subr.mxu0 0.0
        %3073 = vmatpush2.msra.mxu0 0.0
        %3074 = vmatprep.subr.mxu0 0.0
        %3075 = vmatpush2.msra.mxu0 0.0
        %3076 = vmatprep.subr.mxu0 0.0
        %3077 = vmatpush2.msra.mxu0 0.0
        %3078 = vmatprep.subr.mxu0 0.0
        %3079 = vmatpush2.msra.mxu0 0.0
        %3080 = vmatprep.subr.mxu0 0.0
        %3081 = vmatpush2.msra.mxu0 0.0
        %3082 = vmatprep.subr.mxu0 0.0
        %3083 = vmatpush2.msra.mxu0 0.0
        %3084 = vmatprep.subr.mxu0 0.0
        %3085 = vmatpush2.msra.mxu0 0.0
        %3086 = vmatprep.mubr.f32.mxu0 0.0
        %3087 = vmatmul.mubr.f32.gmra.mxu0 %v3020
        %v3088 = vpop.f32.mrf.mxu0
        %v3089 = vadd.f32 0.0, %v3088
        %v3090 = vpop.f32.mrf.mxu0
        %3091 = vdwg.mxu0
        %v3093 = vsel %vm1120, %v3089, 0
        %3095 = vmatprep.subr.mxu0 0.0
        %3096 = vmatpush1.msra.mxu0 0.0
        %3097 = vmatprep.subr.mxu0 0.0
        %3098 = vmatpush1.msra.mxu0 0.0
        %3099 = vmatprep.subr.mxu0 0.0
        %3100 = vmatpush1.msra.mxu0 0.0
        %3101 = vmatprep.subr.mxu0 0.0
        %3102 = vmatpush1.msra.mxu0 0.0
        %3103 = vmatprep.subr.mxu0 0.0
        %3104 = vmatpush1.msra.mxu0 0.0
        %3105 = vmatprep.subr.mxu0 0.0
        %3106 = vmatpush1.msra.mxu0 0.0
        %3107 = vmatprep.subr.mxu0 0.0
        %3108 = vmatpush1.msra.mxu0 0.0
        %3109 = vmatprep.subr.mxu0 0.0
        %3110 = vmatpush1.msra.mxu0 0.0
        %3111 = vmatprep.subr.mxu0 0.0
        %3112 = vmatpush1.msra.mxu0 0.0
        %3113 = vmatprep.subr.mxu0 0.0
        %3114 = vmatpush1.msra.mxu0 0.0
        %3115 = vmatprep.subr.mxu0 0.0
        %3116 = vmatpush1.msra.mxu0 0.0
        %3117 = vmatprep.subr.mxu0 0.0
        %3118 = vmatpush1.msra.mxu0 0.0
        %3119 = vmatprep.subr.mxu0 0.0
        %3120 = vmatpush1.msra.mxu0 0.0
        %3121 = vmatprep.subr.mxu0 0.0
        %3122 = vmatpush1.msra.mxu0 0.0
        %3123 = vmatprep.subr.mxu0 0.0
        %3124 = vmatpush1.msra.mxu0 0.0
        %3125 = vmatprep.subr.mxu0 0.0
        %3126 = vmatpush1.msra.mxu0 %v923
        %3127 = vmatprep.subr.mxu0 0.0
        %3128 = vmatpush2.msra.mxu0 0.0
        %3129 = vmatprep.subr.mxu0 0.0
        %3130 = vmatpush2.msra.mxu0 0.0
        %3131 = vmatprep.subr.mxu0 0.0
        %3132 = vmatpush2.msra.mxu0 0.0
        %3133 = vmatprep.subr.mxu0 0.0
        %3134 = vmatpush2.msra.mxu0 0.0
        %3135 = vmatprep.subr.mxu0 0.0
        %3136 = vmatpush2.msra.mxu0 0.0
        %3137 = vmatprep.subr.mxu0 0.0
        %3138 = vmatpush2.msra.mxu0 0.0
        %3139 = vmatprep.subr.mxu0 0.0
        %3140 = vmatpush2.msra.mxu0 0.0
        %3141 = vmatprep.subr.mxu0 0.0
        %3142 = vmatpush2.msra.mxu0 0.0
        %3143 = vmatprep.subr.mxu0 0.0
        %3144 = vmatpush2.msra.mxu0 0.0
        %3145 = vmatprep.subr.mxu0 0.0
        %3146 = vmatpush2.msra.mxu0 0.0
        %3147 = vmatprep.subr.mxu0 0.0
        %3148 = vmatpush2.msra.mxu0 0.0
        %3149 = vmatprep.subr.mxu0 0.0
        %3150 = vmatpush2.msra.mxu0 0.0
        %3151 = vmatprep.subr.mxu0 0.0
        %3152 = vmatpush2.msra.mxu0 0.0
        %3153 = vmatprep.subr.mxu0 0.0
        %3154 = vmatpush2.msra.mxu0 0.0
        %3155 = vmatprep.subr.mxu0 0.0
        %3156 = vmatpush2.msra.mxu0 0.0
        %3157 = vmatprep.subr.mxu0 0.0
        %3158 = vmatpush2.msra.mxu0 0.0
        %3159 = vmatprep.mubr.f32.mxu0 0.0
        %3160 = vmatmul.mubr.f32.gmra.mxu0 %v3093
        %v3161 = vpop.f32.mrf.mxu0
        %v3162 = vadd.f32 0.0, %v3161
        %v3163 = vpop.f32.mrf.mxu0
        %3164 = vdwg.mxu0
        %v3165 = vadd.f32 %v2919, %v3162
        %v3167 = vlaneseq
        %v3168 = vshrl.u32 %v3167, 7
        %v3169 = vsub.s32 0, %v3168
        %v3170 = vrot.slane %v924, %v3169
        %v3172 = vadd.f32 %v3165, %v3170
        %v3173 = vadd.f32 %v2106, %v3172
        %v3174 = vsel %vm956, %v3173, 0.0
        %3175 = vadd.xlane.f32.xlu0 %v3174
        %v3176 = vpop.xlane.xlu0 %3175
        %v3177 = vmul.f32 %v3176, %v2082
        %v3178 = vsub.f32 %v3173, %v3177
        %v3179 = vmul.f32 %v3178, %v3178
        %v3180 = vsel %vm956, %v3179, 0.0
        %3181 = vadd.xlane.f32.xlu0 %v3180
        %v3182 = vpop.xlane.xlu0 %3181
        %v3183 = vmul.f32 %v3182, %v2082
        %v3184 = vadd.f32 %v3183, 1e-05
        %v3185 = vrsqrt.pop %v3184
        %v3186 = vmul.f32 %v3178, %v3185
        %v3188 = vlaneseq
        %v3189 = vshrl.u32 %v3188, 7
        %v3190 = vsub.s32 0, %v3189
        %v3191 = vrot.slane %v941, %v3190
        %v3193 = vmul.f32 %v3186, %v3191
        %v3195 = vlaneseq
        %v3196 = vshrl.u32 %v3195, 7
        %v3197 = vsub.s32 0, %v3196
        %v3198 = vrot.slane %v942, %v3197
        %v3200 = vadd.f32 %v3193, %v3198
        %v3202 = vlaneseq
        %v3203 = vshrl.u32 %v3202, 7
        %v3204 = vsub.s32 0, %v3203
        %v3205 = vrot.slane %v929, %v3204
        %v3208 = vsel %vm956, %v3200, 0
        %3210 = vmatprep.subr.mxu0 0.0
        %3211 = vmatpush1.msra.mxu0 0.0
        %3212 = vmatprep.subr.mxu0 0.0
        %3213 = vmatpush1.msra.mxu0 0.0
        %3214 = vmatprep.subr.mxu0 0.0
        %3215 = vmatpush1.msra.mxu0 0.0
        %3216 = vmatprep.subr.mxu0 0.0
        %3217 = vmatpush1.msra.mxu0 0.0
        %3218 = vmatprep.subr.mxu0 0.0
        %3219 = vmatpush1.msra.mxu0 0.0
        %3220 = vmatprep.subr.mxu0 0.0
        %3221 = vmatpush1.msra.mxu0 0.0
        %3222 = vmatprep.subr.mxu0 0.0
        %3223 = vmatpush1.msra.mxu0 0.0
        %3224 = vmatprep.subr.mxu0 0.0
        %3225 = vmatpush1.msra.mxu0 0.0
        %3226 = vmatprep.subr.mxu0 0.0
        %3227 = vmatpush1.msra.mxu0 0.0
        %3228 = vmatprep.subr.mxu0 0.0
        %3229 = vmatpush1.msra.mxu0 0.0
        %3230 = vmatprep.subr.mxu0 0.0
        %3231 = vmatpush1.msra.mxu0 0.0
        %3232 = vmatprep.subr.mxu0 0.0
        %3233 = vmatpush1.msra.mxu0 0.0
        %3234 = vmatprep.subr.mxu0 0.0
        %3235 = vmatpush1.msra.mxu0 %v928
        %3236 = vmatprep.subr.mxu0 0.0
        %3237 = vmatpush1.msra.mxu0 %v927
        %3238 = vmatprep.subr.mxu0 0.0
        %3239 = vmatpush1.msra.mxu0 %v926
        %3240 = vmatprep.subr.mxu0 0.0
        %3241 = vmatpush1.msra.mxu0 %v925
        %3242 = vmatprep.subr.mxu0 0.0
        %3243 = vmatpush2.msra.mxu0 0.0
        %3244 = vmatprep.subr.mxu0 0.0
        %3245 = vmatpush2.msra.mxu0 0.0
        %3246 = vmatprep.subr.mxu0 0.0
        %3247 = vmatpush2.msra.mxu0 0.0
        %3248 = vmatprep.subr.mxu0 0.0
        %3249 = vmatpush2.msra.mxu0 0.0
        %3250 = vmatprep.subr.mxu0 0.0
        %3251 = vmatpush2.msra.mxu0 0.0
        %3252 = vmatprep.subr.mxu0 0.0
        %3253 = vmatpush2.msra.mxu0 0.0
        %3254 = vmatprep.subr.mxu0 0.0
        %3255 = vmatpush2.msra.mxu0 0.0
        %3256 = vmatprep.subr.mxu0 0.0
        %3257 = vmatpush2.msra.mxu0 0.0
        %3258 = vmatprep.subr.mxu0 0.0
        %3259 = vmatpush2.msra.mxu0 0.0
        %3260 = vmatprep.subr.mxu0 0.0
        %3261 = vmatpush2.msra.mxu0 0.0
        %3262 = vmatprep.subr.mxu0 0.0
        %3263 = vmatpush2.msra.mxu0 0.0
        %3264 = vmatprep.subr.mxu0 0.0
        %3265 = vmatpush2.msra.mxu0 0.0
        %3266 = vmatprep.subr.mxu0 0.0
        %3267 = vmatpush2.msra.mxu0 0.0
        %3268 = vmatprep.subr.mxu0 0.0
        %3269 = vmatpush2.msra.mxu0 0.0
        %3270 = vmatprep.subr.mxu0 0.0
        %3271 = vmatpush2.msra.mxu0 0.0
        %3272 = vmatprep.subr.mxu0 0.0
        %3273 = vmatpush2.msra.mxu0 0.0
        %3274 = vmatprep.mubr.f32.mxu0 0.0
        %3275 = vmatmul.mubr.f32.gmra.mxu0 %v3208
        %v3276 = vpop.f32.mrf.mxu0
        %v3277 = vadd.f32 %v3205, %v3276
        %v3278 = vpop.f32.mrf.mxu0
        %3279 = vdwg.mxu0
        %v3280 = vmax.f32 %v3277, 0.0
        %v3282 = vlaneseq
        %v3283 = vshrl.u32 %v3282, 7
        %v3284 = vsub.s32 0, %v3283
        %v3285 = vrot.slane %v938, %v3284
        %vm3287 = vcmask 523264
        %v3289 = vsel %vm3287, %v3280, 0
        %3291 = vmatprep.subr.mxu0 0.0
        %3292 = vmatpush1.msra.mxu0 0.0
        %3293 = vmatprep.subr.mxu0 0.0
        %3294 = vmatpush1.msra.mxu0 0.0
        %3295 = vmatprep.subr.mxu0 0.0
        %3296 = vmatpush1.msra.mxu0 0.0
        %3297 = vmatprep.subr.mxu0 0.0
        %3298 = vmatpush1.msra.mxu0 0.0
        %3299 = vmatprep.subr.mxu0 0.0
        %3300 = vmatpush1.msra.mxu0 0.0
        %3301 = vmatprep.subr.mxu0 0.0
        %3302 = vmatpush1.msra.mxu0 0.0
        %3303 = vmatprep.subr.mxu0 0.0
        %3304 = vmatpush1.msra.mxu0 0.0
        %3305 = vmatprep.subr.mxu0 0.0
        %3306 = vmatpush1.msra.mxu0 0.0
        %3307 = vmatprep.subr.mxu0 0.0
        %3308 = vmatpush1.msra.mxu0 %v937
        %3309 = vmatprep.subr.mxu0 0.0
        %3310 = vmatpush1.msra.mxu0 %v936
        %3311 = vmatprep.subr.mxu0 0.0
        %3312 = vmatpush1.msra.mxu0 %v935
        %3313 = vmatprep.subr.mxu0 0.0
        %3314 = vmatpush1.msra.mxu0 %v934
        %3315 = vmatprep.subr.mxu0 0.0
        %3316 = vmatpush1.msra.mxu0 %v933
        %3317 = vmatprep.subr.mxu0 0.0
        %3318 = vmatpush1.msra.mxu0 %v932
        %3319 = vmatprep.subr.mxu0 0.0
        %3320 = vmatpush1.msra.mxu0 %v931
        %3321 = vmatprep.subr.mxu0 0.0
        %3322 = vmatpush1.msra.mxu0 %v930
        %3323 = vmatprep.subr.mxu0 0.0
        %3324 = vmatpush2.msra.mxu0 0.0
        %3325 = vmatprep.subr.mxu0 0.0
        %3326 = vmatpush2.msra.mxu0 0.0
        %3327 = vmatprep.subr.mxu0 0.0
        %3328 = vmatpush2.msra.mxu0 0.0
        %3329 = vmatprep.subr.mxu0 0.0
        %3330 = vmatpush2.msra.mxu0 0.0
        %3331 = vmatprep.subr.mxu0 0.0
        %3332 = vmatpush2.msra.mxu0 0.0
        %3333 = vmatprep.subr.mxu0 0.0
        %3334 = vmatpush2.msra.mxu0 0.0
        %3335 = vmatprep.subr.mxu0 0.0
        %3336 = vmatpush2.msra.mxu0 0.0
        %3337 = vmatprep.subr.mxu0 0.0
        %3338 = vmatpush2.msra.mxu0 0.0
        %3339 = vmatprep.subr.mxu0 0.0
        %3340 = vmatpush2.msra.mxu0 0.0
        %3341 = vmatprep.subr.mxu0 0.0
        %3342 = vmatpush2.msra.mxu0 0.0
        %3343 = vmatprep.subr.mxu0 0.0
        %3344 = vmatpush2.msra.mxu0 0.0
        %3345 = vmatprep.subr.mxu0 0.0
        %3346 = vmatpush2.msra.mxu0 0.0
        %3347 = vmatprep.subr.mxu0 0.0
        %3348 = vmatpush2.msra.mxu0 0.0
        %3349 = vmatprep.subr.mxu0 0.0
        %3350 = vmatpush2.msra.mxu0 0.0
        %3351 = vmatprep.subr.mxu0 0.0
        %3352 = vmatpush2.msra.mxu0 0.0
        %3353 = vmatprep.subr.mxu0 0.0
        %3354 = vmatpush2.msra.mxu0 0.0
        %3355 = vmatprep.mubr.f32.mxu0 0.0
        %3356 = vmatmul.mubr.f32.gmra.mxu0 %v3289
        %v3357 = vpop.f32.mrf.mxu0
        %v3358 = vadd.f32 %v3285, %v3357
        %v3359 = vpop.f32.mrf.mxu0
        %3360 = vdwg.mxu0
        %v3361 = vadd.f32 %v3200, %v3358
        %v3362 = vsel %vm956, %v3361, 0.0
        %3363 = vadd.xlane.f32.xlu0 %v3362
        %v3364 = vpop.xlane.xlu0 %3363
        %v3365 = vmul.f32 %v3364, %v2082
        %v3366 = vsub.f32 %v3361, %v3365
        %v3367 = vmul.f32 %v3366, %v3366
        %v3368 = vsel %vm956, %v3367, 0.0
        %3369 = vadd.xlane.f32.xlu0 %v3368
        %v3370 = vpop.xlane.xlu0 %3369
        %v3371 = vmul.f32 %v3370, %v2082
        %v3372 = vadd.f32 %v3371, 1e-05
        %v3373 = vrsqrt.pop %v3372
        %v3374 = vmul.f32 %v3366, %v3373
        %v3376 = vlaneseq
        %v3377 = vshrl.u32 %v3376, 7
        %v3378 = vsub.s32 0, %v3377
        %v3379 = vrot.slane %v943, %v3378
        %v3381 = vmul.f32 %v3374, %v3379
        %v3383 = vlaneseq
        %v3384 = vshrl.u32 %v3383, 7
        %v3385 = vsub.s32 0, %v3384
        %v3386 = vrot.slane %v944, %v3385
        %v3388 = vadd.f32 %v3381, %v3386
        %v3390 = vsel %vm956, %v3388, 0
        %3392 = vmatprep.subr.mxu0 0.0
        %3393 = vmatpush1.msra.mxu0 0.0
        %3394 = vmatprep.subr.mxu0 0.0
        %3395 = vmatpush1.msra.mxu0 0.0
        %3396 = vmatprep.subr.mxu0 0.0
        %3397 = vmatpush1.msra.mxu0 0.0
        %3398 = vmatprep.subr.mxu0 0.0
        %3399 = vmatpush1.msra.mxu0 0.0
        %3400 = vmatprep.subr.mxu0 0.0
        %3401 = vmatpush1.msra.mxu0 0.0
        %3402 = vmatprep.subr.mxu0 0.0
        %3403 = vmatpush1.msra.mxu0 0.0
        %3404 = vmatprep.subr.mxu0 0.0
        %3405 = vmatpush1.msra.mxu0 0.0
        %3406 = vmatprep.subr.mxu0 0.0
        %3407 = vmatpush1.msra.mxu0 0.0
        %3408 = vmatprep.subr.mxu0 0.0
        %3409 = vmatpush1.msra.mxu0 0.0
        %3410 = vmatprep.subr.mxu0 0.0
        %3411 = vmatpush1.msra.mxu0 0.0
        %3412 = vmatprep.subr.mxu0 0.0
        %3413 = vmatpush1.msra.mxu0 0.0
        %3414 = vmatprep.subr.mxu0 0.0
        %3415 = vmatpush1.msra.mxu0 0.0
        %3416 = vmatprep.subr.mxu0 0.0
        %3417 = vmatpush1.msra.mxu0 %v908
        %3418 = vmatprep.subr.mxu0 0.0
        %3419 = vmatpush1.msra.mxu0 %v907
        %3420 = vmatprep.subr.mxu0 0.0
        %3421 = vmatpush1.msra.mxu0 %v906
        %3422 = vmatprep.subr.mxu0 0.0
        %3423 = vmatpush1.msra.mxu0 %v905
        %3424 = vmatprep.subr.mxu0 0.0
        %3425 = vmatpush2.msra.mxu0 0.0
        %3426 = vmatprep.subr.mxu0 0.0
        %3427 = vmatpush2.msra.mxu0 0.0
        %3428 = vmatprep.subr.mxu0 0.0
        %3429 = vmatpush2.msra.mxu0 0.0
        %3430 = vmatprep.subr.mxu0 0.0
        %3431 = vmatpush2.msra.mxu0 0.0
        %3432 = vmatprep.subr.mxu0 0.0
        %3433 = vmatpush2.msra.mxu0 0.0
        %3434 = vmatprep.subr.mxu0 0.0
        %3435 = vmatpush2.msra.mxu0 0.0
        %3436 = vmatprep.subr.mxu0 0.0
        %3437 = vmatpush2.msra.mxu0 0.0
        %3438 = vmatprep.subr.mxu0 0.0
        %3439 = vmatpush2.msra.mxu0 0.0
        %3440 = vmatprep.subr.mxu0 0.0
        %3441 = vmatpush2.msra.mxu0 0.0
        %3442 = vmatprep.subr.mxu0 0.0
        %3443 = vmatpush2.msra.mxu0 0.0
        %3444 = vmatprep.subr.mxu0 0.0
        %3445 = vmatpush2.msra.mxu0 0.0
        %3446 = vmatprep.subr.mxu0 0.0
        %3447 = vmatpush2.msra.mxu0 0.0
        %3448 = vmatprep.subr.mxu0 0.0
        %3449 = vmatpush2.msra.mxu0 0.0
        %3450 = vmatprep.subr.mxu0 0.0
        %3451 = vmatpush2.msra.mxu0 0.0
        %3452 = vmatprep.subr.mxu0 0.0
        %3453 = vmatpush2.msra.mxu0 0.0
        %3454 = vmatprep.subr.mxu0 0.0
        %3455 = vmatpush2.msra.mxu0 0.0
        %3456 = vmatprep.mubr.f32.mxu0 0.0
        %3457 = vmatmul.mubr.f32.gmra.mxu0 %v3390
        %v3458 = vpop.f32.mrf.mxu0
        %v3459 = vadd.f32 %v1042, %v3458
        %v3460 = vpop.f32.mrf.mxu0
        %3461 = vdwg.mxu0
        %3463 = vrot.lane.b32.xlu0 %v3459, 96
        %v3464 = vpop.permute.xlu0 %3463
        %v3465 = vsel %vm1120, %v3459, 0
        %v3467 = vsel %vm1120, %v3464, 0
        %3469 = vmatprep.subr.mxu0 0.0
        %3470 = vmatpush1.xpose.msra.mxu0 0.0
        %3471 = vmatprep.subr.mxu0 0.0
        %3472 = vmatpush1.xpose.msra.mxu0 0.0
        %3473 = vmatprep.subr.mxu0 0.0
        %3474 = vmatpush1.xpose.msra.mxu0 0.0
        %3475 = vmatprep.subr.mxu0 0.0
        %3476 = vmatpush1.xpose.msra.mxu0 0.0
        %3477 = vmatprep.subr.mxu0 0.0
        %3478 = vmatpush1.xpose.msra.mxu0 0.0
        %3479 = vmatprep.subr.mxu0 0.0
        %3480 = vmatpush1.xpose.msra.mxu0 0.0
        %3481 = vmatprep.subr.mxu0 0.0
        %3482 = vmatpush1.xpose.msra.mxu0 0.0
        %3483 = vmatprep.subr.mxu0 0.0
        %3484 = vmatpush1.xpose.msra.mxu0 0.0
        %3485 = vmatprep.subr.mxu0 0.0
        %3486 = vmatpush1.xpose.msra.mxu0 0.0
        %3487 = vmatprep.subr.mxu0 0.0
        %3488 = vmatpush1.xpose.msra.mxu0 0.0
        %3489 = vmatprep.subr.mxu0 0.0
        %3490 = vmatpush1.xpose.msra.mxu0 0.0
        %3491 = vmatprep.subr.mxu0 0.0
        %3492 = vmatpush1.xpose.msra.mxu0 0.0
        %3493 = vmatprep.subr.mxu0 0.0
        %3494 = vmatpush1.xpose.msra.mxu0 0.0
        %3495 = vmatprep.subr.mxu0 0.0
        %3496 = vmatpush1.xpose.msra.mxu0 0.0
        %3497 = vmatprep.subr.mxu0 0.0
        %3498 = vmatpush1.xpose.msra.mxu0 0.0
        %3499 = vmatprep.subr.mxu0 0.0
        %3500 = vmatpush1.xpose.msra.mxu0 %v3467
        %3501 = vmatprep.subr.mxu0 0.0
        %3502 = vmatpush2.xpose.msra.mxu0 0.0
        %3503 = vmatprep.subr.mxu0 0.0
        %3504 = vmatpush2.xpose.msra.mxu0 0.0
        %3505 = vmatprep.subr.mxu0 0.0
        %3506 = vmatpush2.xpose.msra.mxu0 0.0
        %3507 = vmatprep.subr.mxu0 0.0
        %3508 = vmatpush2.xpose.msra.mxu0 0.0
        %3509 = vmatprep.subr.mxu0 0.0
        %3510 = vmatpush2.xpose.msra.mxu0 0.0
        %3511 = vmatprep.subr.mxu0 0.0
        %3512 = vmatpush2.xpose.msra.mxu0 0.0
        %3513 = vmatprep.subr.mxu0 0.0
        %3514 = vmatpush2.xpose.msra.mxu0 0.0
        %3515 = vmatprep.subr.mxu0 0.0
        %3516 = vmatpush2.xpose.msra.mxu0 0.0
        %3517 = vmatprep.subr.mxu0 0.0
        %3518 = vmatpush2.xpose.msra.mxu0 0.0
        %3519 = vmatprep.subr.mxu0 0.0
        %3520 = vmatpush2.xpose.msra.mxu0 0.0
        %3521 = vmatprep.subr.mxu0 0.0
        %3522 = vmatpush2.xpose.msra.mxu0 0.0
        %3523 = vmatprep.subr.mxu0 0.0
        %3524 = vmatpush2.xpose.msra.mxu0 0.0
        %3525 = vmatprep.subr.mxu0 0.0
        %3526 = vmatpush2.xpose.msra.mxu0 0.0
        %3527 = vmatprep.subr.mxu0 0.0
        %3528 = vmatpush2.xpose.msra.mxu0 0.0
        %3529 = vmatprep.subr.mxu0 0.0
        %3530 = vmatpush2.xpose.msra.mxu0 0.0
        %3531 = vmatprep.subr.mxu0 0.0
        %3532 = vmatpush2.xpose.msra.mxu0 0.0
        %3533 = vmatprep.mubr.f32.mxu0 0.0
        %3534 = vmatmul.mubr.f32.gmra.mxu0 %v3465
        %v3535 = vpop.f32.mrf.mxu0
        %v3536 = vadd.f32 0.0, %v3535
        %v3537 = vpop.f32.mrf.mxu0
        %3538 = vdwg.mxu0
        %v3539 = vsel %vm1120, %v3536, -inf
        %3540 = vmax.xlane.f32.xlu0 %v3539
        %v3541 = vpop.xlane.xlu0 %3540
        %v3542 = vsub.f32 %v3536, %v3541
        %v3543 = vmul.f32 %v3542, 1.442695
        %v3544 = vpow.pop %v3543
        %v3545 = vsel %vm1120, %v3544, 0.0
        %3546 = vadd.xlane.f32.xlu0 %v3545
        %v3547 = vpop.xlane.xlu0 %3546
        %v3548 = vrcp.pop %v3547
        %v3549 = vmul.f32 %v3544, %v3548
        %3550 = vrot.lane.b32.xlu0 %v3459, 64
        %v3551 = vpop.permute.xlu0 %3550
        %v3554 = vsel %vm1120, %v3549, 0
        %3556 = vmatprep.subr.mxu0 0.0
        %3557 = vmatpush1.msra.mxu0 0.0
        %3558 = vmatprep.subr.mxu0 0.0
        %3559 = vmatpush1.msra.mxu0 0.0
        %3560 = vmatprep.subr.mxu0 0.0
        %3561 = vmatpush1.msra.mxu0 0.0
        %3562 = vmatprep.subr.mxu0 0.0
        %3563 = vmatpush1.msra.mxu0 0.0
        %3564 = vmatprep.subr.mxu0 0.0
        %3565 = vmatpush1.msra.mxu0 0.0
        %3566 = vmatprep.subr.mxu0 0.0
        %3567 = vmatpush1.msra.mxu0 0.0
        %3568 = vmatprep.subr.mxu0 0.0
        %3569 = vmatpush1.msra.mxu0 0.0
        %3570 = vmatprep.subr.mxu0 0.0
        %3571 = vmatpush1.msra.mxu0 0.0
        %3572 = vmatprep.subr.mxu0 0.0
        %3573 = vmatpush1.msra.mxu0 0.0
        %3574 = vmatprep.subr.mxu0 0.0
        %3575 = vmatpush1.msra.mxu0 0.0
        %3576 = vmatprep.subr.mxu0 0.0
        %3577 = vmatpush1.msra.mxu0 0.0
        %3578 = vmatprep.subr.mxu0 0.0
        %3579 = vmatpush1.msra.mxu0 0.0
        %3580 = vmatprep.subr.mxu0 0.0
        %3581 = vmatpush1.msra.mxu0 0.0
        %3582 = vmatprep.subr.mxu0 0.0
        %3583 = vmatpush1.msra.mxu0 0.0
        %3584 = vmatprep.subr.mxu0 0.0
        %3585 = vmatpush1.msra.mxu0 0.0
        %3586 = vmatprep.subr.mxu0 0.0
        %3587 = vmatpush1.msra.mxu0 %v3551
        %3588 = vmatprep.subr.mxu0 0.0
        %3589 = vmatpush2.msra.mxu0 0.0
        %3590 = vmatprep.subr.mxu0 0.0
        %3591 = vmatpush2.msra.mxu0 0.0
        %3592 = vmatprep.subr.mxu0 0.0
        %3593 = vmatpush2.msra.mxu0 0.0
        %3594 = vmatprep.subr.mxu0 0.0
        %3595 = vmatpush2.msra.mxu0 0.0
        %3596 = vmatprep.subr.mxu0 0.0
        %3597 = vmatpush2.msra.mxu0 0.0
        %3598 = vmatprep.subr.mxu0 0.0
        %3599 = vmatpush2.msra.mxu0 0.0
        %3600 = vmatprep.subr.mxu0 0.0
        %3601 = vmatpush2.msra.mxu0 0.0
        %3602 = vmatprep.subr.mxu0 0.0
        %3603 = vmatpush2.msra.mxu0 0.0
        %3604 = vmatprep.subr.mxu0 0.0
        %3605 = vmatpush2.msra.mxu0 0.0
        %3606 = vmatprep.subr.mxu0 0.0
        %3607 = vmatpush2.msra.mxu0 0.0
        %3608 = vmatprep.subr.mxu0 0.0
        %3609 = vmatpush2.msra.mxu0 0.0
        %3610 = vmatprep.subr.mxu0 0.0
        %3611 = vmatpush2.msra.mxu0 0.0
        %3612 = vmatprep.subr.mxu0 0.0
        %3613 = vmatpush2.msra.mxu0 0.0
        %3614 = vmatprep.subr.mxu0 0.0
        %3615 = vmatpush2.msra.mxu0 0.0
        %3616 = vmatprep.subr.mxu0 0.0
        %3617 = vmatpush2.msra.mxu0 0.0
        %3618 = vmatprep.subr.mxu0 0.0
        %3619 = vmatpush2.msra.mxu0 0.0
        %3620 = vmatprep.mubr.f32.mxu0 0.0
        %3621 = vmatmul.mubr.f32.gmra.mxu0 %v3554
        %v3622 = vpop.f32.mrf.mxu0
        %v3623 = vadd.f32 0.0, %v3622
        %v3624 = vpop.f32.mrf.mxu0
        %3625 = vdwg.mxu0
        %3626 = vrot.lane.b32.xlu0 %v3459, 120
        %v3627 = vpop.permute.xlu0 %3626
        %3628 = vrot.lane.b32.xlu0 %v3459, 88
        %v3629 = vpop.permute.xlu0 %3628
        %v3630 = vsel %vm1120, %v3627, 0
        %v3632 = vsel %vm1120, %v3629, 0
        %3634 = vmatprep.subr.mxu0 0.0
        %3635 = vmatpush1.xpose.msra.mxu0 0.0
        %3636 = vmatprep.subr.mxu0 0.0
        %3637 = vmatpush1.xpose.msra.mxu0 0.0
        %3638 = vmatprep.subr.mxu0 0.0
        %3639 = vmatpush1.xpose.msra.mxu0 0.0
        %3640 = vmatprep.subr.mxu0 0.0
        %3641 = vmatpush1.xpose.msra.mxu0 0.0
        %3642 = vmatprep.subr.mxu0 0.0
        %3643 = vmatpush1.xpose.msra.mxu0 0.0
        %3644 = vmatprep.subr.mxu0 0.0
        %3645 = vmatpush1.xpose.msra.mxu0 0.0
        %3646 = vmatprep.subr.mxu0 0.0
        %3647 = vmatpush1.xpose.msra.mxu0 0.0
        %3648 = vmatprep.subr.mxu0 0.0
        %3649 = vmatpush1.xpose.msra.mxu0 0.0
        %3650 = vmatprep.subr.mxu0 0.0
        %3651 = vmatpush1.xpose.msra.mxu0 0.0
        %3652 = vmatprep.subr.mxu0 0.0
        %3653 = vmatpush1.xpose.msra.mxu0 0.0
        %3654 = vmatprep.subr.mxu0 0.0
        %3655 = vmatpush1.xpose.msra.mxu0 0.0
        %3656 = vmatprep.subr.mxu0 0.0
        %3657 = vmatpush1.xpose.msra.mxu0 0.0
        %3658 = vmatprep.subr.mxu0 0.0
        %3659 = vmatpush1.xpose.msra.mxu0 0.0
        %3660 = vmatprep.subr.mxu0 0.0
        %3661 = vmatpush1.xpose.msra.mxu0 0.0
        %3662 = vmatprep.subr.mxu0 0.0
        %3663 = vmatpush1.xpose.msra.mxu0 0.0
        %3664 = vmatprep.subr.mxu0 0.0
        %3665 = vmatpush1.xpose.msra.mxu0 %v3632
        %3666 = vmatprep.subr.mxu0 0.0
        %3667 = vmatpush2.xpose.msra.mxu0 0.0
        %3668 = vmatprep.subr.mxu0 0.0
        %3669 = vmatpush2.xpose.msra.mxu0 0.0
        %3670 = vmatprep.subr.mxu0 0.0
        %3671 = vmatpush2.xpose.msra.mxu0 0.0
        %3672 = vmatprep.subr.mxu0 0.0
        %3673 = vmatpush2.xpose.msra.mxu0 0.0
        %3674 = vmatprep.subr.mxu0 0.0
        %3675 = vmatpush2.xpose.msra.mxu0 0.0
        %3676 = vmatprep.subr.mxu0 0.0
        %3677 = vmatpush2.xpose.msra.mxu0 0.0
        %3678 = vmatprep.subr.mxu0 0.0
        %3679 = vmatpush2.xpose.msra.mxu0 0.0
        %3680 = vmatprep.subr.mxu0 0.0
        %3681 = vmatpush2.xpose.msra.mxu0 0.0
        %3682 = vmatprep.subr.mxu0 0.0
        %3683 = vmatpush2.xpose.msra.mxu0 0.0
        %3684 = vmatprep.subr.mxu0 0.0
        %3685 = vmatpush2.xpose.msra.mxu0 0.0
        %3686 = vmatprep.subr.mxu0 0.0
        %3687 = vmatpush2.xpose.msra.mxu0 0.0
        %3688 = vmatprep.subr.mxu0 0.0
        %3689 = vmatpush2.xpose.msra.mxu0 0.0
        %3690 = vmatprep.subr.mxu0 0.0
        %3691 = vmatpush2.xpose.msra.mxu0 0.0
        %3692 = vmatprep.subr.mxu0 0.0
        %3693 = vmatpush2.xpose.msra.mxu0 0.0
        %3694 = vmatprep.subr.mxu0 0.0
        %3695 = vmatpush2.xpose.msra.mxu0 0.0
        %3696 = vmatprep.subr.mxu0 0.0
        %3697 = vmatpush2.xpose.msra.mxu0 0.0
        %3698 = vmatprep.mubr.f32.mxu0 0.0
        %3699 = vmatmul.mubr.f32.gmra.mxu0 %v3630
        %v3700 = vpop.f32.mrf.mxu0
        %v3701 = vadd.f32 0.0, %v3700
        %v3702 = vpop.f32.mrf.mxu0
        %3703 = vdwg.mxu0
        %v3704 = vsel %vm1120, %v3701, -inf
        %3705 = vmax.xlane.f32.xlu0 %v3704
        %v3706 = vpop.xlane.xlu0 %3705
        %v3707 = vsub.f32 %v3701, %v3706
        %v3708 = vmul.f32 %v3707, 1.442695
        %v3709 = vpow.pop %v3708
        %v3710 = vsel %vm1120, %v3709, 0.0
        %3711 = vadd.xlane.f32.xlu0 %v3710
        %v3712 = vpop.xlane.xlu0 %3711
        %v3713 = vrcp.pop %v3712
        %v3714 = vmul.f32 %v3709, %v3713
        %3715 = vrot.lane.b32.xlu0 %v3459, 56
        %v3716 = vpop.permute.xlu0 %3715
        %v3719 = vsel %vm1120, %v3714, 0
        %3721 = vmatprep.subr.mxu0 0.0
        %3722 = vmatpush1.msra.mxu0 0.0
        %3723 = vmatprep.subr.mxu0 0.0
        %3724 = vmatpush1.msra.mxu0 0.0
        %3725 = vmatprep.subr.mxu0 0.0
        %3726 = vmatpush1.msra.mxu0 0.0
        %3727 = vmatprep.subr.mxu0 0.0
        %3728 = vmatpush1.msra.mxu0 0.0
        %3729 = vmatprep.subr.mxu0 0.0
        %3730 = vmatpush1.msra.mxu0 0.0
        %3731 = vmatprep.subr.mxu0 0.0
        %3732 = vmatpush1.msra.mxu0 0.0
        %3733 = vmatprep.subr.mxu0 0.0
        %3734 = vmatpush1.msra.mxu0 0.0
        %3735 = vmatprep.subr.mxu0 0.0
        %3736 = vmatpush1.msra.mxu0 0.0
        %3737 = vmatprep.subr.mxu0 0.0
        %3738 = vmatpush1.msra.mxu0 0.0
        %3739 = vmatprep.subr.mxu0 0.0
        %3740 = vmatpush1.msra.mxu0 0.0
        %3741 = vmatprep.subr.mxu0 0.0
        %3742 = vmatpush1.msra.mxu0 0.0
        %3743 = vmatprep.subr.mxu0 0.0
        %3744 = vmatpush1.msra.mxu0 0.0
        %3745 = vmatprep.subr.mxu0 0.0
        %3746 = vmatpush1.msra.mxu0 0.0
        %3747 = vmatprep.subr.mxu0 0.0
        %3748 = vmatpush1.msra.mxu0 0.0
        %3749 = vmatprep.subr.mxu0 0.0
        %3750 = vmatpush1.msra.mxu0 0.0
        %3751 = vmatprep.subr.mxu0 0.0
        %3752 = vmatpush1.msra.mxu0 %v3716
        %3753 = vmatprep.subr.mxu0 0.0
        %3754 = vmatpush2.msra.mxu0 0.0
        %3755 = vmatprep.subr.mxu0 0.0
        %3756 = vmatpush2.msra.mxu0 0.0
        %3757 = vmatprep.subr.mxu0 0.0
        %3758 = vmatpush2.msra.mxu0 0.0
        %3759 = vmatprep.subr.mxu0 0.0
        %3760 = vmatpush2.msra.mxu0 0.0
        %3761 = vmatprep.subr.mxu0 0.0
        %3762 = vmatpush2.msra.mxu0 0.0
        %3763 = vmatprep.subr.mxu0 0.0
        %3764 = vmatpush2.msra.mxu0 0.0
        %3765 = vmatprep.subr.mxu0 0.0
        %3766 = vmatpush2.msra.mxu0 0.0
        %3767 = vmatprep.subr.mxu0 0.0
        %3768 = vmatpush2.msra.mxu0 0.0
        %3769 = vmatprep.subr.mxu0 0.0
        %3770 = vmatpush2.msra.mxu0 0.0
        %3771 = vmatprep.subr.mxu0 0.0
        %3772 = vmatpush2.msra.mxu0 0.0
        %3773 = vmatprep.subr.mxu0 0.0
        %3774 = vmatpush2.msra.mxu0 0.0
        %3775 = vmatprep.subr.mxu0 0.0
        %3776 = vmatpush2.msra.mxu0 0.0
        %3777 = vmatprep.subr.mxu0 0.0
        %3778 = vmatpush2.msra.mxu0 0.0
        %3779 = vmatprep.subr.mxu0 0.0
        %3780 = vmatpush2.msra.mxu0 0.0
        %3781 = vmatprep.subr.mxu0 0.0
        %3782 = vmatpush2.msra.mxu0 0.0
        %3783 = vmatprep.subr.mxu0 0.0
        %3784 = vmatpush2.msra.mxu0 0.0
        %3785 = vmatprep.mubr.f32.mxu0 0.0
        %3786 = vmatmul.mubr.f32.gmra.mxu0 %v3719
        %v3787 = vpop.f32.mrf.mxu0
        %v3788 = vadd.f32 0.0, %v3787
        %v3789 = vpop.f32.mrf.mxu0
        %3790 = vdwg.mxu0
        %v3792 = vsel %vm1120, %v3788, 0
        %3794 = vmatprep.subr.mxu0 0.0
        %3795 = vmatpush1.msra.mxu0 0.0
        %3796 = vmatprep.subr.mxu0 0.0
        %3797 = vmatpush1.msra.mxu0 0.0
        %3798 = vmatprep.subr.mxu0 0.0
        %3799 = vmatpush1.msra.mxu0 0.0
        %3800 = vmatprep.subr.mxu0 0.0
        %3801 = vmatpush1.msra.mxu0 0.0
        %3802 = vmatprep.subr.mxu0 0.0
        %3803 = vmatpush1.msra.mxu0 0.0
        %3804 = vmatprep.subr.mxu0 0.0
        %3805 = vmatpush1.msra.mxu0 0.0
        %3806 = vmatprep.subr.mxu0 0.0
        %3807 = vmatpush1.msra.mxu0 0.0
        %3808 = vmatprep.subr.mxu0 0.0
        %3809 = vmatpush1.msra.mxu0 0.0
        %3810 = vmatprep.subr.mxu0 0.0
        %3811 = vmatpush1.msra.mxu0 0.0
        %3812 = vmatprep.subr.mxu0 0.0
        %3813 = vmatpush1.msra.mxu0 0.0
        %3814 = vmatprep.subr.mxu0 0.0
        %3815 = vmatpush1.msra.mxu0 0.0
        %3816 = vmatprep.subr.mxu0 0.0
        %3817 = vmatpush1.msra.mxu0 0.0
        %3818 = vmatprep.subr.mxu0 0.0
        %3819 = vmatpush1.msra.mxu0 0.0
        %3820 = vmatprep.subr.mxu0 0.0
        %3821 = vmatpush1.msra.mxu0 0.0
        %3822 = vmatprep.subr.mxu0 0.0
        %3823 = vmatpush1.msra.mxu0 0.0
        %3824 = vmatprep.subr.mxu0 0.0
        %3825 = vmatpush1.msra.mxu0 %v911
        %3826 = vmatprep.subr.mxu0 0.0
        %3827 = vmatpush2.msra.mxu0 0.0
        %3828 = vmatprep.subr.mxu0 0.0
        %3829 = vmatpush2.msra.mxu0 0.0
        %3830 = vmatprep.subr.mxu0 0.0
        %3831 = vmatpush2.msra.mxu0 0.0
        %3832 = vmatprep.subr.mxu0 0.0
        %3833 = vmatpush2.msra.mxu0 0.0
        %3834 = vmatprep.subr.mxu0 0.0
        %3835 = vmatpush2.msra.mxu0 0.0
        %3836 = vmatprep.subr.mxu0 0.0
        %3837 = vmatpush2.msra.mxu0 0.0
        %3838 = vmatprep.subr.mxu0 0.0
        %3839 = vmatpush2.msra.mxu0 0.0
        %3840 = vmatprep.subr.mxu0 0.0
        %3841 = vmatpush2.msra.mxu0 0.0
        %3842 = vmatprep.subr.mxu0 0.0
        %3843 = vmatpush2.msra.mxu0 0.0
        %3844 = vmatprep.subr.mxu0 0.0
        %3845 = vmatpush2.msra.mxu0 0.0
        %3846 = vmatprep.subr.mxu0 0.0
        %3847 = vmatpush2.msra.mxu0 0.0
        %3848 = vmatprep.subr.mxu0 0.0
        %3849 = vmatpush2.msra.mxu0 0.0
        %3850 = vmatprep.subr.mxu0 0.0
        %3851 = vmatpush2.msra.mxu0 0.0
        %3852 = vmatprep.subr.mxu0 0.0
        %3853 = vmatpush2.msra.mxu0 0.0
        %3854 = vmatprep.subr.mxu0 0.0
        %3855 = vmatpush2.msra.mxu0 0.0
        %3856 = vmatprep.subr.mxu0 0.0
        %3857 = vmatpush2.msra.mxu0 0.0
        %3858 = vmatprep.mubr.f32.mxu0 0.0
        %3859 = vmatmul.mubr.f32.gmra.mxu0 %v3792
        %v3860 = vpop.f32.mrf.mxu0
        %v3861 = vadd.f32 0.0, %v3860
        %v3862 = vpop.f32.mrf.mxu0
        %3863 = vdwg.mxu0
        %v3865 = vsel %vm1120, %v3623, 0
        %3867 = vmatprep.subr.mxu0 0.0
        %3868 = vmatpush1.msra.mxu0 0.0
        %3869 = vmatprep.subr.mxu0 0.0
        %3870 = vmatpush1.msra.mxu0 0.0
        %3871 = vmatprep.subr.mxu0 0.0
        %3872 = vmatpush1.msra.mxu0 0.0
        %3873 = vmatprep.subr.mxu0 0.0
        %3874 = vmatpush1.msra.mxu0 0.0
        %3875 = vmatprep.subr.mxu0 0.0
        %3876 = vmatpush1.msra.mxu0 0.0
        %3877 = vmatprep.subr.mxu0 0.0
        %3878 = vmatpush1.msra.mxu0 0.0
        %3879 = vmatprep.subr.mxu0 0.0
        %3880 = vmatpush1.msra.mxu0 0.0
        %3881 = vmatprep.subr.mxu0 0.0
        %3882 = vmatpush1.msra.mxu0 0.0
        %3883 = vmatprep.subr.mxu0 0.0
        %3884 = vmatpush1.msra.mxu0 0.0
        %3885 = vmatprep.subr.mxu0 0.0
        %3886 = vmatpush1.msra.mxu0 0.0
        %3887 = vmatprep.subr.mxu0 0.0
        %3888 = vmatpush1.msra.mxu0 0.0
        %3889 = vmatprep.subr.mxu0 0.0
        %3890 = vmatpush1.msra.mxu0 0.0
        %3891 = vmatprep.subr.mxu0 0.0
        %3892 = vmatpush1.msra.mxu0 0.0
        %3893 = vmatprep.subr.mxu0 0.0
        %3894 = vmatpush1.msra.mxu0 0.0
        %3895 = vmatprep.subr.mxu0 0.0
        %3896 = vmatpush1.msra.mxu0 0.0
        %3897 = vmatprep.subr.mxu0 0.0
        %3898 = vmatpush1.msra.mxu0 %v910
        %3899 = vmatprep.subr.mxu0 0.0
        %3900 = vmatpush2.msra.mxu0 0.0
        %3901 = vmatprep.subr.mxu0 0.0
        %3902 = vmatpush2.msra.mxu0 0.0
        %3903 = vmatprep.subr.mxu0 0.0
        %3904 = vmatpush2.msra.mxu0 0.0
        %3905 = vmatprep.subr.mxu0 0.0
        %3906 = vmatpush2.msra.mxu0 0.0
        %3907 = vmatprep.subr.mxu0 0.0
        %3908 = vmatpush2.msra.mxu0 0.0
        %3909 = vmatprep.subr.mxu0 0.0
        %3910 = vmatpush2.msra.mxu0 0.0
        %3911 = vmatprep.subr.mxu0 0.0
        %3912 = vmatpush2.msra.mxu0 0.0
        %3913 = vmatprep.subr.mxu0 0.0
        %3914 = vmatpush2.msra.mxu0 0.0
        %3915 = vmatprep.subr.mxu0 0.0
        %3916 = vmatpush2.msra.mxu0 0.0
        %3917 = vmatprep.subr.mxu0 0.0
        %3918 = vmatpush2.msra.mxu0 0.0
        %3919 = vmatprep.subr.mxu0 0.0
        %3920 = vmatpush2.msra.mxu0 0.0
        %3921 = vmatprep.subr.mxu0 0.0
        %3922 = vmatpush2.msra.mxu0 0.0
        %3923 = vmatprep.subr.mxu0 0.0
        %3924 = vmatpush2.msra.mxu0 0.0
        %3925 = vmatprep.subr.mxu0 0.0
        %3926 = vmatpush2.msra.mxu0 0.0
        %3927 = vmatprep.subr.mxu0 0.0
        %3928 = vmatpush2.msra.mxu0 0.0
        %3929 = vmatprep.subr.mxu0 0.0
        %3930 = vmatpush2.msra.mxu0 0.0
        %3931 = vmatprep.mubr.f32.mxu0 0.0
        %3932 = vmatmul.mubr.f32.gmra.mxu0 %v3865
        %v3933 = vpop.f32.mrf.mxu0
        %v3934 = vadd.f32 %v3861, %v3933
        %v3935 = vpop.f32.mrf.mxu0
        %3936 = vdwg.mxu0
        %3937 = vrot.lane.b32.xlu0 %v3459, 112
        %v3938 = vpop.permute.xlu0 %3937
        %3939 = vrot.lane.b32.xlu0 %v3459, 80
        %v3940 = vpop.permute.xlu0 %3939
        %v3941 = vsel %vm1120, %v3938, 0
        %v3943 = vsel %vm1120, %v3940, 0
        %3945 = vmatprep.subr.mxu0 0.0
        %3946 = vmatpush1.xpose.msra.mxu0 0.0
        %3947 = vmatprep.subr.mxu0 0.0
        %3948 = vmatpush1.xpose.msra.mxu0 0.0
        %3949 = vmatprep.subr.mxu0 0.0
        %3950 = vmatpush1.xpose.msra.mxu0 0.0
        %3951 = vmatprep.subr.mxu0 0.0
        %3952 = vmatpush1.xpose.msra.mxu0 0.0
        %3953 = vmatprep.subr.mxu0 0.0
        %3954 = vmatpush1.xpose.msra.mxu0 0.0
        %3955 = vmatprep.subr.mxu0 0.0
        %3956 = vmatpush1.xpose.msra.mxu0 0.0
        %3957 = vmatprep.subr.mxu0 0.0
        %3958 = vmatpush1.xpose.msra.mxu0 0.0
        %3959 = vmatprep.subr.mxu0 0.0
        %3960 = vmatpush1.xpose.msra.mxu0 0.0
        %3961 = vmatprep.subr.mxu0 0.0
        %3962 = vmatpush1.xpose.msra.mxu0 0.0
        %3963 = vmatprep.subr.mxu0 0.0
        %3964 = vmatpush1.xpose.msra.mxu0 0.0
        %3965 = vmatprep.subr.mxu0 0.0
        %3966 = vmatpush1.xpose.msra.mxu0 0.0
        %3967 = vmatprep.subr.mxu0 0.0
        %3968 = vmatpush1.xpose.msra.mxu0 0.0
        %3969 = vmatprep.subr.mxu0 0.0
        %3970 = vmatpush1.xpose.msra.mxu0 0.0
        %3971 = vmatprep.subr.mxu0 0.0
        %3972 = vmatpush1.xpose.msra.mxu0 0.0
        %3973 = vmatprep.subr.mxu0 0.0
        %3974 = vmatpush1.xpose.msra.mxu0 0.0
        %3975 = vmatprep.subr.mxu0 0.0
        %3976 = vmatpush1.xpose.msra.mxu0 %v3943
        %3977 = vmatprep.subr.mxu0 0.0
        %3978 = vmatpush2.xpose.msra.mxu0 0.0
        %3979 = vmatprep.subr.mxu0 0.0
        %3980 = vmatpush2.xpose.msra.mxu0 0.0
        %3981 = vmatprep.subr.mxu0 0.0
        %3982 = vmatpush2.xpose.msra.mxu0 0.0
        %3983 = vmatprep.subr.mxu0 0.0
        %3984 = vmatpush2.xpose.msra.mxu0 0.0
        %3985 = vmatprep.subr.mxu0 0.0
        %3986 = vmatpush2.xpose.msra.mxu0 0.0
        %3987 = vmatprep.subr.mxu0 0.0
        %3988 = vmatpush2.xpose.msra.mxu0 0.0
        %3989 = vmatprep.subr.mxu0 0.0
        %3990 = vmatpush2.xpose.msra.mxu0 0.0
        %3991 = vmatprep.subr.mxu0 0.0
        %3992 = vmatpush2.xpose.msra.mxu0 0.0
        %3993 = vmatprep.subr.mxu0 0.0
        %3994 = vmatpush2.xpose.msra.mxu0 0.0
        %3995 = vmatprep.subr.mxu0 0.0
        %3996 = vmatpush2.xpose.msra.mxu0 0.0
        %3997 = vmatprep.subr.mxu0 0.0
        %3998 = vmatpush2.xpose.msra.mxu0 0.0
        %3999 = vmatprep.subr.mxu0 0.0
        %4000 = vmatpush2.xpose.msra.mxu0 0.0
        %4001 = vmatprep.subr.mxu0 0.0
        %4002 = vmatpush2.xpose.msra.mxu0 0.0
        %4003 = vmatprep.subr.mxu0 0.0
        %4004 = vmatpush2.xpose.msra.mxu0 0.0
        %4005 = vmatprep.subr.mxu0 0.0
        %4006 = vmatpush2.xpose.msra.mxu0 0.0
        %4007 = vmatprep.subr.mxu0 0.0
        %4008 = vmatpush2.xpose.msra.mxu0 0.0
        %4009 = vmatprep.mubr.f32.mxu0 0.0
        %4010 = vmatmul.mubr.f32.gmra.mxu0 %v3941
        %v4011 = vpop.f32.mrf.mxu0
        %v4012 = vadd.f32 0.0, %v4011
        %v4013 = vpop.f32.mrf.mxu0
        %4014 = vdwg.mxu0
        %v4015 = vsel %vm1120, %v4012, -inf
        %4016 = vmax.xlane.f32.xlu0 %v4015
        %v4017 = vpop.xlane.xlu0 %4016
        %v4018 = vsub.f32 %v4012, %v4017
        %v4019 = vmul.f32 %v4018, 1.442695
        %v4020 = vpow.pop %v4019
        %v4021 = vsel %vm1120, %v4020, 0.0
        %4022 = vadd.xlane.f32.xlu0 %v4021
        %v4023 = vpop.xlane.xlu0 %4022
        %v4024 = vrcp.pop %v4023
        %v4025 = vmul.f32 %v4020, %v4024
        %4026 = vrot.lane.b32.xlu0 %v3459, 48
        %v4027 = vpop.permute.xlu0 %4026
        %v4030 = vsel %vm1120, %v4025, 0
        %4032 = vmatprep.subr.mxu0 0.0
        %4033 = vmatpush1.msra.mxu0 0.0
        %4034 = vmatprep.subr.mxu0 0.0
        %4035 = vmatpush1.msra.mxu0 0.0
        %4036 = vmatprep.subr.mxu0 0.0
        %4037 = vmatpush1.msra.mxu0 0.0
        %4038 = vmatprep.subr.mxu0 0.0
        %4039 = vmatpush1.msra.mxu0 0.0
        %4040 = vmatprep.subr.mxu0 0.0
        %4041 = vmatpush1.msra.mxu0 0.0
        %4042 = vmatprep.subr.mxu0 0.0
        %4043 = vmatpush1.msra.mxu0 0.0
        %4044 = vmatprep.subr.mxu0 0.0
        %4045 = vmatpush1.msra.mxu0 0.0
        %4046 = vmatprep.subr.mxu0 0.0
        %4047 = vmatpush1.msra.mxu0 0.0
        %4048 = vmatprep.subr.mxu0 0.0
        %4049 = vmatpush1.msra.mxu0 0.0
        %4050 = vmatprep.subr.mxu0 0.0
        %4051 = vmatpush1.msra.mxu0 0.0
        %4052 = vmatprep.subr.mxu0 0.0
        %4053 = vmatpush1.msra.mxu0 0.0
        %4054 = vmatprep.subr.mxu0 0.0
        %4055 = vmatpush1.msra.mxu0 0.0
        %4056 = vmatprep.subr.mxu0 0.0
        %4057 = vmatpush1.msra.mxu0 0.0
        %4058 = vmatprep.subr.mxu0 0.0
        %4059 = vmatpush1.msra.mxu0 0.0
        %4060 = vmatprep.subr.mxu0 0.0
        %4061 = vmatpush1.msra.mxu0 0.0
        %4062 = vmatprep.subr.mxu0 0.0
        %4063 = vmatpush1.msra.mxu0 %v4027
        %4064 = vmatprep.subr.mxu0 0.0
        %4065 = vmatpush2.msra.mxu0 0.0
        %4066 = vmatprep.subr.mxu0 0.0
        %4067 = vmatpush2.msra.mxu0 0.0
        %4068 = vmatprep.subr.mxu0 0.0
        %4069 = vmatpush2.msra.mxu0 0.0
        %4070 = vmatprep.subr.mxu0 0.0
        %4071 = vmatpush2.msra.mxu0 0.0
        %4072 = vmatprep.subr.mxu0 0.0
        %4073 = vmatpush2.msra.mxu0 0.0
        %4074 = vmatprep.subr.mxu0 0.0
        %4075 = vmatpush2.msra.mxu0 0.0
        %4076 = vmatprep.subr.mxu0 0.0
        %4077 = vmatpush2.msra.mxu0 0.0
        %4078 = vmatprep.subr.mxu0 0.0
        %4079 = vmatpush2.msra.mxu0 0.0
        %4080 = vmatprep.subr.mxu0 0.0
        %4081 = vmatpush2.msra.mxu0 0.0
        %4082 = vmatprep.subr.mxu0 0.0
        %4083 = vmatpush2.msra.mxu0 0.0
        %4084 = vmatprep.subr.mxu0 0.0
        %4085 = vmatpush2.msra.mxu0 0.0
        %4086 = vmatprep.subr.mxu0 0.0
        %4087 = vmatpush2.msra.mxu0 0.0
        %4088 = vmatprep.subr.mxu0 0.0
        %4089 = vmatpush2.msra.mxu0 0.0
        %4090 = vmatprep.subr.mxu0 0.0
        %4091 = vmatpush2.msra.mxu0 0.0
        %4092 = vmatprep.subr.mxu0 0.0
        %4093 = vmatpush2.msra.mxu0 0.0
        %4094 = vmatprep.subr.mxu0 0.0
        %4095 = vmatpush2.msra.mxu0 0.0
        %4096 = vmatprep.mubr.f32.mxu0 0.0
        %4097 = vmatmul.mubr.f32.gmra.mxu0 %v4030
        %v4098 = vpop.f32.mrf.mxu0
        %v4099 = vadd.f32 0.0, %v4098
        %v4100 = vpop.f32.mrf.mxu0
        %4101 = vdwg.mxu0
        %v4103 = vsel %vm1120, %v4099, 0
        %4105 = vmatprep.subr.mxu0 0.0
        %4106 = vmatpush1.msra.mxu0 0.0
        %4107 = vmatprep.subr.mxu0 0.0
        %4108 = vmatpush1.msra.mxu0 0.0
        %4109 = vmatprep.subr.mxu0 0.0
        %4110 = vmatpush1.msra.mxu0 0.0
        %4111 = vmatprep.subr.mxu0 0.0
        %4112 = vmatpush1.msra.mxu0 0.0
        %4113 = vmatprep.subr.mxu0 0.0
        %4114 = vmatpush1.msra.mxu0 0.0
        %4115 = vmatprep.subr.mxu0 0.0
        %4116 = vmatpush1.msra.mxu0 0.0
        %4117 = vmatprep.subr.mxu0 0.0
        %4118 = vmatpush1.msra.mxu0 0.0
        %4119 = vmatprep.subr.mxu0 0.0
        %4120 = vmatpush1.msra.mxu0 0.0
        %4121 = vmatprep.subr.mxu0 0.0
        %4122 = vmatpush1.msra.mxu0 0.0
        %4123 = vmatprep.subr.mxu0 0.0
        %4124 = vmatpush1.msra.mxu0 0.0
        %4125 = vmatprep.subr.mxu0 0.0
        %4126 = vmatpush1.msra.mxu0 0.0
        %4127 = vmatprep.subr.mxu0 0.0
        %4128 = vmatpush1.msra.mxu0 0.0
        %4129 = vmatprep.subr.mxu0 0.0
        %4130 = vmatpush1.msra.mxu0 0.0
        %4131 = vmatprep.subr.mxu0 0.0
        %4132 = vmatpush1.msra.mxu0 0.0
        %4133 = vmatprep.subr.mxu0 0.0
        %4134 = vmatpush1.msra.mxu0 0.0
        %4135 = vmatprep.subr.mxu0 0.0
        %4136 = vmatpush1.msra.mxu0 %v912
        %4137 = vmatprep.subr.mxu0 0.0
        %4138 = vmatpush2.msra.mxu0 0.0
        %4139 = vmatprep.subr.mxu0 0.0
        %4140 = vmatpush2.msra.mxu0 0.0
        %4141 = vmatprep.subr.mxu0 0.0
        %4142 = vmatpush2.msra.mxu0 0.0
        %4143 = vmatprep.subr.mxu0 0.0
        %4144 = vmatpush2.msra.mxu0 0.0
        %4145 = vmatprep.subr.mxu0 0.0
        %4146 = vmatpush2.msra.mxu0 0.0
        %4147 = vmatprep.subr.mxu0 0.0
        %4148 = vmatpush2.msra.mxu0 0.0
        %4149 = vmatprep.subr.mxu0 0.0
        %4150 = vmatpush2.msra.mxu0 0.0
        %4151 = vmatprep.subr.mxu0 0.0
        %4152 = vmatpush2.msra.mxu0 0.0
        %4153 = vmatprep.subr.mxu0 0.0
        %4154 = vmatpush2.msra.mxu0 0.0
        %4155 = vmatprep.subr.mxu0 0.0
        %4156 = vmatpush2.msra.mxu0 0.0
        %4157 = vmatprep.subr.mxu0 0.0
        %4158 = vmatpush2.msra.mxu0 0.0
        %4159 = vmatprep.subr.mxu0 0.0
        %4160 = vmatpush2.msra.mxu0 0.0
        %4161 = vmatprep.subr.mxu0 0.0
        %4162 = vmatpush2.msra.mxu0 0.0
        %4163 = vmatprep.subr.mxu0 0.0
        %4164 = vmatpush2.msra.mxu0 0.0
        %4165 = vmatprep.subr.mxu0 0.0
        %4166 = vmatpush2.msra.mxu0 0.0
        %4167 = vmatprep.subr.mxu0 0.0
        %4168 = vmatpush2.msra.mxu0 0.0
        %4169 = vmatprep.mubr.f32.mxu0 0.0
        %4170 = vmatmul.mubr.f32.gmra.mxu0 %v4103
        %v4171 = vpop.f32.mrf.mxu0
        %v4172 = vadd.f32 0.0, %v4171
        %v4173 = vpop.f32.mrf.mxu0
        %4174 = vdwg.mxu0
        %v4175 = vadd.f32 %v3934, %v4172
        %4176 = vrot.lane.b32.xlu0 %v3459, 104
        %v4177 = vpop.permute.xlu0 %4176
        %4178 = vrot.lane.b32.xlu0 %v3459, 72
        %v4179 = vpop.permute.xlu0 %4178
        %v4180 = vsel %vm1120, %v4177, 0
        %v4182 = vsel %vm1120, %v4179, 0
        %4184 = vmatprep.subr.mxu0 0.0
        %4185 = vmatpush1.xpose.msra.mxu0 0.0
        %4186 = vmatprep.subr.mxu0 0.0
        %4187 = vmatpush1.xpose.msra.mxu0 0.0
        %4188 = vmatprep.subr.mxu0 0.0
        %4189 = vmatpush1.xpose.msra.mxu0 0.0
        %4190 = vmatprep.subr.mxu0 0.0
        %4191 = vmatpush1.xpose.msra.mxu0 0.0
        %4192 = vmatprep.subr.mxu0 0.0
        %4193 = vmatpush1.xpose.msra.mxu0 0.0
        %4194 = vmatprep.subr.mxu0 0.0
        %4195 = vmatpush1.xpose.msra.mxu0 0.0
        %4196 = vmatprep.subr.mxu0 0.0
        %4197 = vmatpush1.xpose.msra.mxu0 0.0
        %4198 = vmatprep.subr.mxu0 0.0
        %4199 = vmatpush1.xpose.msra.mxu0 0.0
        %4200 = vmatprep.subr.mxu0 0.0
        %4201 = vmatpush1.xpose.msra.mxu0 0.0
        %4202 = vmatprep.subr.mxu0 0.0
        %4203 = vmatpush1.xpose.msra.mxu0 0.0
        %4204 = vmatprep.subr.mxu0 0.0
        %4205 = vmatpush1.xpose.msra.mxu0 0.0
        %4206 = vmatprep.subr.mxu0 0.0
        %4207 = vmatpush1.xpose.msra.mxu0 0.0
        %4208 = vmatprep.subr.mxu0 0.0
        %4209 = vmatpush1.xpose.msra.mxu0 0.0
        %4210 = vmatprep.subr.mxu0 0.0
        %4211 = vmatpush1.xpose.msra.mxu0 0.0
        %4212 = vmatprep.subr.mxu0 0.0
        %4213 = vmatpush1.xpose.msra.mxu0 0.0
        %4214 = vmatprep.subr.mxu0 0.0
        %4215 = vmatpush1.xpose.msra.mxu0 %v4182
        %4216 = vmatprep.subr.mxu0 0.0
        %4217 = vmatpush2.xpose.msra.mxu0 0.0
        %4218 = vmatprep.subr.mxu0 0.0
        %4219 = vmatpush2.xpose.msra.mxu0 0.0
        %4220 = vmatprep.subr.mxu0 0.0
        %4221 = vmatpush2.xpose.msra.mxu0 0.0
        %4222 = vmatprep.subr.mxu0 0.0
        %4223 = vmatpush2.xpose.msra.mxu0 0.0
        %4224 = vmatprep.subr.mxu0 0.0
        %4225 = vmatpush2.xpose.msra.mxu0 0.0
        %4226 = vmatprep.subr.mxu0 0.0
        %4227 = vmatpush2.xpose.msra.mxu0 0.0
        %4228 = vmatprep.subr.mxu0 0.0
        %4229 = vmatpush2.xpose.msra.mxu0 0.0
        %4230 = vmatprep.subr.mxu0 0.0
        %4231 = vmatpush2.xpose.msra.mxu0 0.0
        %4232 = vmatprep.subr.mxu0 0.0
        %4233 = vmatpush2.xpose.msra.mxu0 0.0
        %4234 = vmatprep.subr.mxu0 0.0
        %4235 = vmatpush2.xpose.msra.mxu0 0.0
        %4236 = vmatprep.subr.mxu0 0.0
        %4237 = vmatpush2.xpose.msra.mxu0 0.0
        %4238 = vmatprep.subr.mxu0 0.0
        %4239 = vmatpush2.xpose.msra.mxu0 0.0
        %4240 = vmatprep.subr.mxu0 0.0
        %4241 = vmatpush2.xpose.msra.mxu0 0.0
        %4242 = vmatprep.subr.mxu0 0.0
        %4243 = vmatpush2.xpose.msra.mxu0 0.0
        %4244 = vmatprep.subr.mxu0 0.0
        %4245 = vmatpush2.xpose.msra.mxu0 0.0
        %4246 = vmatprep.subr.mxu0 0.0
        %4247 = vmatpush2.xpose.msra.mxu0 0.0
        %4248 = vmatprep.mubr.f32.mxu0 0.0
        %4249 = vmatmul.mubr.f32.gmra.mxu0 %v4180
        %v4250 = vpop.f32.mrf.mxu0
        %v4251 = vadd.f32 0.0, %v4250
        %v4252 = vpop.f32.mrf.mxu0
        %4253 = vdwg.mxu0
        %v4254 = vsel %vm1120, %v4251, -inf
        %4255 = vmax.xlane.f32.xlu0 %v4254
        %v4256 = vpop.xlane.xlu0 %4255
        %v4257 = vsub.f32 %v4251, %v4256
        %v4258 = vmul.f32 %v4257, 1.442695
        %v4259 = vpow.pop %v4258
        %v4260 = vsel %vm1120, %v4259, 0.0
        %4261 = vadd.xlane.f32.xlu0 %v4260
        %v4262 = vpop.xlane.xlu0 %4261
        %v4263 = vrcp.pop %v4262
        %v4264 = vmul.f32 %v4259, %v4263
        %4265 = vrot.lane.b32.xlu0 %v3459, 40
        %v4266 = vpop.permute.xlu0 %4265
        %v4269 = vsel %vm1120, %v4264, 0
        %4271 = vmatprep.subr.mxu0 0.0
        %4272 = vmatpush1.msra.mxu0 0.0
        %4273 = vmatprep.subr.mxu0 0.0
        %4274 = vmatpush1.msra.mxu0 0.0
        %4275 = vmatprep.subr.mxu0 0.0
        %4276 = vmatpush1.msra.mxu0 0.0
        %4277 = vmatprep.subr.mxu0 0.0
        %4278 = vmatpush1.msra.mxu0 0.0
        %4279 = vmatprep.subr.mxu0 0.0
        %4280 = vmatpush1.msra.mxu0 0.0
        %4281 = vmatprep.subr.mxu0 0.0
        %4282 = vmatpush1.msra.mxu0 0.0
        %4283 = vmatprep.subr.mxu0 0.0
        %4284 = vmatpush1.msra.mxu0 0.0
        %4285 = vmatprep.subr.mxu0 0.0
        %4286 = vmatpush1.msra.mxu0 0.0
        %4287 = vmatprep.subr.mxu0 0.0
        %4288 = vmatpush1.msra.mxu0 0.0
        %4289 = vmatprep.subr.mxu0 0.0
        %4290 = vmatpush1.msra.mxu0 0.0
        %4291 = vmatprep.subr.mxu0 0.0
        %4292 = vmatpush1.msra.mxu0 0.0
        %4293 = vmatprep.subr.mxu0 0.0
        %4294 = vmatpush1.msra.mxu0 0.0
        %4295 = vmatprep.subr.mxu0 0.0
        %4296 = vmatpush1.msra.mxu0 0.0
        %4297 = vmatprep.subr.mxu0 0.0
        %4298 = vmatpush1.msra.mxu0 0.0
        %4299 = vmatprep.subr.mxu0 0.0
        %4300 = vmatpush1.msra.mxu0 0.0
        %4301 = vmatprep.subr.mxu0 0.0
        %4302 = vmatpush1.msra.mxu0 %v4266
        %4303 = vmatprep.subr.mxu0 0.0
        %4304 = vmatpush2.msra.mxu0 0.0
        %4305 = vmatprep.subr.mxu0 0.0
        %4306 = vmatpush2.msra.mxu0 0.0
        %4307 = vmatprep.subr.mxu0 0.0
        %4308 = vmatpush2.msra.mxu0 0.0
        %4309 = vmatprep.subr.mxu0 0.0
        %4310 = vmatpush2.msra.mxu0 0.0
        %4311 = vmatprep.subr.mxu0 0.0
        %4312 = vmatpush2.msra.mxu0 0.0
        %4313 = vmatprep.subr.mxu0 0.0
        %4314 = vmatpush2.msra.mxu0 0.0
        %4315 = vmatprep.subr.mxu0 0.0
        %4316 = vmatpush2.msra.mxu0 0.0
        %4317 = vmatprep.subr.mxu0 0.0
        %4318 = vmatpush2.msra.mxu0 0.0
        %4319 = vmatprep.subr.mxu0 0.0
        %4320 = vmatpush2.msra.mxu0 0.0
        %4321 = vmatprep.subr.mxu0 0.0
        %4322 = vmatpush2.msra.mxu0 0.0
        %4323 = vmatprep.subr.mxu0 0.0
        %4324 = vmatpush2.msra.mxu0 0.0
        %4325 = vmatprep.subr.mxu0 0.0
        %4326 = vmatpush2.msra.mxu0 0.0
        %4327 = vmatprep.subr.mxu0 0.0
        %4328 = vmatpush2.msra.mxu0 0.0
        %4329 = vmatprep.subr.mxu0 0.0
        %4330 = vmatpush2.msra.mxu0 0.0
        %4331 = vmatprep.subr.mxu0 0.0
        %4332 = vmatpush2.msra.mxu0 0.0
        %4333 = vmatprep.subr.mxu0 0.0
        %4334 = vmatpush2.msra.mxu0 0.0
        %4335 = vmatprep.mubr.f32.mxu0 0.0
        %4336 = vmatmul.mubr.f32.gmra.mxu0 %v4269
        %v4337 = vpop.f32.mrf.mxu0
        %v4338 = vadd.f32 0.0, %v4337
        %v4339 = vpop.f32.mrf.mxu0
        %4340 = vdwg.mxu0
        %v4342 = vsel %vm1120, %v4338, 0
        %4344 = vmatprep.subr.mxu0 0.0
        %4345 = vmatpush1.msra.mxu0 0.0
        %4346 = vmatprep.subr.mxu0 0.0
        %4347 = vmatpush1.msra.mxu0 0.0
        %4348 = vmatprep.subr.mxu0 0.0
        %4349 = vmatpush1.msra.mxu0 0.0
        %4350 = vmatprep.subr.mxu0 0.0
        %4351 = vmatpush1.msra.mxu0 0.0
        %4352 = vmatprep.subr.mxu0 0.0
        %4353 = vmatpush1.msra.mxu0 0.0
        %4354 = vmatprep.subr.mxu0 0.0
        %4355 = vmatpush1.msra.mxu0 0.0
        %4356 = vmatprep.subr.mxu0 0.0
        %4357 = vmatpush1.msra.mxu0 0.0
        %4358 = vmatprep.subr.mxu0 0.0
        %4359 = vmatpush1.msra.mxu0 0.0
        %4360 = vmatprep.subr.mxu0 0.0
        %4361 = vmatpush1.msra.mxu0 0.0
        %4362 = vmatprep.subr.mxu0 0.0
        %4363 = vmatpush1.msra.mxu0 0.0
        %4364 = vmatprep.subr.mxu0 0.0
        %4365 = vmatpush1.msra.mxu0 0.0
        %4366 = vmatprep.subr.mxu0 0.0
        %4367 = vmatpush1.msra.mxu0 0.0
        %4368 = vmatprep.subr.mxu0 0.0
        %4369 = vmatpush1.msra.mxu0 0.0
        %4370 = vmatprep.subr.mxu0 0.0
        %4371 = vmatpush1.msra.mxu0 0.0
        %4372 = vmatprep.subr.mxu0 0.0
        %4373 = vmatpush1.msra.mxu0 0.0
        %4374 = vmatprep.subr.mxu0 0.0
        %4375 = vmatpush1.msra.mxu0 %v913
        %4376 = vmatprep.subr.mxu0 0.0
        %4377 = vmatpush2.msra.mxu0 0.0
        %4378 = vmatprep.subr.mxu0 0.0
        %4379 = vmatpush2.msra.mxu0 0.0
        %4380 = vmatprep.subr.mxu0 0.0
        %4381 = vmatpush2.msra.mxu0 0.0
        %4382 = vmatprep.subr.mxu0 0.0
        %4383 = vmatpush2.msra.mxu0 0.0
        %4384 = vmatprep.subr.mxu0 0.0
        %4385 = vmatpush2.msra.mxu0 0.0
        %4386 = vmatprep.subr.mxu0 0.0
        %4387 = vmatpush2.msra.mxu0 0.0
        %4388 = vmatprep.subr.mxu0 0.0
        %4389 = vmatpush2.msra.mxu0 0.0
        %4390 = vmatprep.subr.mxu0 0.0
        %4391 = vmatpush2.msra.mxu0 0.0
        %4392 = vmatprep.subr.mxu0 0.0
        %4393 = vmatpush2.msra.mxu0 0.0
        %4394 = vmatprep.subr.mxu0 0.0
        %4395 = vmatpush2.msra.mxu0 0.0
        %4396 = vmatprep.subr.mxu0 0.0
        %4397 = vmatpush2.msra.mxu0 0.0
        %4398 = vmatprep.subr.mxu0 0.0
        %4399 = vmatpush2.msra.mxu0 0.0
        %4400 = vmatprep.subr.mxu0 0.0
        %4401 = vmatpush2.msra.mxu0 0.0
        %4402 = vmatprep.subr.mxu0 0.0
        %4403 = vmatpush2.msra.mxu0 0.0
        %4404 = vmatprep.subr.mxu0 0.0
        %4405 = vmatpush2.msra.mxu0 0.0
        %4406 = vmatprep.subr.mxu0 0.0
        %4407 = vmatpush2.msra.mxu0 0.0
        %4408 = vmatprep.mubr.f32.mxu0 0.0
        %4409 = vmatmul.mubr.f32.gmra.mxu0 %v4342
        %v4410 = vpop.f32.mrf.mxu0
        %v4411 = vadd.f32 0.0, %v4410
        %v4412 = vpop.f32.mrf.mxu0
        %4413 = vdwg.mxu0
        %v4414 = vadd.f32 %v4175, %v4411
        %v4415 = vadd.f32 %v4414, %v2075
        %v4416 = vadd.f32 %v3388, %v4415
        %v4417 = vsel %vm956, %v4416, 0.0
        %4418 = vadd.xlane.f32.xlu0 %v4417
        %v4419 = vpop.xlane.xlu0 %4418
        %v4420 = vmul.f32 %v4419, %v2082
        %v4421 = vsub.f32 %v4416, %v4420
        %v4422 = vmul.f32 %v4421, %v4421
        %v4423 = vsel %vm956, %v4422, 0.0
        %4424 = vadd.xlane.f32.xlu0 %v4423
        %v4425 = vpop.xlane.xlu0 %4424
        %v4426 = vmul.f32 %v4425, %v2082
        %v4427 = vadd.f32 %v4426, 1e-05
        %v4428 = vrsqrt.pop %v4427
        %v4429 = vmul.f32 %v4421, %v4428
        %v4430 = vmul.f32 %v4429, %v2097
        %v4431 = vadd.f32 %v4430, %v2104
        %v4433 = vsel %vm956, %v4431, 0
        %4435 = vmatprep.subr.mxu0 0.0
        %4436 = vmatpush1.msra.mxu0 0.0
        %4437 = vmatprep.subr.mxu0 0.0
        %4438 = vmatpush1.msra.mxu0 0.0
        %4439 = vmatprep.subr.mxu0 0.0
        %4440 = vmatpush1.msra.mxu0 0.0
        %4441 = vmatprep.subr.mxu0 0.0
        %4442 = vmatpush1.msra.mxu0 0.0
        %4443 = vmatprep.subr.mxu0 0.0
        %4444 = vmatpush1.msra.mxu0 0.0
        %4445 = vmatprep.subr.mxu0 0.0
        %4446 = vmatpush1.msra.mxu0 0.0
        %4447 = vmatprep.subr.mxu0 0.0
        %4448 = vmatpush1.msra.mxu0 0.0
        %4449 = vmatprep.subr.mxu0 0.0
        %4450 = vmatpush1.msra.mxu0 0.0
        %4451 = vmatprep.subr.mxu0 0.0
        %4452 = vmatpush1.msra.mxu0 0.0
        %4453 = vmatprep.subr.mxu0 0.0
        %4454 = vmatpush1.msra.mxu0 0.0
        %4455 = vmatprep.subr.mxu0 0.0
        %4456 = vmatpush1.msra.mxu0 0.0
        %4457 = vmatprep.subr.mxu0 0.0
        %4458 = vmatpush1.msra.mxu0 0.0
        %4459 = vmatprep.subr.mxu0 0.0
        %4460 = vmatpush1.msra.mxu0 %v918
        %4461 = vmatprep.subr.mxu0 0.0
        %4462 = vmatpush1.msra.mxu0 %v917
        %4463 = vmatprep.subr.mxu0 0.0
        %4464 = vmatpush1.msra.mxu0 %v916
        %4465 = vmatprep.subr.mxu0 0.0
        %4466 = vmatpush1.msra.mxu0 %v915
        %4467 = vmatprep.subr.mxu0 0.0
        %4468 = vmatpush2.msra.mxu0 0.0
        %4469 = vmatprep.subr.mxu0 0.0
        %4470 = vmatpush2.msra.mxu0 0.0
        %4471 = vmatprep.subr.mxu0 0.0
        %4472 = vmatpush2.msra.mxu0 0.0
        %4473 = vmatprep.subr.mxu0 0.0
        %4474 = vmatpush2.msra.mxu0 0.0
        %4475 = vmatprep.subr.mxu0 0.0
        %4476 = vmatpush2.msra.mxu0 0.0
        %4477 = vmatprep.subr.mxu0 0.0
        %4478 = vmatpush2.msra.mxu0 0.0
        %4479 = vmatprep.subr.mxu0 0.0
        %4480 = vmatpush2.msra.mxu0 0.0
        %4481 = vmatprep.subr.mxu0 0.0
        %4482 = vmatpush2.msra.mxu0 0.0
        %4483 = vmatprep.subr.mxu0 0.0
        %4484 = vmatpush2.msra.mxu0 0.0
        %4485 = vmatprep.subr.mxu0 0.0
        %4486 = vmatpush2.msra.mxu0 0.0
        %4487 = vmatprep.subr.mxu0 0.0
        %4488 = vmatpush2.msra.mxu0 0.0
        %4489 = vmatprep.subr.mxu0 0.0
        %4490 = vmatpush2.msra.mxu0 0.0
        %4491 = vmatprep.subr.mxu0 0.0
        %4492 = vmatpush2.msra.mxu0 0.0
        %4493 = vmatprep.subr.mxu0 0.0
        %4494 = vmatpush2.msra.mxu0 0.0
        %4495 = vmatprep.subr.mxu0 0.0
        %4496 = vmatpush2.msra.mxu0 0.0
        %4497 = vmatprep.subr.mxu0 0.0
        %4498 = vmatpush2.msra.mxu0 0.0
        %4499 = vmatprep.mubr.f32.mxu0 0.0
        %4500 = vmatmul.mubr.f32.gmra.mxu0 %v4433
        %v4501 = vpop.f32.mrf.mxu0
        %v4502 = vadd.f32 %v2111, %v4501
        %v4503 = vpop.f32.mrf.mxu0
        %4504 = vdwg.mxu0
        %v4506 = vsel %vm1120, %v4502, 0
        %4508 = vmatprep.subr.mxu0 0.0
        %4509 = vmatpush1.xpose.msra.mxu0 0.0
        %4510 = vmatprep.subr.mxu0 0.0
        %4511 = vmatpush1.xpose.msra.mxu0 0.0
        %4512 = vmatprep.subr.mxu0 0.0
        %4513 = vmatpush1.xpose.msra.mxu0 0.0
        %4514 = vmatprep.subr.mxu0 0.0
        %4515 = vmatpush1.xpose.msra.mxu0 0.0
        %4516 = vmatprep.subr.mxu0 0.0
        %4517 = vmatpush1.xpose.msra.mxu0 0.0
        %4518 = vmatprep.subr.mxu0 0.0
        %4519 = vmatpush1.xpose.msra.mxu0 0.0
        %4520 = vmatprep.subr.mxu0 0.0
        %4521 = vmatpush1.xpose.msra.mxu0 0.0
        %4522 = vmatprep.subr.mxu0 0.0
        %4523 = vmatpush1.xpose.msra.mxu0 0.0
        %4524 = vmatprep.subr.mxu0 0.0
        %4525 = vmatpush1.xpose.msra.mxu0 0.0
        %4526 = vmatprep.subr.mxu0 0.0
        %4527 = vmatpush1.xpose.msra.mxu0 0.0
        %4528 = vmatprep.subr.mxu0 0.0
        %4529 = vmatpush1.xpose.msra.mxu0 0.0
        %4530 = vmatprep.subr.mxu0 0.0
        %4531 = vmatpush1.xpose.msra.mxu0 0.0
        %4532 = vmatprep.subr.mxu0 0.0
        %4533 = vmatpush1.xpose.msra.mxu0 0.0
        %4534 = vmatprep.subr.mxu0 0.0
        %4535 = vmatpush1.xpose.msra.mxu0 0.0
        %4536 = vmatprep.subr.mxu0 0.0
        %4537 = vmatpush1.xpose.msra.mxu0 %v2193
        %4538 = vmatprep.subr.mxu0 0.0
        %4539 = vmatpush1.xpose.msra.mxu0 %v2190
        %4540 = vmatprep.subr.mxu0 0.0
        %4541 = vmatpush2.xpose.msra.mxu0 0.0
        %4542 = vmatprep.subr.mxu0 0.0
        %4543 = vmatpush2.xpose.msra.mxu0 0.0
        %4544 = vmatprep.subr.mxu0 0.0
        %4545 = vmatpush2.xpose.msra.mxu0 0.0
        %4546 = vmatprep.subr.mxu0 0.0
        %4547 = vmatpush2.xpose.msra.mxu0 0.0
        %4548 = vmatprep.subr.mxu0 0.0
        %4549 = vmatpush2.xpose.msra.mxu0 0.0
        %4550 = vmatprep.subr.mxu0 0.0
        %4551 = vmatpush2.xpose.msra.mxu0 0.0
        %4552 = vmatprep.subr.mxu0 0.0
        %4553 = vmatpush2.xpose.msra.mxu0 0.0
        %4554 = vmatprep.subr.mxu0 0.0
        %4555 = vmatpush2.xpose.msra.mxu0 0.0
        %4556 = vmatprep.subr.mxu0 0.0
        %4557 = vmatpush2.xpose.msra.mxu0 0.0
        %4558 = vmatprep.subr.mxu0 0.0
        %4559 = vmatpush2.xpose.msra.mxu0 0.0
        %4560 = vmatprep.subr.mxu0 0.0
        %4561 = vmatpush2.xpose.msra.mxu0 0.0
        %4562 = vmatprep.subr.mxu0 0.0
        %4563 = vmatpush2.xpose.msra.mxu0 0.0
        %4564 = vmatprep.subr.mxu0 0.0
        %4565 = vmatpush2.xpose.msra.mxu0 0.0
        %4566 = vmatprep.subr.mxu0 0.0
        %4567 = vmatpush2.xpose.msra.mxu0 0.0
        %4568 = vmatprep.subr.mxu0 0.0
        %4569 = vmatpush2.xpose.msra.mxu0 0.0
        %4570 = vmatprep.subr.mxu0 0.0
        %4571 = vmatpush2.xpose.msra.mxu0 0.0
        %4572 = vmatprep.mubr.f32.mxu0 0.0
        %4573 = vmatmul.mubr.f32.gmra.mxu0 %v4506
        %v4574 = vpop.f32.mrf.mxu0
        %v4575 = vadd.f32 0.0, %v4574
        %v4576 = vpop.f32.mrf.mxu0
        %4577 = vdwg.mxu0
        %v4578 = vsel %vm2265, %v4575, -inf
        %4579 = vmax.xlane.f32.xlu0 %v4578
        %v4580 = vpop.xlane.xlu0 %4579
        %v4581 = vsub.f32 %v4575, %v4580
        %v4582 = vmul.f32 %v4581, 1.442695
        %v4583 = vpow.pop %v4582
        %v4584 = vsel %vm2265, %v4583, 0.0
        %4585 = vadd.xlane.f32.xlu0 %v4584
        %v4586 = vpop.xlane.xlu0 %4585
        %v4587 = vrcp.pop %v4586
        %v4588 = vmul.f32 %v4583, %v4587
        %v4590 = vsel %vm2265, %v4588, 0
        %4592 = vmatprep.subr.mxu0 0.0
        %4593 = vmatpush1.msra.mxu0 0.0
        %4594 = vmatprep.subr.mxu0 0.0
        %4595 = vmatpush1.msra.mxu0 0.0
        %4596 = vmatprep.subr.mxu0 0.0
        %4597 = vmatpush1.msra.mxu0 0.0
        %4598 = vmatprep.subr.mxu0 0.0
        %4599 = vmatpush1.msra.mxu0 0.0
        %4600 = vmatprep.subr.mxu0 0.0
        %4601 = vmatpush1.msra.mxu0 0.0
        %4602 = vmatprep.subr.mxu0 0.0
        %4603 = vmatpush1.msra.mxu0 0.0
        %4604 = vmatprep.subr.mxu0 0.0
        %4605 = vmatpush1.msra.mxu0 0.0
        %4606 = vmatprep.subr.mxu0 0.0
        %4607 = vmatpush1.msra.mxu0 0.0
        %4608 = vmatprep.subr.mxu0 0.0
        %4609 = vmatpush1.msra.mxu0 0.0
        %4610 = vmatprep.subr.mxu0 0.0
        %4611 = vmatpush1.msra.mxu0 0.0
        %4612 = vmatprep.subr.mxu0 0.0
        %4613 = vmatpush1.msra.mxu0 0.0
        %4614 = vmatprep.subr.mxu0 0.0
        %4615 = vmatpush1.msra.mxu0 0.0
        %4616 = vmatprep.subr.mxu0 0.0
        %4617 = vmatpush1.msra.mxu0 0.0
        %4618 = vmatprep.subr.mxu0 0.0
        %4619 = vmatpush1.msra.mxu0 0.0
        %4620 = vmatprep.subr.mxu0 0.0
        %4621 = vmatpush1.msra.mxu0 %v2280
        %4622 = vmatprep.subr.mxu0 0.0
        %4623 = vmatpush1.msra.mxu0 %v2278
        %4624 = vmatprep.subr.mxu0 0.0
        %4625 = vmatpush2.msra.mxu0 0.0
        %4626 = vmatprep.subr.mxu0 0.0
        %4627 = vmatpush2.msra.mxu0 0.0
        %4628 = vmatprep.subr.mxu0 0.0
        %4629 = vmatpush2.msra.mxu0 0.0
        %4630 = vmatprep.subr.mxu0 0.0
        %4631 = vmatpush2.msra.mxu0 0.0
        %4632 = vmatprep.subr.mxu0 0.0
        %4633 = vmatpush2.msra.mxu0 0.0
        %4634 = vmatprep.subr.mxu0 0.0
        %4635 = vmatpush2.msra.mxu0 0.0
        %4636 = vmatprep.subr.mxu0 0.0
        %4637 = vmatpush2.msra.mxu0 0.0
        %4638 = vmatprep.subr.mxu0 0.0
        %4639 = vmatpush2.msra.mxu0 0.0
        %4640 = vmatprep.subr.mxu0 0.0
        %4641 = vmatpush2.msra.mxu0 0.0
        %4642 = vmatprep.subr.mxu0 0.0
        %4643 = vmatpush2.msra.mxu0 0.0
        %4644 = vmatprep.subr.mxu0 0.0
        %4645 = vmatpush2.msra.mxu0 0.0
        %4646 = vmatprep.subr.mxu0 0.0
        %4647 = vmatpush2.msra.mxu0 0.0
        %4648 = vmatprep.subr.mxu0 0.0
        %4649 = vmatpush2.msra.mxu0 0.0
        %4650 = vmatprep.subr.mxu0 0.0
        %4651 = vmatpush2.msra.mxu0 0.0
        %4652 = vmatprep.subr.mxu0 0.0
        %4653 = vmatpush2.msra.mxu0 0.0
        %4654 = vmatprep.subr.mxu0 0.0
        %4655 = vmatpush2.msra.mxu0 0.0
        %4656 = vmatprep.mubr.f32.mxu0 0.0
        %4657 = vmatmul.mubr.f32.gmra.mxu0 %v4590
        %v4658 = vpop.f32.mrf.mxu0
        %v4659 = vadd.f32 0.0, %v4658
        %v4660 = vpop.f32.mrf.mxu0
        %4661 = vdwg.mxu0
        %4662 = vrot.lane.b32.xlu0 %v4502, 120
        %v4663 = vpop.permute.xlu0 %4662
        %v4664 = vsel %vm1120, %v4663, 0
        %4666 = vmatprep.subr.mxu0 0.0
        %4667 = vmatpush1.xpose.msra.mxu0 0.0
        %4668 = vmatprep.subr.mxu0 0.0
        %4669 = vmatpush1.xpose.msra.mxu0 0.0
        %4670 = vmatprep.subr.mxu0 0.0
        %4671 = vmatpush1.xpose.msra.mxu0 0.0
        %4672 = vmatprep.subr.mxu0 0.0
        %4673 = vmatpush1.xpose.msra.mxu0 0.0
        %4674 = vmatprep.subr.mxu0 0.0
        %4675 = vmatpush1.xpose.msra.mxu0 0.0
        %4676 = vmatprep.subr.mxu0 0.0
        %4677 = vmatpush1.xpose.msra.mxu0 0.0
        %4678 = vmatprep.subr.mxu0 0.0
        %4679 = vmatpush1.xpose.msra.mxu0 0.0
        %4680 = vmatprep.subr.mxu0 0.0
        %4681 = vmatpush1.xpose.msra.mxu0 0.0
        %4682 = vmatprep.subr.mxu0 0.0
        %4683 = vmatpush1.xpose.msra.mxu0 0.0
        %4684 = vmatprep.subr.mxu0 0.0
        %4685 = vmatpush1.xpose.msra.mxu0 0.0
        %4686 = vmatprep.subr.mxu0 0.0
        %4687 = vmatpush1.xpose.msra.mxu0 0.0
        %4688 = vmatprep.subr.mxu0 0.0
        %4689 = vmatpush1.xpose.msra.mxu0 0.0
        %4690 = vmatprep.subr.mxu0 0.0
        %4691 = vmatpush1.xpose.msra.mxu0 0.0
        %4692 = vmatprep.subr.mxu0 0.0
        %4693 = vmatpush1.xpose.msra.mxu0 0.0
        %4694 = vmatprep.subr.mxu0 0.0
        %4695 = vmatpush1.xpose.msra.mxu0 %v2366
        %4696 = vmatprep.subr.mxu0 0.0
        %4697 = vmatpush1.xpose.msra.mxu0 %v2364
        %4698 = vmatprep.subr.mxu0 0.0
        %4699 = vmatpush2.xpose.msra.mxu0 0.0
        %4700 = vmatprep.subr.mxu0 0.0
        %4701 = vmatpush2.xpose.msra.mxu0 0.0
        %4702 = vmatprep.subr.mxu0 0.0
        %4703 = vmatpush2.xpose.msra.mxu0 0.0
        %4704 = vmatprep.subr.mxu0 0.0
        %4705 = vmatpush2.xpose.msra.mxu0 0.0
        %4706 = vmatprep.subr.mxu0 0.0
        %4707 = vmatpush2.xpose.msra.mxu0 0.0
        %4708 = vmatprep.subr.mxu0 0.0
        %4709 = vmatpush2.xpose.msra.mxu0 0.0
        %4710 = vmatprep.subr.mxu0 0.0
        %4711 = vmatpush2.xpose.msra.mxu0 0.0
        %4712 = vmatprep.subr.mxu0 0.0
        %4713 = vmatpush2.xpose.msra.mxu0 0.0
        %4714 = vmatprep.subr.mxu0 0.0
        %4715 = vmatpush2.xpose.msra.mxu0 0.0
        %4716 = vmatprep.subr.mxu0 0.0
        %4717 = vmatpush2.xpose.msra.mxu0 0.0
        %4718 = vmatprep.subr.mxu0 0.0
        %4719 = vmatpush2.xpose.msra.mxu0 0.0
        %4720 = vmatprep.subr.mxu0 0.0
        %4721 = vmatpush2.xpose.msra.mxu0 0.0
        %4722 = vmatprep.subr.mxu0 0.0
        %4723 = vmatpush2.xpose.msra.mxu0 0.0
        %4724 = vmatprep.subr.mxu0 0.0
        %4725 = vmatpush2.xpose.msra.mxu0 0.0
        %4726 = vmatprep.subr.mxu0 0.0
        %4727 = vmatpush2.xpose.msra.mxu0 0.0
        %4728 = vmatprep.subr.mxu0 0.0
        %4729 = vmatpush2.xpose.msra.mxu0 0.0
        %4730 = vmatprep.mubr.f32.mxu0 0.0
        %4731 = vmatmul.mubr.f32.gmra.mxu0 %v4664
        %v4732 = vpop.f32.mrf.mxu0
        %v4733 = vadd.f32 0.0, %v4732
        %v4734 = vpop.f32.mrf.mxu0
        %4735 = vdwg.mxu0
        %v4736 = vsel %vm2265, %v4733, -inf
        %4737 = vmax.xlane.f32.xlu0 %v4736
        %v4738 = vpop.xlane.xlu0 %4737
        %v4739 = vsub.f32 %v4733, %v4738
        %v4740 = vmul.f32 %v4739, 1.442695
        %v4741 = vpow.pop %v4740
        %v4742 = vsel %vm2265, %v4741, 0.0
        %4743 = vadd.xlane.f32.xlu0 %v4742
        %v4744 = vpop.xlane.xlu0 %4743
        %v4745 = vrcp.pop %v4744
        %v4746 = vmul.f32 %v4741, %v4745
        %v4748 = vsel %vm2265, %v4746, 0
        %4750 = vmatprep.subr.mxu0 0.0
        %4751 = vmatpush1.msra.mxu0 0.0
        %4752 = vmatprep.subr.mxu0 0.0
        %4753 = vmatpush1.msra.mxu0 0.0
        %4754 = vmatprep.subr.mxu0 0.0
        %4755 = vmatpush1.msra.mxu0 0.0
        %4756 = vmatprep.subr.mxu0 0.0
        %4757 = vmatpush1.msra.mxu0 0.0
        %4758 = vmatprep.subr.mxu0 0.0
        %4759 = vmatpush1.msra.mxu0 0.0
        %4760 = vmatprep.subr.mxu0 0.0
        %4761 = vmatpush1.msra.mxu0 0.0
        %4762 = vmatprep.subr.mxu0 0.0
        %4763 = vmatpush1.msra.mxu0 0.0
        %4764 = vmatprep.subr.mxu0 0.0
        %4765 = vmatpush1.msra.mxu0 0.0
        %4766 = vmatprep.subr.mxu0 0.0
        %4767 = vmatpush1.msra.mxu0 0.0
        %4768 = vmatprep.subr.mxu0 0.0
        %4769 = vmatpush1.msra.mxu0 0.0
        %4770 = vmatprep.subr.mxu0 0.0
        %4771 = vmatpush1.msra.mxu0 0.0
        %4772 = vmatprep.subr.mxu0 0.0
        %4773 = vmatpush1.msra.mxu0 0.0
        %4774 = vmatprep.subr.mxu0 0.0
        %4775 = vmatpush1.msra.mxu0 0.0
        %4776 = vmatprep.subr.mxu0 0.0
        %4777 = vmatpush1.msra.mxu0 0.0
        %4778 = vmatprep.subr.mxu0 0.0
        %4779 = vmatpush1.msra.mxu0 %v2452
        %4780 = vmatprep.subr.mxu0 0.0
        %4781 = vmatpush1.msra.mxu0 %v2450
        %4782 = vmatprep.subr.mxu0 0.0
        %4783 = vmatpush2.msra.mxu0 0.0
        %4784 = vmatprep.subr.mxu0 0.0
        %4785 = vmatpush2.msra.mxu0 0.0
        %4786 = vmatprep.subr.mxu0 0.0
        %4787 = vmatpush2.msra.mxu0 0.0
        %4788 = vmatprep.subr.mxu0 0.0
        %4789 = vmatpush2.msra.mxu0 0.0
        %4790 = vmatprep.subr.mxu0 0.0
        %4791 = vmatpush2.msra.mxu0 0.0
        %4792 = vmatprep.subr.mxu0 0.0
        %4793 = vmatpush2.msra.mxu0 0.0
        %4794 = vmatprep.subr.mxu0 0.0
        %4795 = vmatpush2.msra.mxu0 0.0
        %4796 = vmatprep.subr.mxu0 0.0
        %4797 = vmatpush2.msra.mxu0 0.0
        %4798 = vmatprep.subr.mxu0 0.0
        %4799 = vmatpush2.msra.mxu0 0.0
        %4800 = vmatprep.subr.mxu0 0.0
        %4801 = vmatpush2.msra.mxu0 0.0
        %4802 = vmatprep.subr.mxu0 0.0
        %4803 = vmatpush2.msra.mxu0 0.0
        %4804 = vmatprep.subr.mxu0 0.0
        %4805 = vmatpush2.msra.mxu0 0.0
        %4806 = vmatprep.subr.mxu0 0.0
        %4807 = vmatpush2.msra.mxu0 0.0
        %4808 = vmatprep.subr.mxu0 0.0
        %4809 = vmatpush2.msra.mxu0 0.0
        %4810 = vmatprep.subr.mxu0 0.0
        %4811 = vmatpush2.msra.mxu0 0.0
        %4812 = vmatprep.subr.mxu0 0.0
        %4813 = vmatpush2.msra.mxu0 0.0
        %4814 = vmatprep.mubr.f32.mxu0 0.0
        %4815 = vmatmul.mubr.f32.gmra.mxu0 %v4748
        %v4816 = vpop.f32.mrf.mxu0
        %v4817 = vadd.f32 0.0, %v4816
        %v4818 = vpop.f32.mrf.mxu0
        %4819 = vdwg.mxu0
        %v4821 = vsel %vm1120, %v4817, 0
        %4823 = vmatprep.subr.mxu0 0.0
        %4824 = vmatpush1.msra.mxu0 0.0
        %4825 = vmatprep.subr.mxu0 0.0
        %4826 = vmatpush1.msra.mxu0 0.0
        %4827 = vmatprep.subr.mxu0 0.0
        %4828 = vmatpush1.msra.mxu0 0.0
        %4829 = vmatprep.subr.mxu0 0.0
        %4830 = vmatpush1.msra.mxu0 0.0
        %4831 = vmatprep.subr.mxu0 0.0
        %4832 = vmatpush1.msra.mxu0 0.0
        %4833 = vmatprep.subr.mxu0 0.0
        %4834 = vmatpush1.msra.mxu0 0.0
        %4835 = vmatprep.subr.mxu0 0.0
        %4836 = vmatpush1.msra.mxu0 0.0
        %4837 = vmatprep.subr.mxu0 0.0
        %4838 = vmatpush1.msra.mxu0 0.0
        %4839 = vmatprep.subr.mxu0 0.0
        %4840 = vmatpush1.msra.mxu0 0.0
        %4841 = vmatprep.subr.mxu0 0.0
        %4842 = vmatpush1.msra.mxu0 0.0
        %4843 = vmatprep.subr.mxu0 0.0
        %4844 = vmatpush1.msra.mxu0 0.0
        %4845 = vmatprep.subr.mxu0 0.0
        %4846 = vmatpush1.msra.mxu0 0.0
        %4847 = vmatprep.subr.mxu0 0.0
        %4848 = vmatpush1.msra.mxu0 0.0
        %4849 = vmatprep.subr.mxu0 0.0
        %4850 = vmatpush1.msra.mxu0 0.0
        %4851 = vmatprep.subr.mxu0 0.0
        %4852 = vmatpush1.msra.mxu0 0.0
        %4853 = vmatprep.subr.mxu0 0.0
        %4854 = vmatpush1.msra.mxu0 %v921
        %4855 = vmatprep.subr.mxu0 0.0
        %4856 = vmatpush2.msra.mxu0 0.0
        %4857 = vmatprep.subr.mxu0 0.0
        %4858 = vmatpush2.msra.mxu0 0.0
        %4859 = vmatprep.subr.mxu0 0.0
        %4860 = vmatpush2.msra.mxu0 0.0
        %4861 = vmatprep.subr.mxu0 0.0
        %4862 = vmatpush2.msra.mxu0 0.0
        %4863 = vmatprep.subr.mxu0 0.0
        %4864 = vmatpush2.msra.mxu0 0.0
        %4865 = vmatprep.subr.mxu0 0.0
        %4866 = vmatpush2.msra.mxu0 0.0
        %4867 = vmatprep.subr.mxu0 0.0
        %4868 = vmatpush2.msra.mxu0 0.0
        %4869 = vmatprep.subr.mxu0 0.0
        %4870 = vmatpush2.msra.mxu0 0.0
        %4871 = vmatprep.subr.mxu0 0.0
        %4872 = vmatpush2.msra.mxu0 0.0
        %4873 = vmatprep.subr.mxu0 0.0
        %4874 = vmatpush2.msra.mxu0 0.0
        %4875 = vmatprep.subr.mxu0 0.0
        %4876 = vmatpush2.msra.mxu0 0.0
        %4877 = vmatprep.subr.mxu0 0.0
        %4878 = vmatpush2.msra.mxu0 0.0
        %4879 = vmatprep.subr.mxu0 0.0
        %4880 = vmatpush2.msra.mxu0 0.0
        %4881 = vmatprep.subr.mxu0 0.0
        %4882 = vmatpush2.msra.mxu0 0.0
        %4883 = vmatprep.subr.mxu0 0.0
        %4884 = vmatpush2.msra.mxu0 0.0
        %4885 = vmatprep.subr.mxu0 0.0
        %4886 = vmatpush2.msra.mxu0 0.0
        %4887 = vmatprep.mubr.f32.mxu0 0.0
        %4888 = vmatmul.mubr.f32.gmra.mxu0 %v4821
        %v4889 = vpop.f32.mrf.mxu0
        %v4890 = vadd.f32 0.0, %v4889
        %v4891 = vpop.f32.mrf.mxu0
        %4892 = vdwg.mxu0
        %v4894 = vsel %vm1120, %v4659, 0
        %4896 = vmatprep.subr.mxu0 0.0
        %4897 = vmatpush1.msra.mxu0 0.0
        %4898 = vmatprep.subr.mxu0 0.0
        %4899 = vmatpush1.msra.mxu0 0.0
        %4900 = vmatprep.subr.mxu0 0.0
        %4901 = vmatpush1.msra.mxu0 0.0
        %4902 = vmatprep.subr.mxu0 0.0
        %4903 = vmatpush1.msra.mxu0 0.0
        %4904 = vmatprep.subr.mxu0 0.0
        %4905 = vmatpush1.msra.mxu0 0.0
        %4906 = vmatprep.subr.mxu0 0.0
        %4907 = vmatpush1.msra.mxu0 0.0
        %4908 = vmatprep.subr.mxu0 0.0
        %4909 = vmatpush1.msra.mxu0 0.0
        %4910 = vmatprep.subr.mxu0 0.0
        %4911 = vmatpush1.msra.mxu0 0.0
        %4912 = vmatprep.subr.mxu0 0.0
        %4913 = vmatpush1.msra.mxu0 0.0
        %4914 = vmatprep.subr.mxu0 0.0
        %4915 = vmatpush1.msra.mxu0 0.0
        %4916 = vmatprep.subr.mxu0 0.0
        %4917 = vmatpush1.msra.mxu0 0.0
        %4918 = vmatprep.subr.mxu0 0.0
        %4919 = vmatpush1.msra.mxu0 0.0
        %4920 = vmatprep.subr.mxu0 0.0
        %4921 = vmatpush1.msra.mxu0 0.0
        %4922 = vmatprep.subr.mxu0 0.0
        %4923 = vmatpush1.msra.mxu0 0.0
        %4924 = vmatprep.subr.mxu0 0.0
        %4925 = vmatpush1.msra.mxu0 0.0
        %4926 = vmatprep.subr.mxu0 0.0
        %4927 = vmatpush1.msra.mxu0 %v920
        %4928 = vmatprep.subr.mxu0 0.0
        %4929 = vmatpush2.msra.mxu0 0.0
        %4930 = vmatprep.subr.mxu0 0.0
        %4931 = vmatpush2.msra.mxu0 0.0
        %4932 = vmatprep.subr.mxu0 0.0
        %4933 = vmatpush2.msra.mxu0 0.0
        %4934 = vmatprep.subr.mxu0 0.0
        %4935 = vmatpush2.msra.mxu0 0.0
        %4936 = vmatprep.subr.mxu0 0.0
        %4937 = vmatpush2.msra.mxu0 0.0
        %4938 = vmatprep.subr.mxu0 0.0
        %4939 = vmatpush2.msra.mxu0 0.0
        %4940 = vmatprep.subr.mxu0 0.0
        %4941 = vmatpush2.msra.mxu0 0.0
        %4942 = vmatprep.subr.mxu0 0.0
        %4943 = vmatpush2.msra.mxu0 0.0
        %4944 = vmatprep.subr.mxu0 0.0
        %4945 = vmatpush2.msra.mxu0 0.0
        %4946 = vmatprep.subr.mxu0 0.0
        %4947 = vmatpush2.msra.mxu0 0.0
        %4948 = vmatprep.subr.mxu0 0.0
        %4949 = vmatpush2.msra.mxu0 0.0
        %4950 = vmatprep.subr.mxu0 0.0
        %4951 = vmatpush2.msra.mxu0 0.0
        %4952 = vmatprep.subr.mxu0 0.0
        %4953 = vmatpush2.msra.mxu0 0.0
        %4954 = vmatprep.subr.mxu0 0.0
        %4955 = vmatpush2.msra.mxu0 0.0
        %4956 = vmatprep.subr.mxu0 0.0
        %4957 = vmatpush2.msra.mxu0 0.0
        %4958 = vmatprep.subr.mxu0 0.0
        %4959 = vmatpush2.msra.mxu0 0.0
        %4960 = vmatprep.mubr.f32.mxu0 0.0
        %4961 = vmatmul.mubr.f32.gmra.mxu0 %v4894
        %v4962 = vpop.f32.mrf.mxu0
        %v4963 = vadd.f32 %v4890, %v4962
        %v4964 = vpop.f32.mrf.mxu0
        %4965 = vdwg.mxu0
        %4966 = vrot.lane.b32.xlu0 %v4502, 112
        %v4967 = vpop.permute.xlu0 %4966
        %v4968 = vsel %vm1120, %v4967, 0
        %4970 = vmatprep.subr.mxu0 0.0
        %4971 = vmatpush1.xpose.msra.mxu0 0.0
        %4972 = vmatprep.subr.mxu0 0.0
        %4973 = vmatpush1.xpose.msra.mxu0 0.0
        %4974 = vmatprep.subr.mxu0 0.0
        %4975 = vmatpush1.xpose.msra.mxu0 0.0
        %4976 = vmatprep.subr.mxu0 0.0
        %4977 = vmatpush1.xpose.msra.mxu0 0.0
        %4978 = vmatprep.subr.mxu0 0.0
        %4979 = vmatpush1.xpose.msra.mxu0 0.0
        %4980 = vmatprep.subr.mxu0 0.0
        %4981 = vmatpush1.xpose.msra.mxu0 0.0
        %4982 = vmatprep.subr.mxu0 0.0
        %4983 = vmatpush1.xpose.msra.mxu0 0.0
        %4984 = vmatprep.subr.mxu0 0.0
        %4985 = vmatpush1.xpose.msra.mxu0 0.0
        %4986 = vmatprep.subr.mxu0 0.0
        %4987 = vmatpush1.xpose.msra.mxu0 0.0
        %4988 = vmatprep.subr.mxu0 0.0
        %4989 = vmatpush1.xpose.msra.mxu0 0.0
        %4990 = vmatprep.subr.mxu0 0.0
        %4991 = vmatpush1.xpose.msra.mxu0 0.0
        %4992 = vmatprep.subr.mxu0 0.0
        %4993 = vmatpush1.xpose.msra.mxu0 0.0
        %4994 = vmatprep.subr.mxu0 0.0
        %4995 = vmatpush1.xpose.msra.mxu0 0.0
        %4996 = vmatprep.subr.mxu0 0.0
        %4997 = vmatpush1.xpose.msra.mxu0 0.0
        %4998 = vmatprep.subr.mxu0 0.0
        %4999 = vmatpush1.xpose.msra.mxu0 %v2684
        %5000 = vmatprep.subr.mxu0 0.0
        %5001 = vmatpush1.xpose.msra.mxu0 %v2682
        %5002 = vmatprep.subr.mxu0 0.0
        %5003 = vmatpush2.xpose.msra.mxu0 0.0
        %5004 = vmatprep.subr.mxu0 0.0
        %5005 = vmatpush2.xpose.msra.mxu0 0.0
        %5006 = vmatprep.subr.mxu0 0.0
        %5007 = vmatpush2.xpose.msra.mxu0 0.0
        %5008 = vmatprep.subr.mxu0 0.0
        %5009 = vmatpush2.xpose.msra.mxu0 0.0
        %5010 = vmatprep.subr.mxu0 0.0
        %5011 = vmatpush2.xpose.msra.mxu0 0.0
        %5012 = vmatprep.subr.mxu0 0.0
        %5013 = vmatpush2.xpose.msra.mxu0 0.0
        %5014 = vmatprep.subr.mxu0 0.0
        %5015 = vmatpush2.xpose.msra.mxu0 0.0
        %5016 = vmatprep.subr.mxu0 0.0
        %5017 = vmatpush2.xpose.msra.mxu0 0.0
        %5018 = vmatprep.subr.mxu0 0.0
        %5019 = vmatpush2.xpose.msra.mxu0 0.0
        %5020 = vmatprep.subr.mxu0 0.0
        %5021 = vmatpush2.xpose.msra.mxu0 0.0
        %5022 = vmatprep.subr.mxu0 0.0
        %5023 = vmatpush2.xpose.msra.mxu0 0.0
        %5024 = vmatprep.subr.mxu0 0.0
        %5025 = vmatpush2.xpose.msra.mxu0 0.0
        %5026 = vmatprep.subr.mxu0 0.0
        %5027 = vmatpush2.xpose.msra.mxu0 0.0
        %5028 = vmatprep.subr.mxu0 0.0
        %5029 = vmatpush2.xpose.msra.mxu0 0.0
        %5030 = vmatprep.subr.mxu0 0.0
        %5031 = vmatpush2.xpose.msra.mxu0 0.0
        %5032 = vmatprep.subr.mxu0 0.0
        %5033 = vmatpush2.xpose.msra.mxu0 0.0
        %5034 = vmatprep.mubr.f32.mxu0 0.0
        %5035 = vmatmul.mubr.f32.gmra.mxu0 %v4968
        %v5036 = vpop.f32.mrf.mxu0
        %v5037 = vadd.f32 0.0, %v5036
        %v5038 = vpop.f32.mrf.mxu0
        %5039 = vdwg.mxu0
        %v5040 = vsel %vm2265, %v5037, -inf
        %5041 = vmax.xlane.f32.xlu0 %v5040
        %v5042 = vpop.xlane.xlu0 %5041
        %v5043 = vsub.f32 %v5037, %v5042
        %v5044 = vmul.f32 %v5043, 1.442695
        %v5045 = vpow.pop %v5044
        %v5046 = vsel %vm2265, %v5045, 0.0
        %5047 = vadd.xlane.f32.xlu0 %v5046
        %v5048 = vpop.xlane.xlu0 %5047
        %v5049 = vrcp.pop %v5048
        %v5050 = vmul.f32 %v5045, %v5049
        %v5052 = vsel %vm2265, %v5050, 0
        %5054 = vmatprep.subr.mxu0 0.0
        %5055 = vmatpush1.msra.mxu0 0.0
        %5056 = vmatprep.subr.mxu0 0.0
        %5057 = vmatpush1.msra.mxu0 0.0
        %5058 = vmatprep.subr.mxu0 0.0
        %5059 = vmatpush1.msra.mxu0 0.0
        %5060 = vmatprep.subr.mxu0 0.0
        %5061 = vmatpush1.msra.mxu0 0.0
        %5062 = vmatprep.subr.mxu0 0.0
        %5063 = vmatpush1.msra.mxu0 0.0
        %5064 = vmatprep.subr.mxu0 0.0
        %5065 = vmatpush1.msra.mxu0 0.0
        %5066 = vmatprep.subr.mxu0 0.0
        %5067 = vmatpush1.msra.mxu0 0.0
        %5068 = vmatprep.subr.mxu0 0.0
        %5069 = vmatpush1.msra.mxu0 0.0
        %5070 = vmatprep.subr.mxu0 0.0
        %5071 = vmatpush1.msra.mxu0 0.0
        %5072 = vmatprep.subr.mxu0 0.0
        %5073 = vmatpush1.msra.mxu0 0.0
        %5074 = vmatprep.subr.mxu0 0.0
        %5075 = vmatpush1.msra.mxu0 0.0
        %5076 = vmatprep.subr.mxu0 0.0
        %5077 = vmatpush1.msra.mxu0 0.0
        %5078 = vmatprep.subr.mxu0 0.0
        %5079 = vmatpush1.msra.mxu0 0.0
        %5080 = vmatprep.subr.mxu0 0.0
        %5081 = vmatpush1.msra.mxu0 0.0
        %5082 = vmatprep.subr.mxu0 0.0
        %5083 = vmatpush1.msra.mxu0 %v2770
        %5084 = vmatprep.subr.mxu0 0.0
        %5085 = vmatpush1.msra.mxu0 %v2768
        %5086 = vmatprep.subr.mxu0 0.0
        %5087 = vmatpush2.msra.mxu0 0.0
        %5088 = vmatprep.subr.mxu0 0.0
        %5089 = vmatpush2.msra.mxu0 0.0
        %5090 = vmatprep.subr.mxu0 0.0
        %5091 = vmatpush2.msra.mxu0 0.0
        %5092 = vmatprep.subr.mxu0 0.0
        %5093 = vmatpush2.msra.mxu0 0.0
        %5094 = vmatprep.subr.mxu0 0.0
        %5095 = vmatpush2.msra.mxu0 0.0
        %5096 = vmatprep.subr.mxu0 0.0
        %5097 = vmatpush2.msra.mxu0 0.0
        %5098 = vmatprep.subr.mxu0 0.0
        %5099 = vmatpush2.msra.mxu0 0.0
        %5100 = vmatprep.subr.mxu0 0.0
        %5101 = vmatpush2.msra.mxu0 0.0
        %5102 = vmatprep.subr.mxu0 0.0
        %5103 = vmatpush2.msra.mxu0 0.0
        %5104 = vmatprep.subr.mxu0 0.0
        %5105 = vmatpush2.msra.mxu0 0.0
        %5106 = vmatprep.subr.mxu0 0.0
        %5107 = vmatpush2.msra.mxu0 0.0
        %5108 = vmatprep.subr.mxu0 0.0
        %5109 = vmatpush2.msra.mxu0 0.0
        %5110 = vmatprep.subr.mxu0 0.0
        %5111 = vmatpush2.msra.mxu0 0.0
        %5112 = vmatprep.subr.mxu0 0.0
        %5113 = vmatpush2.msra.mxu0 0.0
        %5114 = vmatprep.subr.mxu0 0.0
        %5115 = vmatpush2.msra.mxu0 0.0
        %5116 = vmatprep.subr.mxu0 0.0
        %5117 = vmatpush2.msra.mxu0 0.0
        %5118 = vmatprep.mubr.f32.mxu0 0.0
        %5119 = vmatmul.mubr.f32.gmra.mxu0 %v5052
        %v5120 = vpop.f32.mrf.mxu0
        %v5121 = vadd.f32 0.0, %v5120
        %v5122 = vpop.f32.mrf.mxu0
        %5123 = vdwg.mxu0
        %v5125 = vsel %vm1120, %v5121, 0
        %5127 = vmatprep.subr.mxu0 0.0
        %5128 = vmatpush1.msra.mxu0 0.0
        %5129 = vmatprep.subr.mxu0 0.0
        %5130 = vmatpush1.msra.mxu0 0.0
        %5131 = vmatprep.subr.mxu0 0.0
        %5132 = vmatpush1.msra.mxu0 0.0
        %5133 = vmatprep.subr.mxu0 0.0
        %5134 = vmatpush1.msra.mxu0 0.0
        %5135 = vmatprep.subr.mxu0 0.0
        %5136 = vmatpush1.msra.mxu0 0.0
        %5137 = vmatprep.subr.mxu0 0.0
        %5138 = vmatpush1.msra.mxu0 0.0
        %5139 = vmatprep.subr.mxu0 0.0
        %5140 = vmatpush1.msra.mxu0 0.0
        %5141 = vmatprep.subr.mxu0 0.0
        %5142 = vmatpush1.msra.mxu0 0.0
        %5143 = vmatprep.subr.mxu0 0.0
        %5144 = vmatpush1.msra.mxu0 0.0
        %5145 = vmatprep.subr.mxu0 0.0
        %5146 = vmatpush1.msra.mxu0 0.0
        %5147 = vmatprep.subr.mxu0 0.0
        %5148 = vmatpush1.msra.mxu0 0.0
        %5149 = vmatprep.subr.mxu0 0.0
        %5150 = vmatpush1.msra.mxu0 0.0
        %5151 = vmatprep.subr.mxu0 0.0
        %5152 = vmatpush1.msra.mxu0 0.0
        %5153 = vmatprep.subr.mxu0 0.0
        %5154 = vmatpush1.msra.mxu0 0.0
        %5155 = vmatprep.subr.mxu0 0.0
        %5156 = vmatpush1.msra.mxu0 0.0
        %5157 = vmatprep.subr.mxu0 0.0
        %5158 = vmatpush1.msra.mxu0 %v922
        %5159 = vmatprep.subr.mxu0 0.0
        %5160 = vmatpush2.msra.mxu0 0.0
        %5161 = vmatprep.subr.mxu0 0.0
        %5162 = vmatpush2.msra.mxu0 0.0
        %5163 = vmatprep.subr.mxu0 0.0
        %5164 = vmatpush2.msra.mxu0 0.0
        %5165 = vmatprep.subr.mxu0 0.0
        %5166 = vmatpush2.msra.mxu0 0.0
        %5167 = vmatprep.subr.mxu0 0.0
        %5168 = vmatpush2.msra.mxu0 0.0
        %5169 = vmatprep.subr.mxu0 0.0
        %5170 = vmatpush2.msra.mxu0 0.0
        %5171 = vmatprep.subr.mxu0 0.0
        %5172 = vmatpush2.msra.mxu0 0.0
        %5173 = vmatprep.subr.mxu0 0.0
        %5174 = vmatpush2.msra.mxu0 0.0
        %5175 = vmatprep.subr.mxu0 0.0
        %5176 = vmatpush2.msra.mxu0 0.0
        %5177 = vmatprep.subr.mxu0 0.0
        %5178 = vmatpush2.msra.mxu0 0.0
        %5179 = vmatprep.subr.mxu0 0.0
        %5180 = vmatpush2.msra.mxu0 0.0
        %5181 = vmatprep.subr.mxu0 0.0
        %5182 = vmatpush2.msra.mxu0 0.0
        %5183 = vmatprep.subr.mxu0 0.0
        %5184 = vmatpush2.msra.mxu0 0.0
        %5185 = vmatprep.subr.mxu0 0.0
        %5186 = vmatpush2.msra.mxu0 0.0
        %5187 = vmatprep.subr.mxu0 0.0
        %5188 = vmatpush2.msra.mxu0 0.0
        %5189 = vmatprep.subr.mxu0 0.0
        %5190 = vmatpush2.msra.mxu0 0.0
        %5191 = vmatprep.mubr.f32.mxu0 0.0
        %5192 = vmatmul.mubr.f32.gmra.mxu0 %v5125
        %v5193 = vpop.f32.mrf.mxu0
        %v5194 = vadd.f32 0.0, %v5193
        %v5195 = vpop.f32.mrf.mxu0
        %5196 = vdwg.mxu0
        %v5197 = vadd.f32 %v4963, %v5194
        %5198 = vrot.lane.b32.xlu0 %v4502, 104
        %v5199 = vpop.permute.xlu0 %5198
        %v5200 = vsel %vm1120, %v5199, 0
        %5202 = vmatprep.subr.mxu0 0.0
        %5203 = vmatpush1.xpose.msra.mxu0 0.0
        %5204 = vmatprep.subr.mxu0 0.0
        %5205 = vmatpush1.xpose.msra.mxu0 0.0
        %5206 = vmatprep.subr.mxu0 0.0
        %5207 = vmatpush1.xpose.msra.mxu0 0.0
        %5208 = vmatprep.subr.mxu0 0.0
        %5209 = vmatpush1.xpose.msra.mxu0 0.0
        %5210 = vmatprep.subr.mxu0 0.0
        %5211 = vmatpush1.xpose.msra.mxu0 0.0
        %5212 = vmatprep.subr.mxu0 0.0
        %5213 = vmatpush1.xpose.msra.mxu0 0.0
        %5214 = vmatprep.subr.mxu0 0.0
        %5215 = vmatpush1.xpose.msra.mxu0 0.0
        %5216 = vmatprep.subr.mxu0 0.0
        %5217 = vmatpush1.xpose.msra.mxu0 0.0
        %5218 = vmatprep.subr.mxu0 0.0
        %5219 = vmatpush1.xpose.msra.mxu0 0.0
        %5220 = vmatprep.subr.mxu0 0.0
        %5221 = vmatpush1.xpose.msra.mxu0 0.0
        %5222 = vmatprep.subr.mxu0 0.0
        %5223 = vmatpush1.xpose.msra.mxu0 0.0
        %5224 = vmatprep.subr.mxu0 0.0
        %5225 = vmatpush1.xpose.msra.mxu0 0.0
        %5226 = vmatprep.subr.mxu0 0.0
        %5227 = vmatpush1.xpose.msra.mxu0 0.0
        %5228 = vmatprep.subr.mxu0 0.0
        %5229 = vmatpush1.xpose.msra.mxu0 0.0
        %5230 = vmatprep.subr.mxu0 0.0
        %5231 = vmatpush1.xpose.msra.mxu0 %v2930
        %5232 = vmatprep.subr.mxu0 0.0
        %5233 = vmatpush1.xpose.msra.mxu0 %v2928
        %5234 = vmatprep.subr.mxu0 0.0
        %5235 = vmatpush2.xpose.msra.mxu0 0.0
        %5236 = vmatprep.subr.mxu0 0.0
        %5237 = vmatpush2.xpose.msra.mxu0 0.0
        %5238 = vmatprep.subr.mxu0 0.0
        %5239 = vmatpush2.xpose.msra.mxu0 0.0
        %5240 = vmatprep.subr.mxu0 0.0
        %5241 = vmatpush2.xpose.msra.mxu0 0.0
        %5242 = vmatprep.subr.mxu0 0.0
        %5243 = vmatpush2.xpose.msra.mxu0 0.0
        %5244 = vmatprep.subr.mxu0 0.0
        %5245 = vmatpush2.xpose.msra.mxu0 0.0
        %5246 = vmatprep.subr.mxu0 0.0
        %5247 = vmatpush2.xpose.msra.mxu0 0.0
        %5248 = vmatprep.subr.mxu0 0.0
        %5249 = vmatpush2.xpose.msra.mxu0 0.0
        %5250 = vmatprep.subr.mxu0 0.0
        %5251 = vmatpush2.xpose.msra.mxu0 0.0
        %5252 = vmatprep.subr.mxu0 0.0
        %5253 = vmatpush2.xpose.msra.mxu0 0.0
        %5254 = vmatprep.subr.mxu0 0.0
        %5255 = vmatpush2.xpose.msra.mxu0 0.0
        %5256 = vmatprep.subr.mxu0 0.0
        %5257 = vmatpush2.xpose.msra.mxu0 0.0
        %5258 = vmatprep.subr.mxu0 0.0
        %5259 = vmatpush2.xpose.msra.mxu0 0.0
        %5260 = vmatprep.subr.mxu0 0.0
        %5261 = vmatpush2.xpose.msra.mxu0 0.0
        %5262 = vmatprep.subr.mxu0 0.0
        %5263 = vmatpush2.xpose.msra.mxu0 0.0
        %5264 = vmatprep.subr.mxu0 0.0
        %5265 = vmatpush2.xpose.msra.mxu0 0.0
        %5266 = vmatprep.mubr.f32.mxu0 0.0
        %5267 = vmatmul.mubr.f32.gmra.mxu0 %v5200
        %v5268 = vpop.f32.mrf.mxu0
        %v5269 = vadd.f32 0.0, %v5268
        %v5270 = vpop.f32.mrf.mxu0
        %5271 = vdwg.mxu0
        %v5272 = vsel %vm2265, %v5269, -inf
        %5273 = vmax.xlane.f32.xlu0 %v5272
        %v5274 = vpop.xlane.xlu0 %5273
        %v5275 = vsub.f32 %v5269, %v5274
        %v5276 = vmul.f32 %v5275, 1.442695
        %v5277 = vpow.pop %v5276
        %v5278 = vsel %vm2265, %v5277, 0.0
        %5279 = vadd.xlane.f32.xlu0 %v5278
        %v5280 = vpop.xlane.xlu0 %5279
        %v5281 = vrcp.pop %v5280
        %v5282 = vmul.f32 %v5277, %v5281
        %v5284 = vsel %vm2265, %v5282, 0
        %5286 = vmatprep.subr.mxu0 0.0
        %5287 = vmatpush1.msra.mxu0 0.0
        %5288 = vmatprep.subr.mxu0 0.0
        %5289 = vmatpush1.msra.mxu0 0.0
        %5290 = vmatprep.subr.mxu0 0.0
        %5291 = vmatpush1.msra.mxu0 0.0
        %5292 = vmatprep.subr.mxu0 0.0
        %5293 = vmatpush1.msra.mxu0 0.0
        %5294 = vmatprep.subr.mxu0 0.0
        %5295 = vmatpush1.msra.mxu0 0.0
        %5296 = vmatprep.subr.mxu0 0.0
        %5297 = vmatpush1.msra.mxu0 0.0
        %5298 = vmatprep.subr.mxu0 0.0
        %5299 = vmatpush1.msra.mxu0 0.0
        %5300 = vmatprep.subr.mxu0 0.0
        %5301 = vmatpush1.msra.mxu0 0.0
        %5302 = vmatprep.subr.mxu0 0.0
        %5303 = vmatpush1.msra.mxu0 0.0
        %5304 = vmatprep.subr.mxu0 0.0
        %5305 = vmatpush1.msra.mxu0 0.0
        %5306 = vmatprep.subr.mxu0 0.0
        %5307 = vmatpush1.msra.mxu0 0.0
        %5308 = vmatprep.subr.mxu0 0.0
        %5309 = vmatpush1.msra.mxu0 0.0
        %5310 = vmatprep.subr.mxu0 0.0
        %5311 = vmatpush1.msra.mxu0 0.0
        %5312 = vmatprep.subr.mxu0 0.0
        %5313 = vmatpush1.msra.mxu0 0.0
        %5314 = vmatprep.subr.mxu0 0.0
        %5315 = vmatpush1.msra.mxu0 %v3016
        %5316 = vmatprep.subr.mxu0 0.0
        %5317 = vmatpush1.msra.mxu0 %v3014
        %5318 = vmatprep.subr.mxu0 0.0
        %5319 = vmatpush2.msra.mxu0 0.0
        %5320 = vmatprep.subr.mxu0 0.0
        %5321 = vmatpush2.msra.mxu0 0.0
        %5322 = vmatprep.subr.mxu0 0.0
        %5323 = vmatpush2.msra.mxu0 0.0
        %5324 = vmatprep.subr.mxu0 0.0
        %5325 = vmatpush2.msra.mxu0 0.0
        %5326 = vmatprep.subr.mxu0 0.0
        %5327 = vmatpush2.msra.mxu0 0.0
        %5328 = vmatprep.subr.mxu0 0.0
        %5329 = vmatpush2.msra.mxu0 0.0
        %5330 = vmatprep.subr.mxu0 0.0
        %5331 = vmatpush2.msra.mxu0 0.0
        %5332 = vmatprep.subr.mxu0 0.0
        %5333 = vmatpush2.msra.mxu0 0.0
        %5334 = vmatprep.subr.mxu0 0.0
        %5335 = vmatpush2.msra.mxu0 0.0
        %5336 = vmatprep.subr.mxu0 0.0
        %5337 = vmatpush2.msra.mxu0 0.0
        %5338 = vmatprep.subr.mxu0 0.0
        %5339 = vmatpush2.msra.mxu0 0.0
        %5340 = vmatprep.subr.mxu0 0.0
        %5341 = vmatpush2.msra.mxu0 0.0
        %5342 = vmatprep.subr.mxu0 0.0
        %5343 = vmatpush2.msra.mxu0 0.0
        %5344 = vmatprep.subr.mxu0 0.0
        %5345 = vmatpush2.msra.mxu0 0.0
        %5346 = vmatprep.subr.mxu0 0.0
        %5347 = vmatpush2.msra.mxu0 0.0
        %5348 = vmatprep.subr.mxu0 0.0
        %5349 = vmatpush2.msra.mxu0 0.0
        %5350 = vmatprep.mubr.f32.mxu0 0.0
        %5351 = vmatmul.mubr.f32.gmra.mxu0 %v5284
        %v5352 = vpop.f32.mrf.mxu0
        %v5353 = vadd.f32 0.0, %v5352
        %v5354 = vpop.f32.mrf.mxu0
        %5355 = vdwg.mxu0
        %v5357 = vsel %vm1120, %v5353, 0
        %5359 = vmatprep.subr.mxu0 0.0
        %5360 = vmatpush1.msra.mxu0 0.0
        %5361 = vmatprep.subr.mxu0 0.0
        %5362 = vmatpush1.msra.mxu0 0.0
        %5363 = vmatprep.subr.mxu0 0.0
        %5364 = vmatpush1.msra.mxu0 0.0
        %5365 = vmatprep.subr.mxu0 0.0
        %5366 = vmatpush1.msra.mxu0 0.0
        %5367 = vmatprep.subr.mxu0 0.0
        %5368 = vmatpush1.msra.mxu0 0.0
        %5369 = vmatprep.subr.mxu0 0.0
        %5370 = vmatpush1.msra.mxu0 0.0
        %5371 = vmatprep.subr.mxu0 0.0
        %5372 = vmatpush1.msra.mxu0 0.0
        %5373 = vmatprep.subr.mxu0 0.0
        %5374 = vmatpush1.msra.mxu0 0.0
        %5375 = vmatprep.subr.mxu0 0.0
        %5376 = vmatpush1.msra.mxu0 0.0
        %5377 = vmatprep.subr.mxu0 0.0
        %5378 = vmatpush1.msra.mxu0 0.0
        %5379 = vmatprep.subr.mxu0 0.0
        %5380 = vmatpush1.msra.mxu0 0.0
        %5381 = vmatprep.subr.mxu0 0.0
        %5382 = vmatpush1.msra.mxu0 0.0
        %5383 = vmatprep.subr.mxu0 0.0
        %5384 = vmatpush1.msra.mxu0 0.0
        %5385 = vmatprep.subr.mxu0 0.0
        %5386 = vmatpush1.msra.mxu0 0.0
        %5387 = vmatprep.subr.mxu0 0.0
        %5388 = vmatpush1.msra.mxu0 0.0
        %5389 = vmatprep.subr.mxu0 0.0
        %5390 = vmatpush1.msra.mxu0 %v923
        %5391 = vmatprep.subr.mxu0 0.0
        %5392 = vmatpush2.msra.mxu0 0.0
        %5393 = vmatprep.subr.mxu0 0.0
        %5394 = vmatpush2.msra.mxu0 0.0
        %5395 = vmatprep.subr.mxu0 0.0
        %5396 = vmatpush2.msra.mxu0 0.0
        %5397 = vmatprep.subr.mxu0 0.0
        %5398 = vmatpush2.msra.mxu0 0.0
        %5399 = vmatprep.subr.mxu0 0.0
        %5400 = vmatpush2.msra.mxu0 0.0
        %5401 = vmatprep.subr.mxu0 0.0
        %5402 = vmatpush2.msra.mxu0 0.0
        %5403 = vmatprep.subr.mxu0 0.0
        %5404 = vmatpush2.msra.mxu0 0.0
        %5405 = vmatprep.subr.mxu0 0.0
        %5406 = vmatpush2.msra.mxu0 0.0
        %5407 = vmatprep.subr.mxu0 0.0
        %5408 = vmatpush2.msra.mxu0 0.0
        %5409 = vmatprep.subr.mxu0 0.0
        %5410 = vmatpush2.msra.mxu0 0.0
        %5411 = vmatprep.subr.mxu0 0.0
        %5412 = vmatpush2.msra.mxu0 0.0
        %5413 = vmatprep.subr.mxu0 0.0
        %5414 = vmatpush2.msra.mxu0 0.0
        %5415 = vmatprep.subr.mxu0 0.0
        %5416 = vmatpush2.msra.mxu0 0.0
        %5417 = vmatprep.subr.mxu0 0.0
        %5418 = vmatpush2.msra.mxu0 0.0
        %5419 = vmatprep.subr.mxu0 0.0
        %5420 = vmatpush2.msra.mxu0 0.0
        %5421 = vmatprep.subr.mxu0 0.0
        %5422 = vmatpush2.msra.mxu0 0.0
        %5423 = vmatprep.mubr.f32.mxu0 0.0
        %5424 = vmatmul.mubr.f32.gmra.mxu0 %v5357
        %v5425 = vpop.f32.mrf.mxu0
        %v5426 = vadd.f32 0.0, %v5425
        %v5427 = vpop.f32.mrf.mxu0
        %5428 = vdwg.mxu0
        %v5429 = vadd.f32 %v5197, %v5426
        %v5430 = vadd.f32 %v5429, %v3170
        %v5431 = vadd.f32 %v4431, %v5430
        %v5432 = vsel %vm956, %v5431, 0.0
        %5433 = vadd.xlane.f32.xlu0 %v5432
        %v5434 = vpop.xlane.xlu0 %5433
        %v5435 = vmul.f32 %v5434, %v2082
        %v5436 = vsub.f32 %v5431, %v5435
        %v5437 = vmul.f32 %v5436, %v5436
        %v5438 = vsel %vm956, %v5437, 0.0
        %5439 = vadd.xlane.f32.xlu0 %v5438
        %v5440 = vpop.xlane.xlu0 %5439
        %v5441 = vmul.f32 %v5440, %v2082
        %v5442 = vadd.f32 %v5441, 1e-05
        %v5443 = vrsqrt.pop %v5442
        %v5444 = vmul.f32 %v5436, %v5443
        %v5445 = vmul.f32 %v5444, %v3191
        %v5446 = vadd.f32 %v5445, %v3198
        %v5448 = vsel %vm956, %v5446, 0
        %5450 = vmatprep.subr.mxu0 0.0
        %5451 = vmatpush1.msra.mxu0 0.0
        %5452 = vmatprep.subr.mxu0 0.0
        %5453 = vmatpush1.msra.mxu0 0.0
        %5454 = vmatprep.subr.mxu0 0.0
        %5455 = vmatpush1.msra.mxu0 0.0
        %5456 = vmatprep.subr.mxu0 0.0
        %5457 = vmatpush1.msra.mxu0 0.0
        %5458 = vmatprep.subr.mxu0 0.0
        %5459 = vmatpush1.msra.mxu0 0.0
        %5460 = vmatprep.subr.mxu0 0.0
        %5461 = vmatpush1.msra.mxu0 0.0
        %5462 = vmatprep.subr.mxu0 0.0
        %5463 = vmatpush1.msra.mxu0 0.0
        %5464 = vmatprep.subr.mxu0 0.0
        %5465 = vmatpush1.msra.mxu0 0.0
        %5466 = vmatprep.subr.mxu0 0.0
        %5467 = vmatpush1.msra.mxu0 0.0
        %5468 = vmatprep.subr.mxu0 0.0
        %5469 = vmatpush1.msra.mxu0 0.0
        %5470 = vmatprep.subr.mxu0 0.0
        %5471 = vmatpush1.msra.mxu0 0.0
        %5472 = vmatprep.subr.mxu0 0.0
        %5473 = vmatpush1.msra.mxu0 0.0
        %5474 = vmatprep.subr.mxu0 0.0
        %5475 = vmatpush1.msra.mxu0 %v928
        %5476 = vmatprep.subr.mxu0 0.0
        %5477 = vmatpush1.msra.mxu0 %v927
        %5478 = vmatprep.subr.mxu0 0.0
        %5479 = vmatpush1.msra.mxu0 %v926
        %5480 = vmatprep.subr.mxu0 0.0
        %5481 = vmatpush1.msra.mxu0 %v925
        %5482 = vmatprep.subr.mxu0 0.0
        %5483 = vmatpush2.msra.mxu0 0.0
        %5484 = vmatprep.subr.mxu0 0.0
        %5485 = vmatpush2.msra.mxu0 0.0
        %5486 = vmatprep.subr.mxu0 0.0
        %5487 = vmatpush2.msra.mxu0 0.0
        %5488 = vmatprep.subr.mxu0 0.0
        %5489 = vmatpush2.msra.mxu0 0.0
        %5490 = vmatprep.subr.mxu0 0.0
        %5491 = vmatpush2.msra.mxu0 0.0
        %5492 = vmatprep.subr.mxu0 0.0
        %5493 = vmatpush2.msra.mxu0 0.0
        %5494 = vmatprep.subr.mxu0 0.0
        %5495 = vmatpush2.msra.mxu0 0.0
        %5496 = vmatprep.subr.mxu0 0.0
        %5497 = vmatpush2.msra.mxu0 0.0
        %5498 = vmatprep.subr.mxu0 0.0
        %5499 = vmatpush2.msra.mxu0 0.0
        %5500 = vmatprep.subr.mxu0 0.0
        %5501 = vmatpush2.msra.mxu0 0.0
        %5502 = vmatprep.subr.mxu0 0.0
        %5503 = vmatpush2.msra.mxu0 0.0
        %5504 = vmatprep.subr.mxu0 0.0
        %5505 = vmatpush2.msra.mxu0 0.0
        %5506 = vmatprep.subr.mxu0 0.0
        %5507 = vmatpush2.msra.mxu0 0.0
        %5508 = vmatprep.subr.mxu0 0.0
        %5509 = vmatpush2.msra.mxu0 0.0
        %5510 = vmatprep.subr.mxu0 0.0
        %5511 = vmatpush2.msra.mxu0 0.0
        %5512 = vmatprep.subr.mxu0 0.0
        %5513 = vmatpush2.msra.mxu0 0.0
        %5514 = vmatprep.mubr.f32.mxu0 0.0
        %5515 = vmatmul.mubr.f32.gmra.mxu0 %v5448
        %v5516 = vpop.f32.mrf.mxu0
        %v5517 = vadd.f32 %v3205, %v5516
        %v5518 = vpop.f32.mrf.mxu0
        %5519 = vdwg.mxu0
        %v5520 = vmax.f32 %v5517, 0.0
        %v5522 = vsel %vm3287, %v5520, 0
        %5524 = vmatprep.subr.mxu0 0.0
        %5525 = vmatpush1.msra.mxu0 0.0
        %5526 = vmatprep.subr.mxu0 0.0
        %5527 = vmatpush1.msra.mxu0 0.0
        %5528 = vmatprep.subr.mxu0 0.0
        %5529 = vmatpush1.msra.mxu0 0.0
        %5530 = vmatprep.subr.mxu0 0.0
        %5531 = vmatpush1.msra.mxu0 0.0
        %5532 = vmatprep.subr.mxu0 0.0
        %5533 = vmatpush1.msra.mxu0 0.0
        %5534 = vmatprep.subr.mxu0 0.0
        %5535 = vmatpush1.msra.mxu0 0.0
        %5536 = vmatprep.subr.mxu0 0.0
        %5537 = vmatpush1.msra.mxu0 0.0
        %5538 = vmatprep.subr.mxu0 0.0
        %5539 = vmatpush1.msra.mxu0 0.0
        %5540 = vmatprep.subr.mxu0 0.0
        %5541 = vmatpush1.msra.mxu0 %v937
        %5542 = vmatprep.subr.mxu0 0.0
        %5543 = vmatpush1.msra.mxu0 %v936
        %5544 = vmatprep.subr.mxu0 0.0
        %5545 = vmatpush1.msra.mxu0 %v935
        %5546 = vmatprep.subr.mxu0 0.0
        %5547 = vmatpush1.msra.mxu0 %v934
        %5548 = vmatprep.subr.mxu0 0.0
        %5549 = vmatpush1.msra.mxu0 %v933
        %5550 = vmatprep.subr.mxu0 0.0
        %5551 = vmatpush1.msra.mxu0 %v932
        %5552 = vmatprep.subr.mxu0 0.0
        %5553 = vmatpush1.msra.mxu0 %v931
        %5554 = vmatprep.subr.mxu0 0.0
        %5555 = vmatpush1.msra.mxu0 %v930
        %5556 = vmatprep.subr.mxu0 0.0
        %5557 = vmatpush2.msra.mxu0 0.0
        %5558 = vmatprep.subr.mxu0 0.0
        %5559 = vmatpush2.msra.mxu0 0.0
        %5560 = vmatprep.subr.mxu0 0.0
        %5561 = vmatpush2.msra.mxu0 0.0
        %5562 = vmatprep.subr.mxu0 0.0
        %5563 = vmatpush2.msra.mxu0 0.0
        %5564 = vmatprep.subr.mxu0 0.0
        %5565 = vmatpush2.msra.mxu0 0.0
        %5566 = vmatprep.subr.mxu0 0.0
        %5567 = vmatpush2.msra.mxu0 0.0
        %5568 = vmatprep.subr.mxu0 0.0
        %5569 = vmatpush2.msra.mxu0 0.0
        %5570 = vmatprep.subr.mxu0 0.0
        %5571 = vmatpush2.msra.mxu0 0.0
        %5572 = vmatprep.subr.mxu0 0.0
        %5573 = vmatpush2.msra.mxu0 0.0
        %5574 = vmatprep.subr.mxu0 0.0
        %5575 = vmatpush2.msra.mxu0 0.0
        %5576 = vmatprep.subr.mxu0 0.0
        %5577 = vmatpush2.msra.mxu0 0.0
        %5578 = vmatprep.subr.mxu0 0.0
        %5579 = vmatpush2.msra.mxu0 0.0
        %5580 = vmatprep.subr.mxu0 0.0
        %5581 = vmatpush2.msra.mxu0 0.0
        %5582 = vmatprep.subr.mxu0 0.0
        %5583 = vmatpush2.msra.mxu0 0.0
        %5584 = vmatprep.subr.mxu0 0.0
        %5585 = vmatpush2.msra.mxu0 0.0
        %5586 = vmatprep.subr.mxu0 0.0
        %5587 = vmatpush2.msra.mxu0 0.0
        %5588 = vmatprep.mubr.f32.mxu0 0.0
        %5589 = vmatmul.mubr.f32.gmra.mxu0 %v5522
        %v5590 = vpop.f32.mrf.mxu0
        %v5591 = vadd.f32 %v3285, %v5590
        %v5592 = vpop.f32.mrf.mxu0
        %5593 = vdwg.mxu0
        %v5594 = vadd.f32 %v5446, %v5591
        %v5595 = vsel %vm956, %v5594, 0.0
        %5596 = vadd.xlane.f32.xlu0 %v5595
        %v5597 = vpop.xlane.xlu0 %5596
        %v5598 = vmul.f32 %v5597, %v2082
        %v5599 = vsub.f32 %v5594, %v5598
        %v5600 = vmul.f32 %v5599, %v5599
        %v5601 = vsel %vm956, %v5600, 0.0
        %5602 = vadd.xlane.f32.xlu0 %v5601
        %v5603 = vpop.xlane.xlu0 %5602
        %v5604 = vmul.f32 %v5603, %v2082
        %v5605 = vadd.f32 %v5604, 1e-05
        %v5606 = vrsqrt.pop %v5605
        %v5607 = vmul.f32 %v5599, %v5606
        %v5608 = vmul.f32 %v5607, %v3379
        %v5609 = vadd.f32 %v5608, %v3386
        %5610 = vst.msk [vmem:[%s896] sm:$0xff] %vm956, %v5609
        %s5611 = sand.u32 %s526, 1
        %s5612 = scalar_lea.sflag [#allocation4], %s5611
        %s5613 = sand.u32 %s526, 1
        %s5614 = smul.addr %s5613, 8
        %s5615 = scalar_lea.vmem [#allocation26], %s5614
        // Predicated region
        $region169: #{tpu_custom_call.1} parent=107 // pred_check
          %p5616 = pneg %p536
        $region170: #{tpu_custom_call.1} parent=107 // pred_check_branch
          %5618 = sbr.rel (%p5616) target = $region172
        $region171: #{tpu_custom_call.1} parent=107 // pred_region
          %s5620 = ssub.s32 128, 128
          %5621 = vsyncadd %s5612, %s5620
          %s5622 = smul.addr %s46, 128
          %s5623 = scalar_lea.hbm %s22, %s5622
          %s5625 = sshll.u32 %s5615, 4
          %s5626 = int_to_ptr.vmem [resolvable:$true] %s5625
          %5628 = dma.vmem_to_hbm [thread:$0]  %s5626, 128, %s5623, %s5612
        $region172: #{tpu_custom_call.1} parent=107 // pred_fallthru
          _
      $region108: #{tpu_custom_call.1} parent=5 // pred_fallthru
        _
      %p5629 = scmp.le.s32.totalorder 2, %s41
      // Predicated region
      $region173: #{tpu_custom_call.1} parent=5 // pred_check
        %p5630 = pneg %p5629
      $region174: #{tpu_custom_call.1} parent=5 // pred_check_branch
        %5632 = sbr.rel (%p5630) target = $region176
      $region175: #{tpu_custom_call.1} parent=5 // pred_region
        %s5633 = ssub.s32 %s41, 2
        // Predicated region
        $region177: #{tpu_custom_call.1} parent=175 // pred_check
          %p5634 = pneg %p542
        $region178: #{tpu_custom_call.1} parent=175 // pred_check_branch
          %5636 = sbr.rel (%p5634) target = $region180
        $region179: #{tpu_custom_call.1} parent=175 // pred_region
          %s5637 = sand.u32 %s527, 1
          %s5638 = scalar_lea.sflag [#allocation4], %s5637
          %s5639 = sand.u32 %s527, 1
          %s5640 = smul.addr %s5639, 8
          %s5641 = scalar_lea.vmem [#allocation26], %s5640
          %5642 = dma.done %s5638, 128
        $region180: #{tpu_custom_call.1} parent=175 // pred_fallthru
          _
      $region176: #{tpu_custom_call.1} parent=5 // pred_fallthru
        _
    $region6: #{tpu_custom_call.1} parent=1 // loop_footer
      %s45 = sadd.s32 1, %s41
    $region7: #{tpu_custom_call.1} parent=1 // loop_footer_branch
      %40 = sbr.rel target = $region3
    $region8: #{tpu_custom_call.1} parent=1 // loop_exit
      _
    %5643 = vsyncpa [#allocation3], 1
    %s5644 = scalar_lea.sflag [#allocation3], 1
    %5645 = vsyncpa %s5644, 1
    %5646 = vsyncpa [#allocation6], 1
    %5647 = vsyncpa [#allocation9], 1
    %5648 = vsyncpa [#allocation12], 1
    %5649 = vsyncpa [#allocation15], 1
    %5650 = vsyncpa [#allocation18], 1
    %5651 = vsyncpa [#allocation21], 1
    %5652 = vsyncpa [#allocation24], 1
    %5653 = vsyncpa [#allocation4], 1
    %s5654 = scalar_lea.sflag [#allocation4], 1
    %5655 = vsyncpa %s5654, 1

</llo_original>
